<compile_context>
chip_gen: v7x
topology: tpu7x:2x2x1
jax: 0.10.0
libtpu: 0.0.40
codegen_flags: <defaults>
</compile_context>

<pallas_src>
import functools

import jax
import jax.numpy as jnp
from jax.experimental import pallas as pl
from jax.experimental.pallas import tpu as pltpu

BN_EPS = 1e-5          # nn.BatchNorm2d default eps
LN_EPS = 1e-5          # nn.LayerNorm default eps
LEAKY_SLOPE = 0.01     # nn.LeakyReLU default negative_slope


def _vmem_limit_bytes():
    """Generation-aware VMEM cap: ~3/4 of physical (48 MiB on v7x, ~96 MiB on v5e/v6e)."""
    try:
        phys = pltpu.get_tpu_info().vmem_capacity_bytes
    except Exception:
        phys = 64 << 20
    return int(min(phys * 3 // 4, 100 << 20))


_VMEM_LIMIT = _vmem_limit_bytes()


def _pick_row_tile(m, cap):
    """Largest multiple-of-8 divisor of m that is <= cap (or m itself if m <= cap).
    Guard: if no such divisor exists, fall back to a single tile (m) — for this
    module m is always a multiple of 16 whenever it exceeds the cap."""
    if m <= cap:
        return m
    d = cap - cap % 8
    while d >= 8:
        if m % d == 0:
            return d
        d -= 8
    return m


# ---------------------------------------------------------------------------
# Pallas kernels
# ---------------------------------------------------------------------------
def _conv_block_kernel(p_ref, w_ref, b_ref, y_ref, mean_ref, m2_ref):
    """One conv-block tile:
         y = relu(patches @ W' + b')
       where W'/b' already contain the PREVIOUS layer's folded BatchNorm affine.
       Also emits this tile's BN partial statistics (tile mean + centered M2) for
       THIS layer; the wrapper combines tiles with Chan's parallel-variance formula.
       p:(TM,K) bf16  w:(K,Cout) bf16  b:(1,Cout) f32
       y:(TM,Cout) bf16  mean,m2:(1,1,Cout) f32 (one row per grid step)."""
    acc = jnp.dot(p_ref[...], w_ref[...], preferred_element_type=jnp.float32)
    acc = jnp.maximum(acc + b_ref[...], 0.0)            # Conv2d bias + ReLU
    y_ref[...] = acc.astype(y_ref.dtype)

    tmean = jnp.mean(acc, axis=0, keepdims=True)        # (1, Cout)
    d = acc - tmean
    mean_ref[0] = tmean
    m2_ref[0] = jnp.sum(d * d, axis=0, keepdims=True)


def _fc_kernel(x_ref, s_ref, t_ref, w_ref, b_ref, g_ref, bb_ref, o_ref):
    """x = flat*scale + shift (last conv's BN folded in), then
       Linear(4096,512) + LeakyReLU + LayerNorm(512) per row.
       LayerNorm uses centered variance in f32 (no E[x^2]-E[x]^2 cancellation)."""
    x = x_ref[...].astype(jnp.float32) * s_ref[...] + t_ref[...]
    y = jnp.dot(x.astype(jnp.bfloat16), w_ref[...],
                preferred_element_type=jnp.float32) + b_ref[...]
    y = jnp.where(y > 0, y, LEAKY_SLOPE * y)             # LeakyReLU
    mean = jnp.mean(y, axis=-1, keepdims=True)
    d = y - mean
    var = jnp.mean(d * d, axis=-1, keepdims=True)
    o_ref[...] = d * jax.lax.rsqrt(var + LN_EPS) * g_ref[...] + bb_ref[...]


# ---------------------------------------------------------------------------
# pallas_call wrappers
# ---------------------------------------------------------------------------
def conv_block(patches, w_bf16, b_f32, tm_cap):
    """patches:(M,K) bf16, w:(K,Cout) bf16 (BN of previous layer already folded),
    b:(Cout,) f32.  Returns (y:(M,Cout) bf16, mean:(Cout,) f32, var:(Cout,) f32)
    where mean/var are this layer's batch statistics (biased, training-mode BN)."""
    M, K = patches.shape
    Cout = w_bf16.shape[1]
    TM = _pick_row_tile(M, tm_cap)
    G = M // TM
    const2 = lambda i: (0, 0)

    y, pmean, pm2 = pl.pallas_call(
        _conv_block_kernel,
        out_shape=(jax.ShapeDtypeStruct((M, Cout), jnp.bfloat16),
                   jax.ShapeDtypeStruct((G, 1, Cout), jnp.float32),
                   jax.ShapeDtypeStruct((G, 1, Cout), jnp.float32)),
        grid=(G,),
        in_specs=[pl.BlockSpec((TM, K), lambda i: (i, 0)),
                  pl.BlockSpec((K, Cout), const2),
                  pl.BlockSpec((1, Cout), const2)],
        out_specs=(pl.BlockSpec((TM, Cout), lambda i: (i, 0)),
                   pl.BlockSpec((1, 1, Cout), lambda i: (i, 0, 0)),
                   pl.BlockSpec((1, 1, Cout), lambda i: (i, 0, 0))),
        compiler_params=pltpu.CompilerParams(
            dimension_semantics=("parallel",),   # per-tile partials -> megacore-friendly
            vmem_limit_bytes=_VMEM_LIMIT),
    )(patches, w_bf16, b_f32.reshape(1, Cout))

    # Chan's parallel-variance combine across G equal-sized tiles.
    pmean = pmean[:, 0, :]                               # (G, Cout)
    pm2 = pm2[:, 0, :]
    mean = jnp.mean(pmean, axis=0)                       # (Cout,)
    m2 = jnp.sum(pm2, axis=0) + TM * jnp.sum((pmean - mean) ** 2, axis=0)
    var = m2 / M                                         # biased variance
    return y, mean, var


def fc_lrelu_ln(x2d, scale, shift, w, b, gamma, beta):
    """x2d:(B,4096) bf16, scale/shift:(4096,) f32 (last conv BN), w:(4096,512) bf16.
    Returns (B,512) f32."""
    B, K = x2d.shape
    D = w.shape[1]
    # at least 2 row tiles when B > 8 so the 'parallel' axis can span both v7x cores
    TB = _pick_row_tile(B, max(8, min(256, B // 2)))
    const = lambda i: (0, 0)
    # NOTE: constant-index blocks (weight, scale/shift, bias, gamma/beta) are
    # double-buffered by default; VMEM headroom is ample here so we keep defaults.
    return pl.pallas_call(
        _fc_kernel,
        out_shape=jax.ShapeDtypeStruct((B, D), jnp.float32),
        grid=(B // TB,),
        in_specs=[pl.BlockSpec((TB, K), lambda i: (i, 0)),
                  pl.BlockSpec((1, K), const),
                  pl.BlockSpec((1, K), const),
                  pl.BlockSpec((K, D), const),
                  pl.BlockSpec((1, D), const),
                  pl.BlockSpec((1, D), const),
                  pl.BlockSpec((1, D), const)],
        out_specs=pl.BlockSpec((TB, D), lambda i: (i, 0)),
        compiler_params=pltpu.CompilerParams(
            dimension_semantics=("parallel",),
            vmem_limit_bytes=_VMEM_LIMIT),
    )(x2d, scale.reshape(1, K), shift.reshape(1, K), w,
      b.reshape(1, D), gamma.reshape(1, D), beta.reshape(1, D))


# ---------------------------------------------------------------------------
# Glue (layout / parameter setup) in plain JAX — all runs under one jit
# ---------------------------------------------------------------------------
def hierarchical_rows(x_nchw, k, levels):
    """Rearrange the NCHW input so that every subsequent space-to-depth step of a
    kernel==stride conv stack (and the final flatten) is a contiguous reshape.
    Rows ordered (n, h_L,w_L, ..., h_1,w_1), columns (h_0, w_0, c).
    Returns (N*(H/k)*(W/k), k*k*C)."""
    N, C, H, W = x_nchw.shape
    coarse_h, coarse_w = H // k ** levels, W // k ** levels
    x = x_nchw.reshape((N, C, coarse_h) + (k,) * levels + (coarse_w,) + (k,) * levels)
    perm = [0]
    for i in range(levels + 1):
        perm += [2 + i, 3 + levels + i]   # interleave h / w factors, coarse -> fine
    perm += [1]                           # channel last
    x = jnp.transpose(x, perm)
    return x.reshape(N * (H // k) * (W // k), k * k * C)


def init_encoder_params(key, obs_shape, depth, kernel_size, n_conv=4, fc_out=512):
    """Deterministic synthetic parameters (stand-in for initialize_weights).
    Conv weights stored as (k*k*cin, cout) f32 matrices, column order (kh, kw, cin).
    The FC weight is generated against the canonical NCHW-flatten order and its rows
    are permuted ONCE to the kernel's internal (hw-major, channel-minor) order."""
    c_in = obs_shape[0]
    chans = [c_in] + [depth * (2 ** i) for i in range(n_conv)]
    params = {"conv": []}
    for i in range(n_conv):
        key, k1, k2 = jax.random.split(key, 3)
        cin, cout = chans[i], chans[i + 1]
        fan_in = cin * kernel_size * kernel_size
        w = jax.random.normal(k1, (kernel_size, kernel_size, cin, cout),
                              jnp.float32) * (2.0 / fan_in) ** 0.5
        w = w.reshape(kernel_size * kernel_size * cin, cout)
        b = jax.random.normal(k2, (cout,), jnp.float32) * 0.01
        gamma = jnp.ones((cout,), jnp.float32)    # BatchNorm2d affine defaults
        beta = jnp.zeros((cout,), jnp.float32)
        params["conv"].append((w, b, gamma, beta))

    hw = (obs_shape[1] // kernel_size ** n_conv) * (obs_shape[2] // kernel_size ** n_conv)
    c_last = chans[-1]
    in_features = hw * c_last                     # 4096 (matches nn.Linear(4096, 512))
    key, k1, k2 = jax.random.split(key, 3)
    fc_w = jax.random.normal(k1, (in_features, fc_out), jnp.float32) \
        * (2.0 / in_features) ** 0.5
    # canonical flatten index = c*hw + p ; internal index = p*c_last + c
    perm = (jnp.arange(c_last)[None, :] * hw + jnp.arange(hw)[:, None]).reshape(-1)
    params["fc_w"] = fc_w[perm, :].astype(jnp.bfloat16)
    params["fc_b"] = jax.random.normal(k2, (fc_out,), jnp.float32) * 0.01
    params["ln_g"] = jnp.ones((fc_out,), jnp.float32)   # LayerNorm(512) defaults
    params["ln_b"] = jnp.zeros((fc_out,), jnp.float32)
    return params


def encoder_forward(params, x, obs_shape, kernel_size, stride, seq=0):
    """Mirrors Encoder.forward. seq==0: x is (C,H,W) -> (512,).
    seq!=0: x is (S, B, C, H, W) -> (S, B, 512)."""
    assert kernel_size == stride, "space-to-depth conv requires kernel_size == stride"
    if seq:
        seq_len, batch_size = x.shape[0], x.shape[1]
        x = x.reshape((-1,) + tuple(obs_shape))
    else:
        x = x[None, ...]                                     # unsqueeze(0)
    N = x.shape[0]
    n_conv = len(params["conv"])
    kk = kernel_size * kernel_size

    # One up-front rearrangement; all later space-to-depth steps are free reshapes.
    patches = hierarchical_rows(x, kernel_size, n_conv).astype(jnp.bfloat16)

    scale = shift = None
    y = None
    for li, (w, b, gamma, beta) in enumerate(params["conv"]):   # Conv+ReLU+BatchNorm
        if li > 0:
            # fold the previous layer's BatchNorm affine into this layer's weights
            s_col = jnp.tile(scale, kk)                  # patch columns: (kh,kw,c)
            t_col = jnp.tile(shift, kk)
            w_f = s_col[:, None] * w
            b_f = b + t_col @ w
        else:
            w_f, b_f = w, b
        K = w.shape[0]
        tm_cap = 4096 if K <= 64 else 2048
        y, mean, var = conv_block(patches, w_f.astype(jnp.bfloat16), b_f, tm_cap)
        # this layer's training-mode BN (biased variance); normalize is deferred and
        # folded forward into the next layer's weights / the FC kernel's affine
        scale = gamma * jax.lax.rsqrt(var + BN_EPS)
        shift = beta - mean * scale
        if li + 1 < n_conv:
            patches = y.reshape(y.shape[0] // kk, kk * y.shape[1])   # free reshape

    # flatten: rows of y are (n, h, w) -> free reshape; fc weight rows were
    # pre-permuted at init to this (hw-major, channel-minor) order.
    c_last = y.shape[1]
    flat = y.reshape(N, -1)
    hw = flat.shape[1] // c_last
    s_flat = jnp.tile(scale, hw)        # last conv's BN, applied inside the FC kernel
    t_flat = jnp.tile(shift, hw)
    out = fc_lrelu_ln(flat, s_flat, t_flat, params["fc_w"], params["fc_b"],
                      params["ln_g"], params["ln_b"])    # fc + LeakyReLU + LayerNorm
    if seq:
        return out.reshape(seq_len, batch_size, -1)
    return out[0]                                        # squeeze(0)


# TODO(synk): BatchNorm2d running_mean/running_var buffer updates (a training-mode
# side effect of the PyTorch module) are not materialized; only the batch-statistic
# normalization used in the forward output is reproduced.

if __name__ == "__main__":
    obs_shape = (3, 64, 64)
    depth, kernel_size, stride = 32, 2, 2    # conv stack -> (256, 4, 4) = 4096 features
    key = jax.random.PRNGKey(0)
    pkey, xkey, skey = jax.random.split(key, 3)
    params = init_encoder_params(pkey, obs_shape, depth, kernel_size)

    fwd_single = jax.jit(functools.partial(
        encoder_forward, obs_shape=obs_shape, kernel_size=kernel_size,
        stride=stride, seq=0))
    fwd_seq = jax.jit(functools.partial(
        encoder_forward, obs_shape=obs_shape, kernel_size=kernel_size,
        stride=stride, seq=1))

    # single observation (seq=0)
    x0 = jax.random.normal(xkey, obs_shape, jnp.float32)
    out0 = jax.block_until_ready(fwd_single(params, x0))
    assert out0.shape == (512,) and out0.dtype == jnp.float32
    assert bool(jnp.all(jnp.isfinite(out0)))

    # small sequence batch (seq mode): exercises multi-tile grids + BN partial stats
    seq_len, batch = 4, 2
    xs = jax.random.normal(skey, (seq_len, batch) + obs_shape, jnp.float32)
    outs = jax.block_until_ready(fwd_seq(params, xs))
    assert outs.shape == (seq_len, batch, 512) and outs.dtype == jnp.float32
    assert bool(jnp.all(jnp.isfinite(outs)))

    print("KERNEL_OK")
</pallas_src>

<mosaic_0001>
module attributes {stable_mosaic.version = 11 : i64} {
  func.func @_conv_block_kernel(%arg0: i32, %arg1: memref<1024x12xbf16, #tpu.memory_space<vmem>>, %arg2: memref<12x32xbf16, #tpu.memory_space<vmem>>, %arg3: memref<1x32xf32, #tpu.memory_space<vmem>>, %arg4: memref<1024x32xbf16, #tpu.memory_space<vmem>>, %arg5: memref<1x1x32xf32, #tpu.memory_space<vmem>>, %arg6: memref<1x1x32xf32, #tpu.memory_space<vmem>>) attributes {dimension_semantics = [#tpu.dimension_semantics<parallel>], iteration_bounds = array<i64: 1>, scalar_prefetch = 0 : i64, scratch_operands = 0 : i64, tpu.core_type = #tpu.core_type<tc>, window_params = [{transform_indices = @transform_0, window_bounds = array<i64: 1024, 12>}, {pipeline_mode = #tpu.pipeline_mode<synchronous>, transform_indices = @transform_1, window_bounds = array<i64: 12, 32>}, {pipeline_mode = #tpu.pipeline_mode<synchronous>, transform_indices = @transform_2, window_bounds = array<i64: 1, 32>}, {transform_indices = @transform_3, window_bounds = array<i64: 1024, 32>}, {transform_indices = @transform_4, window_bounds = array<i64: 1, 1, 32>}, {transform_indices = @transform_5, window_bounds = array<i64: 1, 1, 32>}]} {
    %c0 = arith.constant 0 : index
    %c0_0 = arith.constant 0 : index
    %0 = vector.load %arg1[%c0, %c0_0] : memref<1024x12xbf16, #tpu.memory_space<vmem>>, vector<1024x12xbf16>
    %c0_1 = arith.constant 0 : index
    %c0_2 = arith.constant 0 : index
    %1 = vector.load %arg2[%c0_1, %c0_2] : memref<12x32xbf16, #tpu.memory_space<vmem>>, vector<12x32xbf16>
    %cst = arith.constant dense<0.000000e+00> : vector<1024x32xf32>
    %2 = tpu.matmul %0, %1, %cst {dimension_numbers = #tpu.dot_dimension_numbers<[1], [0], [0], [1], [0, 0, 1, 1], [], []>} : vector<1024x12xbf16>, vector<12x32xbf16>, vector<1024x32xf32> -> vector<1024x32xf32>
    %c0_3 = arith.constant 0 : index
    %c0_4 = arith.constant 0 : index
    %3 = vector.load %arg3[%c0_3, %c0_4] : memref<1x32xf32, #tpu.memory_space<vmem>>, vector<1x32xf32>
    %4 = vector.broadcast %3 : vector<1x32xf32> to vector<1024x32xf32>
    %5 = arith.addf %2, %4 : vector<1024x32xf32>
    %cst_5 = arith.constant 0.000000e+00 : f32
    %6 = vector.broadcast %cst_5 : f32 to vector<1024x32xf32>
    %7 = arith.maximumf %5, %6 : vector<1024x32xf32>
    %8 = arith.truncf %7 : vector<1024x32xf32> to vector<1024x32xbf16>
    %c0_6 = arith.constant 0 : index
    %c0_7 = arith.constant 0 : index
    %9 = vector.load %arg4[%c0_6, %c0_7] : memref<1024x32xbf16, #tpu.memory_space<vmem>>, vector<1024x32xbf16>
    tpu.vector_store %arg4[%c0_6, %c0_7], %8 {strides = array<i32>} : memref<1024x32xbf16, #tpu.memory_space<vmem>>, vector<1024x32xbf16>,
    %cst_8 = arith.constant dense<0.000000e+00> : vector<32xf32>
    %10 = vector.multi_reduction <add>, %7, %cst_8 [0] : vector<1024x32xf32> to vector<32xf32>
    %11 = vector.shape_cast %10 : vector<32xf32> to vector<1x32xf32>
    %cst_9 = arith.constant 1.024000e+03 : f32
    %12 = vector.broadcast %cst_9 : f32 to vector<1x32xf32>
    %13 = arith.divf %11, %12 : vector<1x32xf32>
    %14 = vector.broadcast %13 : vector<1x32xf32> to vector<1024x32xf32>
    %15 = arith.subf %7, %14 : vector<1024x32xf32>
    %c0_10 = arith.constant 0 : index
    %c0_11 = arith.constant 0 : index
    %c0_12 = arith.constant 0 : index
    %16 = vector.load %arg5[%c0_10, %c0_11, %c0_12] : memref<1x1x32xf32, #tpu.memory_space<vmem>>, vector<1x1x32xf32>
    %17 = vector.shape_cast %16 : vector<1x1x32xf32> to vector<1x32xf32>
    %18 = vector.shape_cast %13 : vector<1x32xf32> to vector<1x1x32xf32>
    tpu.vector_store %arg5[%c0_10, %c0_11, %c0_12], %18 {strides = array<i32>} : memref<1x1x32xf32, #tpu.memory_space<vmem>>, vector<1x1x32xf32>,
    %19 = arith.mulf %15, %15 : vector<1024x32xf32>
    %cst_13 = arith.constant dense<0.000000e+00> : vector<32xf32>
    %20 = vector.multi_reduction <add>, %19, %cst_13 [0] : vector<1024x32xf32> to vector<32xf32>
    %21 = vector.shape_cast %20 : vector<32xf32> to vector<1x32xf32>
    %c0_14 = arith.constant 0 : index
    %c0_15 = arith.constant 0 : index
    %c0_16 = arith.constant 0 : index
    %22 = vector.load %arg6[%c0_14, %c0_15, %c0_16] : memref<1x1x32xf32, #tpu.memory_space<vmem>>, vector<1x1x32xf32>
    %23 = vector.shape_cast %22 : vector<1x1x32xf32> to vector<1x32xf32>
    %24 = vector.shape_cast %21 : vector<1x32xf32> to vector<1x1x32xf32>
    tpu.vector_store %arg6[%c0_14, %c0_15, %c0_16], %24 {strides = array<i32>} : memref<1x1x32xf32, #tpu.memory_space<vmem>>, vector<1x1x32xf32>,
    return
  }
  func.func @transform_0(%arg0: i32) -> (i32, i32) {
    %c0_i32 = arith.constant 0 : i32
    %c0_i32_0 = arith.constant 0 : i32
    return %arg0, %c0_i32 : i32, i32
  }
  func.func @transform_1(%arg0: i32) -> (i32, i32) {
    %c0_i32 = arith.constant 0 : i32
    %c0_i32_0 = arith.constant 0 : i32
    %c0_i32_1 = arith.constant 0 : i32
    return %c0_i32, %c0_i32_0 : i32, i32
  }
  func.func @transform_2(%arg0: i32) -> (i32, i32) {
    %c0_i32 = arith.constant 0 : i32
    %c0_i32_0 = arith.constant 0 : i32
    %c0_i32_1 = arith.constant 0 : i32
    return %c0_i32, %c0_i32_0 : i32, i32
  }
  func.func @transform_3(%arg0: i32) -> (i32, i32) {
    %c0_i32 = arith.constant 0 : i32
    %c0_i32_0 = arith.constant 0 : i32
    return %arg0, %c0_i32 : i32, i32
  }
  func.func @transform_4(%arg0: i32) -> (i32, i32, i32) {
    %c0_i32 = arith.constant 0 : i32
    %c0_i32_0 = arith.constant 0 : i32
    %c0_i32_1 = arith.constant 0 : i32
    return %arg0, %c0_i32, %c0_i32_0 : i32, i32, i32
  }
  func.func @transform_5(%arg0: i32) -> (i32, i32, i32) {
    %c0_i32 = arith.constant 0 : i32
    %c0_i32_0 = arith.constant 0 : i32
    %c0_i32_1 = arith.constant 0 : i32
    return %arg0, %c0_i32, %c0_i32_0 : i32, i32, i32
  }
}

module attributes {stable_mosaic.version = 11 : i64} {
  func.func @_conv_block_kernel(%arg0: i32, %arg1: memref<256x128xbf16, #tpu.memory_space<vmem>>, %arg2: memref<128x64xbf16, #tpu.memory_space<vmem>>, %arg3: memref<1x64xf32, #tpu.memory_space<vmem>>, %arg4: memref<256x64xbf16, #tpu.memory_space<vmem>>, %arg5: memref<1x1x64xf32, #tpu.memory_space<vmem>>, %arg6: memref<1x1x64xf32, #tpu.memory_space<vmem>>) attributes {dimension_semantics = [#tpu.dimension_semantics<parallel>], iteration_bounds = array<i64: 1>, scalar_prefetch = 0 : i64, scratch_operands = 0 : i64, tpu.core_type = #tpu.core_type<tc>, window_params = [{transform_indices = @transform_0, window_bounds = array<i64: 256, 128>}, {pipeline_mode = #tpu.pipeline_mode<synchronous>, transform_indices = @transform_1, window_bounds = array<i64: 128, 64>}, {pipeline_mode = #tpu.pipeline_mode<synchronous>, transform_indices = @transform_2, window_bounds = array<i64: 1, 64>}, {transform_indices = @transform_3, window_bounds = array<i64: 256, 64>}, {transform_indices = @transform_4, window_bounds = array<i64: 1, 1, 64>}, {transform_indices = @transform_5, window_bounds = array<i64: 1, 1, 64>}]} {
    %c0 = arith.constant 0 : index
    %c0_0 = arith.constant 0 : index
    %0 = vector.load %arg1[%c0, %c0_0] : memref<256x128xbf16, #tpu.memory_space<vmem>>, vector<256x128xbf16>
    %c0_1 = arith.constant 0 : index
    %c0_2 = arith.constant 0 : index
    %1 = vector.load %arg2[%c0_1, %c0_2] : memref<128x64xbf16, #tpu.memory_space<vmem>>, vector<128x64xbf16>
    %cst = arith.constant dense<0.000000e+00> : vector<256x64xf32>
    %2 = tpu.matmul %0, %1, %cst {dimension_numbers = #tpu.dot_dimension_numbers<[1], [0], [0], [1], [0, 0, 1, 1], [], []>} : vector<256x128xbf16>, vector<128x64xbf16>, vector<256x64xf32> -> vector<256x64xf32>
    %c0_3 = arith.constant 0 : index
    %c0_4 = arith.constant 0 : index
    %3 = vector.load %arg3[%c0_3, %c0_4] : memref<1x64xf32, #tpu.memory_space<vmem>>, vector<1x64xf32>
    %4 = vector.broadcast %3 : vector<1x64xf32> to vector<256x64xf32>
    %5 = arith.addf %2, %4 : vector<256x64xf32>
    %cst_5 = arith.constant 0.000000e+00 : f32
    %6 = vector.broadcast %cst_5 : f32 to vector<256x64xf32>
    %7 = arith.maximumf %5, %6 : vector<256x64xf32>
    %8 = arith.truncf %7 : vector<256x64xf32> to vector<256x64xbf16>
    %c0_6 = arith.constant 0 : index
    %c0_7 = arith.constant 0 : index
    %9 = vector.load %arg4[%c0_6, %c0_7] : memref<256x64xbf16, #tpu.memory_space<vmem>>, vector<256x64xbf16>
    tpu.vector_store %arg4[%c0_6, %c0_7], %8 {strides = array<i32>} : memref<256x64xbf16, #tpu.memory_space<vmem>>, vector<256x64xbf16>,
    %cst_8 = arith.constant dense<0.000000e+00> : vector<64xf32>
    %10 = vector.multi_reduction <add>, %7, %cst_8 [0] : vector<256x64xf32> to vector<64xf32>
    %11 = vector.shape_cast %10 : vector<64xf32> to vector<1x64xf32>
    %cst_9 = arith.constant 2.560000e+02 : f32
    %12 = vector.broadcast %cst_9 : f32 to vector<1x64xf32>
    %13 = arith.divf %11, %12 : vector<1x64xf32>
    %14 = vector.broadcast %13 : vector<1x64xf32> to vector<256x64xf32>
    %15 = arith.subf %7, %14 : vector<256x64xf32>
    %c0_10 = arith.constant 0 : index
    %c0_11 = arith.constant 0 : index
    %c0_12 = arith.constant 0 : index
    %16 = vector.load %arg5[%c0_10, %c0_11, %c0_12] : memref<1x1x64xf32, #tpu.memory_space<vmem>>, vector<1x1x64xf32>
    %17 = vector.shape_cast %16 : vector<1x1x64xf32> to vector<1x64xf32>
    %18 = vector.shape_cast %13 : vector<1x64xf32> to vector<1x1x64xf32>
    tpu.vector_store %arg5[%c0_10, %c0_11, %c0_12], %18 {strides = array<i32>} : memref<1x1x64xf32, #tpu.memory_space<vmem>>, vector<1x1x64xf32>,
    %19 = arith.mulf %15, %15 : vector<256x64xf32>
    %cst_13 = arith.constant dense<0.000000e+00> : vector<64xf32>
    %20 = vector.multi_reduction <add>, %19, %cst_13 [0] : vector<256x64xf32> to vector<64xf32>
    %21 = vector.shape_cast %20 : vector<64xf32> to vector<1x64xf32>
    %c0_14 = arith.constant 0 : index
    %c0_15 = arith.constant 0 : index
    %c0_16 = arith.constant 0 : index
    %22 = vector.load %arg6[%c0_14, %c0_15, %c0_16] : memref<1x1x64xf32, #tpu.memory_space<vmem>>, vector<1x1x64xf32>
    %23 = vector.shape_cast %22 : vector<1x1x64xf32> to vector<1x64xf32>
    %24 = vector.shape_cast %21 : vector<1x64xf32> to vector<1x1x64xf32>
    tpu.vector_store %arg6[%c0_14, %c0_15, %c0_16], %24 {strides = array<i32>} : memref<1x1x64xf32, #tpu.memory_space<vmem>>, vector<1x1x64xf32>,
    return
  }
  func.func @transform_0(%arg0: i32) -> (i32, i32) {
    %c0_i32 = arith.constant 0 : i32
    %c0_i32_0 = arith.constant 0 : i32
    return %arg0, %c0_i32 : i32, i32
  }
  func.func @transform_1(%arg0: i32) -> (i32, i32) {
    %c0_i32 = arith.constant 0 : i32
    %c0_i32_0 = arith.constant 0 : i32
    %c0_i32_1 = arith.constant 0 : i32
    return %c0_i32, %c0_i32_0 : i32, i32
  }
  func.func @transform_2(%arg0: i32) -> (i32, i32) {
    %c0_i32 = arith.constant 0 : i32
    %c0_i32_0 = arith.constant 0 : i32
    %c0_i32_1 = arith.constant 0 : i32
    return %c0_i32, %c0_i32_0 : i32, i32
  }
  func.func @transform_3(%arg0: i32) -> (i32, i32) {
    %c0_i32 = arith.constant 0 : i32
    %c0_i32_0 = arith.constant 0 : i32
    return %arg0, %c0_i32 : i32, i32
  }
  func.func @transform_4(%arg0: i32) -> (i32, i32, i32) {
    %c0_i32 = arith.constant 0 : i32
    %c0_i32_0 = arith.constant 0 : i32
    %c0_i32_1 = arith.constant 0 : i32
    return %arg0, %c0_i32, %c0_i32_0 : i32, i32, i32
  }
  func.func @transform_5(%arg0: i32) -> (i32, i32, i32) {
    %c0_i32 = arith.constant 0 : i32
    %c0_i32_0 = arith.constant 0 : i32
    %c0_i32_1 = arith.constant 0 : i32
    return %arg0, %c0_i32, %c0_i32_0 : i32, i32, i32
  }
}

module attributes {stable_mosaic.version = 11 : i64} {
  func.func @_conv_block_kernel(%arg0: i32, %arg1: memref<64x256xbf16, #tpu.memory_space<vmem>>, %arg2: memref<256x128xbf16, #tpu.memory_space<vmem>>, %arg3: memref<1x128xf32, #tpu.memory_space<vmem>>, %arg4: memref<64x128xbf16, #tpu.memory_space<vmem>>, %arg5: memref<1x1x128xf32, #tpu.memory_space<vmem>>, %arg6: memref<1x1x128xf32, #tpu.memory_space<vmem>>) attributes {dimension_semantics = [#tpu.dimension_semantics<parallel>], iteration_bounds = array<i64: 1>, scalar_prefetch = 0 : i64, scratch_operands = 0 : i64, tpu.core_type = #tpu.core_type<tc>, window_params = [{transform_indices = @transform_0, window_bounds = array<i64: 64, 256>}, {pipeline_mode = #tpu.pipeline_mode<synchronous>, transform_indices = @transform_1, window_bounds = array<i64: 256, 128>}, {pipeline_mode = #tpu.pipeline_mode<synchronous>, transform_indices = @transform_2, window_bounds = array<i64: 1, 128>}, {transform_indices = @transform_3, window_bounds = array<i64: 64, 128>}, {transform_indices = @transform_4, window_bounds = array<i64: 1, 1, 128>}, {transform_indices = @transform_5, window_bounds = array<i64: 1, 1, 128>}]} {
    %c0 = arith.constant 0 : index
    %c0_0 = arith.constant 0 : index
    %0 = vector.load %arg1[%c0, %c0_0] : memref<64x256xbf16, #tpu.memory_space<vmem>>, vector<64x256xbf16>
    %c0_1 = arith.constant 0 : index
    %c0_2 = arith.constant 0 : index
    %1 = vector.load %arg2[%c0_1, %c0_2] : memref<256x128xbf16, #tpu.memory_space<vmem>>, vector<256x128xbf16>
    %cst = arith.constant dense<0.000000e+00> : vector<64x128xf32>
    %2 = tpu.matmul %0, %1, %cst {dimension_numbers = #tpu.dot_dimension_numbers<[1], [0], [0], [1], [0, 0, 1, 1], [], []>} : vector<64x256xbf16>, vector<256x128xbf16>, vector<64x128xf32> -> vector<64x128xf32>
    %c0_3 = arith.constant 0 : index
    %c0_4 = arith.constant 0 : index
    %3 = vector.load %arg3[%c0_3, %c0_4] : memref<1x128xf32, #tpu.memory_space<vmem>>, vector<1x128xf32>
    %4 = vector.broadcast %3 : vector<1x128xf32> to vector<64x128xf32>
    %5 = arith.addf %2, %4 : vector<64x128xf32>
    %cst_5 = arith.constant 0.000000e+00 : f32
    %6 = vector.broadcast %cst_5 : f32 to vector<64x128xf32>
    %7 = arith.maximumf %5, %6 : vector<64x128xf32>
    %8 = arith.truncf %7 : vector<64x128xf32> to vector<64x128xbf16>
    %c0_6 = arith.constant 0 : index
    %c0_7 = arith.constant 0 : index
    %9 = vector.load %arg4[%c0_6, %c0_7] : memref<64x128xbf16, #tpu.memory_space<vmem>>, vector<64x128xbf16>
    tpu.vector_store %arg4[%c0_6, %c0_7], %8 {strides = array<i32>} : memref<64x128xbf16, #tpu.memory_space<vmem>>, vector<64x128xbf16>,
    %cst_8 = arith.constant dense<0.000000e+00> : vector<128xf32>
    %10 = vector.multi_reduction <add>, %7, %cst_8 [0] : vector<64x128xf32> to vector<128xf32>
    %11 = vector.shape_cast %10 : vector<128xf32> to vector<1x128xf32>
    %cst_9 = arith.constant 6.400000e+01 : f32
    %12 = vector.broadcast %cst_9 : f32 to vector<1x128xf32>
    %13 = arith.divf %11, %12 : vector<1x128xf32>
    %14 = vector.broadcast %13 : vector<1x128xf32> to vector<64x128xf32>
    %15 = arith.subf %7, %14 : vector<64x128xf32>
    %c0_10 = arith.constant 0 : index
    %c0_11 = arith.constant 0 : index
    %c0_12 = arith.constant 0 : index
    %16 = vector.load %arg5[%c0_10, %c0_11, %c0_12] : memref<1x1x128xf32, #tpu.memory_space<vmem>>, vector<1x1x128xf32>
    %17 = vector.shape_cast %16 : vector<1x1x128xf32> to vector<1x128xf32>
    %18 = vector.shape_cast %13 : vector<1x128xf32> to vector<1x1x128xf32>
    tpu.vector_store %arg5[%c0_10, %c0_11, %c0_12], %18 {strides = array<i32>} : memref<1x1x128xf32, #tpu.memory_space<vmem>>, vector<1x1x128xf32>,
    %19 = arith.mulf %15, %15 : vector<64x128xf32>
    %cst_13 = arith.constant dense<0.000000e+00> : vector<128xf32>
    %20 = vector.multi_reduction <add>, %19, %cst_13 [0] : vector<64x128xf32> to vector<128xf32>
    %21 = vector.shape_cast %20 : vector<128xf32> to vector<1x128xf32>
    %c0_14 = arith.constant 0 : index
    %c0_15 = arith.constant 0 : index
    %c0_16 = arith.constant 0 : index
    %22 = vector.load %arg6[%c0_14, %c0_15, %c0_16] : memref<1x1x128xf32, #tpu.memory_space<vmem>>, vector<1x1x128xf32>
    %23 = vector.shape_cast %22 : vector<1x1x128xf32> to vector<1x128xf32>
    %24 = vector.shape_cast %21 : vector<1x128xf32> to vector<1x1x128xf32>
    tpu.vector_store %arg6[%c0_14, %c0_15, %c0_16], %24 {strides = array<i32>} : memref<1x1x128xf32, #tpu.memory_space<vmem>>, vector<1x1x128xf32>,
    return
  }
  func.func @transform_0(%arg0: i32) -> (i32, i32) {
    %c0_i32 = arith.constant 0 : i32
    %c0_i32_0 = arith.constant 0 : i32
    return %arg0, %c0_i32 : i32, i32
  }
  func.func @transform_1(%arg0: i32) -> (i32, i32) {
    %c0_i32 = arith.constant 0 : i32
    %c0_i32_0 = arith.constant 0 : i32
    %c0_i32_1 = arith.constant 0 : i32
    return %c0_i32, %c0_i32_0 : i32, i32
  }
  func.func @transform_2(%arg0: i32) -> (i32, i32) {
    %c0_i32 = arith.constant 0 : i32
    %c0_i32_0 = arith.constant 0 : i32
    %c0_i32_1 = arith.constant 0 : i32
    return %c0_i32, %c0_i32_0 : i32, i32
  }
  func.func @transform_3(%arg0: i32) -> (i32, i32) {
    %c0_i32 = arith.constant 0 : i32
    %c0_i32_0 = arith.constant 0 : i32
    return %arg0, %c0_i32 : i32, i32
  }
  func.func @transform_4(%arg0: i32) -> (i32, i32, i32) {
    %c0_i32 = arith.constant 0 : i32
    %c0_i32_0 = arith.constant 0 : i32
    %c0_i32_1 = arith.constant 0 : i32
    return %arg0, %c0_i32, %c0_i32_0 : i32, i32, i32
  }
  func.func @transform_5(%arg0: i32) -> (i32, i32, i32) {
    %c0_i32 = arith.constant 0 : i32
    %c0_i32_0 = arith.constant 0 : i32
    %c0_i32_1 = arith.constant 0 : i32
    return %arg0, %c0_i32, %c0_i32_0 : i32, i32, i32
  }
}

module attributes {stable_mosaic.version = 11 : i64} {
  func.func @_conv_block_kernel(%arg0: i32, %arg1: memref<16x512xbf16, #tpu.memory_space<vmem>>, %arg2: memref<512x256xbf16, #tpu.memory_space<vmem>>, %arg3: memref<1x256xf32, #tpu.memory_space<vmem>>, %arg4: memref<16x256xbf16, #tpu.memory_space<vmem>>, %arg5: memref<1x1x256xf32, #tpu.memory_space<vmem>>, %arg6: memref<1x1x256xf32, #tpu.memory_space<vmem>>) attributes {dimension_semantics = [#tpu.dimension_semantics<parallel>], iteration_bounds = array<i64: 1>, scalar_prefetch = 0 : i64, scratch_operands = 0 : i64, tpu.core_type = #tpu.core_type<tc>, window_params = [{transform_indices = @transform_0, window_bounds = array<i64: 16, 512>}, {pipeline_mode = #tpu.pipeline_mode<synchronous>, transform_indices = @transform_1, window_bounds = array<i64: 512, 256>}, {pipeline_mode = #tpu.pipeline_mode<synchronous>, transform_indices = @transform_2, window_bounds = array<i64: 1, 256>}, {transform_indices = @transform_3, window_bounds = array<i64: 16, 256>}, {transform_indices = @transform_4, window_bounds = array<i64: 1, 1, 256>}, {transform_indices = @transform_5, window_bounds = array<i64: 1, 1, 256>}]} {
    %c0 = arith.constant 0 : index
    %c0_0 = arith.constant 0 : index
    %0 = vector.load %arg1[%c0, %c0_0] : memref<16x512xbf16, #tpu.memory_space<vmem>>, vector<16x512xbf16>
    %c0_1 = arith.constant 0 : index
    %c0_2 = arith.constant 0 : index
    %1 = vector.load %arg2[%c0_1, %c0_2] : memref<512x256xbf16, #tpu.memory_space<vmem>>, vector<512x256xbf16>
    %cst = arith.constant dense<0.000000e+00> : vector<16x256xf32>
    %2 = tpu.matmul %0, %1, %cst {dimension_numbers = #tpu.dot_dimension_numbers<[1], [0], [0], [1], [0, 0, 1, 1], [], []>} : vector<16x512xbf16>, vector<512x256xbf16>, vector<16x256xf32> -> vector<16x256xf32>
    %c0_3 = arith.constant 0 : index
    %c0_4 = arith.constant 0 : index
    %3 = vector.load %arg3[%c0_3, %c0_4] : memref<1x256xf32, #tpu.memory_space<vmem>>, vector<1x256xf32>
    %4 = vector.broadcast %3 : vector<1x256xf32> to vector<16x256xf32>
    %5 = arith.addf %2, %4 : vector<16x256xf32>
    %cst_5 = arith.constant 0.000000e+00 : f32
    %6 = vector.broadcast %cst_5 : f32 to vector<16x256xf32>
    %7 = arith.maximumf %5, %6 : vector<16x256xf32>
    %8 = arith.truncf %7 : vector<16x256xf32> to vector<16x256xbf16>
    %c0_6 = arith.constant 0 : index
    %c0_7 = arith.constant 0 : index
    %9 = vector.load %arg4[%c0_6, %c0_7] : memref<16x256xbf16, #tpu.memory_space<vmem>>, vector<16x256xbf16>
    tpu.vector_store %arg4[%c0_6, %c0_7], %8 {strides = array<i32>} : memref<16x256xbf16, #tpu.memory_space<vmem>>, vector<16x256xbf16>,
    %cst_8 = arith.constant dense<0.000000e+00> : vector<256xf32>
    %10 = vector.multi_reduction <add>, %7, %cst_8 [0] : vector<16x256xf32> to vector<256xf32>
    %11 = vector.shape_cast %10 : vector<256xf32> to vector<1x256xf32>
    %cst_9 = arith.constant 1.600000e+01 : f32
    %12 = vector.broadcast %cst_9 : f32 to vector<1x256xf32>
    %13 = arith.divf %11, %12 : vector<1x256xf32>
    %14 = vector.broadcast %13 : vector<1x256xf32> to vector<16x256xf32>
    %15 = arith.subf %7, %14 : vector<16x256xf32>
    %c0_10 = arith.constant 0 : index
    %c0_11 = arith.constant 0 : index
    %c0_12 = arith.constant 0 : index
    %16 = vector.load %arg5[%c0_10, %c0_11, %c0_12] : memref<1x1x256xf32, #tpu.memory_space<vmem>>, vector<1x1x256xf32>
    %17 = vector.shape_cast %16 : vector<1x1x256xf32> to vector<1x256xf32>
    %18 = vector.shape_cast %13 : vector<1x256xf32> to vector<1x1x256xf32>
    tpu.vector_store %arg5[%c0_10, %c0_11, %c0_12], %18 {strides = array<i32>} : memref<1x1x256xf32, #tpu.memory_space<vmem>>, vector<1x1x256xf32>,
    %19 = arith.mulf %15, %15 : vector<16x256xf32>
    %cst_13 = arith.constant dense<0.000000e+00> : vector<256xf32>
    %20 = vector.multi_reduction <add>, %19, %cst_13 [0] : vector<16x256xf32> to vector<256xf32>
    %21 = vector.shape_cast %20 : vector<256xf32> to vector<1x256xf32>
    %c0_14 = arith.constant 0 : index
    %c0_15 = arith.constant 0 : index
    %c0_16 = arith.constant 0 : index
    %22 = vector.load %arg6[%c0_14, %c0_15, %c0_16] : memref<1x1x256xf32, #tpu.memory_space<vmem>>, vector<1x1x256xf32>
    %23 = vector.shape_cast %22 : vector<1x1x256xf32> to vector<1x256xf32>
    %24 = vector.shape_cast %21 : vector<1x256xf32> to vector<1x1x256xf32>
    tpu.vector_store %arg6[%c0_14, %c0_15, %c0_16], %24 {strides = array<i32>} : memref<1x1x256xf32, #tpu.memory_space<vmem>>, vector<1x1x256xf32>,
    return
  }
  func.func @transform_0(%arg0: i32) -> (i32, i32) {
    %c0_i32 = arith.constant 0 : i32
    %c0_i32_0 = arith.constant 0 : i32
    return %arg0, %c0_i32 : i32, i32
  }
  func.func @transform_1(%arg0: i32) -> (i32, i32) {
    %c0_i32 = arith.constant 0 : i32
    %c0_i32_0 = arith.constant 0 : i32
    %c0_i32_1 = arith.constant 0 : i32
    return %c0_i32, %c0_i32_0 : i32, i32
  }
  func.func @transform_2(%arg0: i32) -> (i32, i32) {
    %c0_i32 = arith.constant 0 : i32
    %c0_i32_0 = arith.constant 0 : i32
    %c0_i32_1 = arith.constant 0 : i32
    return %c0_i32, %c0_i32_0 : i32, i32
  }
  func.func @transform_3(%arg0: i32) -> (i32, i32) {
    %c0_i32 = arith.constant 0 : i32
    %c0_i32_0 = arith.constant 0 : i32
    return %arg0, %c0_i32 : i32, i32
  }
  func.func @transform_4(%arg0: i32) -> (i32, i32, i32) {
    %c0_i32 = arith.constant 0 : i32
    %c0_i32_0 = arith.constant 0 : i32
    %c0_i32_1 = arith.constant 0 : i32
    return %arg0, %c0_i32, %c0_i32_0 : i32, i32, i32
  }
  func.func @transform_5(%arg0: i32) -> (i32, i32, i32) {
    %c0_i32 = arith.constant 0 : i32
    %c0_i32_0 = arith.constant 0 : i32
    %c0_i32_1 = arith.constant 0 : i32
    return %arg0, %c0_i32, %c0_i32_0 : i32, i32, i32
  }
}

module attributes {stable_mosaic.version = 11 : i64} {
  func.func @_fc_kernel(%arg0: i32, %arg1: memref<1x4096xbf16, #tpu.memory_space<vmem>>, %arg2: memref<1x4096xf32, #tpu.memory_space<vmem>>, %arg3: memref<1x4096xf32, #tpu.memory_space<vmem>>, %arg4: memref<4096x512xbf16, #tpu.memory_space<vmem>>, %arg5: memref<1x512xf32, #tpu.memory_space<vmem>>, %arg6: memref<1x512xf32, #tpu.memory_space<vmem>>, %arg7: memref<1x512xf32, #tpu.memory_space<vmem>>, %arg8: memref<1x512xf32, #tpu.memory_space<vmem>>) attributes {dimension_semantics = [#tpu.dimension_semantics<parallel>], iteration_bounds = array<i64: 1>, scalar_prefetch = 0 : i64, scratch_operands = 0 : i64, tpu.core_type = #tpu.core_type<tc>, window_params = [{transform_indices = @transform_0, window_bounds = array<i64: 1, 4096>}, {pipeline_mode = #tpu.pipeline_mode<synchronous>, transform_indices = @transform_1, window_bounds = array<i64: 1, 4096>}, {pipeline_mode = #tpu.pipeline_mode<synchronous>, transform_indices = @transform_2, window_bounds = array<i64: 1, 4096>}, {pipeline_mode = #tpu.pipeline_mode<synchronous>, transform_indices = @transform_3, window_bounds = array<i64: 4096, 512>}, {pipeline_mode = #tpu.pipeline_mode<synchronous>, transform_indices = @transform_4, window_bounds = array<i64: 1, 512>}, {pipeline_mode = #tpu.pipeline_mode<synchronous>, transform_indices = @transform_5, window_bounds = array<i64: 1, 512>}, {pipeline_mode = #tpu.pipeline_mode<synchronous>, transform_indices = @transform_6, window_bounds = array<i64: 1, 512>}, {transform_indices = @transform_7, window_bounds = array<i64: 1, 512>}]} {
    %c0 = arith.constant 0 : index
    %c0_0 = arith.constant 0 : index
    %0 = vector.load %arg1[%c0, %c0_0] : memref<1x4096xbf16, #tpu.memory_space<vmem>>, vector<1x4096xbf16>
    %1 = arith.extf %0 : vector<1x4096xbf16> to vector<1x4096xf32>
    %c0_1 = arith.constant 0 : index
    %c0_2 = arith.constant 0 : index
    %2 = vector.load %arg2[%c0_1, %c0_2] : memref<1x4096xf32, #tpu.memory_space<vmem>>, vector<1x4096xf32>
    %3 = arith.mulf %1, %2 : vector<1x4096xf32>
    %c0_3 = arith.constant 0 : index
    %c0_4 = arith.constant 0 : index
    %4 = vector.load %arg3[%c0_3, %c0_4] : memref<1x4096xf32, #tpu.memory_space<vmem>>, vector<1x4096xf32>
    %5 = arith.addf %3, %4 : vector<1x4096xf32>
    %6 = arith.truncf %5 : vector<1x4096xf32> to vector<1x4096xbf16>
    %c0_5 = arith.constant 0 : index
    %c0_6 = arith.constant 0 : index
    %7 = vector.load %arg4[%c0_5, %c0_6] : memref<4096x512xbf16, #tpu.memory_space<vmem>>, vector<4096x512xbf16>
    %cst = arith.constant dense<0.000000e+00> : vector<1x512xf32>
    %8 = tpu.matmul %6, %7, %cst {dimension_numbers = #tpu.dot_dimension_numbers<[1], [0], [0], [1], [0, 0, 1, 1], [], []>} : vector<1x4096xbf16>, vector<4096x512xbf16>, vector<1x512xf32> -> vector<1x512xf32>
    %c0_7 = arith.constant 0 : index
    %c0_8 = arith.constant 0 : index
    %9 = vector.load %arg5[%c0_7, %c0_8] : memref<1x512xf32, #tpu.memory_space<vmem>>, vector<1x512xf32>
    %10 = arith.addf %8, %9 : vector<1x512xf32>
    %cst_9 = arith.constant 0.000000e+00 : f32
    %11 = vector.broadcast %cst_9 : f32 to vector<1x512xf32>
    %12 = arith.cmpf ogt, %10, %11 : vector<1x512xf32>
    %cst_10 = arith.constant 0.00999999977 : f32
    %13 = vector.broadcast %cst_10 : f32 to vector<1x512xf32>
    %14 = arith.mulf %13, %10 : vector<1x512xf32>
    %15 = arith.select %12, %10, %14 : vector<1x512xi1>, vector<1x512xf32>
    %cst_11 = arith.constant dense<0.000000e+00> : vector<1xf32>
    %16 = vector.multi_reduction <add>, %15, %cst_11 [1] : vector<1x512xf32> to vector<1xf32>
    %17 = vector.shape_cast %16 : vector<1xf32> to vector<1x1xf32>
    %cst_12 = arith.constant 5.120000e+02 : f32
    %18 = vector.broadcast %cst_12 : f32 to vector<1x1xf32>
    %19 = arith.divf %17, %18 : vector<1x1xf32>
    %20 = vector.broadcast %19 : vector<1x1xf32> to vector<1x512xf32>
    %21 = arith.subf %15, %20 : vector<1x512xf32>
    %22 = arith.mulf %21, %21 : vector<1x512xf32>
    %cst_13 = arith.constant dense<0.000000e+00> : vector<1xf32>
    %23 = vector.multi_reduction <add>, %22, %cst_13 [1] : vector<1x512xf32> to vector<1xf32>
    %24 = vector.shape_cast %23 : vector<1xf32> to vector<1x1xf32>
    %cst_14 = arith.constant 5.120000e+02 : f32
    %25 = vector.broadcast %cst_14 : f32 to vector<1x1xf32>
    %26 = arith.divf %24, %25 : vector<1x1xf32>
    %cst_15 = arith.constant 9.99999974E-6 : f32
    %27 = vector.broadcast %cst_15 : f32 to vector<1x1xf32>
    %28 = arith.addf %26, %27 : vector<1x1xf32>
    %29 = math.rsqrt %28 : vector<1x1xf32>
    %30 = vector.broadcast %29 : vector<1x1xf32> to vector<1x512xf32>
    %31 = arith.mulf %21, %30 : vector<1x512xf32>
    %c0_16 = arith.constant 0 : index
    %c0_17 = arith.constant 0 : index
    %32 = vector.load %arg6[%c0_16, %c0_17] : memref<1x512xf32, #tpu.memory_space<vmem>>, vector<1x512xf32>
    %33 = arith.mulf %31, %32 : vector<1x512xf32>
    %c0_18 = arith.constant 0 : index
    %c0_19 = arith.constant 0 : index
    %34 = vector.load %arg7[%c0_18, %c0_19] : memref<1x512xf32, #tpu.memory_space<vmem>>, vector<1x512xf32>
    %35 = arith.addf %33, %34 : vector<1x512xf32>
    %c0_20 = arith.constant 0 : index
    %c0_21 = arith.constant 0 : index
    %36 = vector.load %arg8[%c0_20, %c0_21] : memref<1x512xf32, #tpu.memory_space<vmem>>, vector<1x512xf32>
    tpu.vector_store %arg8[%c0_20, %c0_21], %35 {strides = array<i32>} : memref<1x512xf32, #tpu.memory_space<vmem>>, vector<1x512xf32>,
    return
  }
  func.func @transform_0(%arg0: i32) -> (i32, i32) {
    %c0_i32 = arith.constant 0 : i32
    %c0_i32_0 = arith.constant 0 : i32
    return %arg0, %c0_i32 : i32, i32
  }
  func.func @transform_1(%arg0: i32) -> (i32, i32) {
    %c0_i32 = arith.constant 0 : i32
    %c0_i32_0 = arith.constant 0 : i32
    %c0_i32_1 = arith.constant 0 : i32
    return %c0_i32, %c0_i32_0 : i32, i32
  }
  func.func @transform_2(%arg0: i32) -> (i32, i32) {
    %c0_i32 = arith.constant 0 : i32
    %c0_i32_0 = arith.constant 0 : i32
    %c0_i32_1 = arith.constant 0 : i32
    return %c0_i32, %c0_i32_0 : i32, i32
  }
  func.func @transform_3(%arg0: i32) -> (i32, i32) {
    %c0_i32 = arith.constant 0 : i32
    %c0_i32_0 = arith.constant 0 : i32
    %c0_i32_1 = arith.constant 0 : i32
    return %c0_i32, %c0_i32_0 : i32, i32
  }
  func.func @transform_4(%arg0: i32) -> (i32, i32) {
    %c0_i32 = arith.constant 0 : i32
    %c0_i32_0 = arith.constant 0 : i32
    %c0_i32_1 = arith.constant 0 : i32
    return %c0_i32, %c0_i32_0 : i32, i32
  }
  func.func @transform_5(%arg0: i32) -> (i32, i32) {
    %c0_i32 = arith.constant 0 : i32
    %c0_i32_0 = arith.constant 0 : i32
    %c0_i32_1 = arith.constant 0 : i32
    return %c0_i32, %c0_i32_0 : i32, i32
  }
  func.func @transform_6(%arg0: i32) -> (i32, i32) {
    %c0_i32 = arith.constant 0 : i32
    %c0_i32_0 = arith.constant 0 : i32
    %c0_i32_1 = arith.constant 0 : i32
    return %c0_i32, %c0_i32_0 : i32, i32
  }
  func.func @transform_7(%arg0: i32) -> (i32, i32) {
    %c0_i32 = arith.constant 0 : i32
    %c0_i32_0 = arith.constant 0 : i32
    return %arg0, %c0_i32 : i32, i32
  }
}

</mosaic_0001>

<llo_original>
// kernel: encoder_forward.5
$region0: #{encoder_forward.5}
  #allocation0 [shape = 'u32[]', space=smem, size = 0x4, offset = 0x4, fixed_abs, tag = 'smem constant byte address 0x4 - core index']
  #allocation1 [shape = 'u32[144,128]{1,0:T(1,128)}', space=vmem, size = 0x12000, scoped, tag = 'internal scratch']
  %s0 = inlined_call_operand.vmem [shape: bf16[1024,12], index: 0, kind: input, shape index: {}]
  %s1 = inlined_call_operand.vmem [shape: bf16[12,32], index: 1, kind: input, shape index: {}]
  %s2 = inlined_call_operand.vmem [shape: f32[1,32], index: 2, kind: input, shape index: {}]
  %s3 = inlined_call_operand.vmem [shape: bf16[1024,32], index: 3, kind: output, shape index: {0}]
  %s4 = inlined_call_operand.vmem [shape: f32[1,1,32], index: 4, kind: output, shape index: {1}]
  %s5 = inlined_call_operand.vmem [shape: f32[1,1,32], index: 5, kind: output, shape index: {2}]
  %6 = xla_tuple %s3, %s4, %s5
  %s7 = sld [smem:[#allocation0]]
  $region38: #{encoder_forward.5} parent=0
    _
  %s9 = ssub.s32 1, %s7
  %s10 = scalar_select 0, %s9, %s7
  // Predicated region
  $region2: #{encoder_forward.5} parent=0 // pred_check
    _
  $region3: #{encoder_forward.5} parent=0 // pred_check_branch
    %12 = sbr.rel (0) target = $region5
  $region4: #{encoder_forward.5} parent=0 // pred_region
    _
  $region5: #{encoder_forward.5} parent=0 // pred_fallthru
    _
  // Predicated region
  $region6: #{encoder_forward.5} parent=0 // pred_check
    _
  $region7: #{encoder_forward.5} parent=0 // pred_check_branch
    %14 = sbr.rel (0) target = $region9
  $region8: #{encoder_forward.5} parent=0 // pred_region
    _
  $region9: #{encoder_forward.5} parent=0 // pred_fallthru
    _
  // Predicated region
  $region10: #{encoder_forward.5} parent=0 // pred_check
    _
  $region11: #{encoder_forward.5} parent=0 // pred_check_branch
    %16 = sbr.rel (0) target = $region13
  $region12: #{encoder_forward.5} parent=0 // pred_region
    _
  $region13: #{encoder_forward.5} parent=0 // pred_fallthru
    _
  %v18 = vld [vmem:[%s0] sm:$0xf]
  %v19 = vld [vmem:[%s0 + $0x4] sm:$0xf]
  %v20 = vld [vmem:[%s0 + $0x8] sm:$0xf]
  %v21 = vld [vmem:[%s0 + $0xc] sm:$0xf]
  %v22 = vld [vmem:[%s0 + $0x10] sm:$0xf]
  %v23 = vld [vmem:[%s0 + $0x14] sm:$0xf]
  %v24 = vld [vmem:[%s0 + $0x18] sm:$0xf]
  %v25 = vld [vmem:[%s0 + $0x1c] sm:$0xf]
  %v26 = vld [vmem:[%s0 + $0x20] sm:$0xf]
  %v27 = vld [vmem:[%s0 + $0x24] sm:$0xf]
  %v28 = vld [vmem:[%s0 + $0x28] sm:$0xf]
  %v29 = vld [vmem:[%s0 + $0x2c] sm:$0xf]
  %v30 = vld [vmem:[%s0 + $0x30] sm:$0xf]
  %v31 = vld [vmem:[%s0 + $0x34] sm:$0xf]
  %v32 = vld [vmem:[%s0 + $0x38] sm:$0xf]
  %v33 = vld [vmem:[%s0 + $0x3c] sm:$0xf]
  %v34 = vld [vmem:[%s0 + $0x40] sm:$0xf]
  %v35 = vld [vmem:[%s0 + $0x44] sm:$0xf]
  %v36 = vld [vmem:[%s0 + $0x48] sm:$0xf]
  %v37 = vld [vmem:[%s0 + $0x4c] sm:$0xf]
  %v38 = vld [vmem:[%s0 + $0x50] sm:$0xf]
  %v39 = vld [vmem:[%s0 + $0x54] sm:$0xf]
  %v40 = vld [vmem:[%s0 + $0x58] sm:$0xf]
  %v41 = vld [vmem:[%s0 + $0x5c] sm:$0xf]
  %v42 = vld [vmem:[%s0 + $0x60] sm:$0xf]
  %v43 = vld [vmem:[%s0 + $0x64] sm:$0xf]
  %v44 = vld [vmem:[%s0 + $0x68] sm:$0xf]
  %v45 = vld [vmem:[%s0 + $0x6c] sm:$0xf]
  %v46 = vld [vmem:[%s0 + $0x70] sm:$0xf]
  %v47 = vld [vmem:[%s0 + $0x74] sm:$0xf]
  %v48 = vld [vmem:[%s0 + $0x78] sm:$0xf]
  %v49 = vld [vmem:[%s0 + $0x7c] sm:$0xf]
  %v50 = vld [vmem:[%s0 + $0x80] sm:$0xf]
  %v51 = vld [vmem:[%s0 + $0x84] sm:$0xf]
  %v52 = vld [vmem:[%s0 + $0x88] sm:$0xf]
  %v53 = vld [vmem:[%s0 + $0x8c] sm:$0xf]
  %v54 = vld [vmem:[%s0 + $0x90] sm:$0xf]
  %v55 = vld [vmem:[%s0 + $0x94] sm:$0xf]
  %v56 = vld [vmem:[%s0 + $0x98] sm:$0xf]
  %v57 = vld [vmem:[%s0 + $0x9c] sm:$0xf]
  %v58 = vld [vmem:[%s0 + $0xa0] sm:$0xf]
  %v59 = vld [vmem:[%s0 + $0xa4] sm:$0xf]
  %v60 = vld [vmem:[%s0 + $0xa8] sm:$0xf]
  %v61 = vld [vmem:[%s0 + $0xac] sm:$0xf]
  %v62 = vld [vmem:[%s0 + $0xb0] sm:$0xf]
  %v63 = vld [vmem:[%s0 + $0xb4] sm:$0xf]
  %v64 = vld [vmem:[%s0 + $0xb8] sm:$0xf]
  %v65 = vld [vmem:[%s0 + $0xbc] sm:$0xf]
  %v66 = vld [vmem:[%s0 + $0xc0] sm:$0xf]
  %v67 = vld [vmem:[%s0 + $0xc4] sm:$0xf]
  %v68 = vld [vmem:[%s0 + $0xc8] sm:$0xf]
  %v69 = vld [vmem:[%s0 + $0xcc] sm:$0xf]
  %v70 = vld [vmem:[%s0 + $0xd0] sm:$0xf]
  %v71 = vld [vmem:[%s0 + $0xd4] sm:$0xf]
  %v72 = vld [vmem:[%s0 + $0xd8] sm:$0xf]
  %v73 = vld [vmem:[%s0 + $0xdc] sm:$0xf]
  %v74 = vld [vmem:[%s0 + $0xe0] sm:$0xf]
  %v75 = vld [vmem:[%s0 + $0xe4] sm:$0xf]
  %v76 = vld [vmem:[%s0 + $0xe8] sm:$0xf]
  %v77 = vld [vmem:[%s0 + $0xec] sm:$0xf]
  %v78 = vld [vmem:[%s0 + $0xf0] sm:$0xf]
  %v79 = vld [vmem:[%s0 + $0xf4] sm:$0xf]
  %v80 = vld [vmem:[%s0 + $0xf8] sm:$0xf]
  %v81 = vld [vmem:[%s0 + $0xfc] sm:$0xf]
  %v82 = vld [vmem:[%s0 + $0x100] sm:$0xf]
  %v83 = vld [vmem:[%s0 + $0x104] sm:$0xf]
  %v84 = vld [vmem:[%s0 + $0x108] sm:$0xf]
  %v85 = vld [vmem:[%s0 + $0x10c] sm:$0xf]
  %v86 = vld [vmem:[%s0 + $0x110] sm:$0xf]
  %v87 = vld [vmem:[%s0 + $0x114] sm:$0xf]
  %v88 = vld [vmem:[%s0 + $0x118] sm:$0xf]
  %v89 = vld [vmem:[%s0 + $0x11c] sm:$0xf]
  %v90 = vld [vmem:[%s0 + $0x120] sm:$0xf]
  %v91 = vld [vmem:[%s0 + $0x124] sm:$0xf]
  %v92 = vld [vmem:[%s0 + $0x128] sm:$0xf]
  %v93 = vld [vmem:[%s0 + $0x12c] sm:$0xf]
  %v94 = vld [vmem:[%s0 + $0x130] sm:$0xf]
  %v95 = vld [vmem:[%s0 + $0x134] sm:$0xf]
  %v96 = vld [vmem:[%s0 + $0x138] sm:$0xf]
  %v97 = vld [vmem:[%s0 + $0x13c] sm:$0xf]
  %v98 = vld [vmem:[%s0 + $0x140] sm:$0xf]
  %v99 = vld [vmem:[%s0 + $0x144] sm:$0xf]
  %v100 = vld [vmem:[%s0 + $0x148] sm:$0xf]
  %v101 = vld [vmem:[%s0 + $0x14c] sm:$0xf]
  %v102 = vld [vmem:[%s0 + $0x150] sm:$0xf]
  %v103 = vld [vmem:[%s0 + $0x154] sm:$0xf]
  %v104 = vld [vmem:[%s0 + $0x158] sm:$0xf]
  %v105 = vld [vmem:[%s0 + $0x15c] sm:$0xf]
  %v106 = vld [vmem:[%s0 + $0x160] sm:$0xf]
  %v107 = vld [vmem:[%s0 + $0x164] sm:$0xf]
  %v108 = vld [vmem:[%s0 + $0x168] sm:$0xf]
  %v109 = vld [vmem:[%s0 + $0x16c] sm:$0xf]
  %v110 = vld [vmem:[%s0 + $0x170] sm:$0xf]
  %v111 = vld [vmem:[%s0 + $0x174] sm:$0xf]
  %v112 = vld [vmem:[%s0 + $0x178] sm:$0xf]
  %v113 = vld [vmem:[%s0 + $0x17c] sm:$0xf]
  %v114 = vld [vmem:[%s0 + $0x180] sm:$0xf]
  %v115 = vld [vmem:[%s0 + $0x184] sm:$0xf]
  %v116 = vld [vmem:[%s0 + $0x188] sm:$0xf]
  %v117 = vld [vmem:[%s0 + $0x18c] sm:$0xf]
  %v118 = vld [vmem:[%s0 + $0x190] sm:$0xf]
  %v119 = vld [vmem:[%s0 + $0x194] sm:$0xf]
  %v120 = vld [vmem:[%s0 + $0x198] sm:$0xf]
  %v121 = vld [vmem:[%s0 + $0x19c] sm:$0xf]
  %v122 = vld [vmem:[%s0 + $0x1a0] sm:$0xf]
  %v123 = vld [vmem:[%s0 + $0x1a4] sm:$0xf]
  %v124 = vld [vmem:[%s0 + $0x1a8] sm:$0xf]
  %v125 = vld [vmem:[%s0 + $0x1ac] sm:$0xf]
  %v126 = vld [vmem:[%s0 + $0x1b0] sm:$0xf]
  %v127 = vld [vmem:[%s0 + $0x1b4] sm:$0xf]
  %v128 = vld [vmem:[%s0 + $0x1b8] sm:$0xf]
  %v129 = vld [vmem:[%s0 + $0x1bc] sm:$0xf]
  %v130 = vld [vmem:[%s0 + $0x1c0] sm:$0xf]
  %v131 = vld [vmem:[%s0 + $0x1c4] sm:$0xf]
  %v132 = vld [vmem:[%s0 + $0x1c8] sm:$0xf]
  %v133 = vld [vmem:[%s0 + $0x1cc] sm:$0xf]
  %v134 = vld [vmem:[%s0 + $0x1d0] sm:$0xf]
  %v135 = vld [vmem:[%s0 + $0x1d4] sm:$0xf]
  %v136 = vld [vmem:[%s0 + $0x1d8] sm:$0xf]
  %v137 = vld [vmem:[%s0 + $0x1dc] sm:$0xf]
  %v138 = vld [vmem:[%s0 + $0x1e0] sm:$0xf]
  %v139 = vld [vmem:[%s0 + $0x1e4] sm:$0xf]
  %v140 = vld [vmem:[%s0 + $0x1e8] sm:$0xf]
  %v141 = vld [vmem:[%s0 + $0x1ec] sm:$0xf]
  %v142 = vld [vmem:[%s0 + $0x1f0] sm:$0xf]
  %v143 = vld [vmem:[%s0 + $0x1f4] sm:$0xf]
  %v144 = vld [vmem:[%s0 + $0x1f8] sm:$0xf]
  %v145 = vld [vmem:[%s0 + $0x1fc] sm:$0xf]
  %v146 = vld [vmem:[%s1] sm:$0xf]
  %v147 = vld [vmem:[%s1 + $0x4] sm:$0x3]
  %v148 = vld [vmem:[%s2] sm:$0x1]
  %v150 = vlaneseq
  %v151 = vshrl.u32 %v150, 7
  %v152 = vsub.s32 0, %v151
  %v153 = vrot.slane %v148, %v152
  %v283 = vunpack.c.l.b16 %v18
  %v284 = vunpack.c.l.b16 %v19
  %v285 = vunpack.c.l.b16 %v20
  %v286 = vunpack.c.l.b16 %v21
  %v287 = vunpack.c.l.b16 %v22
  %v288 = vunpack.c.l.b16 %v23
  %v289 = vunpack.c.l.b16 %v24
  %v290 = vunpack.c.l.b16 %v25
  %v291 = vunpack.c.l.b16 %v26
  %v292 = vunpack.c.l.b16 %v27
  %v293 = vunpack.c.l.b16 %v28
  %v294 = vunpack.c.l.b16 %v29
  %v295 = vunpack.c.l.b16 %v30
  %v296 = vunpack.c.l.b16 %v31
  %v297 = vunpack.c.l.b16 %v32
  %v298 = vunpack.c.l.b16 %v33
  %v299 = vunpack.c.l.b16 %v34
  %v300 = vunpack.c.l.b16 %v35
  %v301 = vunpack.c.l.b16 %v36
  %v302 = vunpack.c.l.b16 %v37
  %v303 = vunpack.c.l.b16 %v38
  %v304 = vunpack.c.l.b16 %v39
  %v305 = vunpack.c.l.b16 %v40
  %v306 = vunpack.c.l.b16 %v41
  %v307 = vunpack.c.l.b16 %v42
  %v308 = vunpack.c.l.b16 %v43
  %v309 = vunpack.c.l.b16 %v44
  %v310 = vunpack.c.l.b16 %v45
  %v311 = vunpack.c.l.b16 %v46
  %v312 = vunpack.c.l.b16 %v47
  %v313 = vunpack.c.l.b16 %v48
  %v314 = vunpack.c.l.b16 %v49
  %v315 = vunpack.c.l.b16 %v50
  %v316 = vunpack.c.l.b16 %v51
  %v317 = vunpack.c.l.b16 %v52
  %v318 = vunpack.c.l.b16 %v53
  %v319 = vunpack.c.l.b16 %v54
  %v320 = vunpack.c.l.b16 %v55
  %v321 = vunpack.c.l.b16 %v56
  %v322 = vunpack.c.l.b16 %v57
  %v323 = vunpack.c.l.b16 %v58
  %v324 = vunpack.c.l.b16 %v59
  %v325 = vunpack.c.l.b16 %v60
  %v326 = vunpack.c.l.b16 %v61
  %v327 = vunpack.c.l.b16 %v62
  %v328 = vunpack.c.l.b16 %v63
  %v329 = vunpack.c.l.b16 %v64
  %v330 = vunpack.c.l.b16 %v65
  %v331 = vunpack.c.l.b16 %v66
  %v332 = vunpack.c.l.b16 %v67
  %v333 = vunpack.c.l.b16 %v68
  %v334 = vunpack.c.l.b16 %v69
  %v335 = vunpack.c.l.b16 %v70
  %v336 = vunpack.c.l.b16 %v71
  %v337 = vunpack.c.l.b16 %v72
  %v338 = vunpack.c.l.b16 %v73
  %v339 = vunpack.c.l.b16 %v74
  %v340 = vunpack.c.l.b16 %v75
  %v341 = vunpack.c.l.b16 %v76
  %v342 = vunpack.c.l.b16 %v77
  %v343 = vunpack.c.l.b16 %v78
  %v344 = vunpack.c.l.b16 %v79
  %v345 = vunpack.c.l.b16 %v80
  %v346 = vunpack.c.l.b16 %v81
  %v347 = vunpack.c.l.b16 %v82
  %v348 = vunpack.c.l.b16 %v83
  %v349 = vunpack.c.l.b16 %v84
  %v350 = vunpack.c.l.b16 %v85
  %v351 = vunpack.c.l.b16 %v86
  %v352 = vunpack.c.l.b16 %v87
  %v353 = vunpack.c.l.b16 %v88
  %v354 = vunpack.c.l.b16 %v89
  %v355 = vunpack.c.l.b16 %v90
  %v356 = vunpack.c.l.b16 %v91
  %v357 = vunpack.c.l.b16 %v92
  %v358 = vunpack.c.l.b16 %v93
  %v359 = vunpack.c.l.b16 %v94
  %v360 = vunpack.c.l.b16 %v95
  %v361 = vunpack.c.l.b16 %v96
  %v362 = vunpack.c.l.b16 %v97
  %v363 = vunpack.c.l.b16 %v98
  %v364 = vunpack.c.l.b16 %v99
  %v365 = vunpack.c.l.b16 %v100
  %v366 = vunpack.c.l.b16 %v101
  %v367 = vunpack.c.l.b16 %v102
  %v368 = vunpack.c.l.b16 %v103
  %v369 = vunpack.c.l.b16 %v104
  %v370 = vunpack.c.l.b16 %v105
  %v371 = vunpack.c.l.b16 %v106
  %v372 = vunpack.c.l.b16 %v107
  %v373 = vunpack.c.l.b16 %v108
  %v374 = vunpack.c.l.b16 %v109
  %v375 = vunpack.c.l.b16 %v110
  %v376 = vunpack.c.l.b16 %v111
  %v377 = vunpack.c.l.b16 %v112
  %v378 = vunpack.c.l.b16 %v113
  %v379 = vunpack.c.l.b16 %v114
  %v380 = vunpack.c.l.b16 %v115
  %v381 = vunpack.c.l.b16 %v116
  %v382 = vunpack.c.l.b16 %v117
  %v383 = vunpack.c.l.b16 %v118
  %v384 = vunpack.c.l.b16 %v119
  %v385 = vunpack.c.l.b16 %v120
  %v386 = vunpack.c.l.b16 %v121
  %v387 = vunpack.c.l.b16 %v122
  %v388 = vunpack.c.l.b16 %v123
  %v389 = vunpack.c.l.b16 %v124
  %v390 = vunpack.c.l.b16 %v125
  %v391 = vunpack.c.l.b16 %v126
  %v392 = vunpack.c.l.b16 %v127
  %v393 = vunpack.c.l.b16 %v128
  %v394 = vunpack.c.l.b16 %v129
  %v395 = vunpack.c.l.b16 %v130
  %v396 = vunpack.c.l.b16 %v131
  %v397 = vunpack.c.l.b16 %v132
  %v398 = vunpack.c.l.b16 %v133
  %v399 = vunpack.c.l.b16 %v134
  %v400 = vunpack.c.l.b16 %v135
  %v401 = vunpack.c.l.b16 %v136
  %v402 = vunpack.c.l.b16 %v137
  %v403 = vunpack.c.l.b16 %v138
  %v404 = vunpack.c.l.b16 %v139
  %v405 = vunpack.c.l.b16 %v140
  %v406 = vunpack.c.l.b16 %v141
  %v407 = vunpack.c.l.b16 %v142
  %v408 = vunpack.c.l.b16 %v143
  %v409 = vunpack.c.l.b16 %v144
  %v410 = vunpack.c.l.b16 %v145
  %v411 = vpack.c.b16 %v284, %v283
  %v412 = vpack.c.b16 %v286, %v285
  %v413 = vpack.c.b16 %v288, %v287
  %v414 = vpack.c.b16 %v290, %v289
  %v415 = vpack.c.b16 %v292, %v291
  %v416 = vpack.c.b16 %v294, %v293
  %v417 = vpack.c.b16 %v296, %v295
  %v418 = vpack.c.b16 %v298, %v297
  %v419 = vpack.c.b16 %v300, %v299
  %v420 = vpack.c.b16 %v302, %v301
  %v421 = vpack.c.b16 %v304, %v303
  %v422 = vpack.c.b16 %v306, %v305
  %v423 = vpack.c.b16 %v308, %v307
  %v424 = vpack.c.b16 %v310, %v309
  %v425 = vpack.c.b16 %v312, %v311
  %v426 = vpack.c.b16 %v314, %v313
  %v427 = vpack.c.b16 %v316, %v315
  %v428 = vpack.c.b16 %v318, %v317
  %v429 = vpack.c.b16 %v320, %v319
  %v430 = vpack.c.b16 %v322, %v321
  %v431 = vpack.c.b16 %v324, %v323
  %v432 = vpack.c.b16 %v326, %v325
  %v433 = vpack.c.b16 %v328, %v327
  %v434 = vpack.c.b16 %v330, %v329
  %v435 = vpack.c.b16 %v332, %v331
  %v436 = vpack.c.b16 %v334, %v333
  %v437 = vpack.c.b16 %v336, %v335
  %v438 = vpack.c.b16 %v338, %v337
  %v439 = vpack.c.b16 %v340, %v339
  %v440 = vpack.c.b16 %v342, %v341
  %v441 = vpack.c.b16 %v344, %v343
  %v442 = vpack.c.b16 %v346, %v345
  %v443 = vpack.c.b16 %v348, %v347
  %v444 = vpack.c.b16 %v350, %v349
  %v445 = vpack.c.b16 %v352, %v351
  %v446 = vpack.c.b16 %v354, %v353
  %v447 = vpack.c.b16 %v356, %v355
  %v448 = vpack.c.b16 %v358, %v357
  %v449 = vpack.c.b16 %v360, %v359
  %v450 = vpack.c.b16 %v362, %v361
  %v451 = vpack.c.b16 %v364, %v363
  %v452 = vpack.c.b16 %v366, %v365
  %v453 = vpack.c.b16 %v368, %v367
  %v454 = vpack.c.b16 %v370, %v369
  %v455 = vpack.c.b16 %v372, %v371
  %v456 = vpack.c.b16 %v374, %v373
  %v457 = vpack.c.b16 %v376, %v375
  %v458 = vpack.c.b16 %v378, %v377
  %v459 = vpack.c.b16 %v380, %v379
  %v460 = vpack.c.b16 %v382, %v381
  %v461 = vpack.c.b16 %v384, %v383
  %v462 = vpack.c.b16 %v386, %v385
  %v463 = vpack.c.b16 %v388, %v387
  %v464 = vpack.c.b16 %v390, %v389
  %v465 = vpack.c.b16 %v392, %v391
  %v466 = vpack.c.b16 %v394, %v393
  %v467 = vpack.c.b16 %v396, %v395
  %v468 = vpack.c.b16 %v398, %v397
  %v469 = vpack.c.b16 %v400, %v399
  %v470 = vpack.c.b16 %v402, %v401
  %v471 = vpack.c.b16 %v404, %v403
  %v472 = vpack.c.b16 %v406, %v405
  %v473 = vpack.c.b16 %v408, %v407
  %v474 = vpack.c.b16 %v410, %v409
  %v477 = vunpack.c.l.b16 %v146
  %v478 = vunpack.c.l.b16 %v147
  %v479 = vpack.c.b16 %v478, %v477
  %vm480 = vcmask 97280
  %v482 = vsel %vm480, %v411, 0
  %v485 = vsel %vm480, %v412, 0
  %v488 = vsel %vm480, %v413, 0
  %v491 = vsel %vm480, %v414, 0
  %v494 = vsel %vm480, %v415, 0
  %v497 = vsel %vm480, %v416, 0
  %v500 = vsel %vm480, %v417, 0
  %v503 = vsel %vm480, %v418, 0
  %v506 = vsel %vm480, %v419, 0
  %v509 = vsel %vm480, %v420, 0
  %v512 = vsel %vm480, %v421, 0
  %v515 = vsel %vm480, %v422, 0
  %v518 = vsel %vm480, %v423, 0
  %v521 = vsel %vm480, %v424, 0
  %v524 = vsel %vm480, %v425, 0
  %v527 = vsel %vm480, %v426, 0
  %v530 = vsel %vm480, %v427, 0
  %v533 = vsel %vm480, %v428, 0
  %v536 = vsel %vm480, %v429, 0
  %v539 = vsel %vm480, %v430, 0
  %v542 = vsel %vm480, %v431, 0
  %v545 = vsel %vm480, %v432, 0
  %v548 = vsel %vm480, %v433, 0
  %v551 = vsel %vm480, %v434, 0
  %v554 = vsel %vm480, %v435, 0
  %v557 = vsel %vm480, %v436, 0
  %v560 = vsel %vm480, %v437, 0
  %v563 = vsel %vm480, %v438, 0
  %v566 = vsel %vm480, %v439, 0
  %v569 = vsel %vm480, %v440, 0
  %v572 = vsel %vm480, %v441, 0
  %v575 = vsel %vm480, %v442, 0
  %v578 = vsel %vm480, %v443, 0
  %v581 = vsel %vm480, %v444, 0
  %v584 = vsel %vm480, %v445, 0
  %v587 = vsel %vm480, %v446, 0
  %v590 = vsel %vm480, %v447, 0
  %v593 = vsel %vm480, %v448, 0
  %v596 = vsel %vm480, %v449, 0
  %v599 = vsel %vm480, %v450, 0
  %v602 = vsel %vm480, %v451, 0
  %v605 = vsel %vm480, %v452, 0
  %v608 = vsel %vm480, %v453, 0
  %v611 = vsel %vm480, %v454, 0
  %v614 = vsel %vm480, %v455, 0
  %v617 = vsel %vm480, %v456, 0
  %v620 = vsel %vm480, %v457, 0
  %v623 = vsel %vm480, %v458, 0
  %v626 = vsel %vm480, %v459, 0
  %v629 = vsel %vm480, %v460, 0
  %v632 = vsel %vm480, %v461, 0
  %v635 = vsel %vm480, %v462, 0
  %v638 = vsel %vm480, %v463, 0
  %v641 = vsel %vm480, %v464, 0
  %v644 = vsel %vm480, %v465, 0
  %v647 = vsel %vm480, %v466, 0
  %v650 = vsel %vm480, %v467, 0
  %v653 = vsel %vm480, %v468, 0
  %v656 = vsel %vm480, %v469, 0
  %v659 = vsel %vm480, %v470, 0
  %v662 = vsel %vm480, %v471, 0
  %v665 = vsel %vm480, %v472, 0
  %v668 = vsel %vm480, %v473, 0
  %v671 = vsel %vm480, %v474, 0
  %vm673 = vcmask 1045504
  %v675 = vsel %vm673, %v479, 0
  %677 = vmatprep.subr.bf16.mxu0 0
  %678 = vmatpush1.bf16.msra.mxu0 %v675
  %679 = vmatprep.subr.bf16.mxu0 0
  %680 = vmatpush1.bf16.msra.mxu0 0
  %681 = vmatprep.subr.bf16.mxu0 0
  %682 = vmatpush1.bf16.msra.mxu0 0
  %683 = vmatprep.subr.bf16.mxu0 0
  %684 = vmatpush1.bf16.msra.mxu0 0
  %685 = vmatprep.subr.bf16.mxu0 0
  %686 = vmatpush1.bf16.msra.mxu0 0
  %687 = vmatprep.subr.bf16.mxu0 0
  %688 = vmatpush1.bf16.msra.mxu0 0
  %689 = vmatprep.subr.bf16.mxu0 0
  %690 = vmatpush1.bf16.msra.mxu0 0
  %691 = vmatprep.subr.bf16.mxu0 0
  %692 = vmatpush1.bf16.msra.mxu0 0
  %693 = vmatprep.subr.bf16.mxu0 0
  %694 = vmatpush1.bf16.msra.mxu0 0
  %695 = vmatprep.subr.bf16.mxu0 0
  %696 = vmatpush1.bf16.msra.mxu0 0
  %697 = vmatprep.subr.bf16.mxu0 0
  %698 = vmatpush1.bf16.msra.mxu0 0
  %699 = vmatprep.subr.bf16.mxu0 0
  %700 = vmatpush1.bf16.msra.mxu0 0
  %701 = vmatprep.subr.bf16.mxu0 0
  %702 = vmatpush1.bf16.msra.mxu0 0
  %703 = vmatprep.subr.bf16.mxu0 0
  %704 = vmatpush1.bf16.msra.mxu0 0
  %705 = vmatprep.subr.bf16.mxu0 0
  %706 = vmatpush1.bf16.msra.mxu0 0
  %707 = vmatprep.subr.bf16.mxu0 0
  %708 = vmatpush1.bf16.msra.mxu0 0
  %709 = vmatprep.mubr.bf16.mxu0 0
  %710 = vmatmul.mubr.bf16.gmra.mrb[0].mxu0 %v482
  %v711 = vpop.f32.mrb[0].mxu0
  %v712 = vadd.f32 %v153, %v711
  %v713 = vpop.f32.mrb[0].mxu0
  %v714 = vpop.f32.mrb[0].mxu0
  %v715 = vadd.f32 %v153, %v714
  %v716 = vpop.f32.mrb[0].mxu0
  %717 = vmatprep.mubr.bf16.mxu0 0
  %718 = vmatmul.mubr.bf16.gmra.mrb[0].mxu0 %v485
  %v719 = vpop.f32.mrb[0].mxu0
  %v720 = vadd.f32 %v153, %v719
  %v721 = vpop.f32.mrb[0].mxu0
  %v722 = vpop.f32.mrb[0].mxu0
  %v723 = vadd.f32 %v153, %v722
  %v724 = vpop.f32.mrb[0].mxu0
  %725 = vmatprep.mubr.bf16.mxu0 0
  %726 = vmatmul.mubr.bf16.gmra.mrb[0].mxu0 %v488
  %v727 = vpop.f32.mrb[0].mxu0
  %v728 = vadd.f32 %v153, %v727
  %v729 = vpop.f32.mrb[0].mxu0
  %v730 = vpop.f32.mrb[0].mxu0
  %v731 = vadd.f32 %v153, %v730
  %v732 = vpop.f32.mrb[0].mxu0
  %733 = vmatprep.mubr.bf16.mxu0 0
  %734 = vmatmul.mubr.bf16.gmra.mrb[0].mxu0 %v491
  %v735 = vpop.f32.mrb[0].mxu0
  %v736 = vadd.f32 %v153, %v735
  %v737 = vpop.f32.mrb[0].mxu0
  %v738 = vpop.f32.mrb[0].mxu0
  %v739 = vadd.f32 %v153, %v738
  %v740 = vpop.f32.mrb[0].mxu0
  %741 = vmatprep.mubr.bf16.mxu0 0
  %742 = vmatmul.mubr.bf16.gmra.mrb[0].mxu0 %v494
  %v743 = vpop.f32.mrb[0].mxu0
  %v744 = vadd.f32 %v153, %v743
  %v745 = vpop.f32.mrb[0].mxu0
  %v746 = vpop.f32.mrb[0].mxu0
  %v747 = vadd.f32 %v153, %v746
  %v748 = vpop.f32.mrb[0].mxu0
  %749 = vmatprep.mubr.bf16.mxu0 0
  %750 = vmatmul.mubr.bf16.gmra.mrb[0].mxu0 %v497
  %v751 = vpop.f32.mrb[0].mxu0
  %v752 = vadd.f32 %v153, %v751
  %v753 = vpop.f32.mrb[0].mxu0
  %v754 = vpop.f32.mrb[0].mxu0
  %v755 = vadd.f32 %v153, %v754
  %v756 = vpop.f32.mrb[0].mxu0
  %757 = vmatprep.mubr.bf16.mxu0 0
  %758 = vmatmul.mubr.bf16.gmra.mrb[0].mxu0 %v500
  %v759 = vpop.f32.mrb[0].mxu0
  %v760 = vadd.f32 %v153, %v759
  %v761 = vpop.f32.mrb[0].mxu0
  %v762 = vpop.f32.mrb[0].mxu0
  %v763 = vadd.f32 %v153, %v762
  %v764 = vpop.f32.mrb[0].mxu0
  %765 = vmatprep.mubr.bf16.mxu0 0
  %766 = vmatmul.mubr.bf16.gmra.mrb[0].mxu0 %v503
  %v767 = vpop.f32.mrb[0].mxu0
  %v768 = vadd.f32 %v153, %v767
  %v769 = vpop.f32.mrb[0].mxu0
  %v770 = vpop.f32.mrb[0].mxu0
  %v771 = vadd.f32 %v153, %v770
  %v772 = vpop.f32.mrb[0].mxu0
  %773 = vmatprep.mubr.bf16.mxu0 0
  %774 = vmatmul.mubr.bf16.gmra.mrb[0].mxu0 %v506
  %v775 = vpop.f32.mrb[0].mxu0
  %v776 = vadd.f32 %v153, %v775
  %v777 = vpop.f32.mrb[0].mxu0
  %v778 = vpop.f32.mrb[0].mxu0
  %v779 = vadd.f32 %v153, %v778
  %v780 = vpop.f32.mrb[0].mxu0
  %781 = vmatprep.mubr.bf16.mxu0 0
  %782 = vmatmul.mubr.bf16.gmra.mrb[0].mxu0 %v509
  %v783 = vpop.f32.mrb[0].mxu0
  %v784 = vadd.f32 %v153, %v783
  %v785 = vpop.f32.mrb[0].mxu0
  %v786 = vpop.f32.mrb[0].mxu0
  %v787 = vadd.f32 %v153, %v786
  %v788 = vpop.f32.mrb[0].mxu0
  %789 = vmatprep.mubr.bf16.mxu0 0
  %790 = vmatmul.mubr.bf16.gmra.mrb[0].mxu0 %v512
  %v791 = vpop.f32.mrb[0].mxu0
  %v792 = vadd.f32 %v153, %v791
  %v793 = vpop.f32.mrb[0].mxu0
  %v794 = vpop.f32.mrb[0].mxu0
  %v795 = vadd.f32 %v153, %v794
  %v796 = vpop.f32.mrb[0].mxu0
  %797 = vmatprep.mubr.bf16.mxu0 0
  %798 = vmatmul.mubr.bf16.gmra.mrb[0].mxu0 %v515
  %v799 = vpop.f32.mrb[0].mxu0
  %v800 = vadd.f32 %v153, %v799
  %v801 = vpop.f32.mrb[0].mxu0
  %v802 = vpop.f32.mrb[0].mxu0
  %v803 = vadd.f32 %v153, %v802
  %v804 = vpop.f32.mrb[0].mxu0
  %805 = vmatprep.mubr.bf16.mxu0 0
  %806 = vmatmul.mubr.bf16.gmra.mrb[0].mxu0 %v518
  %v807 = vpop.f32.mrb[0].mxu0
  %v808 = vadd.f32 %v153, %v807
  %v809 = vpop.f32.mrb[0].mxu0
  %v810 = vpop.f32.mrb[0].mxu0
  %v811 = vadd.f32 %v153, %v810
  %v812 = vpop.f32.mrb[0].mxu0
  %813 = vmatprep.mubr.bf16.mxu0 0
  %814 = vmatmul.mubr.bf16.gmra.mrb[0].mxu0 %v521
  %v815 = vpop.f32.mrb[0].mxu0
  %v816 = vadd.f32 %v153, %v815
  %v817 = vpop.f32.mrb[0].mxu0
  %v818 = vpop.f32.mrb[0].mxu0
  %v819 = vadd.f32 %v153, %v818
  %v820 = vpop.f32.mrb[0].mxu0
  %821 = vmatprep.mubr.bf16.mxu0 0
  %822 = vmatmul.mubr.bf16.gmra.mrb[0].mxu0 %v524
  %v823 = vpop.f32.mrb[0].mxu0
  %v824 = vadd.f32 %v153, %v823
  %v825 = vpop.f32.mrb[0].mxu0
  %v826 = vpop.f32.mrb[0].mxu0
  %v827 = vadd.f32 %v153, %v826
  %v828 = vpop.f32.mrb[0].mxu0
  %829 = vmatprep.mubr.bf16.mxu0 0
  %830 = vmatmul.mubr.bf16.gmra.mrb[0].mxu0 %v527
  %v831 = vpop.f32.mrb[0].mxu0
  %v832 = vadd.f32 %v153, %v831
  %v833 = vpop.f32.mrb[0].mxu0
  %v834 = vpop.f32.mrb[0].mxu0
  %v835 = vadd.f32 %v153, %v834
  %v836 = vpop.f32.mrb[0].mxu0
  %837 = vmatprep.mubr.bf16.mxu0 0
  %838 = vmatmul.mubr.bf16.gmra.mrb[0].mxu0 %v530
  %v839 = vpop.f32.mrb[0].mxu0
  %v840 = vadd.f32 %v153, %v839
  %v841 = vpop.f32.mrb[0].mxu0
  %v842 = vpop.f32.mrb[0].mxu0
  %v843 = vadd.f32 %v153, %v842
  %v844 = vpop.f32.mrb[0].mxu0
  %845 = vmatprep.mubr.bf16.mxu0 0
  %846 = vmatmul.mubr.bf16.gmra.mrb[0].mxu0 %v533
  %v847 = vpop.f32.mrb[0].mxu0
  %v848 = vadd.f32 %v153, %v847
  %v849 = vpop.f32.mrb[0].mxu0
  %v850 = vpop.f32.mrb[0].mxu0
  %v851 = vadd.f32 %v153, %v850
  %v852 = vpop.f32.mrb[0].mxu0
  %853 = vmatprep.mubr.bf16.mxu0 0
  %854 = vmatmul.mubr.bf16.gmra.mrb[0].mxu0 %v536
  %v855 = vpop.f32.mrb[0].mxu0
  %v856 = vadd.f32 %v153, %v855
  %v857 = vpop.f32.mrb[0].mxu0
  %v858 = vpop.f32.mrb[0].mxu0
  %v859 = vadd.f32 %v153, %v858
  %v860 = vpop.f32.mrb[0].mxu0
  %861 = vmatprep.mubr.bf16.mxu0 0
  %862 = vmatmul.mubr.bf16.gmra.mrb[0].mxu0 %v539
  %v863 = vpop.f32.mrb[0].mxu0
  %v864 = vadd.f32 %v153, %v863
  %v865 = vpop.f32.mrb[0].mxu0
  %v866 = vpop.f32.mrb[0].mxu0
  %v867 = vadd.f32 %v153, %v866
  %v868 = vpop.f32.mrb[0].mxu0
  %869 = vmatprep.mubr.bf16.mxu0 0
  %870 = vmatmul.mubr.bf16.gmra.mrb[0].mxu0 %v542
  %v871 = vpop.f32.mrb[0].mxu0
  %v872 = vadd.f32 %v153, %v871
  %v873 = vpop.f32.mrb[0].mxu0
  %v874 = vpop.f32.mrb[0].mxu0
  %v875 = vadd.f32 %v153, %v874
  %v876 = vpop.f32.mrb[0].mxu0
  %877 = vmatprep.mubr.bf16.mxu0 0
  %878 = vmatmul.mubr.bf16.gmra.mrb[0].mxu0 %v545
  %v879 = vpop.f32.mrb[0].mxu0
  %v880 = vadd.f32 %v153, %v879
  %v881 = vpop.f32.mrb[0].mxu0
  %v882 = vpop.f32.mrb[0].mxu0
  %v883 = vadd.f32 %v153, %v882
  %v884 = vpop.f32.mrb[0].mxu0
  %885 = vmatprep.mubr.bf16.mxu0 0
  %886 = vmatmul.mubr.bf16.gmra.mrb[0].mxu0 %v548
  %v887 = vpop.f32.mrb[0].mxu0
  %v888 = vadd.f32 %v153, %v887
  %v889 = vpop.f32.mrb[0].mxu0
  %v890 = vpop.f32.mrb[0].mxu0
  %v891 = vadd.f32 %v153, %v890
  %v892 = vpop.f32.mrb[0].mxu0
  %893 = vmatprep.mubr.bf16.mxu0 0
  %894 = vmatmul.mubr.bf16.gmra.mrb[0].mxu0 %v551
  %v895 = vpop.f32.mrb[0].mxu0
  %v896 = vadd.f32 %v153, %v895
  %v897 = vpop.f32.mrb[0].mxu0
  %v898 = vpop.f32.mrb[0].mxu0
  %v899 = vadd.f32 %v153, %v898
  %v900 = vpop.f32.mrb[0].mxu0
  %901 = vmatprep.mubr.bf16.mxu0 0
  %902 = vmatmul.mubr.bf16.gmra.mrb[0].mxu0 %v554
  %v903 = vpop.f32.mrb[0].mxu0
  %v904 = vadd.f32 %v153, %v903
  %v905 = vpop.f32.mrb[0].mxu0
  %v906 = vpop.f32.mrb[0].mxu0
  %v907 = vadd.f32 %v153, %v906
  %v908 = vpop.f32.mrb[0].mxu0
  %909 = vmatprep.mubr.bf16.mxu0 0
  %910 = vmatmul.mubr.bf16.gmra.mrb[0].mxu0 %v557
  %v911 = vpop.f32.mrb[0].mxu0
  %v912 = vadd.f32 %v153, %v911
  %v913 = vpop.f32.mrb[0].mxu0
  %v914 = vpop.f32.mrb[0].mxu0
  %v915 = vadd.f32 %v153, %v914
  %v916 = vpop.f32.mrb[0].mxu0
  %917 = vmatprep.mubr.bf16.mxu0 0
  %918 = vmatmul.mubr.bf16.gmra.mrb[0].mxu0 %v560
  %v919 = vpop.f32.mrb[0].mxu0
  %v920 = vadd.f32 %v153, %v919
  %v921 = vpop.f32.mrb[0].mxu0
  %v922 = vpop.f32.mrb[0].mxu0
  %v923 = vadd.f32 %v153, %v922
  %v924 = vpop.f32.mrb[0].mxu0
  %925 = vmatprep.mubr.bf16.mxu0 0
  %926 = vmatmul.mubr.bf16.gmra.mrb[0].mxu0 %v563
  %v927 = vpop.f32.mrb[0].mxu0
  %v928 = vadd.f32 %v153, %v927
  %v929 = vpop.f32.mrb[0].mxu0
  %v930 = vpop.f32.mrb[0].mxu0
  %v931 = vadd.f32 %v153, %v930
  %v932 = vpop.f32.mrb[0].mxu0
  %933 = vmatprep.mubr.bf16.mxu0 0
  %934 = vmatmul.mubr.bf16.gmra.mrb[0].mxu0 %v566
  %v935 = vpop.f32.mrb[0].mxu0
  %v936 = vadd.f32 %v153, %v935
  %v937 = vpop.f32.mrb[0].mxu0
  %v938 = vpop.f32.mrb[0].mxu0
  %v939 = vadd.f32 %v153, %v938
  %v940 = vpop.f32.mrb[0].mxu0
  %941 = vmatprep.mubr.bf16.mxu0 0
  %942 = vmatmul.mubr.bf16.gmra.mrb[0].mxu0 %v569
  %v943 = vpop.f32.mrb[0].mxu0
  %v944 = vadd.f32 %v153, %v943
  %v945 = vpop.f32.mrb[0].mxu0
  %v946 = vpop.f32.mrb[0].mxu0
  %v947 = vadd.f32 %v153, %v946
  %v948 = vpop.f32.mrb[0].mxu0
  %949 = vmatprep.mubr.bf16.mxu0 0
  %950 = vmatmul.mubr.bf16.gmra.mrb[0].mxu0 %v572
  %v951 = vpop.f32.mrb[0].mxu0
  %v952 = vadd.f32 %v153, %v951
  %v953 = vpop.f32.mrb[0].mxu0
  %v954 = vpop.f32.mrb[0].mxu0
  %v955 = vadd.f32 %v153, %v954
  %v956 = vpop.f32.mrb[0].mxu0
  %957 = vmatprep.mubr.bf16.mxu0 0
  %958 = vmatmul.mubr.bf16.gmra.mrb[0].mxu0 %v575
  %v959 = vpop.f32.mrb[0].mxu0
  %v960 = vadd.f32 %v153, %v959
  %v961 = vpop.f32.mrb[0].mxu0
  %v962 = vpop.f32.mrb[0].mxu0
  %v963 = vadd.f32 %v153, %v962
  %v964 = vpop.f32.mrb[0].mxu0
  %965 = vmatprep.mubr.bf16.mxu0 0
  %966 = vmatmul.mubr.bf16.gmra.mrb[0].mxu0 %v578
  %v967 = vpop.f32.mrb[0].mxu0
  %v968 = vadd.f32 %v153, %v967
  %v969 = vpop.f32.mrb[0].mxu0
  %v970 = vpop.f32.mrb[0].mxu0
  %v971 = vadd.f32 %v153, %v970
  %v972 = vpop.f32.mrb[0].mxu0
  %973 = vmatprep.mubr.bf16.mxu0 0
  %974 = vmatmul.mubr.bf16.gmra.mrb[0].mxu0 %v581
  %v975 = vpop.f32.mrb[0].mxu0
  %v976 = vadd.f32 %v153, %v975
  %v977 = vpop.f32.mrb[0].mxu0
  %v978 = vpop.f32.mrb[0].mxu0
  %v979 = vadd.f32 %v153, %v978
  %v980 = vpop.f32.mrb[0].mxu0
  %981 = vmatprep.mubr.bf16.mxu0 0
  %982 = vmatmul.mubr.bf16.gmra.mrb[0].mxu0 %v584
  %v983 = vpop.f32.mrb[0].mxu0
  %v984 = vadd.f32 %v153, %v983
  %v985 = vpop.f32.mrb[0].mxu0
  %v986 = vpop.f32.mrb[0].mxu0
  %v987 = vadd.f32 %v153, %v986
  %v988 = vpop.f32.mrb[0].mxu0
  %989 = vmatprep.mubr.bf16.mxu0 0
  %990 = vmatmul.mubr.bf16.gmra.mrb[0].mxu0 %v587
  %v991 = vpop.f32.mrb[0].mxu0
  %v992 = vadd.f32 %v153, %v991
  %v993 = vpop.f32.mrb[0].mxu0
  %v994 = vpop.f32.mrb[0].mxu0
  %v995 = vadd.f32 %v153, %v994
  %v996 = vpop.f32.mrb[0].mxu0
  %997 = vmatprep.mubr.bf16.mxu0 0
  %998 = vmatmul.mubr.bf16.gmra.mrb[0].mxu0 %v590
  %v999 = vpop.f32.mrb[0].mxu0
  %v1000 = vadd.f32 %v153, %v999
  %v1001 = vpop.f32.mrb[0].mxu0
  %v1002 = vpop.f32.mrb[0].mxu0
  %v1003 = vadd.f32 %v153, %v1002
  %v1004 = vpop.f32.mrb[0].mxu0
  %1005 = vmatprep.mubr.bf16.mxu0 0
  %1006 = vmatmul.mubr.bf16.gmra.mrb[0].mxu0 %v593
  %v1007 = vpop.f32.mrb[0].mxu0
  %v1008 = vadd.f32 %v153, %v1007
  %v1009 = vpop.f32.mrb[0].mxu0
  %v1010 = vpop.f32.mrb[0].mxu0
  %v1011 = vadd.f32 %v153, %v1010
  %v1012 = vpop.f32.mrb[0].mxu0
  %1013 = vmatprep.mubr.bf16.mxu0 0
  %1014 = vmatmul.mubr.bf16.gmra.mrb[0].mxu0 %v596
  %v1015 = vpop.f32.mrb[0].mxu0
  %v1016 = vadd.f32 %v153, %v1015
  %v1017 = vpop.f32.mrb[0].mxu0
  %v1018 = vpop.f32.mrb[0].mxu0
  %v1019 = vadd.f32 %v153, %v1018
  %v1020 = vpop.f32.mrb[0].mxu0
  %1021 = vmatprep.mubr.bf16.mxu0 0
  %1022 = vmatmul.mubr.bf16.gmra.mrb[0].mxu0 %v599
  %v1023 = vpop.f32.mrb[0].mxu0
  %v1024 = vadd.f32 %v153, %v1023
  %v1025 = vpop.f32.mrb[0].mxu0
  %v1026 = vpop.f32.mrb[0].mxu0
  %v1027 = vadd.f32 %v153, %v1026
  %v1028 = vpop.f32.mrb[0].mxu0
  %1029 = vmatprep.mubr.bf16.mxu0 0
  %1030 = vmatmul.mubr.bf16.gmra.mrb[0].mxu0 %v602
  %v1031 = vpop.f32.mrb[0].mxu0
  %v1032 = vadd.f32 %v153, %v1031
  %v1033 = vpop.f32.mrb[0].mxu0
  %v1034 = vpop.f32.mrb[0].mxu0
  %v1035 = vadd.f32 %v153, %v1034
  %v1036 = vpop.f32.mrb[0].mxu0
  %1037 = vmatprep.mubr.bf16.mxu0 0
  %1038 = vmatmul.mubr.bf16.gmra.mrb[0].mxu0 %v605
  %v1039 = vpop.f32.mrb[0].mxu0
  %v1040 = vadd.f32 %v153, %v1039
  %v1041 = vpop.f32.mrb[0].mxu0
  %v1042 = vpop.f32.mrb[0].mxu0
  %v1043 = vadd.f32 %v153, %v1042
  %v1044 = vpop.f32.mrb[0].mxu0
  %1045 = vmatprep.mubr.bf16.mxu0 0
  %1046 = vmatmul.mubr.bf16.gmra.mrb[0].mxu0 %v608
  %v1047 = vpop.f32.mrb[0].mxu0
  %v1048 = vadd.f32 %v153, %v1047
  %v1049 = vpop.f32.mrb[0].mxu0
  %v1050 = vpop.f32.mrb[0].mxu0
  %v1051 = vadd.f32 %v153, %v1050
  %v1052 = vpop.f32.mrb[0].mxu0
  %1053 = vmatprep.mubr.bf16.mxu0 0
  %1054 = vmatmul.mubr.bf16.gmra.mrb[0].mxu0 %v611
  %v1055 = vpop.f32.mrb[0].mxu0
  %v1056 = vadd.f32 %v153, %v1055
  %v1057 = vpop.f32.mrb[0].mxu0
  %v1058 = vpop.f32.mrb[0].mxu0
  %v1059 = vadd.f32 %v153, %v1058
  %v1060 = vpop.f32.mrb[0].mxu0
  %1061 = vmatprep.mubr.bf16.mxu0 0
  %1062 = vmatmul.mubr.bf16.gmra.mrb[0].mxu0 %v614
  %v1063 = vpop.f32.mrb[0].mxu0
  %v1064 = vadd.f32 %v153, %v1063
  %v1065 = vpop.f32.mrb[0].mxu0
  %v1066 = vpop.f32.mrb[0].mxu0
  %v1067 = vadd.f32 %v153, %v1066
  %v1068 = vpop.f32.mrb[0].mxu0
  %1069 = vmatprep.mubr.bf16.mxu0 0
  %1070 = vmatmul.mubr.bf16.gmra.mrb[0].mxu0 %v617
  %v1071 = vpop.f32.mrb[0].mxu0
  %v1072 = vadd.f32 %v153, %v1071
  %v1073 = vpop.f32.mrb[0].mxu0
  %v1074 = vpop.f32.mrb[0].mxu0
  %v1075 = vadd.f32 %v153, %v1074
  %v1076 = vpop.f32.mrb[0].mxu0
  %1077 = vmatprep.mubr.bf16.mxu0 0
  %1078 = vmatmul.mubr.bf16.gmra.mrb[0].mxu0 %v620
  %v1079 = vpop.f32.mrb[0].mxu0
  %v1080 = vadd.f32 %v153, %v1079
  %v1081 = vpop.f32.mrb[0].mxu0
  %v1082 = vpop.f32.mrb[0].mxu0
  %v1083 = vadd.f32 %v153, %v1082
  %v1084 = vpop.f32.mrb[0].mxu0
  %1085 = vmatprep.mubr.bf16.mxu0 0
  %1086 = vmatmul.mubr.bf16.gmra.mrb[0].mxu0 %v623
  %v1087 = vpop.f32.mrb[0].mxu0
  %v1088 = vadd.f32 %v153, %v1087
  %v1089 = vpop.f32.mrb[0].mxu0
  %v1090 = vpop.f32.mrb[0].mxu0
  %v1091 = vadd.f32 %v153, %v1090
  %v1092 = vpop.f32.mrb[0].mxu0
  %1093 = vmatprep.mubr.bf16.mxu0 0
  %1094 = vmatmul.mubr.bf16.gmra.mrb[0].mxu0 %v626
  %v1095 = vpop.f32.mrb[0].mxu0
  %v1096 = vadd.f32 %v153, %v1095
  %v1097 = vpop.f32.mrb[0].mxu0
  %v1098 = vpop.f32.mrb[0].mxu0
  %v1099 = vadd.f32 %v153, %v1098
  %v1100 = vpop.f32.mrb[0].mxu0
  %1101 = vmatprep.mubr.bf16.mxu0 0
  %1102 = vmatmul.mubr.bf16.gmra.mrb[0].mxu0 %v629
  %v1103 = vpop.f32.mrb[0].mxu0
  %v1104 = vadd.f32 %v153, %v1103
  %v1105 = vpop.f32.mrb[0].mxu0
  %v1106 = vpop.f32.mrb[0].mxu0
  %v1107 = vadd.f32 %v153, %v1106
  %v1108 = vpop.f32.mrb[0].mxu0
  %1109 = vmatprep.mubr.bf16.mxu0 0
  %1110 = vmatmul.mubr.bf16.gmra.mrb[0].mxu0 %v632
  %v1111 = vpop.f32.mrb[0].mxu0
  %v1112 = vadd.f32 %v153, %v1111
  %v1113 = vpop.f32.mrb[0].mxu0
  %v1114 = vpop.f32.mrb[0].mxu0
  %v1115 = vadd.f32 %v153, %v1114
  %v1116 = vpop.f32.mrb[0].mxu0
  %1117 = vmatprep.mubr.bf16.mxu0 0
  %1118 = vmatmul.mubr.bf16.gmra.mrb[0].mxu0 %v635
  %v1119 = vpop.f32.mrb[0].mxu0
  %v1120 = vadd.f32 %v153, %v1119
  %v1121 = vpop.f32.mrb[0].mxu0
  %v1122 = vpop.f32.mrb[0].mxu0
  %v1123 = vadd.f32 %v153, %v1122
  %v1124 = vpop.f32.mrb[0].mxu0
  %1125 = vmatprep.mubr.bf16.mxu0 0
  %1126 = vmatmul.mubr.bf16.gmra.mrb[0].mxu0 %v638
  %v1127 = vpop.f32.mrb[0].mxu0
  %v1128 = vadd.f32 %v153, %v1127
  %v1129 = vpop.f32.mrb[0].mxu0
  %v1130 = vpop.f32.mrb[0].mxu0
  %v1131 = vadd.f32 %v153, %v1130
  %v1132 = vpop.f32.mrb[0].mxu0
  %1133 = vmatprep.mubr.bf16.mxu0 0
  %1134 = vmatmul.mubr.bf16.gmra.mrb[0].mxu0 %v641
  %v1135 = vpop.f32.mrb[0].mxu0
  %v1136 = vadd.f32 %v153, %v1135
  %v1137 = vpop.f32.mrb[0].mxu0
  %v1138 = vpop.f32.mrb[0].mxu0
  %v1139 = vadd.f32 %v153, %v1138
  %v1140 = vpop.f32.mrb[0].mxu0
  %1141 = vmatprep.mubr.bf16.mxu0 0
  %1142 = vmatmul.mubr.bf16.gmra.mrb[0].mxu0 %v644
  %v1143 = vpop.f32.mrb[0].mxu0
  %v1144 = vadd.f32 %v153, %v1143
  %v1145 = vpop.f32.mrb[0].mxu0
  %v1146 = vpop.f32.mrb[0].mxu0
  %v1147 = vadd.f32 %v153, %v1146
  %v1148 = vpop.f32.mrb[0].mxu0
  %1149 = vmatprep.mubr.bf16.mxu0 0
  %1150 = vmatmul.mubr.bf16.gmra.mrb[0].mxu0 %v647
  %v1151 = vpop.f32.mrb[0].mxu0
  %v1152 = vadd.f32 %v153, %v1151
  %v1153 = vpop.f32.mrb[0].mxu0
  %v1154 = vpop.f32.mrb[0].mxu0
  %v1155 = vadd.f32 %v153, %v1154
  %v1156 = vpop.f32.mrb[0].mxu0
  %1157 = vmatprep.mubr.bf16.mxu0 0
  %1158 = vmatmul.mubr.bf16.gmra.mrb[0].mxu0 %v650
  %v1159 = vpop.f32.mrb[0].mxu0
  %v1160 = vadd.f32 %v153, %v1159
  %v1161 = vpop.f32.mrb[0].mxu0
  %v1162 = vpop.f32.mrb[0].mxu0
  %v1163 = vadd.f32 %v153, %v1162
  %v1164 = vpop.f32.mrb[0].mxu0
  %1165 = vmatprep.mubr.bf16.mxu0 0
  %1166 = vmatmul.mubr.bf16.gmra.mrb[0].mxu0 %v653
  %v1167 = vpop.f32.mrb[0].mxu0
  %v1168 = vadd.f32 %v153, %v1167
  %v1169 = vpop.f32.mrb[0].mxu0
  %v1170 = vpop.f32.mrb[0].mxu0
  %v1171 = vadd.f32 %v153, %v1170
  %v1172 = vpop.f32.mrb[0].mxu0
  %1173 = vmatprep.mubr.bf16.mxu0 0
  %1174 = vmatmul.mubr.bf16.gmra.mrb[0].mxu0 %v656
  %v1175 = vpop.f32.mrb[0].mxu0
  %v1176 = vadd.f32 %v153, %v1175
  %v1177 = vpop.f32.mrb[0].mxu0
  %v1178 = vpop.f32.mrb[0].mxu0
  %v1179 = vadd.f32 %v153, %v1178
  %v1180 = vpop.f32.mrb[0].mxu0
  %1181 = vmatprep.mubr.bf16.mxu0 0
  %1182 = vmatmul.mubr.bf16.gmra.mrb[0].mxu0 %v659
  %v1183 = vpop.f32.mrb[0].mxu0
  %v1184 = vadd.f32 %v153, %v1183
  %v1185 = vpop.f32.mrb[0].mxu0
  %v1186 = vpop.f32.mrb[0].mxu0
  %v1187 = vadd.f32 %v153, %v1186
  %v1188 = vpop.f32.mrb[0].mxu0
  %1189 = vmatprep.mubr.bf16.mxu0 0
  %1190 = vmatmul.mubr.bf16.gmra.mrb[0].mxu0 %v662
  %v1191 = vpop.f32.mrb[0].mxu0
  %v1192 = vadd.f32 %v153, %v1191
  %v1193 = vpop.f32.mrb[0].mxu0
  %v1194 = vpop.f32.mrb[0].mxu0
  %v1195 = vadd.f32 %v153, %v1194
  %v1196 = vpop.f32.mrb[0].mxu0
  %1197 = vmatprep.mubr.bf16.mxu0 0
  %1198 = vmatmul.mubr.bf16.gmra.mrb[0].mxu0 %v665
  %v1199 = vpop.f32.mrb[0].mxu0
  %v1200 = vadd.f32 %v153, %v1199
  %v1201 = vpop.f32.mrb[0].mxu0
  %v1202 = vpop.f32.mrb[0].mxu0
  %v1203 = vadd.f32 %v153, %v1202
  %v1204 = vpop.f32.mrb[0].mxu0
  %1205 = vmatprep.mubr.bf16.mxu0 0
  %1206 = vmatmul.mubr.bf16.gmra.mrb[0].mxu0 %v668
  %v1207 = vpop.f32.mrb[0].mxu0
  %v1208 = vadd.f32 %v153, %v1207
  %v1209 = vpop.f32.mrb[0].mxu0
  %v1210 = vpop.f32.mrb[0].mxu0
  %v1211 = vadd.f32 %v153, %v1210
  %v1212 = vpop.f32.mrb[0].mxu0
  %1213 = vmatprep.mubr.bf16.mxu0 0
  %1214 = vmatmul.mubr.bf16.gmra.mrb[0].mxu0 %v671
  %v1215 = vpop.f32.mrb[0].mxu0
  %v1216 = vadd.f32 %v153, %v1215
  %v1217 = vpop.f32.mrb[0].mxu0
  %v1218 = vpop.f32.mrb[0].mxu0
  %v1219 = vadd.f32 %v153, %v1218
  %v1220 = vpop.f32.mrb[0].mxu0
  %1221 = vdwg.mxu0
  %v1222 = vmax.f32 %v712, 0.0
  %v1223 = vmax.f32 %v715, 0.0
  %v1224 = vmax.f32 %v720, 0.0
  %v1225 = vmax.f32 %v723, 0.0
  %v1226 = vmax.f32 %v728, 0.0
  %v1227 = vmax.f32 %v731, 0.0
  %v1228 = vmax.f32 %v736, 0.0
  %v1229 = vmax.f32 %v739, 0.0
  %v1230 = vmax.f32 %v744, 0.0
  %v1231 = vmax.f32 %v747, 0.0
  %v1232 = vmax.f32 %v752, 0.0
  %v1233 = vmax.f32 %v755, 0.0
  %v1234 = vmax.f32 %v760, 0.0
  %v1235 = vmax.f32 %v763, 0.0
  %v1236 = vmax.f32 %v768, 0.0
  %v1237 = vmax.f32 %v771, 0.0
  %v1238 = vmax.f32 %v776, 0.0
  %v1239 = vmax.f32 %v779, 0.0
  %v1240 = vmax.f32 %v784, 0.0
  %v1241 = vmax.f32 %v787, 0.0
  %v1242 = vmax.f32 %v792, 0.0
  %v1243 = vmax.f32 %v795, 0.0
  %v1244 = vmax.f32 %v800, 0.0
  %v1245 = vmax.f32 %v803, 0.0
  %v1246 = vmax.f32 %v808, 0.0
  %v1247 = vmax.f32 %v811, 0.0
  %v1248 = vmax.f32 %v816, 0.0
  %v1249 = vmax.f32 %v819, 0.0
  %v1250 = vmax.f32 %v824, 0.0
  %v1251 = vmax.f32 %v827, 0.0
  %v1252 = vmax.f32 %v832, 0.0
  %v1253 = vmax.f32 %v835, 0.0
  %v1254 = vmax.f32 %v840, 0.0
  %v1255 = vmax.f32 %v843, 0.0
  %v1256 = vmax.f32 %v848, 0.0
  %v1257 = vmax.f32 %v851, 0.0
  %v1258 = vmax.f32 %v856, 0.0
  %v1259 = vmax.f32 %v859, 0.0
  %v1260 = vmax.f32 %v864, 0.0
  %v1261 = vmax.f32 %v867, 0.0
  %v1262 = vmax.f32 %v872, 0.0
  %v1263 = vmax.f32 %v875, 0.0
  %v1264 = vmax.f32 %v880, 0.0
  %v1265 = vmax.f32 %v883, 0.0
  %v1266 = vmax.f32 %v888, 0.0
  %v1267 = vmax.f32 %v891, 0.0
  %v1268 = vmax.f32 %v896, 0.0
  %v1269 = vmax.f32 %v899, 0.0
  %v1270 = vmax.f32 %v904, 0.0
  %v1271 = vmax.f32 %v907, 0.0
  %v1272 = vmax.f32 %v912, 0.0
  %v1273 = vmax.f32 %v915, 0.0
  %v1274 = vmax.f32 %v920, 0.0
  %v1275 = vmax.f32 %v923, 0.0
  %v1276 = vmax.f32 %v928, 0.0
  %v1277 = vmax.f32 %v931, 0.0
  %v1278 = vmax.f32 %v936, 0.0
  %v1279 = vmax.f32 %v939, 0.0
  %v1280 = vmax.f32 %v944, 0.0
  %v1281 = vmax.f32 %v947, 0.0
  %v1282 = vmax.f32 %v952, 0.0
  %v1283 = vmax.f32 %v955, 0.0
  %v1284 = vmax.f32 %v960, 0.0
  %v1285 = vmax.f32 %v963, 0.0
  %v1286 = vmax.f32 %v968, 0.0
  %v1287 = vmax.f32 %v971, 0.0
  %v1288 = vmax.f32 %v976, 0.0
  %v1289 = vmax.f32 %v979, 0.0
  %v1290 = vmax.f32 %v984, 0.0
  %v1291 = vmax.f32 %v987, 0.0
  %v1292 = vmax.f32 %v992, 0.0
  %v1293 = vmax.f32 %v995, 0.0
  %v1294 = vmax.f32 %v1000, 0.0
  %v1295 = vmax.f32 %v1003, 0.0
  %v1296 = vmax.f32 %v1008, 0.0
  %v1297 = vmax.f32 %v1011, 0.0
  %v1298 = vmax.f32 %v1016, 0.0
  %v1299 = vmax.f32 %v1019, 0.0
  %v1300 = vmax.f32 %v1024, 0.0
  %v1301 = vmax.f32 %v1027, 0.0
  %v1302 = vmax.f32 %v1032, 0.0
  %v1303 = vmax.f32 %v1035, 0.0
  %v1304 = vmax.f32 %v1040, 0.0
  %v1305 = vmax.f32 %v1043, 0.0
  %v1306 = vmax.f32 %v1048, 0.0
  %v1307 = vmax.f32 %v1051, 0.0
  %v1308 = vmax.f32 %v1056, 0.0
  %v1309 = vmax.f32 %v1059, 0.0
  %v1310 = vmax.f32 %v1064, 0.0
  %v1311 = vmax.f32 %v1067, 0.0
  %v1312 = vmax.f32 %v1072, 0.0
  %v1313 = vmax.f32 %v1075, 0.0
  %v1314 = vmax.f32 %v1080, 0.0
  %v1315 = vmax.f32 %v1083, 0.0
  %v1316 = vmax.f32 %v1088, 0.0
  %v1317 = vmax.f32 %v1091, 0.0
  %v1318 = vmax.f32 %v1096, 0.0
  %v1319 = vmax.f32 %v1099, 0.0
  %v1320 = vmax.f32 %v1104, 0.0
  %v1321 = vmax.f32 %v1107, 0.0
  %v1322 = vmax.f32 %v1112, 0.0
  %v1323 = vmax.f32 %v1115, 0.0
  %v1324 = vmax.f32 %v1120, 0.0
  %v1325 = vmax.f32 %v1123, 0.0
  %v1326 = vmax.f32 %v1128, 0.0
  %v1327 = vmax.f32 %v1131, 0.0
  %v1328 = vmax.f32 %v1136, 0.0
  %v1329 = vmax.f32 %v1139, 0.0
  %v1330 = vmax.f32 %v1144, 0.0
  %v1331 = vmax.f32 %v1147, 0.0
  %v1332 = vmax.f32 %v1152, 0.0
  %v1333 = vmax.f32 %v1155, 0.0
  %v1334 = vmax.f32 %v1160, 0.0
  %v1335 = vmax.f32 %v1163, 0.0
  %v1336 = vmax.f32 %v1168, 0.0
  %v1337 = vmax.f32 %v1171, 0.0
  %v1338 = vmax.f32 %v1176, 0.0
  %v1339 = vmax.f32 %v1179, 0.0
  %v1340 = vmax.f32 %v1184, 0.0
  %v1341 = vmax.f32 %v1187, 0.0
  %v1342 = vmax.f32 %v1192, 0.0
  %v1343 = vmax.f32 %v1195, 0.0
  %v1344 = vmax.f32 %v1200, 0.0
  %v1345 = vmax.f32 %v1203, 0.0
  %v1346 = vmax.f32 %v1208, 0.0
  %v1347 = vmax.f32 %v1211, 0.0
  %v1348 = vmax.f32 %v1216, 0.0
  %v1349 = vmax.f32 %v1219, 0.0
  %v1350 = vpack.c.bf16 %v1223, %v1222
  %v1351 = vpack.c.bf16 %v1225, %v1224
  %v1352 = vpack.c.bf16 %v1227, %v1226
  %v1353 = vpack.c.bf16 %v1229, %v1228
  %v1354 = vpack.c.bf16 %v1231, %v1230
  %v1355 = vpack.c.bf16 %v1233, %v1232
  %v1356 = vpack.c.bf16 %v1235, %v1234
  %v1357 = vpack.c.bf16 %v1237, %v1236
  %v1358 = vpack.c.bf16 %v1239, %v1238
  %v1359 = vpack.c.bf16 %v1241, %v1240
  %v1360 = vpack.c.bf16 %v1243, %v1242
  %v1361 = vpack.c.bf16 %v1245, %v1244
  %v1362 = vpack.c.bf16 %v1247, %v1246
  %v1363 = vpack.c.bf16 %v1249, %v1248
  %v1364 = vpack.c.bf16 %v1251, %v1250
  %v1365 = vpack.c.bf16 %v1253, %v1252
  %v1366 = vpack.c.bf16 %v1255, %v1254
  %v1367 = vpack.c.bf16 %v1257, %v1256
  %v1368 = vpack.c.bf16 %v1259, %v1258
  %v1369 = vpack.c.bf16 %v1261, %v1260
  %v1370 = vpack.c.bf16 %v1263, %v1262
  %v1371 = vpack.c.bf16 %v1265, %v1264
  %v1372 = vpack.c.bf16 %v1267, %v1266
  %v1373 = vpack.c.bf16 %v1269, %v1268
  %v1374 = vpack.c.bf16 %v1271, %v1270
  %v1375 = vpack.c.bf16 %v1273, %v1272
  %v1376 = vpack.c.bf16 %v1275, %v1274
  %v1377 = vpack.c.bf16 %v1277, %v1276
  %v1378 = vpack.c.bf16 %v1279, %v1278
  %v1379 = vpack.c.bf16 %v1281, %v1280
  %v1380 = vpack.c.bf16 %v1283, %v1282
  %v1381 = vpack.c.bf16 %v1285, %v1284
  %v1382 = vpack.c.bf16 %v1287, %v1286
  %v1383 = vpack.c.bf16 %v1289, %v1288
  %v1384 = vpack.c.bf16 %v1291, %v1290
  %v1385 = vpack.c.bf16 %v1293, %v1292
  %v1386 = vpack.c.bf16 %v1295, %v1294
  %v1387 = vpack.c.bf16 %v1297, %v1296
  %v1388 = vpack.c.bf16 %v1299, %v1298
  %v1389 = vpack.c.bf16 %v1301, %v1300
  %v1390 = vpack.c.bf16 %v1303, %v1302
  %v1391 = vpack.c.bf16 %v1305, %v1304
  %v1392 = vpack.c.bf16 %v1307, %v1306
  %v1393 = vpack.c.bf16 %v1309, %v1308
  %v1394 = vpack.c.bf16 %v1311, %v1310
  %v1395 = vpack.c.bf16 %v1313, %v1312
  %v1396 = vpack.c.bf16 %v1315, %v1314
  %v1397 = vpack.c.bf16 %v1317, %v1316
  %v1398 = vpack.c.bf16 %v1319, %v1318
  %v1399 = vpack.c.bf16 %v1321, %v1320
  %v1400 = vpack.c.bf16 %v1323, %v1322
  %v1401 = vpack.c.bf16 %v1325, %v1324
  %v1402 = vpack.c.bf16 %v1327, %v1326
  %v1403 = vpack.c.bf16 %v1329, %v1328
  %v1404 = vpack.c.bf16 %v1331, %v1330
  %v1405 = vpack.c.bf16 %v1333, %v1332
  %v1406 = vpack.c.bf16 %v1335, %v1334
  %v1407 = vpack.c.bf16 %v1337, %v1336
  %v1408 = vpack.c.bf16 %v1339, %v1338
  %v1409 = vpack.c.bf16 %v1341, %v1340
  %v1410 = vpack.c.bf16 %v1343, %v1342
  %v1411 = vpack.c.bf16 %v1345, %v1344
  %v1412 = vpack.c.bf16 %v1347, %v1346
  %v1413 = vpack.c.bf16 %v1349, %v1348
  %v1478 = vunpack.c.l.b16 %v1350
  %v1479 = vunpack.c.h.b16 %v1350
  %v1480 = vunpack.c.l.b16 %v1351
  %v1481 = vunpack.c.h.b16 %v1351
  %v1482 = vunpack.c.l.b16 %v1352
  %v1483 = vunpack.c.h.b16 %v1352
  %v1484 = vunpack.c.l.b16 %v1353
  %v1485 = vunpack.c.h.b16 %v1353
  %v1486 = vunpack.c.l.b16 %v1354
  %v1487 = vunpack.c.h.b16 %v1354
  %v1488 = vunpack.c.l.b16 %v1355
  %v1489 = vunpack.c.h.b16 %v1355
  %v1490 = vunpack.c.l.b16 %v1356
  %v1491 = vunpack.c.h.b16 %v1356
  %v1492 = vunpack.c.l.b16 %v1357
  %v1493 = vunpack.c.h.b16 %v1357
  %v1494 = vunpack.c.l.b16 %v1358
  %v1495 = vunpack.c.h.b16 %v1358
  %v1496 = vunpack.c.l.b16 %v1359
  %v1497 = vunpack.c.h.b16 %v1359
  %v1498 = vunpack.c.l.b16 %v1360
  %v1499 = vunpack.c.h.b16 %v1360
  %v1500 = vunpack.c.l.b16 %v1361
  %v1501 = vunpack.c.h.b16 %v1361
  %v1502 = vunpack.c.l.b16 %v1362
  %v1503 = vunpack.c.h.b16 %v1362
  %v1504 = vunpack.c.l.b16 %v1363
  %v1505 = vunpack.c.h.b16 %v1363
  %v1506 = vunpack.c.l.b16 %v1364
  %v1507 = vunpack.c.h.b16 %v1364
  %v1508 = vunpack.c.l.b16 %v1365
  %v1509 = vunpack.c.h.b16 %v1365
  %v1510 = vunpack.c.l.b16 %v1366
  %v1511 = vunpack.c.h.b16 %v1366
  %v1512 = vunpack.c.l.b16 %v1367
  %v1513 = vunpack.c.h.b16 %v1367
  %v1514 = vunpack.c.l.b16 %v1368
  %v1515 = vunpack.c.h.b16 %v1368
  %v1516 = vunpack.c.l.b16 %v1369
  %v1517 = vunpack.c.h.b16 %v1369
  %v1518 = vunpack.c.l.b16 %v1370
  %v1519 = vunpack.c.h.b16 %v1370
  %v1520 = vunpack.c.l.b16 %v1371
  %v1521 = vunpack.c.h.b16 %v1371
  %v1522 = vunpack.c.l.b16 %v1372
  %v1523 = vunpack.c.h.b16 %v1372
  %v1524 = vunpack.c.l.b16 %v1373
  %v1525 = vunpack.c.h.b16 %v1373
  %v1526 = vunpack.c.l.b16 %v1374
  %v1527 = vunpack.c.h.b16 %v1374
  %v1528 = vunpack.c.l.b16 %v1375
  %v1529 = vunpack.c.h.b16 %v1375
  %v1530 = vunpack.c.l.b16 %v1376
  %v1531 = vunpack.c.h.b16 %v1376
  %v1532 = vunpack.c.l.b16 %v1377
  %v1533 = vunpack.c.h.b16 %v1377
  %v1534 = vunpack.c.l.b16 %v1378
  %v1535 = vunpack.c.h.b16 %v1378
  %v1536 = vunpack.c.l.b16 %v1379
  %v1537 = vunpack.c.h.b16 %v1379
  %v1538 = vunpack.c.l.b16 %v1380
  %v1539 = vunpack.c.h.b16 %v1380
  %v1540 = vunpack.c.l.b16 %v1381
  %v1541 = vunpack.c.h.b16 %v1381
  %v1542 = vunpack.c.l.b16 %v1382
  %v1543 = vunpack.c.h.b16 %v1382
  %v1544 = vunpack.c.l.b16 %v1383
  %v1545 = vunpack.c.h.b16 %v1383
  %v1546 = vunpack.c.l.b16 %v1384
  %v1547 = vunpack.c.h.b16 %v1384
  %v1548 = vunpack.c.l.b16 %v1385
  %v1549 = vunpack.c.h.b16 %v1385
  %v1550 = vunpack.c.l.b16 %v1386
  %v1551 = vunpack.c.h.b16 %v1386
  %v1552 = vunpack.c.l.b16 %v1387
  %v1553 = vunpack.c.h.b16 %v1387
  %v1554 = vunpack.c.l.b16 %v1388
  %v1555 = vunpack.c.h.b16 %v1388
  %v1556 = vunpack.c.l.b16 %v1389
  %v1557 = vunpack.c.h.b16 %v1389
  %v1558 = vunpack.c.l.b16 %v1390
  %v1559 = vunpack.c.h.b16 %v1390
  %v1560 = vunpack.c.l.b16 %v1391
  %v1561 = vunpack.c.h.b16 %v1391
  %v1562 = vunpack.c.l.b16 %v1392
  %v1563 = vunpack.c.h.b16 %v1392
  %v1564 = vunpack.c.l.b16 %v1393
  %v1565 = vunpack.c.h.b16 %v1393
  %v1566 = vunpack.c.l.b16 %v1394
  %v1567 = vunpack.c.h.b16 %v1394
  %v1568 = vunpack.c.l.b16 %v1395
  %v1569 = vunpack.c.h.b16 %v1395
  %v1570 = vunpack.c.l.b16 %v1396
  %v1571 = vunpack.c.h.b16 %v1396
  %v1572 = vunpack.c.l.b16 %v1397
  %v1573 = vunpack.c.h.b16 %v1397
  %v1574 = vunpack.c.l.b16 %v1398
  %v1575 = vunpack.c.h.b16 %v1398
  %v1576 = vunpack.c.l.b16 %v1399
  %v1577 = vunpack.c.h.b16 %v1399
  %v1578 = vunpack.c.l.b16 %v1400
  %v1579 = vunpack.c.h.b16 %v1400
  %v1580 = vunpack.c.l.b16 %v1401
  %v1581 = vunpack.c.h.b16 %v1401
  %v1582 = vunpack.c.l.b16 %v1402
  %v1583 = vunpack.c.h.b16 %v1402
  %v1584 = vunpack.c.l.b16 %v1403
  %v1585 = vunpack.c.h.b16 %v1403
  %v1586 = vunpack.c.l.b16 %v1404
  %v1587 = vunpack.c.h.b16 %v1404
  %v1588 = vunpack.c.l.b16 %v1405
  %v1589 = vunpack.c.h.b16 %v1405
  %v1590 = vunpack.c.l.b16 %v1406
  %v1591 = vunpack.c.h.b16 %v1406
  %v1592 = vunpack.c.l.b16 %v1407
  %v1593 = vunpack.c.h.b16 %v1407
  %v1594 = vunpack.c.l.b16 %v1408
  %v1595 = vunpack.c.h.b16 %v1408
  %v1596 = vunpack.c.l.b16 %v1409
  %v1597 = vunpack.c.h.b16 %v1409
  %v1598 = vunpack.c.l.b16 %v1410
  %v1599 = vunpack.c.h.b16 %v1410
  %v1600 = vunpack.c.l.b16 %v1411
  %v1601 = vunpack.c.h.b16 %v1411
  %v1602 = vunpack.c.l.b16 %v1412
  %v1603 = vunpack.c.h.b16 %v1412
  %v1604 = vunpack.c.l.b16 %v1413
  %v1605 = vunpack.c.h.b16 %v1413
  %v1606 = vpack.c.b16 %v1478, %v1478
  %v1607 = vpack.c.b16 %v1479, %v1479
  %v1608 = vpack.c.b16 %v1480, %v1480
  %v1609 = vpack.c.b16 %v1481, %v1481
  %v1610 = vpack.c.b16 %v1482, %v1482
  %v1611 = vpack.c.b16 %v1483, %v1483
  %v1612 = vpack.c.b16 %v1484, %v1484
  %v1613 = vpack.c.b16 %v1485, %v1485
  %v1614 = vpack.c.b16 %v1486, %v1486
  %v1615 = vpack.c.b16 %v1487, %v1487
  %v1616 = vpack.c.b16 %v1488, %v1488
  %v1617 = vpack.c.b16 %v1489, %v1489
  %v1618 = vpack.c.b16 %v1490, %v1490
  %v1619 = vpack.c.b16 %v1491, %v1491
  %v1620 = vpack.c.b16 %v1492, %v1492
  %v1621 = vpack.c.b16 %v1493, %v1493
  %v1622 = vpack.c.b16 %v1494, %v1494
  %v1623 = vpack.c.b16 %v1495, %v1495
  %v1624 = vpack.c.b16 %v1496, %v1496
  %v1625 = vpack.c.b16 %v1497, %v1497
  %v1626 = vpack.c.b16 %v1498, %v1498
  %v1627 = vpack.c.b16 %v1499, %v1499
  %v1628 = vpack.c.b16 %v1500, %v1500
  %v1629 = vpack.c.b16 %v1501, %v1501
  %v1630 = vpack.c.b16 %v1502, %v1502
  %v1631 = vpack.c.b16 %v1503, %v1503
  %v1632 = vpack.c.b16 %v1504, %v1504
  %v1633 = vpack.c.b16 %v1505, %v1505
  %v1634 = vpack.c.b16 %v1506, %v1506
  %v1635 = vpack.c.b16 %v1507, %v1507
  %v1636 = vpack.c.b16 %v1508, %v1508
  %v1637 = vpack.c.b16 %v1509, %v1509
  %v1638 = vpack.c.b16 %v1510, %v1510
  %v1639 = vpack.c.b16 %v1511, %v1511
  %v1640 = vpack.c.b16 %v1512, %v1512
  %v1641 = vpack.c.b16 %v1513, %v1513
  %v1642 = vpack.c.b16 %v1514, %v1514
  %v1643 = vpack.c.b16 %v1515, %v1515
  %v1644 = vpack.c.b16 %v1516, %v1516
  %v1645 = vpack.c.b16 %v1517, %v1517
  %v1646 = vpack.c.b16 %v1518, %v1518
  %v1647 = vpack.c.b16 %v1519, %v1519
  %v1648 = vpack.c.b16 %v1520, %v1520
  %v1649 = vpack.c.b16 %v1521, %v1521
  %v1650 = vpack.c.b16 %v1522, %v1522
  %v1651 = vpack.c.b16 %v1523, %v1523
  %v1652 = vpack.c.b16 %v1524, %v1524
  %v1653 = vpack.c.b16 %v1525, %v1525
  %v1654 = vpack.c.b16 %v1526, %v1526
  %v1655 = vpack.c.b16 %v1527, %v1527
  %v1656 = vpack.c.b16 %v1528, %v1528
  %v1657 = vpack.c.b16 %v1529, %v1529
  %v1658 = vpack.c.b16 %v1530, %v1530
  %v1659 = vpack.c.b16 %v1531, %v1531
  %v1660 = vpack.c.b16 %v1532, %v1532
  %v1661 = vpack.c.b16 %v1533, %v1533
  %v1662 = vpack.c.b16 %v1534, %v1534
  %v1663 = vpack.c.b16 %v1535, %v1535
  %v1664 = vpack.c.b16 %v1536, %v1536
  %v1665 = vpack.c.b16 %v1537, %v1537
  %v1666 = vpack.c.b16 %v1538, %v1538
  %v1667 = vpack.c.b16 %v1539, %v1539
  %v1668 = vpack.c.b16 %v1540, %v1540
  %v1669 = vpack.c.b16 %v1541, %v1541
  %v1670 = vpack.c.b16 %v1542, %v1542
  %v1671 = vpack.c.b16 %v1543, %v1543
  %v1672 = vpack.c.b16 %v1544, %v1544
  %v1673 = vpack.c.b16 %v1545, %v1545
  %v1674 = vpack.c.b16 %v1546, %v1546
  %v1675 = vpack.c.b16 %v1547, %v1547
  %v1676 = vpack.c.b16 %v1548, %v1548
  %v1677 = vpack.c.b16 %v1549, %v1549
  %v1678 = vpack.c.b16 %v1550, %v1550
  %v1679 = vpack.c.b16 %v1551, %v1551
  %v1680 = vpack.c.b16 %v1552, %v1552
  %v1681 = vpack.c.b16 %v1553, %v1553
  %v1682 = vpack.c.b16 %v1554, %v1554
  %v1683 = vpack.c.b16 %v1555, %v1555
  %v1684 = vpack.c.b16 %v1556, %v1556
  %v1685 = vpack.c.b16 %v1557, %v1557
  %v1686 = vpack.c.b16 %v1558, %v1558
  %v1687 = vpack.c.b16 %v1559, %v1559
  %v1688 = vpack.c.b16 %v1560, %v1560
  %v1689 = vpack.c.b16 %v1561, %v1561
  %v1690 = vpack.c.b16 %v1562, %v1562
  %v1691 = vpack.c.b16 %v1563, %v1563
  %v1692 = vpack.c.b16 %v1564, %v1564
  %v1693 = vpack.c.b16 %v1565, %v1565
  %v1694 = vpack.c.b16 %v1566, %v1566
  %v1695 = vpack.c.b16 %v1567, %v1567
  %v1696 = vpack.c.b16 %v1568, %v1568
  %v1697 = vpack.c.b16 %v1569, %v1569
  %v1698 = vpack.c.b16 %v1570, %v1570
  %v1699 = vpack.c.b16 %v1571, %v1571
  %v1700 = vpack.c.b16 %v1572, %v1572
  %v1701 = vpack.c.b16 %v1573, %v1573
  %v1702 = vpack.c.b16 %v1574, %v1574
  %v1703 = vpack.c.b16 %v1575, %v1575
  %v1704 = vpack.c.b16 %v1576, %v1576
  %v1705 = vpack.c.b16 %v1577, %v1577
  %v1706 = vpack.c.b16 %v1578, %v1578
  %v1707 = vpack.c.b16 %v1579, %v1579
  %v1708 = vpack.c.b16 %v1580, %v1580
  %v1709 = vpack.c.b16 %v1581, %v1581
  %v1710 = vpack.c.b16 %v1582, %v1582
  %v1711 = vpack.c.b16 %v1583, %v1583
  %v1712 = vpack.c.b16 %v1584, %v1584
  %v1713 = vpack.c.b16 %v1585, %v1585
  %v1714 = vpack.c.b16 %v1586, %v1586
  %v1715 = vpack.c.b16 %v1587, %v1587
  %v1716 = vpack.c.b16 %v1588, %v1588
  %v1717 = vpack.c.b16 %v1589, %v1589
  %v1718 = vpack.c.b16 %v1590, %v1590
  %v1719 = vpack.c.b16 %v1591, %v1591
  %v1720 = vpack.c.b16 %v1592, %v1592
  %v1721 = vpack.c.b16 %v1593, %v1593
  %v1722 = vpack.c.b16 %v1594, %v1594
  %v1723 = vpack.c.b16 %v1595, %v1595
  %v1724 = vpack.c.b16 %v1596, %v1596
  %v1725 = vpack.c.b16 %v1597, %v1597
  %v1726 = vpack.c.b16 %v1598, %v1598
  %v1727 = vpack.c.b16 %v1599, %v1599
  %v1728 = vpack.c.b16 %v1600, %v1600
  %v1729 = vpack.c.b16 %v1601, %v1601
  %v1730 = vpack.c.b16 %v1602, %v1602
  %v1731 = vpack.c.b16 %v1603, %v1603
  %v1732 = vpack.c.b16 %v1604, %v1604
  %v1733 = vpack.c.b16 %v1605, %v1605
  %vm1862 = vcmask 257024
  %1863 = vst.msk [vmem:[%s3] sm:$0xf] %vm1862, %v1606
  %1864 = vst.msk [vmem:[%s3 + $0x4] sm:$0xf] %vm1862, %v1607
  %1865 = vst.msk [vmem:[%s3 + $0x8] sm:$0xf] %vm1862, %v1608
  %1866 = vst.msk [vmem:[%s3 + $0xc] sm:$0xf] %vm1862, %v1609
  %1867 = vst.msk [vmem:[%s3 + $0x10] sm:$0xf] %vm1862, %v1610
  %1868 = vst.msk [vmem:[%s3 + $0x14] sm:$0xf] %vm1862, %v1611
  %1869 = vst.msk [vmem:[%s3 + $0x18] sm:$0xf] %vm1862, %v1612
  %1870 = vst.msk [vmem:[%s3 + $0x1c] sm:$0xf] %vm1862, %v1613
  %1871 = vst.msk [vmem:[%s3 + $0x20] sm:$0xf] %vm1862, %v1614
  %1872 = vst.msk [vmem:[%s3 + $0x24] sm:$0xf] %vm1862, %v1615
  %1873 = vst.msk [vmem:[%s3 + $0x28] sm:$0xf] %vm1862, %v1616
  %1874 = vst.msk [vmem:[%s3 + $0x2c] sm:$0xf] %vm1862, %v1617
  %1875 = vst.msk [vmem:[%s3 + $0x30] sm:$0xf] %vm1862, %v1618
  %1876 = vst.msk [vmem:[%s3 + $0x34] sm:$0xf] %vm1862, %v1619
  %1877 = vst.msk [vmem:[%s3 + $0x38] sm:$0xf] %vm1862, %v1620
  %1878 = vst.msk [vmem:[%s3 + $0x3c] sm:$0xf] %vm1862, %v1621
  %1879 = vst.msk [vmem:[%s3 + $0x40] sm:$0xf] %vm1862, %v1622
  %1880 = vst.msk [vmem:[%s3 + $0x44] sm:$0xf] %vm1862, %v1623
  %1881 = vst.msk [vmem:[%s3 + $0x48] sm:$0xf] %vm1862, %v1624
  %1882 = vst.msk [vmem:[%s3 + $0x4c] sm:$0xf] %vm1862, %v1625
  %1883 = vst.msk [vmem:[%s3 + $0x50] sm:$0xf] %vm1862, %v1626
  %1884 = vst.msk [vmem:[%s3 + $0x54] sm:$0xf] %vm1862, %v1627
  %1885 = vst.msk [vmem:[%s3 + $0x58] sm:$0xf] %vm1862, %v1628
  %1886 = vst.msk [vmem:[%s3 + $0x5c] sm:$0xf] %vm1862, %v1629
  %1887 = vst.msk [vmem:[%s3 + $0x60] sm:$0xf] %vm1862, %v1630
  %1888 = vst.msk [vmem:[%s3 + $0x64] sm:$0xf] %vm1862, %v1631
  %1889 = vst.msk [vmem:[%s3 + $0x68] sm:$0xf] %vm1862, %v1632
  %1890 = vst.msk [vmem:[%s3 + $0x6c] sm:$0xf] %vm1862, %v1633
  %1891 = vst.msk [vmem:[%s3 + $0x70] sm:$0xf] %vm1862, %v1634
  %1892 = vst.msk [vmem:[%s3 + $0x74] sm:$0xf] %vm1862, %v1635
  %1893 = vst.msk [vmem:[%s3 + $0x78] sm:$0xf] %vm1862, %v1636
  %1894 = vst.msk [vmem:[%s3 + $0x7c] sm:$0xf] %vm1862, %v1637
  %1895 = vst.msk [vmem:[%s3 + $0x80] sm:$0xf] %vm1862, %v1638
  %1896 = vst.msk [vmem:[%s3 + $0x84] sm:$0xf] %vm1862, %v1639
  %1897 = vst.msk [vmem:[%s3 + $0x88] sm:$0xf] %vm1862, %v1640
  %1898 = vst.msk [vmem:[%s3 + $0x8c] sm:$0xf] %vm1862, %v1641
  %1899 = vst.msk [vmem:[%s3 + $0x90] sm:$0xf] %vm1862, %v1642
  %1900 = vst.msk [vmem:[%s3 + $0x94] sm:$0xf] %vm1862, %v1643
  %1901 = vst.msk [vmem:[%s3 + $0x98] sm:$0xf] %vm1862, %v1644
  %1902 = vst.msk [vmem:[%s3 + $0x9c] sm:$0xf] %vm1862, %v1645
  %1903 = vst.msk [vmem:[%s3 + $0xa0] sm:$0xf] %vm1862, %v1646
  %1904 = vst.msk [vmem:[%s3 + $0xa4] sm:$0xf] %vm1862, %v1647
  %1905 = vst.msk [vmem:[%s3 + $0xa8] sm:$0xf] %vm1862, %v1648
  %1906 = vst.msk [vmem:[%s3 + $0xac] sm:$0xf] %vm1862, %v1649
  %1907 = vst.msk [vmem:[%s3 + $0xb0] sm:$0xf] %vm1862, %v1650
  %1908 = vst.msk [vmem:[%s3 + $0xb4] sm:$0xf] %vm1862, %v1651
  %1909 = vst.msk [vmem:[%s3 + $0xb8] sm:$0xf] %vm1862, %v1652
  %1910 = vst.msk [vmem:[%s3 + $0xbc] sm:$0xf] %vm1862, %v1653
  %1911 = vst.msk [vmem:[%s3 + $0xc0] sm:$0xf] %vm1862, %v1654
  %1912 = vst.msk [vmem:[%s3 + $0xc4] sm:$0xf] %vm1862, %v1655
  %1913 = vst.msk [vmem:[%s3 + $0xc8] sm:$0xf] %vm1862, %v1656
  %1914 = vst.msk [vmem:[%s3 + $0xcc] sm:$0xf] %vm1862, %v1657
  %1915 = vst.msk [vmem:[%s3 + $0xd0] sm:$0xf] %vm1862, %v1658
  %1916 = vst.msk [vmem:[%s3 + $0xd4] sm:$0xf] %vm1862, %v1659
  %1917 = vst.msk [vmem:[%s3 + $0xd8] sm:$0xf] %vm1862, %v1660
  %1918 = vst.msk [vmem:[%s3 + $0xdc] sm:$0xf] %vm1862, %v1661
  %1919 = vst.msk [vmem:[%s3 + $0xe0] sm:$0xf] %vm1862, %v1662
  %1920 = vst.msk [vmem:[%s3 + $0xe4] sm:$0xf] %vm1862, %v1663
  %1921 = vst.msk [vmem:[%s3 + $0xe8] sm:$0xf] %vm1862, %v1664
  %1922 = vst.msk [vmem:[%s3 + $0xec] sm:$0xf] %vm1862, %v1665
  %1923 = vst.msk [vmem:[%s3 + $0xf0] sm:$0xf] %vm1862, %v1666
  %1924 = vst.msk [vmem:[%s3 + $0xf4] sm:$0xf] %vm1862, %v1667
  %1925 = vst.msk [vmem:[%s3 + $0xf8] sm:$0xf] %vm1862, %v1668
  %1926 = vst.msk [vmem:[%s3 + $0xfc] sm:$0xf] %vm1862, %v1669
  %1927 = vst.msk [vmem:[%s3 + $0x100] sm:$0xf] %vm1862, %v1670
  %1928 = vst.msk [vmem:[%s3 + $0x104] sm:$0xf] %vm1862, %v1671
  %1929 = vst.msk [vmem:[%s3 + $0x108] sm:$0xf] %vm1862, %v1672
  %1930 = vst.msk [vmem:[%s3 + $0x10c] sm:$0xf] %vm1862, %v1673
  %1931 = vst.msk [vmem:[%s3 + $0x110] sm:$0xf] %vm1862, %v1674
  %1932 = vst.msk [vmem:[%s3 + $0x114] sm:$0xf] %vm1862, %v1675
  %1933 = vst.msk [vmem:[%s3 + $0x118] sm:$0xf] %vm1862, %v1676
  %1934 = vst.msk [vmem:[%s3 + $0x11c] sm:$0xf] %vm1862, %v1677
  %1935 = vst.msk [vmem:[%s3 + $0x120] sm:$0xf] %vm1862, %v1678
  %1936 = vst.msk [vmem:[%s3 + $0x124] sm:$0xf] %vm1862, %v1679
  %1937 = vst.msk [vmem:[%s3 + $0x128] sm:$0xf] %vm1862, %v1680
  %1938 = vst.msk [vmem:[%s3 + $0x12c] sm:$0xf] %vm1862, %v1681
  %1939 = vst.msk [vmem:[%s3 + $0x130] sm:$0xf] %vm1862, %v1682
  %1940 = vst.msk [vmem:[%s3 + $0x134] sm:$0xf] %vm1862, %v1683
  %1941 = vst.msk [vmem:[%s3 + $0x138] sm:$0xf] %vm1862, %v1684
  %1942 = vst.msk [vmem:[%s3 + $0x13c] sm:$0xf] %vm1862, %v1685
  %1943 = vst.msk [vmem:[%s3 + $0x140] sm:$0xf] %vm1862, %v1686
  %1944 = vst.msk [vmem:[%s3 + $0x144] sm:$0xf] %vm1862, %v1687
  %1945 = vst.msk [vmem:[%s3 + $0x148] sm:$0xf] %vm1862, %v1688
  %1946 = vst.msk [vmem:[%s3 + $0x14c] sm:$0xf] %vm1862, %v1689
  %1947 = vst.msk [vmem:[%s3 + $0x150] sm:$0xf] %vm1862, %v1690
  %1948 = vst.msk [vmem:[%s3 + $0x154] sm:$0xf] %vm1862, %v1691
  %1949 = vst.msk [vmem:[%s3 + $0x158] sm:$0xf] %vm1862, %v1692
  %1950 = vst.msk [vmem:[%s3 + $0x15c] sm:$0xf] %vm1862, %v1693
  %1951 = vst.msk [vmem:[%s3 + $0x160] sm:$0xf] %vm1862, %v1694
  %1952 = vst.msk [vmem:[%s3 + $0x164] sm:$0xf] %vm1862, %v1695
  %1953 = vst.msk [vmem:[%s3 + $0x168] sm:$0xf] %vm1862, %v1696
  %1954 = vst.msk [vmem:[%s3 + $0x16c] sm:$0xf] %vm1862, %v1697
  %1955 = vst.msk [vmem:[%s3 + $0x170] sm:$0xf] %vm1862, %v1698
  %1956 = vst.msk [vmem:[%s3 + $0x174] sm:$0xf] %vm1862, %v1699
  %1957 = vst.msk [vmem:[%s3 + $0x178] sm:$0xf] %vm1862, %v1700
  %1958 = vst.msk [vmem:[%s3 + $0x17c] sm:$0xf] %vm1862, %v1701
  %1959 = vst.msk [vmem:[%s3 + $0x180] sm:$0xf] %vm1862, %v1702
  %1960 = vst.msk [vmem:[%s3 + $0x184] sm:$0xf] %vm1862, %v1703
  %1961 = vst.msk [vmem:[%s3 + $0x188] sm:$0xf] %vm1862, %v1704
  %1962 = vst.msk [vmem:[%s3 + $0x18c] sm:$0xf] %vm1862, %v1705
  %1963 = vst.msk [vmem:[%s3 + $0x190] sm:$0xf] %vm1862, %v1706
  %1964 = vst.msk [vmem:[%s3 + $0x194] sm:$0xf] %vm1862, %v1707
  %1965 = vst.msk [vmem:[%s3 + $0x198] sm:$0xf] %vm1862, %v1708
  %1966 = vst.msk [vmem:[%s3 + $0x19c] sm:$0xf] %vm1862, %v1709
  %1967 = vst.msk [vmem:[%s3 + $0x1a0] sm:$0xf] %vm1862, %v1710
  %1968 = vst.msk [vmem:[%s3 + $0x1a4] sm:$0xf] %vm1862, %v1711
  %1969 = vst.msk [vmem:[%s3 + $0x1a8] sm:$0xf] %vm1862, %v1712
  %1970 = vst.msk [vmem:[%s3 + $0x1ac] sm:$0xf] %vm1862, %v1713
  %1971 = vst.msk [vmem:[%s3 + $0x1b0] sm:$0xf] %vm1862, %v1714
  %1972 = vst.msk [vmem:[%s3 + $0x1b4] sm:$0xf] %vm1862, %v1715
  %1973 = vst.msk [vmem:[%s3 + $0x1b8] sm:$0xf] %vm1862, %v1716
  %1974 = vst.msk [vmem:[%s3 + $0x1bc] sm:$0xf] %vm1862, %v1717
  %1975 = vst.msk [vmem:[%s3 + $0x1c0] sm:$0xf] %vm1862, %v1718
  %1976 = vst.msk [vmem:[%s3 + $0x1c4] sm:$0xf] %vm1862, %v1719
  %1977 = vst.msk [vmem:[%s3 + $0x1c8] sm:$0xf] %vm1862, %v1720
  %1978 = vst.msk [vmem:[%s3 + $0x1cc] sm:$0xf] %vm1862, %v1721
  %1979 = vst.msk [vmem:[%s3 + $0x1d0] sm:$0xf] %vm1862, %v1722
  %1980 = vst.msk [vmem:[%s3 + $0x1d4] sm:$0xf] %vm1862, %v1723
  %1981 = vst.msk [vmem:[%s3 + $0x1d8] sm:$0xf] %vm1862, %v1724
  %1982 = vst.msk [vmem:[%s3 + $0x1dc] sm:$0xf] %vm1862, %v1725
  %1983 = vst.msk [vmem:[%s3 + $0x1e0] sm:$0xf] %vm1862, %v1726
  %1984 = vst.msk [vmem:[%s3 + $0x1e4] sm:$0xf] %vm1862, %v1727
  %1985 = vst.msk [vmem:[%s3 + $0x1e8] sm:$0xf] %vm1862, %v1728
  %1986 = vst.msk [vmem:[%s3 + $0x1ec] sm:$0xf] %vm1862, %v1729
  %1987 = vst.msk [vmem:[%s3 + $0x1f0] sm:$0xf] %vm1862, %v1730
  %1988 = vst.msk [vmem:[%s3 + $0x1f4] sm:$0xf] %vm1862, %v1731
  %1989 = vst.msk [vmem:[%s3 + $0x1f8] sm:$0xf] %vm1862, %v1732
  %1990 = vst.msk [vmem:[%s3 + $0x1fc] sm:$0xf] %vm1862, %v1733
  %vm1991 = vcmask 261120
  %v1992 = vsel %vm1991, %v1222, 0.0
  %v1993 = vsel %vm1991, %v1223, 0.0
  %v1994 = vadd.f32 %v1992, %v1993
  %v1995 = vsel %vm1991, %v1224, 0.0
  %v1996 = vadd.f32 %v1994, %v1995
  %v1997 = vsel %vm1991, %v1225, 0.0
  %v1998 = vadd.f32 %v1996, %v1997
  %v1999 = vsel %vm1991, %v1226, 0.0
  %v2000 = vadd.f32 %v1998, %v1999
  %v2001 = vsel %vm1991, %v1227, 0.0
  %v2002 = vadd.f32 %v2000, %v2001
  %v2003 = vsel %vm1991, %v1228, 0.0
  %v2004 = vadd.f32 %v2002, %v2003
  %v2005 = vsel %vm1991, %v1229, 0.0
  %v2006 = vadd.f32 %v2004, %v2005
  %v2007 = vsel %vm1991, %v1230, 0.0
  %v2008 = vadd.f32 %v2006, %v2007
  %v2009 = vsel %vm1991, %v1231, 0.0
  %v2010 = vadd.f32 %v2008, %v2009
  %v2011 = vsel %vm1991, %v1232, 0.0
  %v2012 = vadd.f32 %v2010, %v2011
  %v2013 = vsel %vm1991, %v1233, 0.0
  %v2014 = vadd.f32 %v2012, %v2013
  %v2015 = vsel %vm1991, %v1234, 0.0
  %v2016 = vadd.f32 %v2014, %v2015
  %v2017 = vsel %vm1991, %v1235, 0.0
  %v2018 = vadd.f32 %v2016, %v2017
  %v2019 = vsel %vm1991, %v1236, 0.0
  %v2020 = vadd.f32 %v2018, %v2019
  %v2021 = vsel %vm1991, %v1237, 0.0
  %v2022 = vadd.f32 %v2020, %v2021
  %v2023 = vsel %vm1991, %v1238, 0.0
  %v2024 = vadd.f32 %v2022, %v2023
  %v2025 = vsel %vm1991, %v1239, 0.0
  %v2026 = vadd.f32 %v2024, %v2025
  %v2027 = vsel %vm1991, %v1240, 0.0
  %v2028 = vadd.f32 %v2026, %v2027
  %v2029 = vsel %vm1991, %v1241, 0.0
  %v2030 = vadd.f32 %v2028, %v2029
  %v2031 = vsel %vm1991, %v1242, 0.0
  %v2032 = vadd.f32 %v2030, %v2031
  %v2033 = vsel %vm1991, %v1243, 0.0
  %v2034 = vadd.f32 %v2032, %v2033
  %v2035 = vsel %vm1991, %v1244, 0.0
  %v2036 = vadd.f32 %v2034, %v2035
  %v2037 = vsel %vm1991, %v1245, 0.0
  %v2038 = vadd.f32 %v2036, %v2037
  %v2039 = vsel %vm1991, %v1246, 0.0
  %v2040 = vadd.f32 %v2038, %v2039
  %v2041 = vsel %vm1991, %v1247, 0.0
  %v2042 = vadd.f32 %v2040, %v2041
  %v2043 = vsel %vm1991, %v1248, 0.0
  %v2044 = vadd.f32 %v2042, %v2043
  %v2045 = vsel %vm1991, %v1249, 0.0
  %v2046 = vadd.f32 %v2044, %v2045
  %v2047 = vsel %vm1991, %v1250, 0.0
  %v2048 = vadd.f32 %v2046, %v2047
  %v2049 = vsel %vm1991, %v1251, 0.0
  %v2050 = vadd.f32 %v2048, %v2049
  %v2051 = vsel %vm1991, %v1252, 0.0
  %v2052 = vadd.f32 %v2050, %v2051
  %v2053 = vsel %vm1991, %v1253, 0.0
  %v2054 = vadd.f32 %v2052, %v2053
  %v2055 = vsel %vm1991, %v1254, 0.0
  %v2056 = vadd.f32 %v2054, %v2055
  %v2057 = vsel %vm1991, %v1255, 0.0
  %v2058 = vadd.f32 %v2056, %v2057
  %v2059 = vsel %vm1991, %v1256, 0.0
  %v2060 = vadd.f32 %v2058, %v2059
  %v2061 = vsel %vm1991, %v1257, 0.0
  %v2062 = vadd.f32 %v2060, %v2061
  %v2063 = vsel %vm1991, %v1258, 0.0
  %v2064 = vadd.f32 %v2062, %v2063
  %v2065 = vsel %vm1991, %v1259, 0.0
  %v2066 = vadd.f32 %v2064, %v2065
  %v2067 = vsel %vm1991, %v1260, 0.0
  %v2068 = vadd.f32 %v2066, %v2067
  %v2069 = vsel %vm1991, %v1261, 0.0
  %v2070 = vadd.f32 %v2068, %v2069
  %v2071 = vsel %vm1991, %v1262, 0.0
  %v2072 = vadd.f32 %v2070, %v2071
  %v2073 = vsel %vm1991, %v1263, 0.0
  %v2074 = vadd.f32 %v2072, %v2073
  %v2075 = vsel %vm1991, %v1264, 0.0
  %v2076 = vadd.f32 %v2074, %v2075
  %v2077 = vsel %vm1991, %v1265, 0.0
  %v2078 = vadd.f32 %v2076, %v2077
  %v2079 = vsel %vm1991, %v1266, 0.0
  %v2080 = vadd.f32 %v2078, %v2079
  %v2081 = vsel %vm1991, %v1267, 0.0
  %v2082 = vadd.f32 %v2080, %v2081
  %v2083 = vsel %vm1991, %v1268, 0.0
  %v2084 = vadd.f32 %v2082, %v2083
  %v2085 = vsel %vm1991, %v1269, 0.0
  %v2086 = vadd.f32 %v2084, %v2085
  %v2087 = vsel %vm1991, %v1270, 0.0
  %v2088 = vadd.f32 %v2086, %v2087
  %v2089 = vsel %vm1991, %v1271, 0.0
  %v2090 = vadd.f32 %v2088, %v2089
  %v2091 = vsel %vm1991, %v1272, 0.0
  %v2092 = vadd.f32 %v2090, %v2091
  %v2093 = vsel %vm1991, %v1273, 0.0
  %v2094 = vadd.f32 %v2092, %v2093
  %v2095 = vsel %vm1991, %v1274, 0.0
  %v2096 = vadd.f32 %v2094, %v2095
  %v2097 = vsel %vm1991, %v1275, 0.0
  %v2098 = vadd.f32 %v2096, %v2097
  %v2099 = vsel %vm1991, %v1276, 0.0
  %v2100 = vadd.f32 %v2098, %v2099
  %v2101 = vsel %vm1991, %v1277, 0.0
  %v2102 = vadd.f32 %v2100, %v2101
  %v2103 = vsel %vm1991, %v1278, 0.0
  %v2104 = vadd.f32 %v2102, %v2103
  %v2105 = vsel %vm1991, %v1279, 0.0
  %v2106 = vadd.f32 %v2104, %v2105
  %v2107 = vsel %vm1991, %v1280, 0.0
  %v2108 = vadd.f32 %v2106, %v2107
  %v2109 = vsel %vm1991, %v1281, 0.0
  %v2110 = vadd.f32 %v2108, %v2109
  %v2111 = vsel %vm1991, %v1282, 0.0
  %v2112 = vadd.f32 %v2110, %v2111
  %v2113 = vsel %vm1991, %v1283, 0.0
  %v2114 = vadd.f32 %v2112, %v2113
  %v2115 = vsel %vm1991, %v1284, 0.0
  %v2116 = vadd.f32 %v2114, %v2115
  %v2117 = vsel %vm1991, %v1285, 0.0
  %v2118 = vadd.f32 %v2116, %v2117
  %v2119 = vsel %vm1991, %v1286, 0.0
  %v2120 = vadd.f32 %v2118, %v2119
  %v2121 = vsel %vm1991, %v1287, 0.0
  %v2122 = vadd.f32 %v2120, %v2121
  %v2123 = vsel %vm1991, %v1288, 0.0
  %v2124 = vadd.f32 %v2122, %v2123
  %v2125 = vsel %vm1991, %v1289, 0.0
  %v2126 = vadd.f32 %v2124, %v2125
  %v2127 = vsel %vm1991, %v1290, 0.0
  %v2128 = vadd.f32 %v2126, %v2127
  %v2129 = vsel %vm1991, %v1291, 0.0
  %v2130 = vadd.f32 %v2128, %v2129
  %v2131 = vsel %vm1991, %v1292, 0.0
  %v2132 = vadd.f32 %v2130, %v2131
  %v2133 = vsel %vm1991, %v1293, 0.0
  %v2134 = vadd.f32 %v2132, %v2133
  %v2135 = vsel %vm1991, %v1294, 0.0
  %v2136 = vadd.f32 %v2134, %v2135
  %v2137 = vsel %vm1991, %v1295, 0.0
  %v2138 = vadd.f32 %v2136, %v2137
  %v2139 = vsel %vm1991, %v1296, 0.0
  %v2140 = vadd.f32 %v2138, %v2139
  %v2141 = vsel %vm1991, %v1297, 0.0
  %v2142 = vadd.f32 %v2140, %v2141
  %v2143 = vsel %vm1991, %v1298, 0.0
  %v2144 = vadd.f32 %v2142, %v2143
  %v2145 = vsel %vm1991, %v1299, 0.0
  %v2146 = vadd.f32 %v2144, %v2145
  %v2147 = vsel %vm1991, %v1300, 0.0
  %v2148 = vadd.f32 %v2146, %v2147
  %v2149 = vsel %vm1991, %v1301, 0.0
  %v2150 = vadd.f32 %v2148, %v2149
  %v2151 = vsel %vm1991, %v1302, 0.0
  %v2152 = vadd.f32 %v2150, %v2151
  %v2153 = vsel %vm1991, %v1303, 0.0
  %v2154 = vadd.f32 %v2152, %v2153
  %v2155 = vsel %vm1991, %v1304, 0.0
  %v2156 = vadd.f32 %v2154, %v2155
  %v2157 = vsel %vm1991, %v1305, 0.0
  %v2158 = vadd.f32 %v2156, %v2157
  %v2159 = vsel %vm1991, %v1306, 0.0
  %v2160 = vadd.f32 %v2158, %v2159
  %v2161 = vsel %vm1991, %v1307, 0.0
  %v2162 = vadd.f32 %v2160, %v2161
  %v2163 = vsel %vm1991, %v1308, 0.0
  %v2164 = vadd.f32 %v2162, %v2163
  %v2165 = vsel %vm1991, %v1309, 0.0
  %v2166 = vadd.f32 %v2164, %v2165
  %v2167 = vsel %vm1991, %v1310, 0.0
  %v2168 = vadd.f32 %v2166, %v2167
  %v2169 = vsel %vm1991, %v1311, 0.0
  %v2170 = vadd.f32 %v2168, %v2169
  %v2171 = vsel %vm1991, %v1312, 0.0
  %v2172 = vadd.f32 %v2170, %v2171
  %v2173 = vsel %vm1991, %v1313, 0.0
  %v2174 = vadd.f32 %v2172, %v2173
  %v2175 = vsel %vm1991, %v1314, 0.0
  %v2176 = vadd.f32 %v2174, %v2175
  %v2177 = vsel %vm1991, %v1315, 0.0
  %v2178 = vadd.f32 %v2176, %v2177
  %v2179 = vsel %vm1991, %v1316, 0.0
  %v2180 = vadd.f32 %v2178, %v2179
  %v2181 = vsel %vm1991, %v1317, 0.0
  %v2182 = vadd.f32 %v2180, %v2181
  %v2183 = vsel %vm1991, %v1318, 0.0
  %v2184 = vadd.f32 %v2182, %v2183
  %v2185 = vsel %vm1991, %v1319, 0.0
  %v2186 = vadd.f32 %v2184, %v2185
  %v2187 = vsel %vm1991, %v1320, 0.0
  %v2188 = vadd.f32 %v2186, %v2187
  %v2189 = vsel %vm1991, %v1321, 0.0
  %v2190 = vadd.f32 %v2188, %v2189
  %v2191 = vsel %vm1991, %v1322, 0.0
  %v2192 = vadd.f32 %v2190, %v2191
  %v2193 = vsel %vm1991, %v1323, 0.0
  %v2194 = vadd.f32 %v2192, %v2193
  %v2195 = vsel %vm1991, %v1324, 0.0
  %v2196 = vadd.f32 %v2194, %v2195
  %v2197 = vsel %vm1991, %v1325, 0.0
  %v2198 = vadd.f32 %v2196, %v2197
  %v2199 = vsel %vm1991, %v1326, 0.0
  %v2200 = vadd.f32 %v2198, %v2199
  %v2201 = vsel %vm1991, %v1327, 0.0
  %v2202 = vadd.f32 %v2200, %v2201
  %v2203 = vsel %vm1991, %v1328, 0.0
  %v2204 = vadd.f32 %v2202, %v2203
  %v2205 = vsel %vm1991, %v1329, 0.0
  %v2206 = vadd.f32 %v2204, %v2205
  %v2207 = vsel %vm1991, %v1330, 0.0
  %v2208 = vadd.f32 %v2206, %v2207
  %v2209 = vsel %vm1991, %v1331, 0.0
  %v2210 = vadd.f32 %v2208, %v2209
  %v2211 = vsel %vm1991, %v1332, 0.0
  %v2212 = vadd.f32 %v2210, %v2211
  %v2213 = vsel %vm1991, %v1333, 0.0
  %v2214 = vadd.f32 %v2212, %v2213
  %v2215 = vsel %vm1991, %v1334, 0.0
  %v2216 = vadd.f32 %v2214, %v2215
  %v2217 = vsel %vm1991, %v1335, 0.0
  %v2218 = vadd.f32 %v2216, %v2217
  %v2219 = vsel %vm1991, %v1336, 0.0
  %v2220 = vadd.f32 %v2218, %v2219
  %v2221 = vsel %vm1991, %v1337, 0.0
  %v2222 = vadd.f32 %v2220, %v2221
  %v2223 = vsel %vm1991, %v1338, 0.0
  %v2224 = vadd.f32 %v2222, %v2223
  %v2225 = vsel %vm1991, %v1339, 0.0
  %v2226 = vadd.f32 %v2224, %v2225
  %v2227 = vsel %vm1991, %v1340, 0.0
  %v2228 = vadd.f32 %v2226, %v2227
  %v2229 = vsel %vm1991, %v1341, 0.0
  %v2230 = vadd.f32 %v2228, %v2229
  %v2231 = vsel %vm1991, %v1342, 0.0
  %v2232 = vadd.f32 %v2230, %v2231
  %v2233 = vsel %vm1991, %v1343, 0.0
  %v2234 = vadd.f32 %v2232, %v2233
  %v2235 = vsel %vm1991, %v1344, 0.0
  %v2236 = vadd.f32 %v2234, %v2235
  %v2237 = vsel %vm1991, %v1345, 0.0
  %v2238 = vadd.f32 %v2236, %v2237
  %v2239 = vsel %vm1991, %v1346, 0.0
  %v2240 = vadd.f32 %v2238, %v2239
  %v2241 = vsel %vm1991, %v1347, 0.0
  %v2242 = vadd.f32 %v2240, %v2241
  %v2243 = vsel %vm1991, %v1348, 0.0
  %v2244 = vadd.f32 %v2242, %v2243
  %v2245 = vsel %vm1991, %v1349, 0.0
  %v2246 = vadd.f32 %v2244, %v2245
  %v2247 = vrot.slane %v2246, 4
  %v2248 = vadd.f32 %v2246, %v2247
  %v2249 = vrot.slane %v2248, 2
  %v2250 = vadd.f32 %v2248, %v2249
  %v2251 = vrot.slane %v2250, 1
  %v2252 = vadd.f32 %v2250, %v2251
  %v2253 = vrcp.pop 1024.0
  %v2254 = vmul.f32 %v2252, %v2253
  %v2255 = vsub.f32 %v1222, %v2254
  %v2256 = vsub.f32 %v1223, %v2254
  %v2257 = vsub.f32 %v1224, %v2254
  %v2258 = vsub.f32 %v1225, %v2254
  %v2259 = vsub.f32 %v1226, %v2254
  %v2260 = vsub.f32 %v1227, %v2254
  %v2261 = vsub.f32 %v1228, %v2254
  %v2262 = vsub.f32 %v1229, %v2254
  %v2263 = vsub.f32 %v1230, %v2254
  %v2264 = vsub.f32 %v1231, %v2254
  %v2265 = vsub.f32 %v1232, %v2254
  %v2266 = vsub.f32 %v1233, %v2254
  %v2267 = vsub.f32 %v1234, %v2254
  %v2268 = vsub.f32 %v1235, %v2254
  %v2269 = vsub.f32 %v1236, %v2254
  %v2270 = vsub.f32 %v1237, %v2254
  %v2271 = vsub.f32 %v1238, %v2254
  %v2272 = vsub.f32 %v1239, %v2254
  %v2273 = vsub.f32 %v1240, %v2254
  %v2274 = vsub.f32 %v1241, %v2254
  %v2275 = vsub.f32 %v1242, %v2254
  %v2276 = vsub.f32 %v1243, %v2254
  %v2277 = vsub.f32 %v1244, %v2254
  %v2278 = vsub.f32 %v1245, %v2254
  %v2279 = vsub.f32 %v1246, %v2254
  %v2280 = vsub.f32 %v1247, %v2254
  %v2281 = vsub.f32 %v1248, %v2254
  %v2282 = vsub.f32 %v1249, %v2254
  %v2283 = vsub.f32 %v1250, %v2254
  %v2284 = vsub.f32 %v1251, %v2254
  %v2285 = vsub.f32 %v1252, %v2254
  %v2286 = vsub.f32 %v1253, %v2254
  %v2287 = vsub.f32 %v1254, %v2254
  %v2288 = vsub.f32 %v1255, %v2254
  %v2289 = vsub.f32 %v1256, %v2254
  %v2290 = vsub.f32 %v1257, %v2254
  %v2291 = vsub.f32 %v1258, %v2254
  %v2292 = vsub.f32 %v1259, %v2254
  %v2293 = vsub.f32 %v1260, %v2254
  %v2294 = vsub.f32 %v1261, %v2254
  %v2295 = vsub.f32 %v1262, %v2254
  %v2296 = vsub.f32 %v1263, %v2254
  %v2297 = vsub.f32 %v1264, %v2254
  %v2298 = vsub.f32 %v1265, %v2254
  %v2299 = vsub.f32 %v1266, %v2254
  %v2300 = vsub.f32 %v1267, %v2254
  %v2301 = vsub.f32 %v1268, %v2254
  %v2302 = vsub.f32 %v1269, %v2254
  %v2303 = vsub.f32 %v1270, %v2254
  %v2304 = vsub.f32 %v1271, %v2254
  %v2305 = vsub.f32 %v1272, %v2254
  %v2306 = vsub.f32 %v1273, %v2254
  %v2307 = vsub.f32 %v1274, %v2254
  %v2308 = vsub.f32 %v1275, %v2254
  %v2309 = vsub.f32 %v1276, %v2254
  %v2310 = vsub.f32 %v1277, %v2254
  %v2311 = vsub.f32 %v1278, %v2254
  %v2312 = vsub.f32 %v1279, %v2254
  %v2313 = vsub.f32 %v1280, %v2254
  %v2314 = vsub.f32 %v1281, %v2254
  %v2315 = vsub.f32 %v1282, %v2254
  %v2316 = vsub.f32 %v1283, %v2254
  %v2317 = vsub.f32 %v1284, %v2254
  %v2318 = vsub.f32 %v1285, %v2254
  %v2319 = vsub.f32 %v1286, %v2254
  %v2320 = vsub.f32 %v1287, %v2254
  %v2321 = vsub.f32 %v1288, %v2254
  %v2322 = vsub.f32 %v1289, %v2254
  %v2323 = vsub.f32 %v1290, %v2254
  %v2324 = vsub.f32 %v1291, %v2254
  %v2325 = vsub.f32 %v1292, %v2254
  %v2326 = vsub.f32 %v1293, %v2254
  %v2327 = vsub.f32 %v1294, %v2254
  %v2328 = vsub.f32 %v1295, %v2254
  %v2329 = vsub.f32 %v1296, %v2254
  %v2330 = vsub.f32 %v1297, %v2254
  %v2331 = vsub.f32 %v1298, %v2254
  %v2332 = vsub.f32 %v1299, %v2254
  %v2333 = vsub.f32 %v1300, %v2254
  %v2334 = vsub.f32 %v1301, %v2254
  %v2335 = vsub.f32 %v1302, %v2254
  %v2336 = vsub.f32 %v1303, %v2254
  %v2337 = vsub.f32 %v1304, %v2254
  %v2338 = vsub.f32 %v1305, %v2254
  %v2339 = vsub.f32 %v1306, %v2254
  %v2340 = vsub.f32 %v1307, %v2254
  %v2341 = vsub.f32 %v1308, %v2254
  %v2342 = vsub.f32 %v1309, %v2254
  %v2343 = vsub.f32 %v1310, %v2254
  %v2344 = vsub.f32 %v1311, %v2254
  %v2345 = vsub.f32 %v1312, %v2254
  %v2346 = vsub.f32 %v1313, %v2254
  %v2347 = vsub.f32 %v1314, %v2254
  %v2348 = vsub.f32 %v1315, %v2254
  %v2349 = vsub.f32 %v1316, %v2254
  %v2350 = vsub.f32 %v1317, %v2254
  %v2351 = vsub.f32 %v1318, %v2254
  %v2352 = vsub.f32 %v1319, %v2254
  %v2353 = vsub.f32 %v1320, %v2254
  %v2354 = vsub.f32 %v1321, %v2254
  %v2355 = vsub.f32 %v1322, %v2254
  %v2356 = vsub.f32 %v1323, %v2254
  %v2357 = vsub.f32 %v1324, %v2254
  %v2358 = vsub.f32 %v1325, %v2254
  %v2359 = vsub.f32 %v1326, %v2254
  %v2360 = vsub.f32 %v1327, %v2254
  %v2361 = vsub.f32 %v1328, %v2254
  %v2362 = vsub.f32 %v1329, %v2254
  %v2363 = vsub.f32 %v1330, %v2254
  %v2364 = vsub.f32 %v1331, %v2254
  %v2365 = vsub.f32 %v1332, %v2254
  %v2366 = vsub.f32 %v1333, %v2254
  %v2367 = vsub.f32 %v1334, %v2254
  %v2368 = vsub.f32 %v1335, %v2254
  %v2369 = vsub.f32 %v1336, %v2254
  %v2370 = vsub.f32 %v1337, %v2254
  %v2371 = vsub.f32 %v1338, %v2254
  %v2372 = vsub.f32 %v1339, %v2254
  %v2373 = vsub.f32 %v1340, %v2254
  %v2374 = vsub.f32 %v1341, %v2254
  %v2375 = vsub.f32 %v1342, %v2254
  %v2376 = vsub.f32 %v1343, %v2254
  %v2377 = vsub.f32 %v1344, %v2254
  %v2378 = vsub.f32 %v1345, %v2254
  %v2379 = vsub.f32 %v1346, %v2254
  %v2380 = vsub.f32 %v1347, %v2254
  %v2381 = vsub.f32 %v1348, %v2254
  %v2382 = vsub.f32 %v1349, %v2254
  %vm2383 = vcmask 253952
  %2384 = vst.msk [vmem:[%s4] sm:$0x1] %vm2383, %v2254
  %v2385 = vmul.f32 %v2255, %v2255
  %v2386 = vmul.f32 %v2256, %v2256
  %v2387 = vmul.f32 %v2257, %v2257
  %v2388 = vmul.f32 %v2258, %v2258
  %v2389 = vmul.f32 %v2259, %v2259
  %v2390 = vmul.f32 %v2260, %v2260
  %v2391 = vmul.f32 %v2261, %v2261
  %v2392 = vmul.f32 %v2262, %v2262
  %v2393 = vmul.f32 %v2263, %v2263
  %v2394 = vmul.f32 %v2264, %v2264
  %v2395 = vmul.f32 %v2265, %v2265
  %v2396 = vmul.f32 %v2266, %v2266
  %v2397 = vmul.f32 %v2267, %v2267
  %v2398 = vmul.f32 %v2268, %v2268
  %v2399 = vmul.f32 %v2269, %v2269
  %v2400 = vmul.f32 %v2270, %v2270
  %v2401 = vmul.f32 %v2271, %v2271
  %v2402 = vmul.f32 %v2272, %v2272
  %v2403 = vmul.f32 %v2273, %v2273
  %v2404 = vmul.f32 %v2274, %v2274
  %v2405 = vmul.f32 %v2275, %v2275
  %v2406 = vmul.f32 %v2276, %v2276
  %v2407 = vmul.f32 %v2277, %v2277
  %v2408 = vmul.f32 %v2278, %v2278
  %v2409 = vmul.f32 %v2279, %v2279
  %v2410 = vmul.f32 %v2280, %v2280
  %v2411 = vmul.f32 %v2281, %v2281
  %v2412 = vmul.f32 %v2282, %v2282
  %v2413 = vmul.f32 %v2283, %v2283
  %v2414 = vmul.f32 %v2284, %v2284
  %v2415 = vmul.f32 %v2285, %v2285
  %v2416 = vmul.f32 %v2286, %v2286
  %v2417 = vmul.f32 %v2287, %v2287
  %v2418 = vmul.f32 %v2288, %v2288
  %v2419 = vmul.f32 %v2289, %v2289
  %v2420 = vmul.f32 %v2290, %v2290
  %v2421 = vmul.f32 %v2291, %v2291
  %v2422 = vmul.f32 %v2292, %v2292
  %v2423 = vmul.f32 %v2293, %v2293
  %v2424 = vmul.f32 %v2294, %v2294
  %v2425 = vmul.f32 %v2295, %v2295
  %v2426 = vmul.f32 %v2296, %v2296
  %v2427 = vmul.f32 %v2297, %v2297
  %v2428 = vmul.f32 %v2298, %v2298
  %v2429 = vmul.f32 %v2299, %v2299
  %v2430 = vmul.f32 %v2300, %v2300
  %v2431 = vmul.f32 %v2301, %v2301
  %v2432 = vmul.f32 %v2302, %v2302
  %v2433 = vmul.f32 %v2303, %v2303
  %v2434 = vmul.f32 %v2304, %v2304
  %v2435 = vmul.f32 %v2305, %v2305
  %v2436 = vmul.f32 %v2306, %v2306
  %v2437 = vmul.f32 %v2307, %v2307
  %v2438 = vmul.f32 %v2308, %v2308
  %v2439 = vmul.f32 %v2309, %v2309
  %v2440 = vmul.f32 %v2310, %v2310
  %v2441 = vmul.f32 %v2311, %v2311
  %v2442 = vmul.f32 %v2312, %v2312
  %v2443 = vmul.f32 %v2313, %v2313
  %v2444 = vmul.f32 %v2314, %v2314
  %v2445 = vmul.f32 %v2315, %v2315
  %v2446 = vmul.f32 %v2316, %v2316
  %v2447 = vmul.f32 %v2317, %v2317
  %v2448 = vmul.f32 %v2318, %v2318
  %v2449 = vmul.f32 %v2319, %v2319
  %v2450 = vmul.f32 %v2320, %v2320
  %v2451 = vmul.f32 %v2321, %v2321
  %v2452 = vmul.f32 %v2322, %v2322
  %v2453 = vmul.f32 %v2323, %v2323
  %v2454 = vmul.f32 %v2324, %v2324
  %v2455 = vmul.f32 %v2325, %v2325
  %v2456 = vmul.f32 %v2326, %v2326
  %v2457 = vmul.f32 %v2327, %v2327
  %v2458 = vmul.f32 %v2328, %v2328
  %v2459 = vmul.f32 %v2329, %v2329
  %v2460 = vmul.f32 %v2330, %v2330
  %v2461 = vmul.f32 %v2331, %v2331
  %v2462 = vmul.f32 %v2332, %v2332
  %v2463 = vmul.f32 %v2333, %v2333
  %v2464 = vmul.f32 %v2334, %v2334
  %v2465 = vmul.f32 %v2335, %v2335
  %v2466 = vmul.f32 %v2336, %v2336
  %v2467 = vmul.f32 %v2337, %v2337
  %v2468 = vmul.f32 %v2338, %v2338
  %v2469 = vmul.f32 %v2339, %v2339
  %v2470 = vmul.f32 %v2340, %v2340
  %v2471 = vmul.f32 %v2341, %v2341
  %v2472 = vmul.f32 %v2342, %v2342
  %v2473 = vmul.f32 %v2343, %v2343
  %v2474 = vmul.f32 %v2344, %v2344
  %v2475 = vmul.f32 %v2345, %v2345
  %v2476 = vmul.f32 %v2346, %v2346
  %v2477 = vmul.f32 %v2347, %v2347
  %v2478 = vmul.f32 %v2348, %v2348
  %v2479 = vmul.f32 %v2349, %v2349
  %v2480 = vmul.f32 %v2350, %v2350
  %v2481 = vmul.f32 %v2351, %v2351
  %v2482 = vmul.f32 %v2352, %v2352
  %v2483 = vmul.f32 %v2353, %v2353
  %v2484 = vmul.f32 %v2354, %v2354
  %v2485 = vmul.f32 %v2355, %v2355
  %v2486 = vmul.f32 %v2356, %v2356
  %v2487 = vmul.f32 %v2357, %v2357
  %v2488 = vmul.f32 %v2358, %v2358
  %v2489 = vmul.f32 %v2359, %v2359
  %v2490 = vmul.f32 %v2360, %v2360
  %v2491 = vmul.f32 %v2361, %v2361
  %v2492 = vmul.f32 %v2362, %v2362
  %v2493 = vmul.f32 %v2363, %v2363
  %v2494 = vmul.f32 %v2364, %v2364
  %v2495 = vmul.f32 %v2365, %v2365
  %v2496 = vmul.f32 %v2366, %v2366
  %v2497 = vmul.f32 %v2367, %v2367
  %v2498 = vmul.f32 %v2368, %v2368
  %v2499 = vmul.f32 %v2369, %v2369
  %v2500 = vmul.f32 %v2370, %v2370
  %v2501 = vmul.f32 %v2371, %v2371
  %v2502 = vmul.f32 %v2372, %v2372
  %v2503 = vmul.f32 %v2373, %v2373
  %v2504 = vmul.f32 %v2374, %v2374
  %v2505 = vmul.f32 %v2375, %v2375
  %v2506 = vmul.f32 %v2376, %v2376
  %v2507 = vmul.f32 %v2377, %v2377
  %v2508 = vmul.f32 %v2378, %v2378
  %v2509 = vmul.f32 %v2379, %v2379
  %v2510 = vmul.f32 %v2380, %v2380
  %v2511 = vmul.f32 %v2381, %v2381
  %v2512 = vmul.f32 %v2382, %v2382
  %v2513 = vsel %vm1991, %v2385, 0.0
  %v2514 = vsel %vm1991, %v2386, 0.0
  %v2515 = vadd.f32 %v2513, %v2514
  %v2516 = vsel %vm1991, %v2387, 0.0
  %v2517 = vadd.f32 %v2515, %v2516
  %v2518 = vsel %vm1991, %v2388, 0.0
  %v2519 = vadd.f32 %v2517, %v2518
  %v2520 = vsel %vm1991, %v2389, 0.0
  %v2521 = vadd.f32 %v2519, %v2520
  %v2522 = vsel %vm1991, %v2390, 0.0
  %v2523 = vadd.f32 %v2521, %v2522
  %v2524 = vsel %vm1991, %v2391, 0.0
  %v2525 = vadd.f32 %v2523, %v2524
  %v2526 = vsel %vm1991, %v2392, 0.0
  %v2527 = vadd.f32 %v2525, %v2526
  %v2528 = vsel %vm1991, %v2393, 0.0
  %v2529 = vadd.f32 %v2527, %v2528
  %v2530 = vsel %vm1991, %v2394, 0.0
  %v2531 = vadd.f32 %v2529, %v2530
  %v2532 = vsel %vm1991, %v2395, 0.0
  %v2533 = vadd.f32 %v2531, %v2532
  %v2534 = vsel %vm1991, %v2396, 0.0
  %v2535 = vadd.f32 %v2533, %v2534
  %v2536 = vsel %vm1991, %v2397, 0.0
  %v2537 = vadd.f32 %v2535, %v2536
  %v2538 = vsel %vm1991, %v2398, 0.0
  %v2539 = vadd.f32 %v2537, %v2538
  %v2540 = vsel %vm1991, %v2399, 0.0
  %v2541 = vadd.f32 %v2539, %v2540
  %v2542 = vsel %vm1991, %v2400, 0.0
  %v2543 = vadd.f32 %v2541, %v2542
  %v2544 = vsel %vm1991, %v2401, 0.0
  %v2545 = vadd.f32 %v2543, %v2544
  %v2546 = vsel %vm1991, %v2402, 0.0
  %v2547 = vadd.f32 %v2545, %v2546
  %v2548 = vsel %vm1991, %v2403, 0.0
  %v2549 = vadd.f32 %v2547, %v2548
  %v2550 = vsel %vm1991, %v2404, 0.0
  %v2551 = vadd.f32 %v2549, %v2550
  %v2552 = vsel %vm1991, %v2405, 0.0
  %v2553 = vadd.f32 %v2551, %v2552
  %v2554 = vsel %vm1991, %v2406, 0.0
  %v2555 = vadd.f32 %v2553, %v2554
  %v2556 = vsel %vm1991, %v2407, 0.0
  %v2557 = vadd.f32 %v2555, %v2556
  %v2558 = vsel %vm1991, %v2408, 0.0
  %v2559 = vadd.f32 %v2557, %v2558
  %v2560 = vsel %vm1991, %v2409, 0.0
  %v2561 = vadd.f32 %v2559, %v2560
  %v2562 = vsel %vm1991, %v2410, 0.0
  %v2563 = vadd.f32 %v2561, %v2562
  %v2564 = vsel %vm1991, %v2411, 0.0
  %v2565 = vadd.f32 %v2563, %v2564
  %v2566 = vsel %vm1991, %v2412, 0.0
  %v2567 = vadd.f32 %v2565, %v2566
  %v2568 = vsel %vm1991, %v2413, 0.0
  %v2569 = vadd.f32 %v2567, %v2568
  %v2570 = vsel %vm1991, %v2414, 0.0
  %v2571 = vadd.f32 %v2569, %v2570
  %v2572 = vsel %vm1991, %v2415, 0.0
  %v2573 = vadd.f32 %v2571, %v2572
  %v2574 = vsel %vm1991, %v2416, 0.0
  %v2575 = vadd.f32 %v2573, %v2574
  %v2576 = vsel %vm1991, %v2417, 0.0
  %v2577 = vadd.f32 %v2575, %v2576
  %v2578 = vsel %vm1991, %v2418, 0.0
  %v2579 = vadd.f32 %v2577, %v2578
  %v2580 = vsel %vm1991, %v2419, 0.0
  %v2581 = vadd.f32 %v2579, %v2580
  %v2582 = vsel %vm1991, %v2420, 0.0
  %v2583 = vadd.f32 %v2581, %v2582
  %v2584 = vsel %vm1991, %v2421, 0.0
  %v2585 = vadd.f32 %v2583, %v2584
  %v2586 = vsel %vm1991, %v2422, 0.0
  %v2587 = vadd.f32 %v2585, %v2586
  %v2588 = vsel %vm1991, %v2423, 0.0
  %v2589 = vadd.f32 %v2587, %v2588
  %v2590 = vsel %vm1991, %v2424, 0.0
  %v2591 = vadd.f32 %v2589, %v2590
  %v2592 = vsel %vm1991, %v2425, 0.0
  %v2593 = vadd.f32 %v2591, %v2592
  %v2594 = vsel %vm1991, %v2426, 0.0
  %v2595 = vadd.f32 %v2593, %v2594
  %v2596 = vsel %vm1991, %v2427, 0.0
  %v2597 = vadd.f32 %v2595, %v2596
  %v2598 = vsel %vm1991, %v2428, 0.0
  %v2599 = vadd.f32 %v2597, %v2598
  %v2600 = vsel %vm1991, %v2429, 0.0
  %v2601 = vadd.f32 %v2599, %v2600
  %v2602 = vsel %vm1991, %v2430, 0.0
  %v2603 = vadd.f32 %v2601, %v2602
  %v2604 = vsel %vm1991, %v2431, 0.0
  %v2605 = vadd.f32 %v2603, %v2604
  %v2606 = vsel %vm1991, %v2432, 0.0
  %v2607 = vadd.f32 %v2605, %v2606
  %v2608 = vsel %vm1991, %v2433, 0.0
  %v2609 = vadd.f32 %v2607, %v2608
  %v2610 = vsel %vm1991, %v2434, 0.0
  %v2611 = vadd.f32 %v2609, %v2610
  %v2612 = vsel %vm1991, %v2435, 0.0
  %v2613 = vadd.f32 %v2611, %v2612
  %v2614 = vsel %vm1991, %v2436, 0.0
  %v2615 = vadd.f32 %v2613, %v2614
  %v2616 = vsel %vm1991, %v2437, 0.0
  %v2617 = vadd.f32 %v2615, %v2616
  %v2618 = vsel %vm1991, %v2438, 0.0
  %v2619 = vadd.f32 %v2617, %v2618
  %v2620 = vsel %vm1991, %v2439, 0.0
  %v2621 = vadd.f32 %v2619, %v2620
  %v2622 = vsel %vm1991, %v2440, 0.0
  %v2623 = vadd.f32 %v2621, %v2622
  %v2624 = vsel %vm1991, %v2441, 0.0
  %v2625 = vadd.f32 %v2623, %v2624
  %v2626 = vsel %vm1991, %v2442, 0.0
  %v2627 = vadd.f32 %v2625, %v2626
  %v2628 = vsel %vm1991, %v2443, 0.0
  %v2629 = vadd.f32 %v2627, %v2628
  %v2630 = vsel %vm1991, %v2444, 0.0
  %v2631 = vadd.f32 %v2629, %v2630
  %v2632 = vsel %vm1991, %v2445, 0.0
  %v2633 = vadd.f32 %v2631, %v2632
  %v2634 = vsel %vm1991, %v2446, 0.0
  %v2635 = vadd.f32 %v2633, %v2634
  %v2636 = vsel %vm1991, %v2447, 0.0
  %v2637 = vadd.f32 %v2635, %v2636
  %v2638 = vsel %vm1991, %v2448, 0.0
  %v2639 = vadd.f32 %v2637, %v2638
  %v2640 = vsel %vm1991, %v2449, 0.0
  %v2641 = vadd.f32 %v2639, %v2640
  %v2642 = vsel %vm1991, %v2450, 0.0
  %v2643 = vadd.f32 %v2641, %v2642
  %v2644 = vsel %vm1991, %v2451, 0.0
  %v2645 = vadd.f32 %v2643, %v2644
  %v2646 = vsel %vm1991, %v2452, 0.0
  %v2647 = vadd.f32 %v2645, %v2646
  %v2648 = vsel %vm1991, %v2453, 0.0
  %v2649 = vadd.f32 %v2647, %v2648
  %v2650 = vsel %vm1991, %v2454, 0.0
  %v2651 = vadd.f32 %v2649, %v2650
  %v2652 = vsel %vm1991, %v2455, 0.0
  %v2653 = vadd.f32 %v2651, %v2652
  %v2654 = vsel %vm1991, %v2456, 0.0
  %v2655 = vadd.f32 %v2653, %v2654
  %v2656 = vsel %vm1991, %v2457, 0.0
  %v2657 = vadd.f32 %v2655, %v2656
  %v2658 = vsel %vm1991, %v2458, 0.0
  %v2659 = vadd.f32 %v2657, %v2658
  %v2660 = vsel %vm1991, %v2459, 0.0
  %v2661 = vadd.f32 %v2659, %v2660
  %v2662 = vsel %vm1991, %v2460, 0.0
  %v2663 = vadd.f32 %v2661, %v2662
  %v2664 = vsel %vm1991, %v2461, 0.0
  %v2665 = vadd.f32 %v2663, %v2664
  %v2666 = vsel %vm1991, %v2462, 0.0
  %v2667 = vadd.f32 %v2665, %v2666
  %v2668 = vsel %vm1991, %v2463, 0.0
  %v2669 = vadd.f32 %v2667, %v2668
  %v2670 = vsel %vm1991, %v2464, 0.0
  %v2671 = vadd.f32 %v2669, %v2670
  %v2672 = vsel %vm1991, %v2465, 0.0
  %v2673 = vadd.f32 %v2671, %v2672
  %v2674 = vsel %vm1991, %v2466, 0.0
  %v2675 = vadd.f32 %v2673, %v2674
  %v2676 = vsel %vm1991, %v2467, 0.0
  %v2677 = vadd.f32 %v2675, %v2676
  %v2678 = vsel %vm1991, %v2468, 0.0
  %v2679 = vadd.f32 %v2677, %v2678
  %v2680 = vsel %vm1991, %v2469, 0.0
  %v2681 = vadd.f32 %v2679, %v2680
  %v2682 = vsel %vm1991, %v2470, 0.0
  %v2683 = vadd.f32 %v2681, %v2682
  %v2684 = vsel %vm1991, %v2471, 0.0
  %v2685 = vadd.f32 %v2683, %v2684
  %v2686 = vsel %vm1991, %v2472, 0.0
  %v2687 = vadd.f32 %v2685, %v2686
  %v2688 = vsel %vm1991, %v2473, 0.0
  %v2689 = vadd.f32 %v2687, %v2688
  %v2690 = vsel %vm1991, %v2474, 0.0
  %v2691 = vadd.f32 %v2689, %v2690
  %v2692 = vsel %vm1991, %v2475, 0.0
  %v2693 = vadd.f32 %v2691, %v2692
  %v2694 = vsel %vm1991, %v2476, 0.0
  %v2695 = vadd.f32 %v2693, %v2694
  %v2696 = vsel %vm1991, %v2477, 0.0
  %v2697 = vadd.f32 %v2695, %v2696
  %v2698 = vsel %vm1991, %v2478, 0.0
  %v2699 = vadd.f32 %v2697, %v2698
  %v2700 = vsel %vm1991, %v2479, 0.0
  %v2701 = vadd.f32 %v2699, %v2700
  %v2702 = vsel %vm1991, %v2480, 0.0
  %v2703 = vadd.f32 %v2701, %v2702
  %v2704 = vsel %vm1991, %v2481, 0.0
  %v2705 = vadd.f32 %v2703, %v2704
  %v2706 = vsel %vm1991, %v2482, 0.0
  %v2707 = vadd.f32 %v2705, %v2706
  %v2708 = vsel %vm1991, %v2483, 0.0
  %v2709 = vadd.f32 %v2707, %v2708
  %v2710 = vsel %vm1991, %v2484, 0.0
  %v2711 = vadd.f32 %v2709, %v2710
  %v2712 = vsel %vm1991, %v2485, 0.0
  %v2713 = vadd.f32 %v2711, %v2712
  %v2714 = vsel %vm1991, %v2486, 0.0
  %v2715 = vadd.f32 %v2713, %v2714
  %v2716 = vsel %vm1991, %v2487, 0.0
  %v2717 = vadd.f32 %v2715, %v2716
  %v2718 = vsel %vm1991, %v2488, 0.0
  %v2719 = vadd.f32 %v2717, %v2718
  %v2720 = vsel %vm1991, %v2489, 0.0
  %v2721 = vadd.f32 %v2719, %v2720
  %v2722 = vsel %vm1991, %v2490, 0.0
  %v2723 = vadd.f32 %v2721, %v2722
  %v2724 = vsel %vm1991, %v2491, 0.0
  %v2725 = vadd.f32 %v2723, %v2724
  %v2726 = vsel %vm1991, %v2492, 0.0
  %v2727 = vadd.f32 %v2725, %v2726
  %v2728 = vsel %vm1991, %v2493, 0.0
  %v2729 = vadd.f32 %v2727, %v2728
  %v2730 = vsel %vm1991, %v2494, 0.0
  %v2731 = vadd.f32 %v2729, %v2730
  %v2732 = vsel %vm1991, %v2495, 0.0
  %v2733 = vadd.f32 %v2731, %v2732
  %v2734 = vsel %vm1991, %v2496, 0.0
  %v2735 = vadd.f32 %v2733, %v2734
  %v2736 = vsel %vm1991, %v2497, 0.0
  %v2737 = vadd.f32 %v2735, %v2736
  %v2738 = vsel %vm1991, %v2498, 0.0
  %v2739 = vadd.f32 %v2737, %v2738
  %v2740 = vsel %vm1991, %v2499, 0.0
  %v2741 = vadd.f32 %v2739, %v2740
  %v2742 = vsel %vm1991, %v2500, 0.0
  %v2743 = vadd.f32 %v2741, %v2742
  %v2744 = vsel %vm1991, %v2501, 0.0
  %v2745 = vadd.f32 %v2743, %v2744
  %v2746 = vsel %vm1991, %v2502, 0.0
  %v2747 = vadd.f32 %v2745, %v2746
  %v2748 = vsel %vm1991, %v2503, 0.0
  %v2749 = vadd.f32 %v2747, %v2748
  %v2750 = vsel %vm1991, %v2504, 0.0
  %v2751 = vadd.f32 %v2749, %v2750
  %v2752 = vsel %vm1991, %v2505, 0.0
  %v2753 = vadd.f32 %v2751, %v2752
  %v2754 = vsel %vm1991, %v2506, 0.0
  %v2755 = vadd.f32 %v2753, %v2754
  %v2756 = vsel %vm1991, %v2507, 0.0
  %v2757 = vadd.f32 %v2755, %v2756
  %v2758 = vsel %vm1991, %v2508, 0.0
  %v2759 = vadd.f32 %v2757, %v2758
  %v2760 = vsel %vm1991, %v2509, 0.0
  %v2761 = vadd.f32 %v2759, %v2760
  %v2762 = vsel %vm1991, %v2510, 0.0
  %v2763 = vadd.f32 %v2761, %v2762
  %v2764 = vsel %vm1991, %v2511, 0.0
  %v2765 = vadd.f32 %v2763, %v2764
  %v2766 = vsel %vm1991, %v2512, 0.0
  %v2767 = vadd.f32 %v2765, %v2766
  %v2768 = vrot.slane %v2767, 4
  %v2769 = vadd.f32 %v2767, %v2768
  %v2770 = vrot.slane %v2769, 2
  %v2771 = vadd.f32 %v2769, %v2770
  %v2772 = vrot.slane %v2771, 1
  %v2773 = vadd.f32 %v2771, %v2772
  %2774 = vst.msk [vmem:[%s5] sm:$0x1] %vm2383, %v2773
  // Predicated region
  $region14: #{encoder_forward.5} parent=0 // pred_check
    _
  $region15: #{encoder_forward.5} parent=0 // pred_check_branch
    %2776 = sbr.rel (0) target = $region17
  $region16: #{encoder_forward.5} parent=0 // pred_region
    _
  $region17: #{encoder_forward.5} parent=0 // pred_fallthru
    _
  // Predicated region
  $region18: #{encoder_forward.5} parent=0 // pred_check
    _
  $region19: #{encoder_forward.5} parent=0 // pred_check_branch
    %2778 = sbr.rel (0) target = $region21
  $region20: #{encoder_forward.5} parent=0 // pred_region
    _
  $region21: #{encoder_forward.5} parent=0 // pred_fallthru
    _
  // Predicated region
  $region22: #{encoder_forward.5} parent=0 // pred_check
    _
  $region23: #{encoder_forward.5} parent=0 // pred_check_branch
    %2780 = sbr.rel (0) target = $region25
  $region24: #{encoder_forward.5} parent=0 // pred_region
    _
  $region25: #{encoder_forward.5} parent=0 // pred_fallthru
    _
  // Predicated region
  $region26: #{encoder_forward.5} parent=0 // pred_check
    _
  $region27: #{encoder_forward.5} parent=0 // pred_check_branch
    %2782 = sbr.rel (0) target = $region29
  $region28: #{encoder_forward.5} parent=0 // pred_region
    _
  $region29: #{encoder_forward.5} parent=0 // pred_fallthru
    _
  // Predicated region
  $region30: #{encoder_forward.5} parent=0 // pred_check
    _
  $region31: #{encoder_forward.5} parent=0 // pred_check_branch
    %2784 = sbr.rel (0) target = $region33
  $region32: #{encoder_forward.5} parent=0 // pred_region
    _
  $region33: #{encoder_forward.5} parent=0 // pred_fallthru
    _
  // Predicated region
  $region34: #{encoder_forward.5} parent=0 // pred_check
    _
  $region35: #{encoder_forward.5} parent=0 // pred_check_branch
    %2786 = sbr.rel (0) target = $region37
  $region36: #{encoder_forward.5} parent=0 // pred_region
    _
  $region37: #{encoder_forward.5} parent=0 // pred_fallthru
    _

// kernel: tile.43
$region0: #{tile.43}
  #allocation0 [shape = 's32[1]{0}', space=sflag, size = 0x4, scoped, tag = 'scoped memory for tile.43']
  %s0 = inlined_call_operand.vmem [shape: f32[32], index: 0, kind: input, shape index: {}]
  %s1 = inlined_call_operand.vmem [shape: f32[4,32], index: 1, kind: output, shape index: {}]
  // Predicated region
  $region2: #{tile.43} parent=0 // pred_check
    _
  $region3: #{tile.43} parent=0 // pred_check_branch
    %3 = sbr.rel (0) target = $region5
  $region4: #{tile.43} parent=0 // pred_region
    _
  $region5: #{tile.43} parent=0 // pred_fallthru
    _
  %v4 = vld [vmem:[%s0] ss:$0 sm:$0xff]
  %5 = vst [vmem:[%s1] sm:$0xf] %v4

// kernel: mul.28
$region0: #{mul.28}
  %s0 = inlined_call_operand.vmem [shape: f32[4,32], index: 0, kind: input, shape index: {}]
  %s1 = inlined_call_operand.vmem [shape: f32[128], index: 1, kind: output, shape index: {}]
  $region1: #{mul.28} parent=0
    #allocation0 [shape = 'u8[4096]{0}', space=vmem, size = 0x1000, scoped, tag = 'scoped mem for output reshape']
    #allocation1 [shape = 'u8[4096]{0}', space=vmem, size = 0x1000, scoped, tag = 'scoped mem for input reshape']
    %s3 = sshllo.u32 0, 4
    %v4 = vld [vmem:[%s0] sm:%s3]
    %5 = vst [vmem:[#allocation1] sm:%s3] %v4
    %v6 = vld [vmem:[#allocation1] sm:$0x1]
    %vm7 = vcmask 261120
    %8 = vst.msk [vmem:[#allocation0] sm:$0x1] %vm7, %v6
    %s9 = scalar_lea.vmem [#allocation1], 3
    %v10 = vld [vmem:[%s9] sm:$0x1]
    %11 = vrot.lane.b32.xlu0 %v10, 96
    %v12 = vpop.permute.xlu0 %11
    %vm13 = vcmask 1048320
    %14 = vst.msk [vmem:[#allocation0] sm:$0x1] %vm13, %v12
    %s15 = scalar_lea.vmem [#allocation1], 2
    %v16 = vld [vmem:[%s15] sm:$0x1]
    %17 = vrot.lane.b32.xlu0 %v16, 64
    %v18 = vpop.permute.xlu0 %17
    %vm19 = vcmask 785920
    %20 = vst.msk [vmem:[#allocation0] sm:$0x1] %vm19, %v18
    %s21 = scalar_lea.vmem [#allocation1], 1
    %v22 = vld [vmem:[%s21] sm:$0x1]
    %23 = vrot.lane.b32.xlu0 %v22, 32
    %v24 = vpop.permute.xlu0 %23
    %vm25 = vcmask 523520
    %26 = vst.msk [vmem:[#allocation0] sm:$0x1] %vm25, %v24
    %s28 = sshllo.u32 0, 1
    %v30 = vld [vmem:[#allocation0] sm:%s28]
    %s31 = sshllo.u32 0, 1
    %32 = vst [vmem:[%s1] sm:%s31] %v30

// kernel: encoder_forward.6
$region0: #{encoder_forward.6}
  #allocation0 [shape = 'u32[]', space=smem, size = 0x4, offset = 0x4, fixed_abs, tag = 'smem constant byte address 0x4 - core index']
  #allocation1 [shape = 'u32[144,128]{1,0:T(1,128)}', space=vmem, size = 0x12000, scoped, tag = 'internal scratch']
  %s0 = inlined_call_operand.vmem [shape: bf16[256,128], index: 0, kind: input, shape index: {}]
  %s1 = inlined_call_operand.vmem [shape: bf16[128,64], index: 1, kind: input, shape index: {}]
  %s2 = inlined_call_operand.vmem [shape: f32[1,64], index: 2, kind: input, shape index: {}]
  %s3 = inlined_call_operand.vmem [shape: bf16[256,64], index: 3, kind: output, shape index: {0}]
  %s4 = inlined_call_operand.vmem [shape: f32[1,1,64], index: 4, kind: output, shape index: {1}]
  %s5 = inlined_call_operand.vmem [shape: f32[1,1,64], index: 5, kind: output, shape index: {2}]
  %6 = xla_tuple %s3, %s4, %s5
  %s7 = sld [smem:[#allocation0]]
  $region38: #{encoder_forward.6} parent=0
    _
  %s9 = ssub.s32 1, %s7
  %s10 = scalar_select 0, %s9, %s7
  // Predicated region
  $region2: #{encoder_forward.6} parent=0 // pred_check
    _
  $region3: #{encoder_forward.6} parent=0 // pred_check_branch
    %12 = sbr.rel (0) target = $region5
  $region4: #{encoder_forward.6} parent=0 // pred_region
    _
  $region5: #{encoder_forward.6} parent=0 // pred_fallthru
    _
  // Predicated region
  $region6: #{encoder_forward.6} parent=0 // pred_check
    _
  $region7: #{encoder_forward.6} parent=0 // pred_check_branch
    %14 = sbr.rel (0) target = $region9
  $region8: #{encoder_forward.6} parent=0 // pred_region
    _
  $region9: #{encoder_forward.6} parent=0 // pred_fallthru
    _
  // Predicated region
  $region10: #{encoder_forward.6} parent=0 // pred_check
    _
  $region11: #{encoder_forward.6} parent=0 // pred_check_branch
    %16 = sbr.rel (0) target = $region13
  $region12: #{encoder_forward.6} parent=0 // pred_region
    _
  $region13: #{encoder_forward.6} parent=0 // pred_fallthru
    _
  %v18 = vld [vmem:[%s0] sm:$0xf]
  %v19 = vld [vmem:[%s0 + $0x4] sm:$0xf]
  %v20 = vld [vmem:[%s0 + $0x8] sm:$0xf]
  %v21 = vld [vmem:[%s0 + $0xc] sm:$0xf]
  %v22 = vld [vmem:[%s0 + $0x10] sm:$0xf]
  %v23 = vld [vmem:[%s0 + $0x14] sm:$0xf]
  %v24 = vld [vmem:[%s0 + $0x18] sm:$0xf]
  %v25 = vld [vmem:[%s0 + $0x1c] sm:$0xf]
  %v26 = vld [vmem:[%s0 + $0x20] sm:$0xf]
  %v27 = vld [vmem:[%s0 + $0x24] sm:$0xf]
  %v28 = vld [vmem:[%s0 + $0x28] sm:$0xf]
  %v29 = vld [vmem:[%s0 + $0x2c] sm:$0xf]
  %v30 = vld [vmem:[%s0 + $0x30] sm:$0xf]
  %v31 = vld [vmem:[%s0 + $0x34] sm:$0xf]
  %v32 = vld [vmem:[%s0 + $0x38] sm:$0xf]
  %v33 = vld [vmem:[%s0 + $0x3c] sm:$0xf]
  %v34 = vld [vmem:[%s0 + $0x40] sm:$0xf]
  %v35 = vld [vmem:[%s0 + $0x44] sm:$0xf]
  %v36 = vld [vmem:[%s0 + $0x48] sm:$0xf]
  %v37 = vld [vmem:[%s0 + $0x4c] sm:$0xf]
  %v38 = vld [vmem:[%s0 + $0x50] sm:$0xf]
  %v39 = vld [vmem:[%s0 + $0x54] sm:$0xf]
  %v40 = vld [vmem:[%s0 + $0x58] sm:$0xf]
  %v41 = vld [vmem:[%s0 + $0x5c] sm:$0xf]
  %v42 = vld [vmem:[%s0 + $0x60] sm:$0xf]
  %v43 = vld [vmem:[%s0 + $0x64] sm:$0xf]
  %v44 = vld [vmem:[%s0 + $0x68] sm:$0xf]
  %v45 = vld [vmem:[%s0 + $0x6c] sm:$0xf]
  %v46 = vld [vmem:[%s0 + $0x70] sm:$0xf]
  %v47 = vld [vmem:[%s0 + $0x74] sm:$0xf]
  %v48 = vld [vmem:[%s0 + $0x78] sm:$0xf]
  %v49 = vld [vmem:[%s0 + $0x7c] sm:$0xf]
  %v50 = vld [vmem:[%s1] sm:$0xf]
  %v51 = vld [vmem:[%s1 + $0x4] sm:$0xf]
  %v52 = vld [vmem:[%s1 + $0x8] sm:$0xf]
  %v53 = vld [vmem:[%s1 + $0xc] sm:$0xf]
  %v54 = vld [vmem:[%s1 + $0x10] sm:$0xf]
  %v55 = vld [vmem:[%s1 + $0x14] sm:$0xf]
  %v56 = vld [vmem:[%s1 + $0x18] sm:$0xf]
  %v57 = vld [vmem:[%s1 + $0x1c] sm:$0xf]
  %v58 = vld [vmem:[%s1 + $0x20] sm:$0xf]
  %v59 = vld [vmem:[%s1 + $0x24] sm:$0xf]
  %v60 = vld [vmem:[%s1 + $0x28] sm:$0xf]
  %v61 = vld [vmem:[%s1 + $0x2c] sm:$0xf]
  %v62 = vld [vmem:[%s1 + $0x30] sm:$0xf]
  %v63 = vld [vmem:[%s1 + $0x34] sm:$0xf]
  %v64 = vld [vmem:[%s1 + $0x38] sm:$0xf]
  %v65 = vld [vmem:[%s1 + $0x3c] sm:$0xf]
  %v66 = vld [vmem:[%s2] sm:$0x1]
  %v68 = vlaneseq
  %v69 = vshrl.u32 %v68, 7
  %v70 = vsub.s32 0, %v69
  %v71 = vrot.slane %v66, %v70
  %v105 = vunpack.c.l.b16 %v18
  %v106 = vunpack.c.l.b16 %v19
  %v107 = vunpack.c.l.b16 %v20
  %v108 = vunpack.c.l.b16 %v21
  %v109 = vunpack.c.l.b16 %v22
  %v110 = vunpack.c.l.b16 %v23
  %v111 = vunpack.c.l.b16 %v24
  %v112 = vunpack.c.l.b16 %v25
  %v113 = vunpack.c.l.b16 %v26
  %v114 = vunpack.c.l.b16 %v27
  %v115 = vunpack.c.l.b16 %v28
  %v116 = vunpack.c.l.b16 %v29
  %v117 = vunpack.c.l.b16 %v30
  %v118 = vunpack.c.l.b16 %v31
  %v119 = vunpack.c.l.b16 %v32
  %v120 = vunpack.c.l.b16 %v33
  %v121 = vunpack.c.l.b16 %v34
  %v122 = vunpack.c.l.b16 %v35
  %v123 = vunpack.c.l.b16 %v36
  %v124 = vunpack.c.l.b16 %v37
  %v125 = vunpack.c.l.b16 %v38
  %v126 = vunpack.c.l.b16 %v39
  %v127 = vunpack.c.l.b16 %v40
  %v128 = vunpack.c.l.b16 %v41
  %v129 = vunpack.c.l.b16 %v42
  %v130 = vunpack.c.l.b16 %v43
  %v131 = vunpack.c.l.b16 %v44
  %v132 = vunpack.c.l.b16 %v45
  %v133 = vunpack.c.l.b16 %v46
  %v134 = vunpack.c.l.b16 %v47
  %v135 = vunpack.c.l.b16 %v48
  %v136 = vunpack.c.l.b16 %v49
  %v137 = vpack.c.b16 %v106, %v105
  %v138 = vpack.c.b16 %v108, %v107
  %v139 = vpack.c.b16 %v110, %v109
  %v140 = vpack.c.b16 %v112, %v111
  %v141 = vpack.c.b16 %v114, %v113
  %v142 = vpack.c.b16 %v116, %v115
  %v143 = vpack.c.b16 %v118, %v117
  %v144 = vpack.c.b16 %v120, %v119
  %v145 = vpack.c.b16 %v122, %v121
  %v146 = vpack.c.b16 %v124, %v123
  %v147 = vpack.c.b16 %v126, %v125
  %v148 = vpack.c.b16 %v128, %v127
  %v149 = vpack.c.b16 %v130, %v129
  %v150 = vpack.c.b16 %v132, %v131
  %v151 = vpack.c.b16 %v134, %v133
  %v152 = vpack.c.b16 %v136, %v135
  %v185 = vunpack.c.l.b16 %v50
  %v186 = vunpack.c.l.b16 %v51
  %v187 = vunpack.c.l.b16 %v52
  %v188 = vunpack.c.l.b16 %v53
  %v189 = vunpack.c.l.b16 %v54
  %v190 = vunpack.c.l.b16 %v55
  %v191 = vunpack.c.l.b16 %v56
  %v192 = vunpack.c.l.b16 %v57
  %v193 = vunpack.c.l.b16 %v58
  %v194 = vunpack.c.l.b16 %v59
  %v195 = vunpack.c.l.b16 %v60
  %v196 = vunpack.c.l.b16 %v61
  %v197 = vunpack.c.l.b16 %v62
  %v198 = vunpack.c.l.b16 %v63
  %v199 = vunpack.c.l.b16 %v64
  %v200 = vunpack.c.l.b16 %v65
  %v201 = vpack.c.b16 %v186, %v185
  %v202 = vpack.c.b16 %v188, %v187
  %v203 = vpack.c.b16 %v190, %v189
  %v204 = vpack.c.b16 %v192, %v191
  %v205 = vpack.c.b16 %v194, %v193
  %v206 = vpack.c.b16 %v196, %v195
  %v207 = vpack.c.b16 %v198, %v197
  %v208 = vpack.c.b16 %v200, %v199
  %217 = vmatprep.subr.bf16.mxu0 0
  %218 = vmatpush1.bf16.msra.mxu0 %v201
  %219 = vmatprep.subr.bf16.mxu0 0
  %220 = vmatpush1.bf16.msra.mxu0 %v202
  %221 = vmatprep.subr.bf16.mxu0 0
  %222 = vmatpush1.bf16.msra.mxu0 %v203
  %223 = vmatprep.subr.bf16.mxu0 0
  %224 = vmatpush1.bf16.msra.mxu0 %v204
  %225 = vmatprep.subr.bf16.mxu0 0
  %226 = vmatpush1.bf16.msra.mxu0 %v205
  %227 = vmatprep.subr.bf16.mxu0 0
  %228 = vmatpush1.bf16.msra.mxu0 %v206
  %229 = vmatprep.subr.bf16.mxu0 0
  %230 = vmatpush1.bf16.msra.mxu0 %v207
  %231 = vmatprep.subr.bf16.mxu0 0
  %232 = vmatpush1.bf16.msra.mxu0 %v208
  %233 = vmatprep.subr.bf16.mxu0 0
  %234 = vmatpush1.bf16.msra.mxu0 0
  %235 = vmatprep.subr.bf16.mxu0 0
  %236 = vmatpush1.bf16.msra.mxu0 0
  %237 = vmatprep.subr.bf16.mxu0 0
  %238 = vmatpush1.bf16.msra.mxu0 0
  %239 = vmatprep.subr.bf16.mxu0 0
  %240 = vmatpush1.bf16.msra.mxu0 0
  %241 = vmatprep.subr.bf16.mxu0 0
  %242 = vmatpush1.bf16.msra.mxu0 0
  %243 = vmatprep.subr.bf16.mxu0 0
  %244 = vmatpush1.bf16.msra.mxu0 0
  %245 = vmatprep.subr.bf16.mxu0 0
  %246 = vmatpush1.bf16.msra.mxu0 0
  %247 = vmatprep.subr.bf16.mxu0 0
  %248 = vmatpush1.bf16.msra.mxu0 0
  %249 = vmatprep.mubr.bf16.mxu0 0
  %250 = vmatmul.mubr.bf16.gmra.mrb[0].mxu0 %v137
  %v251 = vpop.f32.mrb[0].mxu0
  %v252 = vadd.f32 %v71, %v251
  %v253 = vpop.f32.mrb[0].mxu0
  %v254 = vpop.f32.mrb[0].mxu0
  %v255 = vadd.f32 %v71, %v254
  %v256 = vpop.f32.mrb[0].mxu0
  %257 = vmatprep.mubr.bf16.mxu0 0
  %258 = vmatmul.mubr.bf16.gmra.mrb[0].mxu0 %v138
  %v259 = vpop.f32.mrb[0].mxu0
  %v260 = vadd.f32 %v71, %v259
  %v261 = vpop.f32.mrb[0].mxu0
  %v262 = vpop.f32.mrb[0].mxu0
  %v263 = vadd.f32 %v71, %v262
  %v264 = vpop.f32.mrb[0].mxu0
  %265 = vmatprep.mubr.bf16.mxu0 0
  %266 = vmatmul.mubr.bf16.gmra.mrb[0].mxu0 %v139
  %v267 = vpop.f32.mrb[0].mxu0
  %v268 = vadd.f32 %v71, %v267
  %v269 = vpop.f32.mrb[0].mxu0
  %v270 = vpop.f32.mrb[0].mxu0
  %v271 = vadd.f32 %v71, %v270
  %v272 = vpop.f32.mrb[0].mxu0
  %273 = vmatprep.mubr.bf16.mxu0 0
  %274 = vmatmul.mubr.bf16.gmra.mrb[0].mxu0 %v140
  %v275 = vpop.f32.mrb[0].mxu0
  %v276 = vadd.f32 %v71, %v275
  %v277 = vpop.f32.mrb[0].mxu0
  %v278 = vpop.f32.mrb[0].mxu0
  %v279 = vadd.f32 %v71, %v278
  %v280 = vpop.f32.mrb[0].mxu0
  %281 = vmatprep.mubr.bf16.mxu0 0
  %282 = vmatmul.mubr.bf16.gmra.mrb[0].mxu0 %v141
  %v283 = vpop.f32.mrb[0].mxu0
  %v284 = vadd.f32 %v71, %v283
  %v285 = vpop.f32.mrb[0].mxu0
  %v286 = vpop.f32.mrb[0].mxu0
  %v287 = vadd.f32 %v71, %v286
  %v288 = vpop.f32.mrb[0].mxu0
  %289 = vmatprep.mubr.bf16.mxu0 0
  %290 = vmatmul.mubr.bf16.gmra.mrb[0].mxu0 %v142
  %v291 = vpop.f32.mrb[0].mxu0
  %v292 = vadd.f32 %v71, %v291
  %v293 = vpop.f32.mrb[0].mxu0
  %v294 = vpop.f32.mrb[0].mxu0
  %v295 = vadd.f32 %v71, %v294
  %v296 = vpop.f32.mrb[0].mxu0
  %297 = vmatprep.mubr.bf16.mxu0 0
  %298 = vmatmul.mubr.bf16.gmra.mrb[0].mxu0 %v143
  %v299 = vpop.f32.mrb[0].mxu0
  %v300 = vadd.f32 %v71, %v299
  %v301 = vpop.f32.mrb[0].mxu0
  %v302 = vpop.f32.mrb[0].mxu0
  %v303 = vadd.f32 %v71, %v302
  %v304 = vpop.f32.mrb[0].mxu0
  %305 = vmatprep.mubr.bf16.mxu0 0
  %306 = vmatmul.mubr.bf16.gmra.mrb[0].mxu0 %v144
  %v307 = vpop.f32.mrb[0].mxu0
  %v308 = vadd.f32 %v71, %v307
  %v309 = vpop.f32.mrb[0].mxu0
  %v310 = vpop.f32.mrb[0].mxu0
  %v311 = vadd.f32 %v71, %v310
  %v312 = vpop.f32.mrb[0].mxu0
  %313 = vmatprep.mubr.bf16.mxu0 0
  %314 = vmatmul.mubr.bf16.gmra.mrb[0].mxu0 %v145
  %v315 = vpop.f32.mrb[0].mxu0
  %v316 = vadd.f32 %v71, %v315
  %v317 = vpop.f32.mrb[0].mxu0
  %v318 = vpop.f32.mrb[0].mxu0
  %v319 = vadd.f32 %v71, %v318
  %v320 = vpop.f32.mrb[0].mxu0
  %321 = vmatprep.mubr.bf16.mxu0 0
  %322 = vmatmul.mubr.bf16.gmra.mrb[0].mxu0 %v146
  %v323 = vpop.f32.mrb[0].mxu0
  %v324 = vadd.f32 %v71, %v323
  %v325 = vpop.f32.mrb[0].mxu0
  %v326 = vpop.f32.mrb[0].mxu0
  %v327 = vadd.f32 %v71, %v326
  %v328 = vpop.f32.mrb[0].mxu0
  %329 = vmatprep.mubr.bf16.mxu0 0
  %330 = vmatmul.mubr.bf16.gmra.mrb[0].mxu0 %v147
  %v331 = vpop.f32.mrb[0].mxu0
  %v332 = vadd.f32 %v71, %v331
  %v333 = vpop.f32.mrb[0].mxu0
  %v334 = vpop.f32.mrb[0].mxu0
  %v335 = vadd.f32 %v71, %v334
  %v336 = vpop.f32.mrb[0].mxu0
  %337 = vmatprep.mubr.bf16.mxu0 0
  %338 = vmatmul.mubr.bf16.gmra.mrb[0].mxu0 %v148
  %v339 = vpop.f32.mrb[0].mxu0
  %v340 = vadd.f32 %v71, %v339
  %v341 = vpop.f32.mrb[0].mxu0
  %v342 = vpop.f32.mrb[0].mxu0
  %v343 = vadd.f32 %v71, %v342
  %v344 = vpop.f32.mrb[0].mxu0
  %345 = vmatprep.mubr.bf16.mxu0 0
  %346 = vmatmul.mubr.bf16.gmra.mrb[0].mxu0 %v149
  %v347 = vpop.f32.mrb[0].mxu0
  %v348 = vadd.f32 %v71, %v347
  %v349 = vpop.f32.mrb[0].mxu0
  %v350 = vpop.f32.mrb[0].mxu0
  %v351 = vadd.f32 %v71, %v350
  %v352 = vpop.f32.mrb[0].mxu0
  %353 = vmatprep.mubr.bf16.mxu0 0
  %354 = vmatmul.mubr.bf16.gmra.mrb[0].mxu0 %v150
  %v355 = vpop.f32.mrb[0].mxu0
  %v356 = vadd.f32 %v71, %v355
  %v357 = vpop.f32.mrb[0].mxu0
  %v358 = vpop.f32.mrb[0].mxu0
  %v359 = vadd.f32 %v71, %v358
  %v360 = vpop.f32.mrb[0].mxu0
  %361 = vmatprep.mubr.bf16.mxu0 0
  %362 = vmatmul.mubr.bf16.gmra.mrb[0].mxu0 %v151
  %v363 = vpop.f32.mrb[0].mxu0
  %v364 = vadd.f32 %v71, %v363
  %v365 = vpop.f32.mrb[0].mxu0
  %v366 = vpop.f32.mrb[0].mxu0
  %v367 = vadd.f32 %v71, %v366
  %v368 = vpop.f32.mrb[0].mxu0
  %369 = vmatprep.mubr.bf16.mxu0 0
  %370 = vmatmul.mubr.bf16.gmra.mrb[0].mxu0 %v152
  %v371 = vpop.f32.mrb[0].mxu0
  %v372 = vadd.f32 %v71, %v371
  %v373 = vpop.f32.mrb[0].mxu0
  %v374 = vpop.f32.mrb[0].mxu0
  %v375 = vadd.f32 %v71, %v374
  %v376 = vpop.f32.mrb[0].mxu0
  %377 = vdwg.mxu0
  %v378 = vmax.f32 %v252, 0.0
  %v379 = vmax.f32 %v255, 0.0
  %v380 = vmax.f32 %v260, 0.0
  %v381 = vmax.f32 %v263, 0.0
  %v382 = vmax.f32 %v268, 0.0
  %v383 = vmax.f32 %v271, 0.0
  %v384 = vmax.f32 %v276, 0.0
  %v385 = vmax.f32 %v279, 0.0
  %v386 = vmax.f32 %v284, 0.0
  %v387 = vmax.f32 %v287, 0.0
  %v388 = vmax.f32 %v292, 0.0
  %v389 = vmax.f32 %v295, 0.0
  %v390 = vmax.f32 %v300, 0.0
  %v391 = vmax.f32 %v303, 0.0
  %v392 = vmax.f32 %v308, 0.0
  %v393 = vmax.f32 %v311, 0.0
  %v394 = vmax.f32 %v316, 0.0
  %v395 = vmax.f32 %v319, 0.0
  %v396 = vmax.f32 %v324, 0.0
  %v397 = vmax.f32 %v327, 0.0
  %v398 = vmax.f32 %v332, 0.0
  %v399 = vmax.f32 %v335, 0.0
  %v400 = vmax.f32 %v340, 0.0
  %v401 = vmax.f32 %v343, 0.0
  %v402 = vmax.f32 %v348, 0.0
  %v403 = vmax.f32 %v351, 0.0
  %v404 = vmax.f32 %v356, 0.0
  %v405 = vmax.f32 %v359, 0.0
  %v406 = vmax.f32 %v364, 0.0
  %v407 = vmax.f32 %v367, 0.0
  %v408 = vmax.f32 %v372, 0.0
  %v409 = vmax.f32 %v375, 0.0
  %v410 = vpack.c.bf16 %v379, %v378
  %v411 = vpack.c.bf16 %v381, %v380
  %v412 = vpack.c.bf16 %v383, %v382
  %v413 = vpack.c.bf16 %v385, %v384
  %v414 = vpack.c.bf16 %v387, %v386
  %v415 = vpack.c.bf16 %v389, %v388
  %v416 = vpack.c.bf16 %v391, %v390
  %v417 = vpack.c.bf16 %v393, %v392
  %v418 = vpack.c.bf16 %v395, %v394
  %v419 = vpack.c.bf16 %v397, %v396
  %v420 = vpack.c.bf16 %v399, %v398
  %v421 = vpack.c.bf16 %v401, %v400
  %v422 = vpack.c.bf16 %v403, %v402
  %v423 = vpack.c.bf16 %v405, %v404
  %v424 = vpack.c.bf16 %v407, %v406
  %v425 = vpack.c.bf16 %v409, %v408
  %v442 = vunpack.c.l.b16 %v410
  %v443 = vunpack.c.h.b16 %v410
  %v444 = vunpack.c.l.b16 %v411
  %v445 = vunpack.c.h.b16 %v411
  %v446 = vunpack.c.l.b16 %v412
  %v447 = vunpack.c.h.b16 %v412
  %v448 = vunpack.c.l.b16 %v413
  %v449 = vunpack.c.h.b16 %v413
  %v450 = vunpack.c.l.b16 %v414
  %v451 = vunpack.c.h.b16 %v414
  %v452 = vunpack.c.l.b16 %v415
  %v453 = vunpack.c.h.b16 %v415
  %v454 = vunpack.c.l.b16 %v416
  %v455 = vunpack.c.h.b16 %v416
  %v456 = vunpack.c.l.b16 %v417
  %v457 = vunpack.c.h.b16 %v417
  %v458 = vunpack.c.l.b16 %v418
  %v459 = vunpack.c.h.b16 %v418
  %v460 = vunpack.c.l.b16 %v419
  %v461 = vunpack.c.h.b16 %v419
  %v462 = vunpack.c.l.b16 %v420
  %v463 = vunpack.c.h.b16 %v420
  %v464 = vunpack.c.l.b16 %v421
  %v465 = vunpack.c.h.b16 %v421
  %v466 = vunpack.c.l.b16 %v422
  %v467 = vunpack.c.h.b16 %v422
  %v468 = vunpack.c.l.b16 %v423
  %v469 = vunpack.c.h.b16 %v423
  %v470 = vunpack.c.l.b16 %v424
  %v471 = vunpack.c.h.b16 %v424
  %v472 = vunpack.c.l.b16 %v425
  %v473 = vunpack.c.h.b16 %v425
  %v474 = vpack.c.b16 %v442, %v442
  %v475 = vpack.c.b16 %v443, %v443
  %v476 = vpack.c.b16 %v444, %v444
  %v477 = vpack.c.b16 %v445, %v445
  %v478 = vpack.c.b16 %v446, %v446
  %v479 = vpack.c.b16 %v447, %v447
  %v480 = vpack.c.b16 %v448, %v448
  %v481 = vpack.c.b16 %v449, %v449
  %v482 = vpack.c.b16 %v450, %v450
  %v483 = vpack.c.b16 %v451, %v451
  %v484 = vpack.c.b16 %v452, %v452
  %v485 = vpack.c.b16 %v453, %v453
  %v486 = vpack.c.b16 %v454, %v454
  %v487 = vpack.c.b16 %v455, %v455
  %v488 = vpack.c.b16 %v456, %v456
  %v489 = vpack.c.b16 %v457, %v457
  %v490 = vpack.c.b16 %v458, %v458
  %v491 = vpack.c.b16 %v459, %v459
  %v492 = vpack.c.b16 %v460, %v460
  %v493 = vpack.c.b16 %v461, %v461
  %v494 = vpack.c.b16 %v462, %v462
  %v495 = vpack.c.b16 %v463, %v463
  %v496 = vpack.c.b16 %v464, %v464
  %v497 = vpack.c.b16 %v465, %v465
  %v498 = vpack.c.b16 %v466, %v466
  %v499 = vpack.c.b16 %v467, %v467
  %v500 = vpack.c.b16 %v468, %v468
  %v501 = vpack.c.b16 %v469, %v469
  %v502 = vpack.c.b16 %v470, %v470
  %v503 = vpack.c.b16 %v471, %v471
  %v504 = vpack.c.b16 %v472, %v472
  %v505 = vpack.c.b16 %v473, %v473
  %vm538 = vcmask 519168
  %539 = vst.msk [vmem:[%s3] sm:$0xf] %vm538, %v474
  %540 = vst.msk [vmem:[%s3 + $0x4] sm:$0xf] %vm538, %v475
  %541 = vst.msk [vmem:[%s3 + $0x8] sm:$0xf] %vm538, %v476
  %542 = vst.msk [vmem:[%s3 + $0xc] sm:$0xf] %vm538, %v477
  %543 = vst.msk [vmem:[%s3 + $0x10] sm:$0xf] %vm538, %v478
  %544 = vst.msk [vmem:[%s3 + $0x14] sm:$0xf] %vm538, %v479
  %545 = vst.msk [vmem:[%s3 + $0x18] sm:$0xf] %vm538, %v480
  %546 = vst.msk [vmem:[%s3 + $0x1c] sm:$0xf] %vm538, %v481
  %547 = vst.msk [vmem:[%s3 + $0x20] sm:$0xf] %vm538, %v482
  %548 = vst.msk [vmem:[%s3 + $0x24] sm:$0xf] %vm538, %v483
  %549 = vst.msk [vmem:[%s3 + $0x28] sm:$0xf] %vm538, %v484
  %550 = vst.msk [vmem:[%s3 + $0x2c] sm:$0xf] %vm538, %v485
  %551 = vst.msk [vmem:[%s3 + $0x30] sm:$0xf] %vm538, %v486
  %552 = vst.msk [vmem:[%s3 + $0x34] sm:$0xf] %vm538, %v487
  %553 = vst.msk [vmem:[%s3 + $0x38] sm:$0xf] %vm538, %v488
  %554 = vst.msk [vmem:[%s3 + $0x3c] sm:$0xf] %vm538, %v489
  %555 = vst.msk [vmem:[%s3 + $0x40] sm:$0xf] %vm538, %v490
  %556 = vst.msk [vmem:[%s3 + $0x44] sm:$0xf] %vm538, %v491
  %557 = vst.msk [vmem:[%s3 + $0x48] sm:$0xf] %vm538, %v492
  %558 = vst.msk [vmem:[%s3 + $0x4c] sm:$0xf] %vm538, %v493
  %559 = vst.msk [vmem:[%s3 + $0x50] sm:$0xf] %vm538, %v494
  %560 = vst.msk [vmem:[%s3 + $0x54] sm:$0xf] %vm538, %v495
  %561 = vst.msk [vmem:[%s3 + $0x58] sm:$0xf] %vm538, %v496
  %562 = vst.msk [vmem:[%s3 + $0x5c] sm:$0xf] %vm538, %v497
  %563 = vst.msk [vmem:[%s3 + $0x60] sm:$0xf] %vm538, %v498
  %564 = vst.msk [vmem:[%s3 + $0x64] sm:$0xf] %vm538, %v499
  %565 = vst.msk [vmem:[%s3 + $0x68] sm:$0xf] %vm538, %v500
  %566 = vst.msk [vmem:[%s3 + $0x6c] sm:$0xf] %vm538, %v501
  %567 = vst.msk [vmem:[%s3 + $0x70] sm:$0xf] %vm538, %v502
  %568 = vst.msk [vmem:[%s3 + $0x74] sm:$0xf] %vm538, %v503
  %569 = vst.msk [vmem:[%s3 + $0x78] sm:$0xf] %vm538, %v504
  %570 = vst.msk [vmem:[%s3 + $0x7c] sm:$0xf] %vm538, %v505
  %vm571 = vcmask 523264
  %v572 = vsel %vm571, %v378, 0.0
  %v573 = vsel %vm571, %v379, 0.0
  %v574 = vadd.f32 %v572, %v573
  %v575 = vsel %vm571, %v380, 0.0
  %v576 = vadd.f32 %v574, %v575
  %v577 = vsel %vm571, %v381, 0.0
  %v578 = vadd.f32 %v576, %v577
  %v579 = vsel %vm571, %v382, 0.0
  %v580 = vadd.f32 %v578, %v579
  %v581 = vsel %vm571, %v383, 0.0
  %v582 = vadd.f32 %v580, %v581
  %v583 = vsel %vm571, %v384, 0.0
  %v584 = vadd.f32 %v582, %v583
  %v585 = vsel %vm571, %v385, 0.0
  %v586 = vadd.f32 %v584, %v585
  %v587 = vsel %vm571, %v386, 0.0
  %v588 = vadd.f32 %v586, %v587
  %v589 = vsel %vm571, %v387, 0.0
  %v590 = vadd.f32 %v588, %v589
  %v591 = vsel %vm571, %v388, 0.0
  %v592 = vadd.f32 %v590, %v591
  %v593 = vsel %vm571, %v389, 0.0
  %v594 = vadd.f32 %v592, %v593
  %v595 = vsel %vm571, %v390, 0.0
  %v596 = vadd.f32 %v594, %v595
  %v597 = vsel %vm571, %v391, 0.0
  %v598 = vadd.f32 %v596, %v597
  %v599 = vsel %vm571, %v392, 0.0
  %v600 = vadd.f32 %v598, %v599
  %v601 = vsel %vm571, %v393, 0.0
  %v602 = vadd.f32 %v600, %v601
  %v603 = vsel %vm571, %v394, 0.0
  %v604 = vadd.f32 %v602, %v603
  %v605 = vsel %vm571, %v395, 0.0
  %v606 = vadd.f32 %v604, %v605
  %v607 = vsel %vm571, %v396, 0.0
  %v608 = vadd.f32 %v606, %v607
  %v609 = vsel %vm571, %v397, 0.0
  %v610 = vadd.f32 %v608, %v609
  %v611 = vsel %vm571, %v398, 0.0
  %v612 = vadd.f32 %v610, %v611
  %v613 = vsel %vm571, %v399, 0.0
  %v614 = vadd.f32 %v612, %v613
  %v615 = vsel %vm571, %v400, 0.0
  %v616 = vadd.f32 %v614, %v615
  %v617 = vsel %vm571, %v401, 0.0
  %v618 = vadd.f32 %v616, %v617
  %v619 = vsel %vm571, %v402, 0.0
  %v620 = vadd.f32 %v618, %v619
  %v621 = vsel %vm571, %v403, 0.0
  %v622 = vadd.f32 %v620, %v621
  %v623 = vsel %vm571, %v404, 0.0
  %v624 = vadd.f32 %v622, %v623
  %v625 = vsel %vm571, %v405, 0.0
  %v626 = vadd.f32 %v624, %v625
  %v627 = vsel %vm571, %v406, 0.0
  %v628 = vadd.f32 %v626, %v627
  %v629 = vsel %vm571, %v407, 0.0
  %v630 = vadd.f32 %v628, %v629
  %v631 = vsel %vm571, %v408, 0.0
  %v632 = vadd.f32 %v630, %v631
  %v633 = vsel %vm571, %v409, 0.0
  %v634 = vadd.f32 %v632, %v633
  %v635 = vrot.slane %v634, 4
  %v636 = vadd.f32 %v634, %v635
  %v637 = vrot.slane %v636, 2
  %v638 = vadd.f32 %v636, %v637
  %v639 = vrot.slane %v638, 1
  %v640 = vadd.f32 %v638, %v639
  %v641 = vrcp.pop 256.0
  %v642 = vmul.f32 %v640, %v641
  %v643 = vsub.f32 %v378, %v642
  %v644 = vsub.f32 %v379, %v642
  %v645 = vsub.f32 %v380, %v642
  %v646 = vsub.f32 %v381, %v642
  %v647 = vsub.f32 %v382, %v642
  %v648 = vsub.f32 %v383, %v642
  %v649 = vsub.f32 %v384, %v642
  %v650 = vsub.f32 %v385, %v642
  %v651 = vsub.f32 %v386, %v642
  %v652 = vsub.f32 %v387, %v642
  %v653 = vsub.f32 %v388, %v642
  %v654 = vsub.f32 %v389, %v642
  %v655 = vsub.f32 %v390, %v642
  %v656 = vsub.f32 %v391, %v642
  %v657 = vsub.f32 %v392, %v642
  %v658 = vsub.f32 %v393, %v642
  %v659 = vsub.f32 %v394, %v642
  %v660 = vsub.f32 %v395, %v642
  %v661 = vsub.f32 %v396, %v642
  %v662 = vsub.f32 %v397, %v642
  %v663 = vsub.f32 %v398, %v642
  %v664 = vsub.f32 %v399, %v642
  %v665 = vsub.f32 %v400, %v642
  %v666 = vsub.f32 %v401, %v642
  %v667 = vsub.f32 %v402, %v642
  %v668 = vsub.f32 %v403, %v642
  %v669 = vsub.f32 %v404, %v642
  %v670 = vsub.f32 %v405, %v642
  %v671 = vsub.f32 %v406, %v642
  %v672 = vsub.f32 %v407, %v642
  %v673 = vsub.f32 %v408, %v642
  %v674 = vsub.f32 %v409, %v642
  %vm675 = vcmask 516096
  %676 = vst.msk [vmem:[%s4] sm:$0x1] %vm675, %v642
  %v677 = vmul.f32 %v643, %v643
  %v678 = vmul.f32 %v644, %v644
  %v679 = vmul.f32 %v645, %v645
  %v680 = vmul.f32 %v646, %v646
  %v681 = vmul.f32 %v647, %v647
  %v682 = vmul.f32 %v648, %v648
  %v683 = vmul.f32 %v649, %v649
  %v684 = vmul.f32 %v650, %v650
  %v685 = vmul.f32 %v651, %v651
  %v686 = vmul.f32 %v652, %v652
  %v687 = vmul.f32 %v653, %v653
  %v688 = vmul.f32 %v654, %v654
  %v689 = vmul.f32 %v655, %v655
  %v690 = vmul.f32 %v656, %v656
  %v691 = vmul.f32 %v657, %v657
  %v692 = vmul.f32 %v658, %v658
  %v693 = vmul.f32 %v659, %v659
  %v694 = vmul.f32 %v660, %v660
  %v695 = vmul.f32 %v661, %v661
  %v696 = vmul.f32 %v662, %v662
  %v697 = vmul.f32 %v663, %v663
  %v698 = vmul.f32 %v664, %v664
  %v699 = vmul.f32 %v665, %v665
  %v700 = vmul.f32 %v666, %v666
  %v701 = vmul.f32 %v667, %v667
  %v702 = vmul.f32 %v668, %v668
  %v703 = vmul.f32 %v669, %v669
  %v704 = vmul.f32 %v670, %v670
  %v705 = vmul.f32 %v671, %v671
  %v706 = vmul.f32 %v672, %v672
  %v707 = vmul.f32 %v673, %v673
  %v708 = vmul.f32 %v674, %v674
  %v709 = vsel %vm571, %v677, 0.0
  %v710 = vsel %vm571, %v678, 0.0
  %v711 = vadd.f32 %v709, %v710
  %v712 = vsel %vm571, %v679, 0.0
  %v713 = vadd.f32 %v711, %v712
  %v714 = vsel %vm571, %v680, 0.0
  %v715 = vadd.f32 %v713, %v714
  %v716 = vsel %vm571, %v681, 0.0
  %v717 = vadd.f32 %v715, %v716
  %v718 = vsel %vm571, %v682, 0.0
  %v719 = vadd.f32 %v717, %v718
  %v720 = vsel %vm571, %v683, 0.0
  %v721 = vadd.f32 %v719, %v720
  %v722 = vsel %vm571, %v684, 0.0
  %v723 = vadd.f32 %v721, %v722
  %v724 = vsel %vm571, %v685, 0.0
  %v725 = vadd.f32 %v723, %v724
  %v726 = vsel %vm571, %v686, 0.0
  %v727 = vadd.f32 %v725, %v726
  %v728 = vsel %vm571, %v687, 0.0
  %v729 = vadd.f32 %v727, %v728
  %v730 = vsel %vm571, %v688, 0.0
  %v731 = vadd.f32 %v729, %v730
  %v732 = vsel %vm571, %v689, 0.0
  %v733 = vadd.f32 %v731, %v732
  %v734 = vsel %vm571, %v690, 0.0
  %v735 = vadd.f32 %v733, %v734
  %v736 = vsel %vm571, %v691, 0.0
  %v737 = vadd.f32 %v735, %v736
  %v738 = vsel %vm571, %v692, 0.0
  %v739 = vadd.f32 %v737, %v738
  %v740 = vsel %vm571, %v693, 0.0
  %v741 = vadd.f32 %v739, %v740
  %v742 = vsel %vm571, %v694, 0.0
  %v743 = vadd.f32 %v741, %v742
  %v744 = vsel %vm571, %v695, 0.0
  %v745 = vadd.f32 %v743, %v744
  %v746 = vsel %vm571, %v696, 0.0
  %v747 = vadd.f32 %v745, %v746
  %v748 = vsel %vm571, %v697, 0.0
  %v749 = vadd.f32 %v747, %v748
  %v750 = vsel %vm571, %v698, 0.0
  %v751 = vadd.f32 %v749, %v750
  %v752 = vsel %vm571, %v699, 0.0
  %v753 = vadd.f32 %v751, %v752
  %v754 = vsel %vm571, %v700, 0.0
  %v755 = vadd.f32 %v753, %v754
  %v756 = vsel %vm571, %v701, 0.0
  %v757 = vadd.f32 %v755, %v756
  %v758 = vsel %vm571, %v702, 0.0
  %v759 = vadd.f32 %v757, %v758
  %v760 = vsel %vm571, %v703, 0.0
  %v761 = vadd.f32 %v759, %v760
  %v762 = vsel %vm571, %v704, 0.0
  %v763 = vadd.f32 %v761, %v762
  %v764 = vsel %vm571, %v705, 0.0
  %v765 = vadd.f32 %v763, %v764
  %v766 = vsel %vm571, %v706, 0.0
  %v767 = vadd.f32 %v765, %v766
  %v768 = vsel %vm571, %v707, 0.0
  %v769 = vadd.f32 %v767, %v768
  %v770 = vsel %vm571, %v708, 0.0
  %v771 = vadd.f32 %v769, %v770
  %v772 = vrot.slane %v771, 4
  %v773 = vadd.f32 %v771, %v772
  %v774 = vrot.slane %v773, 2
  %v775 = vadd.f32 %v773, %v774
  %v776 = vrot.slane %v775, 1
  %v777 = vadd.f32 %v775, %v776
  %778 = vst.msk [vmem:[%s5] sm:$0x1] %vm675, %v777
  // Predicated region
  $region14: #{encoder_forward.6} parent=0 // pred_check
    _
  $region15: #{encoder_forward.6} parent=0 // pred_check_branch
    %780 = sbr.rel (0) target = $region17
  $region16: #{encoder_forward.6} parent=0 // pred_region
    _
  $region17: #{encoder_forward.6} parent=0 // pred_fallthru
    _
  // Predicated region
  $region18: #{encoder_forward.6} parent=0 // pred_check
    _
  $region19: #{encoder_forward.6} parent=0 // pred_check_branch
    %782 = sbr.rel (0) target = $region21
  $region20: #{encoder_forward.6} parent=0 // pred_region
    _
  $region21: #{encoder_forward.6} parent=0 // pred_fallthru
    _
  // Predicated region
  $region22: #{encoder_forward.6} parent=0 // pred_check
    _
  $region23: #{encoder_forward.6} parent=0 // pred_check_branch
    %784 = sbr.rel (0) target = $region25
  $region24: #{encoder_forward.6} parent=0 // pred_region
    _
  $region25: #{encoder_forward.6} parent=0 // pred_fallthru
    _
  // Predicated region
  $region26: #{encoder_forward.6} parent=0 // pred_check
    _
  $region27: #{encoder_forward.6} parent=0 // pred_check_branch
    %786 = sbr.rel (0) target = $region29
  $region28: #{encoder_forward.6} parent=0 // pred_region
    _
  $region29: #{encoder_forward.6} parent=0 // pred_fallthru
    _
  // Predicated region
  $region30: #{encoder_forward.6} parent=0 // pred_check
    _
  $region31: #{encoder_forward.6} parent=0 // pred_check_branch
    %788 = sbr.rel (0) target = $region33
  $region32: #{encoder_forward.6} parent=0 // pred_region
    _
  $region33: #{encoder_forward.6} parent=0 // pred_fallthru
    _
  // Predicated region
  $region34: #{encoder_forward.6} parent=0 // pred_check
    _
  $region35: #{encoder_forward.6} parent=0 // pred_check_branch
    %790 = sbr.rel (0) target = $region37
  $region36: #{encoder_forward.6} parent=0 // pred_region
    _
  $region37: #{encoder_forward.6} parent=0 // pred_fallthru
    _

// kernel: tile.53
$region0: #{tile.53}
  #allocation0 [shape = 's32[1]{0}', space=sflag, size = 0x4, scoped, tag = 'scoped memory for tile.53']
  %s0 = inlined_call_operand.vmem [shape: f32[64], index: 0, kind: input, shape index: {}]
  %s1 = inlined_call_operand.vmem [shape: f32[4,64], index: 1, kind: output, shape index: {}]
  // Predicated region
  $region2: #{tile.53} parent=0 // pred_check
    _
  $region3: #{tile.53} parent=0 // pred_check_branch
    %3 = sbr.rel (0) target = $region5
  $region4: #{tile.53} parent=0 // pred_region
    _
  $region5: #{tile.53} parent=0 // pred_fallthru
    _
  %v4 = vld [vmem:[%s0] ss:$0 sm:$0xff]
  %5 = vst [vmem:[%s1] sm:$0xf] %v4

// kernel: mul.35
$region0: #{mul.35}
  %s0 = inlined_call_operand.vmem [shape: f32[4,64], index: 0, kind: input, shape index: {}]
  %s1 = inlined_call_operand.vmem [shape: f32[256], index: 1, kind: output, shape index: {}]
  $region1: #{mul.35} parent=0
    #allocation0 [shape = 'u8[4096]{0}', space=vmem, size = 0x1000, scoped, tag = 'scoped mem for output reshape']
    #allocation1 [shape = 'u8[4096]{0}', space=vmem, size = 0x1000, scoped, tag = 'scoped mem for input reshape']
    %s3 = sshllo.u32 0, 4
    %v4 = vld [vmem:[%s0] sm:%s3]
    %5 = vst [vmem:[#allocation1] sm:%s3] %v4
    %s6 = smov 3
    %v7 = vld [vmem:[#allocation1] ss:$2 sm:%s6]
    %vm8 = vcmask 523264
    %9 = vst.msk [vmem:[#allocation0] sm:$0x3] %vm8, %v7
    %s10 = scalar_lea.vmem [#allocation1], 1
    %s11 = smov 3
    %v12 = vld [vmem:[%s10] ss:$2 sm:%s11]
    %13 = vrot.lane.b32.xlu0 %v12, 64
    %v14 = vpop.permute.xlu0 %13
    %vm15 = vcmask 1048064
    %16 = vst.msk [vmem:[#allocation0] sm:$0x3] %vm15, %v14
    %s18 = sshllo.u32 0, 2
    %v20 = vld [vmem:[#allocation0] sm:%s18]
    %s21 = sshllo.u32 0, 2
    %22 = vst [vmem:[%s1] sm:%s21] %v20

// kernel: encoder_forward.7
$region0: #{encoder_forward.7}
  #allocation0 [shape = 'u32[]', space=smem, size = 0x4, offset = 0x4, fixed_abs, tag = 'smem constant byte address 0x4 - core index']
  #allocation1 [shape = 'u32[144,128]{1,0:T(1,128)}', space=vmem, size = 0x12000, scoped, tag = 'internal scratch']
  %s0 = inlined_call_operand.vmem [shape: bf16[64,256], index: 0, kind: input, shape index: {}]
  %s1 = inlined_call_operand.vmem [shape: bf16[256,128], index: 1, kind: input, shape index: {}]
  %s2 = inlined_call_operand.vmem [shape: f32[1,128], index: 2, kind: input, shape index: {}]
  %s3 = inlined_call_operand.vmem [shape: bf16[64,128], index: 3, kind: output, shape index: {0}]
  %s4 = inlined_call_operand.vmem [shape: f32[1,1,128], index: 4, kind: output, shape index: {1}]
  %s5 = inlined_call_operand.vmem [shape: f32[1,1,128], index: 5, kind: output, shape index: {2}]
  %6 = xla_tuple %s3, %s4, %s5
  %s7 = sld [smem:[#allocation0]]
  $region38: #{encoder_forward.7} parent=0
    _
  %s9 = ssub.s32 1, %s7
  %s10 = scalar_select 0, %s9, %s7
  // Predicated region
  $region2: #{encoder_forward.7} parent=0 // pred_check
    _
  $region3: #{encoder_forward.7} parent=0 // pred_check_branch
    %12 = sbr.rel (0) target = $region5
  $region4: #{encoder_forward.7} parent=0 // pred_region
    _
  $region5: #{encoder_forward.7} parent=0 // pred_fallthru
    _
  // Predicated region
  $region6: #{encoder_forward.7} parent=0 // pred_check
    _
  $region7: #{encoder_forward.7} parent=0 // pred_check_branch
    %14 = sbr.rel (0) target = $region9
  $region8: #{encoder_forward.7} parent=0 // pred_region
    _
  $region9: #{encoder_forward.7} parent=0 // pred_fallthru
    _
  // Predicated region
  $region10: #{encoder_forward.7} parent=0 // pred_check
    _
  $region11: #{encoder_forward.7} parent=0 // pred_check_branch
    %16 = sbr.rel (0) target = $region13
  $region12: #{encoder_forward.7} parent=0 // pred_region
    _
  $region13: #{encoder_forward.7} parent=0 // pred_fallthru
    _
  %v18 = vld [vmem:[%s0] sm:$0xff]
  %v19 = vld [vmem:[%s0 + $0x8] sm:$0xff]
  %v20 = vld [vmem:[%s0 + $0x10] sm:$0xff]
  %v21 = vld [vmem:[%s0 + $0x18] sm:$0xff]
  %v22 = vld [vmem:[%s0 + $0x20] sm:$0xff]
  %v23 = vld [vmem:[%s0 + $0x28] sm:$0xff]
  %v24 = vld [vmem:[%s0 + $0x30] sm:$0xff]
  %v25 = vld [vmem:[%s0 + $0x38] sm:$0xff]
  %v26 = vld [vmem:[%s1] sm:$0xf]
  %v27 = vld [vmem:[%s1 + $0x4] sm:$0xf]
  %v28 = vld [vmem:[%s1 + $0x8] sm:$0xf]
  %v29 = vld [vmem:[%s1 + $0xc] sm:$0xf]
  %v30 = vld [vmem:[%s1 + $0x10] sm:$0xf]
  %v31 = vld [vmem:[%s1 + $0x14] sm:$0xf]
  %v32 = vld [vmem:[%s1 + $0x18] sm:$0xf]
  %v33 = vld [vmem:[%s1 + $0x1c] sm:$0xf]
  %v34 = vld [vmem:[%s1 + $0x20] sm:$0xf]
  %v35 = vld [vmem:[%s1 + $0x24] sm:$0xf]
  %v36 = vld [vmem:[%s1 + $0x28] sm:$0xf]
  %v37 = vld [vmem:[%s1 + $0x2c] sm:$0xf]
  %v38 = vld [vmem:[%s1 + $0x30] sm:$0xf]
  %v39 = vld [vmem:[%s1 + $0x34] sm:$0xf]
  %v40 = vld [vmem:[%s1 + $0x38] sm:$0xf]
  %v41 = vld [vmem:[%s1 + $0x3c] sm:$0xf]
  %v42 = vld [vmem:[%s1 + $0x40] sm:$0xf]
  %v43 = vld [vmem:[%s1 + $0x44] sm:$0xf]
  %v44 = vld [vmem:[%s1 + $0x48] sm:$0xf]
  %v45 = vld [vmem:[%s1 + $0x4c] sm:$0xf]
  %v46 = vld [vmem:[%s1 + $0x50] sm:$0xf]
  %v47 = vld [vmem:[%s1 + $0x54] sm:$0xf]
  %v48 = vld [vmem:[%s1 + $0x58] sm:$0xf]
  %v49 = vld [vmem:[%s1 + $0x5c] sm:$0xf]
  %v50 = vld [vmem:[%s1 + $0x60] sm:$0xf]
  %v51 = vld [vmem:[%s1 + $0x64] sm:$0xf]
  %v52 = vld [vmem:[%s1 + $0x68] sm:$0xf]
  %v53 = vld [vmem:[%s1 + $0x6c] sm:$0xf]
  %v54 = vld [vmem:[%s1 + $0x70] sm:$0xf]
  %v55 = vld [vmem:[%s1 + $0x74] sm:$0xf]
  %v56 = vld [vmem:[%s1 + $0x78] sm:$0xf]
  %v57 = vld [vmem:[%s1 + $0x7c] sm:$0xf]
  %v58 = vld [vmem:[%s2] sm:$0x1]
  %v60 = vlaneseq
  %v61 = vshrl.u32 %v60, 7
  %v62 = vsub.s32 0, %v61
  %v63 = vrot.slane %v58, %v62
  %v73 = vunpack.c.l.b16 %v18
  %v74 = vunpack.c.h.b16 %v18
  %v75 = vunpack.c.l.b16 %v19
  %v76 = vunpack.c.h.b16 %v19
  %v77 = vunpack.c.l.b16 %v20
  %v78 = vunpack.c.h.b16 %v20
  %v79 = vunpack.c.l.b16 %v21
  %v80 = vunpack.c.h.b16 %v21
  %v81 = vunpack.c.l.b16 %v22
  %v82 = vunpack.c.h.b16 %v22
  %v83 = vunpack.c.l.b16 %v23
  %v84 = vunpack.c.h.b16 %v23
  %v85 = vunpack.c.l.b16 %v24
  %v86 = vunpack.c.h.b16 %v24
  %v87 = vunpack.c.l.b16 %v25
  %v88 = vunpack.c.h.b16 %v25
  %v89 = vpack.c.b16 %v75, %v73
  %v90 = vpack.c.b16 %v76, %v74
  %v91 = vpack.c.b16 %v79, %v77
  %v92 = vpack.c.b16 %v80, %v78
  %v93 = vpack.c.b16 %v83, %v81
  %v94 = vpack.c.b16 %v84, %v82
  %v95 = vpack.c.b16 %v87, %v85
  %v96 = vpack.c.b16 %v88, %v86
  %v137 = vunpack.c.l.b16 %v26
  %v138 = vunpack.c.l.b16 %v27
  %v139 = vunpack.c.l.b16 %v28
  %v140 = vunpack.c.l.b16 %v29
  %v141 = vunpack.c.l.b16 %v30
  %v142 = vunpack.c.l.b16 %v31
  %v143 = vunpack.c.l.b16 %v32
  %v144 = vunpack.c.l.b16 %v33
  %v145 = vunpack.c.l.b16 %v34
  %v146 = vunpack.c.l.b16 %v35
  %v147 = vunpack.c.l.b16 %v36
  %v148 = vunpack.c.l.b16 %v37
  %v149 = vunpack.c.l.b16 %v38
  %v150 = vunpack.c.l.b16 %v39
  %v151 = vunpack.c.l.b16 %v40
  %v152 = vunpack.c.l.b16 %v41
  %v153 = vunpack.c.l.b16 %v42
  %v154 = vunpack.c.l.b16 %v43
  %v155 = vunpack.c.l.b16 %v44
  %v156 = vunpack.c.l.b16 %v45
  %v157 = vunpack.c.l.b16 %v46
  %v158 = vunpack.c.l.b16 %v47
  %v159 = vunpack.c.l.b16 %v48
  %v160 = vunpack.c.l.b16 %v49
  %v161 = vunpack.c.l.b16 %v50
  %v162 = vunpack.c.l.b16 %v51
  %v163 = vunpack.c.l.b16 %v52
  %v164 = vunpack.c.l.b16 %v53
  %v165 = vunpack.c.l.b16 %v54
  %v166 = vunpack.c.l.b16 %v55
  %v167 = vunpack.c.l.b16 %v56
  %v168 = vunpack.c.l.b16 %v57
  %v169 = vpack.c.b16 %v138, %v137
  %v170 = vpack.c.b16 %v140, %v139
  %v171 = vpack.c.b16 %v142, %v141
  %v172 = vpack.c.b16 %v144, %v143
  %v173 = vpack.c.b16 %v146, %v145
  %v174 = vpack.c.b16 %v148, %v147
  %v175 = vpack.c.b16 %v150, %v149
  %v176 = vpack.c.b16 %v152, %v151
  %v177 = vpack.c.b16 %v154, %v153
  %v178 = vpack.c.b16 %v156, %v155
  %v179 = vpack.c.b16 %v158, %v157
  %v180 = vpack.c.b16 %v160, %v159
  %v181 = vpack.c.b16 %v162, %v161
  %v182 = vpack.c.b16 %v164, %v163
  %v183 = vpack.c.b16 %v166, %v165
  %v184 = vpack.c.b16 %v168, %v167
  %201 = vmatprep.subr.bf16.mxu0 0
  %202 = vmatpush1.bf16.msra.mxu0 %v169
  %203 = vmatprep.subr.bf16.mxu0 0
  %204 = vmatpush1.bf16.msra.mxu0 %v170
  %205 = vmatprep.subr.bf16.mxu0 0
  %206 = vmatpush1.bf16.msra.mxu0 %v171
  %207 = vmatprep.subr.bf16.mxu0 0
  %208 = vmatpush1.bf16.msra.mxu0 %v172
  %209 = vmatprep.subr.bf16.mxu0 0
  %210 = vmatpush1.bf16.msra.mxu0 %v173
  %211 = vmatprep.subr.bf16.mxu0 0
  %212 = vmatpush1.bf16.msra.mxu0 %v174
  %213 = vmatprep.subr.bf16.mxu0 0
  %214 = vmatpush1.bf16.msra.mxu0 %v175
  %215 = vmatprep.subr.bf16.mxu0 0
  %216 = vmatpush1.bf16.msra.mxu0 %v176
  %217 = vmatprep.subr.bf16.mxu0 0
  %218 = vmatpush1.bf16.msra.mxu0 %v177
  %219 = vmatprep.subr.bf16.mxu0 0
  %220 = vmatpush1.bf16.msra.mxu0 %v178
  %221 = vmatprep.subr.bf16.mxu0 0
  %222 = vmatpush1.bf16.msra.mxu0 %v179
  %223 = vmatprep.subr.bf16.mxu0 0
  %224 = vmatpush1.bf16.msra.mxu0 %v180
  %225 = vmatprep.subr.bf16.mxu0 0
  %226 = vmatpush1.bf16.msra.mxu0 %v181
  %227 = vmatprep.subr.bf16.mxu0 0
  %228 = vmatpush1.bf16.msra.mxu0 %v182
  %229 = vmatprep.subr.bf16.mxu0 0
  %230 = vmatpush1.bf16.msra.mxu0 %v183
  %231 = vmatprep.subr.bf16.mxu0 0
  %232 = vmatpush1.bf16.msra.mxu0 %v184
  %233 = vmatprep.mubr.bf16.mxu0 %v90
  %234 = vmatmul.mubr.bf16.gmra.mrb[0].mxu0 %v89
  %v235 = vpop.f32.mrb[0].mxu0
  %v236 = vadd.f32 %v63, %v235
  %v237 = vpop.f32.mrb[0].mxu0
  %v238 = vpop.f32.mrb[0].mxu0
  %v239 = vadd.f32 %v63, %v238
  %v240 = vpop.f32.mrb[0].mxu0
  %241 = vmatprep.mubr.bf16.mxu0 %v92
  %242 = vmatmul.mubr.bf16.gmra.mrb[0].mxu0 %v91
  %v243 = vpop.f32.mrb[0].mxu0
  %v244 = vadd.f32 %v63, %v243
  %v245 = vpop.f32.mrb[0].mxu0
  %v246 = vpop.f32.mrb[0].mxu0
  %v247 = vadd.f32 %v63, %v246
  %v248 = vpop.f32.mrb[0].mxu0
  %249 = vmatprep.mubr.bf16.mxu0 %v94
  %250 = vmatmul.mubr.bf16.gmra.mrb[0].mxu0 %v93
  %v251 = vpop.f32.mrb[0].mxu0
  %v252 = vadd.f32 %v63, %v251
  %v253 = vpop.f32.mrb[0].mxu0
  %v254 = vpop.f32.mrb[0].mxu0
  %v255 = vadd.f32 %v63, %v254
  %v256 = vpop.f32.mrb[0].mxu0
  %257 = vmatprep.mubr.bf16.mxu0 %v96
  %258 = vmatmul.mubr.bf16.gmra.mrb[0].mxu0 %v95
  %v259 = vpop.f32.mrb[0].mxu0
  %v260 = vadd.f32 %v63, %v259
  %v261 = vpop.f32.mrb[0].mxu0
  %v262 = vpop.f32.mrb[0].mxu0
  %v263 = vadd.f32 %v63, %v262
  %v264 = vpop.f32.mrb[0].mxu0
  %265 = vdwg.mxu0
  %v266 = vmax.f32 %v236, 0.0
  %v267 = vmax.f32 %v239, 0.0
  %v268 = vmax.f32 %v244, 0.0
  %v269 = vmax.f32 %v247, 0.0
  %v270 = vmax.f32 %v252, 0.0
  %v271 = vmax.f32 %v255, 0.0
  %v272 = vmax.f32 %v260, 0.0
  %v273 = vmax.f32 %v263, 0.0
  %v274 = vpack.c.bf16 %v267, %v266
  %v275 = vpack.c.bf16 %v269, %v268
  %v276 = vpack.c.bf16 %v271, %v270
  %v277 = vpack.c.bf16 %v273, %v272
  %v282 = vunpack.c.l.b16 %v274
  %v283 = vunpack.c.h.b16 %v274
  %v284 = vunpack.c.l.b16 %v275
  %v285 = vunpack.c.h.b16 %v275
  %v286 = vunpack.c.l.b16 %v276
  %v287 = vunpack.c.h.b16 %v276
  %v288 = vunpack.c.l.b16 %v277
  %v289 = vunpack.c.h.b16 %v277
  %v290 = vpack.c.b16 %v282, %v282
  %v291 = vpack.c.b16 %v283, %v283
  %v292 = vpack.c.b16 %v284, %v284
  %v293 = vpack.c.b16 %v285, %v285
  %v294 = vpack.c.b16 %v286, %v286
  %v295 = vpack.c.b16 %v287, %v287
  %v296 = vpack.c.b16 %v288, %v288
  %v297 = vpack.c.b16 %v289, %v289
  %306 = vst [vmem:[%s3] sm:$0xf] %v290
  %307 = vst [vmem:[%s3 + $0x4] sm:$0xf] %v291
  %308 = vst [vmem:[%s3 + $0x8] sm:$0xf] %v292
  %309 = vst [vmem:[%s3 + $0xc] sm:$0xf] %v293
  %310 = vst [vmem:[%s3 + $0x10] sm:$0xf] %v294
  %311 = vst [vmem:[%s3 + $0x14] sm:$0xf] %v295
  %312 = vst [vmem:[%s3 + $0x18] sm:$0xf] %v296
  %313 = vst [vmem:[%s3 + $0x1c] sm:$0xf] %v297
  %v314 = vadd.f32 %v266, %v267
  %v315 = vadd.f32 %v314, %v268
  %v316 = vadd.f32 %v315, %v269
  %v317 = vadd.f32 %v316, %v270
  %v318 = vadd.f32 %v317, %v271
  %v319 = vadd.f32 %v318, %v272
  %v320 = vadd.f32 %v319, %v273
  %v321 = vrot.slane %v320, 4
  %v322 = vadd.f32 %v320, %v321
  %v323 = vrot.slane %v322, 2
  %v324 = vadd.f32 %v322, %v323
  %v325 = vrot.slane %v324, 1
  %v326 = vadd.f32 %v324, %v325
  %v327 = vrcp.pop 64.0
  %v328 = vmul.f32 %v326, %v327
  %v329 = vsub.f32 %v266, %v328
  %v330 = vsub.f32 %v267, %v328
  %v331 = vsub.f32 %v268, %v328
  %v332 = vsub.f32 %v269, %v328
  %v333 = vsub.f32 %v270, %v328
  %v334 = vsub.f32 %v271, %v328
  %v335 = vsub.f32 %v272, %v328
  %v336 = vsub.f32 %v273, %v328
  %337 = vst [vmem:[%s4] sm:$0x1] %v328
  %v338 = vmul.f32 %v329, %v329
  %v339 = vmul.f32 %v330, %v330
  %v340 = vmul.f32 %v331, %v331
  %v341 = vmul.f32 %v332, %v332
  %v342 = vmul.f32 %v333, %v333
  %v343 = vmul.f32 %v334, %v334
  %v344 = vmul.f32 %v335, %v335
  %v345 = vmul.f32 %v336, %v336
  %v346 = vadd.f32 %v338, %v339
  %v347 = vadd.f32 %v346, %v340
  %v348 = vadd.f32 %v347, %v341
  %v349 = vadd.f32 %v348, %v342
  %v350 = vadd.f32 %v349, %v343
  %v351 = vadd.f32 %v350, %v344
  %v352 = vadd.f32 %v351, %v345
  %v353 = vrot.slane %v352, 4
  %v354 = vadd.f32 %v352, %v353
  %v355 = vrot.slane %v354, 2
  %v356 = vadd.f32 %v354, %v355
  %v357 = vrot.slane %v356, 1
  %v358 = vadd.f32 %v356, %v357
  %359 = vst [vmem:[%s5] sm:$0x1] %v358
  // Predicated region
  $region14: #{encoder_forward.7} parent=0 // pred_check
    _
  $region15: #{encoder_forward.7} parent=0 // pred_check_branch
    %361 = sbr.rel (0) target = $region17
  $region16: #{encoder_forward.7} parent=0 // pred_region
    _
  $region17: #{encoder_forward.7} parent=0 // pred_fallthru
    _
  // Predicated region
  $region18: #{encoder_forward.7} parent=0 // pred_check
    _
  $region19: #{encoder_forward.7} parent=0 // pred_check_branch
    %363 = sbr.rel (0) target = $region21
  $region20: #{encoder_forward.7} parent=0 // pred_region
    _
  $region21: #{encoder_forward.7} parent=0 // pred_fallthru
    _
  // Predicated region
  $region22: #{encoder_forward.7} parent=0 // pred_check
    _
  $region23: #{encoder_forward.7} parent=0 // pred_check_branch
    %365 = sbr.rel (0) target = $region25
  $region24: #{encoder_forward.7} parent=0 // pred_region
    _
  $region25: #{encoder_forward.7} parent=0 // pred_fallthru
    _
  // Predicated region
  $region26: #{encoder_forward.7} parent=0 // pred_check
    _
  $region27: #{encoder_forward.7} parent=0 // pred_check_branch
    %367 = sbr.rel (0) target = $region29
  $region28: #{encoder_forward.7} parent=0 // pred_region
    _
  $region29: #{encoder_forward.7} parent=0 // pred_fallthru
    _
  // Predicated region
  $region30: #{encoder_forward.7} parent=0 // pred_check
    _
  $region31: #{encoder_forward.7} parent=0 // pred_check_branch
    %369 = sbr.rel (0) target = $region33
  $region32: #{encoder_forward.7} parent=0 // pred_region
    _
  $region33: #{encoder_forward.7} parent=0 // pred_fallthru
    _
  // Predicated region
  $region34: #{encoder_forward.7} parent=0 // pred_check
    _
  $region35: #{encoder_forward.7} parent=0 // pred_check_branch
    %371 = sbr.rel (0) target = $region37
  $region36: #{encoder_forward.7} parent=0 // pred_region
    _
  $region37: #{encoder_forward.7} parent=0 // pred_fallthru
    _

// kernel: encoder_forward.8
$region0: #{encoder_forward.8}
  #allocation0 [shape = 'u32[]', space=smem, size = 0x4, offset = 0x4, fixed_abs, tag = 'smem constant byte address 0x4 - core index']
  #allocation1 [shape = 'u32[144,128]{1,0:T(1,128)}', space=vmem, size = 0x12000, scoped, tag = 'internal scratch']
  %s0 = inlined_call_operand.vmem [shape: bf16[16,512], index: 0, kind: input, shape index: {}]
  %s1 = inlined_call_operand.vmem [shape: bf16[512,256], index: 1, kind: input, shape index: {}]
  %s2 = inlined_call_operand.vmem [shape: f32[1,256], index: 2, kind: input, shape index: {}]
  %s3 = inlined_call_operand.vmem [shape: bf16[16,256], index: 3, kind: output, shape index: {0}]
  %s4 = inlined_call_operand.vmem [shape: f32[1,1,256], index: 4, kind: output, shape index: {1}]
  %s5 = inlined_call_operand.vmem [shape: f32[1,1,256], index: 5, kind: output, shape index: {2}]
  %6 = xla_tuple %s3, %s4, %s5
  %s7 = sld [smem:[#allocation0]]
  $region38: #{encoder_forward.8} parent=0
    _
  %s9 = ssub.s32 1, %s7
  %s10 = scalar_select 0, %s9, %s7
  // Predicated region
  $region2: #{encoder_forward.8} parent=0 // pred_check
    _
  $region3: #{encoder_forward.8} parent=0 // pred_check_branch
    %12 = sbr.rel (0) target = $region5
  $region4: #{encoder_forward.8} parent=0 // pred_region
    _
  $region5: #{encoder_forward.8} parent=0 // pred_fallthru
    _
  // Predicated region
  $region6: #{encoder_forward.8} parent=0 // pred_check
    _
  $region7: #{encoder_forward.8} parent=0 // pred_check_branch
    %14 = sbr.rel (0) target = $region9
  $region8: #{encoder_forward.8} parent=0 // pred_region
    _
  $region9: #{encoder_forward.8} parent=0 // pred_fallthru
    _
  // Predicated region
  $region10: #{encoder_forward.8} parent=0 // pred_check
    _
  $region11: #{encoder_forward.8} parent=0 // pred_check_branch
    %16 = sbr.rel (0) target = $region13
  $region12: #{encoder_forward.8} parent=0 // pred_region
    _
  $region13: #{encoder_forward.8} parent=0 // pred_fallthru
    _
  %v17 = vld [vmem:[%s0] sm:$0xff]
  %v18 = vld [vmem:[%s0 + $0x8] sm:$0xff]
  %v19 = vld [vmem:[%s0 + $0x10] sm:$0xff]
  %v20 = vld [vmem:[%s0 + $0x18] sm:$0xff]
  %v21 = vld [vmem:[%s1] sm:$0xff]
  %v22 = vld [vmem:[%s1 + $0x8] sm:$0xff]
  %v23 = vld [vmem:[%s1 + $0x10] sm:$0xff]
  %v24 = vld [vmem:[%s1 + $0x18] sm:$0xff]
  %v25 = vld [vmem:[%s1 + $0x20] sm:$0xff]
  %v26 = vld [vmem:[%s1 + $0x28] sm:$0xff]
  %v27 = vld [vmem:[%s1 + $0x30] sm:$0xff]
  %v28 = vld [vmem:[%s1 + $0x38] sm:$0xff]
  %v29 = vld [vmem:[%s1 + $0x40] sm:$0xff]
  %v30 = vld [vmem:[%s1 + $0x48] sm:$0xff]
  %v31 = vld [vmem:[%s1 + $0x50] sm:$0xff]
  %v32 = vld [vmem:[%s1 + $0x58] sm:$0xff]
  %v33 = vld [vmem:[%s1 + $0x60] sm:$0xff]
  %v34 = vld [vmem:[%s1 + $0x68] sm:$0xff]
  %v35 = vld [vmem:[%s1 + $0x70] sm:$0xff]
  %v36 = vld [vmem:[%s1 + $0x78] sm:$0xff]
  %v37 = vld [vmem:[%s1 + $0x80] sm:$0xff]
  %v38 = vld [vmem:[%s1 + $0x88] sm:$0xff]
  %v39 = vld [vmem:[%s1 + $0x90] sm:$0xff]
  %v40 = vld [vmem:[%s1 + $0x98] sm:$0xff]
  %v41 = vld [vmem:[%s1 + $0xa0] sm:$0xff]
  %v42 = vld [vmem:[%s1 + $0xa8] sm:$0xff]
  %v43 = vld [vmem:[%s1 + $0xb0] sm:$0xff]
  %v44 = vld [vmem:[%s1 + $0xb8] sm:$0xff]
  %v45 = vld [vmem:[%s1 + $0xc0] sm:$0xff]
  %v46 = vld [vmem:[%s1 + $0xc8] sm:$0xff]
  %v47 = vld [vmem:[%s1 + $0xd0] sm:$0xff]
  %v48 = vld [vmem:[%s1 + $0xd8] sm:$0xff]
  %v49 = vld [vmem:[%s1 + $0xe0] sm:$0xff]
  %v50 = vld [vmem:[%s1 + $0xe8] sm:$0xff]
  %v51 = vld [vmem:[%s1 + $0xf0] sm:$0xff]
  %v52 = vld [vmem:[%s1 + $0xf8] sm:$0xff]
  %v53 = vld [vmem:[%s1 + $0x100] sm:$0xff]
  %v54 = vld [vmem:[%s1 + $0x108] sm:$0xff]
  %v55 = vld [vmem:[%s1 + $0x110] sm:$0xff]
  %v56 = vld [vmem:[%s1 + $0x118] sm:$0xff]
  %v57 = vld [vmem:[%s1 + $0x120] sm:$0xff]
  %v58 = vld [vmem:[%s1 + $0x128] sm:$0xff]
  %v59 = vld [vmem:[%s1 + $0x130] sm:$0xff]
  %v60 = vld [vmem:[%s1 + $0x138] sm:$0xff]
  %v61 = vld [vmem:[%s1 + $0x140] sm:$0xff]
  %v62 = vld [vmem:[%s1 + $0x148] sm:$0xff]
  %v63 = vld [vmem:[%s1 + $0x150] sm:$0xff]
  %v64 = vld [vmem:[%s1 + $0x158] sm:$0xff]
  %v65 = vld [vmem:[%s1 + $0x160] sm:$0xff]
  %v66 = vld [vmem:[%s1 + $0x168] sm:$0xff]
  %v67 = vld [vmem:[%s1 + $0x170] sm:$0xff]
  %v68 = vld [vmem:[%s1 + $0x178] sm:$0xff]
  %v69 = vld [vmem:[%s1 + $0x180] sm:$0xff]
  %v70 = vld [vmem:[%s1 + $0x188] sm:$0xff]
  %v71 = vld [vmem:[%s1 + $0x190] sm:$0xff]
  %v72 = vld [vmem:[%s1 + $0x198] sm:$0xff]
  %v73 = vld [vmem:[%s1 + $0x1a0] sm:$0xff]
  %v74 = vld [vmem:[%s1 + $0x1a8] sm:$0xff]
  %v75 = vld [vmem:[%s1 + $0x1b0] sm:$0xff]
  %v76 = vld [vmem:[%s1 + $0x1b8] sm:$0xff]
  %v77 = vld [vmem:[%s1 + $0x1c0] sm:$0xff]
  %v78 = vld [vmem:[%s1 + $0x1c8] sm:$0xff]
  %v79 = vld [vmem:[%s1 + $0x1d0] sm:$0xff]
  %v80 = vld [vmem:[%s1 + $0x1d8] sm:$0xff]
  %v81 = vld [vmem:[%s1 + $0x1e0] sm:$0xff]
  %v82 = vld [vmem:[%s1 + $0x1e8] sm:$0xff]
  %v83 = vld [vmem:[%s1 + $0x1f0] sm:$0xff]
  %v84 = vld [vmem:[%s1 + $0x1f8] sm:$0xff]
  %v85 = vld [vmem:[%s2] sm:$0x3]
  %v87 = vlaneseq
  %v88 = vshrl.u32 %v87, 7
  %v89 = vsub.s32 0, %v88
  %v90 = vrot.slane %v85, %v89
  %v91 = vlaneseq
  %v92 = vshrl.u32 %v91, 7
  %v93 = vsub.s32 1, %v92
  %v94 = vrot.slane %v85, %v93
  %v101 = vunpack.c.l.b16 %v17
  %v102 = vunpack.c.h.b16 %v17
  %v103 = vunpack.c.l.b16 %v18
  %v104 = vunpack.c.h.b16 %v18
  %v105 = vunpack.c.l.b16 %v19
  %v106 = vunpack.c.h.b16 %v19
  %v107 = vunpack.c.l.b16 %v20
  %v108 = vunpack.c.h.b16 %v20
  %v109 = vpack.c.b16 %v105, %v101
  %v110 = vpack.c.b16 %v106, %v102
  %v111 = vpack.c.b16 %v107, %v103
  %v112 = vpack.c.b16 %v108, %v104
  %v181 = vunpack.c.l.b16 %v21
  %v182 = vunpack.c.h.b16 %v21
  %v183 = vunpack.c.l.b16 %v22
  %v184 = vunpack.c.h.b16 %v22
  %v185 = vunpack.c.l.b16 %v23
  %v186 = vunpack.c.h.b16 %v23
  %v187 = vunpack.c.l.b16 %v24
  %v188 = vunpack.c.h.b16 %v24
  %v189 = vunpack.c.l.b16 %v25
  %v190 = vunpack.c.h.b16 %v25
  %v191 = vunpack.c.l.b16 %v26
  %v192 = vunpack.c.h.b16 %v26
  %v193 = vunpack.c.l.b16 %v27
  %v194 = vunpack.c.h.b16 %v27
  %v195 = vunpack.c.l.b16 %v28
  %v196 = vunpack.c.h.b16 %v28
  %v197 = vunpack.c.l.b16 %v29
  %v198 = vunpack.c.h.b16 %v29
  %v199 = vunpack.c.l.b16 %v30
  %v200 = vunpack.c.h.b16 %v30
  %v201 = vunpack.c.l.b16 %v31
  %v202 = vunpack.c.h.b16 %v31
  %v203 = vunpack.c.l.b16 %v32
  %v204 = vunpack.c.h.b16 %v32
  %v205 = vunpack.c.l.b16 %v33
  %v206 = vunpack.c.h.b16 %v33
  %v207 = vunpack.c.l.b16 %v34
  %v208 = vunpack.c.h.b16 %v34
  %v209 = vunpack.c.l.b16 %v35
  %v210 = vunpack.c.h.b16 %v35
  %v211 = vunpack.c.l.b16 %v36
  %v212 = vunpack.c.h.b16 %v36
  %v213 = vunpack.c.l.b16 %v37
  %v214 = vunpack.c.h.b16 %v37
  %v215 = vunpack.c.l.b16 %v38
  %v216 = vunpack.c.h.b16 %v38
  %v217 = vunpack.c.l.b16 %v39
  %v218 = vunpack.c.h.b16 %v39
  %v219 = vunpack.c.l.b16 %v40
  %v220 = vunpack.c.h.b16 %v40
  %v221 = vunpack.c.l.b16 %v41
  %v222 = vunpack.c.h.b16 %v41
  %v223 = vunpack.c.l.b16 %v42
  %v224 = vunpack.c.h.b16 %v42
  %v225 = vunpack.c.l.b16 %v43
  %v226 = vunpack.c.h.b16 %v43
  %v227 = vunpack.c.l.b16 %v44
  %v228 = vunpack.c.h.b16 %v44
  %v229 = vunpack.c.l.b16 %v45
  %v230 = vunpack.c.h.b16 %v45
  %v231 = vunpack.c.l.b16 %v46
  %v232 = vunpack.c.h.b16 %v46
  %v233 = vunpack.c.l.b16 %v47
  %v234 = vunpack.c.h.b16 %v47
  %v235 = vunpack.c.l.b16 %v48
  %v236 = vunpack.c.h.b16 %v48
  %v237 = vunpack.c.l.b16 %v49
  %v238 = vunpack.c.h.b16 %v49
  %v239 = vunpack.c.l.b16 %v50
  %v240 = vunpack.c.h.b16 %v50
  %v241 = vunpack.c.l.b16 %v51
  %v242 = vunpack.c.h.b16 %v51
  %v243 = vunpack.c.l.b16 %v52
  %v244 = vunpack.c.h.b16 %v52
  %v245 = vunpack.c.l.b16 %v53
  %v246 = vunpack.c.h.b16 %v53
  %v247 = vunpack.c.l.b16 %v54
  %v248 = vunpack.c.h.b16 %v54
  %v249 = vunpack.c.l.b16 %v55
  %v250 = vunpack.c.h.b16 %v55
  %v251 = vunpack.c.l.b16 %v56
  %v252 = vunpack.c.h.b16 %v56
  %v253 = vunpack.c.l.b16 %v57
  %v254 = vunpack.c.h.b16 %v57
  %v255 = vunpack.c.l.b16 %v58
  %v256 = vunpack.c.h.b16 %v58
  %v257 = vunpack.c.l.b16 %v59
  %v258 = vunpack.c.h.b16 %v59
  %v259 = vunpack.c.l.b16 %v60
  %v260 = vunpack.c.h.b16 %v60
  %v261 = vunpack.c.l.b16 %v61
  %v262 = vunpack.c.h.b16 %v61
  %v263 = vunpack.c.l.b16 %v62
  %v264 = vunpack.c.h.b16 %v62
  %v265 = vunpack.c.l.b16 %v63
  %v266 = vunpack.c.h.b16 %v63
  %v267 = vunpack.c.l.b16 %v64
  %v268 = vunpack.c.h.b16 %v64
  %v269 = vunpack.c.l.b16 %v65
  %v270 = vunpack.c.h.b16 %v65
  %v271 = vunpack.c.l.b16 %v66
  %v272 = vunpack.c.h.b16 %v66
  %v273 = vunpack.c.l.b16 %v67
  %v274 = vunpack.c.h.b16 %v67
  %v275 = vunpack.c.l.b16 %v68
  %v276 = vunpack.c.h.b16 %v68
  %v277 = vunpack.c.l.b16 %v69
  %v278 = vunpack.c.h.b16 %v69
  %v279 = vunpack.c.l.b16 %v70
  %v280 = vunpack.c.h.b16 %v70
  %v281 = vunpack.c.l.b16 %v71
  %v282 = vunpack.c.h.b16 %v71
  %v283 = vunpack.c.l.b16 %v72
  %v284 = vunpack.c.h.b16 %v72
  %v285 = vunpack.c.l.b16 %v73
  %v286 = vunpack.c.h.b16 %v73
  %v287 = vunpack.c.l.b16 %v74
  %v288 = vunpack.c.h.b16 %v74
  %v289 = vunpack.c.l.b16 %v75
  %v290 = vunpack.c.h.b16 %v75
  %v291 = vunpack.c.l.b16 %v76
  %v292 = vunpack.c.h.b16 %v76
  %v293 = vunpack.c.l.b16 %v77
  %v294 = vunpack.c.h.b16 %v77
  %v295 = vunpack.c.l.b16 %v78
  %v296 = vunpack.c.h.b16 %v78
  %v297 = vunpack.c.l.b16 %v79
  %v298 = vunpack.c.h.b16 %v79
  %v299 = vunpack.c.l.b16 %v80
  %v300 = vunpack.c.h.b16 %v80
  %v301 = vunpack.c.l.b16 %v81
  %v302 = vunpack.c.h.b16 %v81
  %v303 = vunpack.c.l.b16 %v82
  %v304 = vunpack.c.h.b16 %v82
  %v305 = vunpack.c.l.b16 %v83
  %v306 = vunpack.c.h.b16 %v83
  %v307 = vunpack.c.l.b16 %v84
  %v308 = vunpack.c.h.b16 %v84
  %v309 = vpack.c.b16 %v183, %v181
  %v310 = vpack.c.b16 %v184, %v182
  %v311 = vpack.c.b16 %v187, %v185
  %v312 = vpack.c.b16 %v188, %v186
  %v313 = vpack.c.b16 %v191, %v189
  %v314 = vpack.c.b16 %v192, %v190
  %v315 = vpack.c.b16 %v195, %v193
  %v316 = vpack.c.b16 %v196, %v194
  %v317 = vpack.c.b16 %v199, %v197
  %v318 = vpack.c.b16 %v200, %v198
  %v319 = vpack.c.b16 %v203, %v201
  %v320 = vpack.c.b16 %v204, %v202
  %v321 = vpack.c.b16 %v207, %v205
  %v322 = vpack.c.b16 %v208, %v206
  %v323 = vpack.c.b16 %v211, %v209
  %v324 = vpack.c.b16 %v212, %v210
  %v325 = vpack.c.b16 %v215, %v213
  %v326 = vpack.c.b16 %v216, %v214
  %v327 = vpack.c.b16 %v219, %v217
  %v328 = vpack.c.b16 %v220, %v218
  %v329 = vpack.c.b16 %v223, %v221
  %v330 = vpack.c.b16 %v224, %v222
  %v331 = vpack.c.b16 %v227, %v225
  %v332 = vpack.c.b16 %v228, %v226
  %v333 = vpack.c.b16 %v231, %v229
  %v334 = vpack.c.b16 %v232, %v230
  %v335 = vpack.c.b16 %v235, %v233
  %v336 = vpack.c.b16 %v236, %v234
  %v337 = vpack.c.b16 %v239, %v237
  %v338 = vpack.c.b16 %v240, %v238
  %v339 = vpack.c.b16 %v243, %v241
  %v340 = vpack.c.b16 %v244, %v242
  %v341 = vpack.c.b16 %v247, %v245
  %v342 = vpack.c.b16 %v248, %v246
  %v343 = vpack.c.b16 %v251, %v249
  %v344 = vpack.c.b16 %v252, %v250
  %v345 = vpack.c.b16 %v255, %v253
  %v346 = vpack.c.b16 %v256, %v254
  %v347 = vpack.c.b16 %v259, %v257
  %v348 = vpack.c.b16 %v260, %v258
  %v349 = vpack.c.b16 %v263, %v261
  %v350 = vpack.c.b16 %v264, %v262
  %v351 = vpack.c.b16 %v267, %v265
  %v352 = vpack.c.b16 %v268, %v266
  %v353 = vpack.c.b16 %v271, %v269
  %v354 = vpack.c.b16 %v272, %v270
  %v355 = vpack.c.b16 %v275, %v273
  %v356 = vpack.c.b16 %v276, %v274
  %v357 = vpack.c.b16 %v279, %v277
  %v358 = vpack.c.b16 %v280, %v278
  %v359 = vpack.c.b16 %v283, %v281
  %v360 = vpack.c.b16 %v284, %v282
  %v361 = vpack.c.b16 %v287, %v285
  %v362 = vpack.c.b16 %v288, %v286
  %v363 = vpack.c.b16 %v291, %v289
  %v364 = vpack.c.b16 %v292, %v290
  %v365 = vpack.c.b16 %v295, %v293
  %v366 = vpack.c.b16 %v296, %v294
  %v367 = vpack.c.b16 %v299, %v297
  %v368 = vpack.c.b16 %v300, %v298
  %v369 = vpack.c.b16 %v303, %v301
  %v370 = vpack.c.b16 %v304, %v302
  %v371 = vpack.c.b16 %v307, %v305
  %v372 = vpack.c.b16 %v308, %v306
  %437 = vmatprep.subr.bf16.mxu0 %v310
  %438 = vmatpush1.bf16.msra.mxu0 %v309
  %439 = vmatprep.subr.bf16.mxu0 %v312
  %440 = vmatpush1.bf16.msra.mxu0 %v311
  %441 = vmatprep.subr.bf16.mxu0 %v314
  %442 = vmatpush1.bf16.msra.mxu0 %v313
  %443 = vmatprep.subr.bf16.mxu0 %v316
  %444 = vmatpush1.bf16.msra.mxu0 %v315
  %445 = vmatprep.subr.bf16.mxu0 %v318
  %446 = vmatpush1.bf16.msra.mxu0 %v317
  %447 = vmatprep.subr.bf16.mxu0 %v320
  %448 = vmatpush1.bf16.msra.mxu0 %v319
  %449 = vmatprep.subr.bf16.mxu0 %v322
  %450 = vmatpush1.bf16.msra.mxu0 %v321
  %451 = vmatprep.subr.bf16.mxu0 %v324
  %452 = vmatpush1.bf16.msra.mxu0 %v323
  %453 = vmatprep.subr.bf16.mxu0 %v326
  %454 = vmatpush1.bf16.msra.mxu0 %v325
  %455 = vmatprep.subr.bf16.mxu0 %v328
  %456 = vmatpush1.bf16.msra.mxu0 %v327
  %457 = vmatprep.subr.bf16.mxu0 %v330
  %458 = vmatpush1.bf16.msra.mxu0 %v329
  %459 = vmatprep.subr.bf16.mxu0 %v332
  %460 = vmatpush1.bf16.msra.mxu0 %v331
  %461 = vmatprep.subr.bf16.mxu0 %v334
  %462 = vmatpush1.bf16.msra.mxu0 %v333
  %463 = vmatprep.subr.bf16.mxu0 %v336
  %464 = vmatpush1.bf16.msra.mxu0 %v335
  %465 = vmatprep.subr.bf16.mxu0 %v338
  %466 = vmatpush1.bf16.msra.mxu0 %v337
  %467 = vmatprep.subr.bf16.mxu0 %v340
  %468 = vmatpush1.bf16.msra.mxu0 %v339
  %469 = vmatprep.mubr.bf16.mxu0 %v110
  %470 = vmatmul.mubr.bf16.gmra.mrb[0].mxu0 %v109
  %v471 = vpop.f32.mrb[0].mxu0
  %v472 = vadd.f32 %v90, %v471
  %v473 = vpop.f32.mrb[0].mxu0
  %v474 = vadd.f32 %v94, %v473
  %v475 = vpop.f32.mrb[0].mxu0
  %v476 = vadd.f32 %v90, %v475
  %v477 = vpop.f32.mrb[0].mxu0
  %v478 = vadd.f32 %v94, %v477
  %479 = vdwg.mxu0
  %480 = vmatprep.subr.bf16.mxu0 %v342
  %481 = vmatpush1.bf16.msra.mxu0 %v341
  %482 = vmatprep.subr.bf16.mxu0 %v344
  %483 = vmatpush1.bf16.msra.mxu0 %v343
  %484 = vmatprep.subr.bf16.mxu0 %v346
  %485 = vmatpush1.bf16.msra.mxu0 %v345
  %486 = vmatprep.subr.bf16.mxu0 %v348
  %487 = vmatpush1.bf16.msra.mxu0 %v347
  %488 = vmatprep.subr.bf16.mxu0 %v350
  %489 = vmatpush1.bf16.msra.mxu0 %v349
  %490 = vmatprep.subr.bf16.mxu0 %v352
  %491 = vmatpush1.bf16.msra.mxu0 %v351
  %492 = vmatprep.subr.bf16.mxu0 %v354
  %493 = vmatpush1.bf16.msra.mxu0 %v353
  %494 = vmatprep.subr.bf16.mxu0 %v356
  %495 = vmatpush1.bf16.msra.mxu0 %v355
  %496 = vmatprep.subr.bf16.mxu0 %v358
  %497 = vmatpush1.bf16.msra.mxu0 %v357
  %498 = vmatprep.subr.bf16.mxu0 %v360
  %499 = vmatpush1.bf16.msra.mxu0 %v359
  %500 = vmatprep.subr.bf16.mxu0 %v362
  %501 = vmatpush1.bf16.msra.mxu0 %v361
  %502 = vmatprep.subr.bf16.mxu0 %v364
  %503 = vmatpush1.bf16.msra.mxu0 %v363
  %504 = vmatprep.subr.bf16.mxu0 %v366
  %505 = vmatpush1.bf16.msra.mxu0 %v365
  %506 = vmatprep.subr.bf16.mxu0 %v368
  %507 = vmatpush1.bf16.msra.mxu0 %v367
  %508 = vmatprep.subr.bf16.mxu0 %v370
  %509 = vmatpush1.bf16.msra.mxu0 %v369
  %510 = vmatprep.subr.bf16.mxu0 %v372
  %511 = vmatpush1.bf16.msra.mxu0 %v371
  %512 = vmatprep.mubr.bf16.mxu0 %v112
  %513 = vmatmul.mubr.bf16.gmra.mrb[0].mxu0 %v111
  %v514 = vpop.f32.mrb[0].mxu0
  %v515 = vadd.f32 %v472, %v514
  %v516 = vpop.f32.mrb[0].mxu0
  %v517 = vadd.f32 %v474, %v516
  %v518 = vpop.f32.mrb[0].mxu0
  %v519 = vadd.f32 %v476, %v518
  %v520 = vpop.f32.mrb[0].mxu0
  %v521 = vadd.f32 %v478, %v520
  %522 = vdwg.mxu0
  %v523 = vmax.f32 %v515, 0.0
  %v524 = vmax.f32 %v517, 0.0
  %v525 = vmax.f32 %v519, 0.0
  %v526 = vmax.f32 %v521, 0.0
  %v527 = vpack.c.bf16 %v525, %v523
  %v528 = vpack.c.bf16 %v526, %v524
  %v531 = vunpack.c.l.b16 %v527
  %v532 = vunpack.c.l.b16 %v528
  %v533 = vunpack.c.h.b16 %v527
  %v534 = vunpack.c.h.b16 %v528
  %v535 = vpack.c.b16 %v532, %v531
  %v536 = vpack.c.b16 %v534, %v533
  %539 = vst [vmem:[%s3] sm:$0xff] %v535
  %540 = vst [vmem:[%s3 + $0x8] sm:$0xff] %v536
  %v541 = vadd.f32 %v523, %v525
  %v542 = vrot.slane %v541, 4
  %v543 = vadd.f32 %v541, %v542
  %v544 = vrot.slane %v543, 2
  %v545 = vadd.f32 %v543, %v544
  %v546 = vrot.slane %v545, 1
  %v547 = vadd.f32 %v545, %v546
  %v548 = vadd.f32 %v524, %v526
  %v549 = vrot.slane %v548, 4
  %v550 = vadd.f32 %v548, %v549
  %v551 = vrot.slane %v550, 2
  %v552 = vadd.f32 %v550, %v551
  %v553 = vrot.slane %v552, 1
  %v554 = vadd.f32 %v552, %v553
  %v555 = vrcp.pop 16.0
  %v556 = vmul.f32 %v547, %v555
  %v557 = vmul.f32 %v554, %v555
  %v558 = vsub.f32 %v523, %v556
  %v559 = vsub.f32 %v524, %v557
  %v560 = vsub.f32 %v525, %v556
  %v561 = vsub.f32 %v526, %v557
  %v564 = vcombine.low %v556, %v557
  %v566 = vunpack.c.l.s4 1966171168
  %v567 = vunpack.c.0.s8 %v566
  %v568 = vlaneseq
  %v569 = vshrl.u32 %v568, 7
  %v570 = vsub.s32 %v567, %v569
  %v571 = vrot.slane %v564, %v570
  %v573 = vunpack.c.l.s4 1966171168
  %v574 = vunpack.c.0.s8 %v573
  %v575 = vlaneseq
  %v576 = vshrl.u32 %v575, 7
  %v577 = vsub.s32 %v574, %v576
  %v578 = vrot.slane %v571, %v577
  %v580 = vlaneseq
  %vm581 = vcmp.ge.s32.totalorder %v580, 0
  %vm582 = vcmp.lt.s32.totalorder %v580, 256
  %vm583 = vmand %vm581, %vm582
  %584 = vst.msk [vmem:[%s4] sm:$0x3] %vm583, %v578
  %v585 = vmul.f32 %v558, %v558
  %v586 = vmul.f32 %v559, %v559
  %v587 = vmul.f32 %v560, %v560
  %v588 = vmul.f32 %v561, %v561
  %v589 = vadd.f32 %v585, %v587
  %v590 = vrot.slane %v589, 4
  %v591 = vadd.f32 %v589, %v590
  %v592 = vrot.slane %v591, 2
  %v593 = vadd.f32 %v591, %v592
  %v594 = vrot.slane %v593, 1
  %v595 = vadd.f32 %v593, %v594
  %v596 = vadd.f32 %v586, %v588
  %v597 = vrot.slane %v596, 4
  %v598 = vadd.f32 %v596, %v597
  %v599 = vrot.slane %v598, 2
  %v600 = vadd.f32 %v598, %v599
  %v601 = vrot.slane %v600, 1
  %v602 = vadd.f32 %v600, %v601
  %v605 = vcombine.low %v595, %v602
  %v607 = vunpack.c.l.s4 1966171168
  %v608 = vunpack.c.0.s8 %v607
  %v609 = vlaneseq
  %v610 = vshrl.u32 %v609, 7
  %v611 = vsub.s32 %v608, %v610
  %v612 = vrot.slane %v605, %v611
  %v614 = vunpack.c.l.s4 1966171168
  %v615 = vunpack.c.0.s8 %v614
  %v616 = vlaneseq
  %v617 = vshrl.u32 %v616, 7
  %v618 = vsub.s32 %v615, %v617
  %v619 = vrot.slane %v612, %v618
  %621 = vst.msk [vmem:[%s5] sm:$0x3] %vm583, %v619
  // Predicated region
  $region14: #{encoder_forward.8} parent=0 // pred_check
    _
  $region15: #{encoder_forward.8} parent=0 // pred_check_branch
    %623 = sbr.rel (0) target = $region17
  $region16: #{encoder_forward.8} parent=0 // pred_region
    _
  $region17: #{encoder_forward.8} parent=0 // pred_fallthru
    _
  // Predicated region
  $region18: #{encoder_forward.8} parent=0 // pred_check
    _
  $region19: #{encoder_forward.8} parent=0 // pred_check_branch
    %625 = sbr.rel (0) target = $region21
  $region20: #{encoder_forward.8} parent=0 // pred_region
    _
  $region21: #{encoder_forward.8} parent=0 // pred_fallthru
    _
  // Predicated region
  $region22: #{encoder_forward.8} parent=0 // pred_check
    _
  $region23: #{encoder_forward.8} parent=0 // pred_check_branch
    %627 = sbr.rel (0) target = $region25
  $region24: #{encoder_forward.8} parent=0 // pred_region
    _
  $region25: #{encoder_forward.8} parent=0 // pred_fallthru
    _
  // Predicated region
  $region26: #{encoder_forward.8} parent=0 // pred_check
    _
  $region27: #{encoder_forward.8} parent=0 // pred_check_branch
    %629 = sbr.rel (0) target = $region29
  $region28: #{encoder_forward.8} parent=0 // pred_region
    _
  $region29: #{encoder_forward.8} parent=0 // pred_fallthru
    _
  // Predicated region
  $region30: #{encoder_forward.8} parent=0 // pred_check
    _
  $region31: #{encoder_forward.8} parent=0 // pred_check_branch
    %631 = sbr.rel (0) target = $region33
  $region32: #{encoder_forward.8} parent=0 // pred_region
    _
  $region33: #{encoder_forward.8} parent=0 // pred_fallthru
    _
  // Predicated region
  $region34: #{encoder_forward.8} parent=0 // pred_check
    _
  $region35: #{encoder_forward.8} parent=0 // pred_check_branch
    %633 = sbr.rel (0) target = $region37
  $region36: #{encoder_forward.8} parent=0 // pred_region
    _
  $region37: #{encoder_forward.8} parent=0 // pred_fallthru
    _

// kernel: encoder_forward.9
$region0: #{encoder_forward.9}
  #allocation0 [shape = 'u32[]', space=smem, size = 0x4, offset = 0x4, fixed_abs, tag = 'smem constant byte address 0x4 - core index']
  #allocation1 [shape = 'u32[144,128]{1,0:T(1,128)}', space=vmem, size = 0x12000, scoped, tag = 'internal scratch']
  %s0 = inlined_call_operand.vmem [shape: bf16[1,4096], index: 0, kind: input, shape index: {}]
  %s1 = inlined_call_operand.vmem [shape: f32[1,4096], index: 1, kind: input, shape index: {}]
  %s2 = inlined_call_operand.vmem [shape: f32[1,4096], index: 2, kind: input, shape index: {}]
  %s3 = inlined_call_operand.vmem [shape: bf16[4096,512], index: 3, kind: input, shape index: {}]
  %s4 = inlined_call_operand.vmem [shape: f32[1,512], index: 4, kind: input, shape index: {}]
  %s5 = inlined_call_operand.vmem [shape: f32[1,512], index: 5, kind: input, shape index: {}]
  %s6 = inlined_call_operand.vmem [shape: f32[1,512], index: 6, kind: input, shape index: {}]
  %s7 = inlined_call_operand.hbm [shape: f32[1,512], index: 7, kind: output, shape index: {}]
  %s8 = sld [smem:[#allocation0]]
  $region38: #{encoder_forward.9} parent=0
    _
  %s10 = ssub.s32 1, %s8
  %s11 = scalar_select 0, %s10, %s8
  $region1: #{encoder_forward.9} parent=0
    #allocation2 [shape = 'u8[2048]{0}', space=vmem, size = 0x800, scoped, tag = 'output window, operand 0, single buffered']
    #allocation3 [shape = 's32[1]{0}', space=sflag, size = 0x4, scoped, tag = 'scoped memory for encoder_forward.9']
    %12 = vsyncpa [#allocation3], 0
    // Predicated region
    $region2: #{encoder_forward.9} parent=1 // pred_check
      _
    $region3: #{encoder_forward.9} parent=1 // pred_check_branch
      %14 = sbr.rel (0) target = $region5
    $region4: #{encoder_forward.9} parent=1 // pred_region
      _
    $region5: #{encoder_forward.9} parent=1 // pred_fallthru
      _
    // Predicated region
    $region6: #{encoder_forward.9} parent=1 // pred_check
      _
    $region7: #{encoder_forward.9} parent=1 // pred_check_branch
      %16 = sbr.rel (0) target = $region9
    $region8: #{encoder_forward.9} parent=1 // pred_region
      _
    $region9: #{encoder_forward.9} parent=1 // pred_fallthru
      _
    // Predicated region
    $region10: #{encoder_forward.9} parent=1 // pred_check
      _
    $region11: #{encoder_forward.9} parent=1 // pred_check_branch
      %18 = sbr.rel (0) target = $region13
    $region12: #{encoder_forward.9} parent=1 // pred_region
      _
    $region13: #{encoder_forward.9} parent=1 // pred_fallthru
      _
    // Predicated region
    $region14: #{encoder_forward.9} parent=1 // pred_check
      _
    $region15: #{encoder_forward.9} parent=1 // pred_check_branch
      %20 = sbr.rel (0) target = $region17
    $region16: #{encoder_forward.9} parent=1 // pred_region
      _
    $region17: #{encoder_forward.9} parent=1 // pred_fallthru
      _
    // Predicated region
    $region18: #{encoder_forward.9} parent=1 // pred_check
      _
    $region19: #{encoder_forward.9} parent=1 // pred_check_branch
      %22 = sbr.rel (0) target = $region21
    $region20: #{encoder_forward.9} parent=1 // pred_region
      _
    $region21: #{encoder_forward.9} parent=1 // pred_fallthru
      _
    // Predicated region
    $region22: #{encoder_forward.9} parent=1 // pred_check
      _
    $region23: #{encoder_forward.9} parent=1 // pred_check_branch
      %24 = sbr.rel (0) target = $region25
    $region24: #{encoder_forward.9} parent=1 // pred_region
      _
    $region25: #{encoder_forward.9} parent=1 // pred_fallthru
      _
    // Predicated region
    $region26: #{encoder_forward.9} parent=1 // pred_check
      _
    $region27: #{encoder_forward.9} parent=1 // pred_check_branch
      %26 = sbr.rel (0) target = $region29
    $region28: #{encoder_forward.9} parent=1 // pred_region
      _
    $region29: #{encoder_forward.9} parent=1 // pred_fallthru
      _
    %v27 = vld [vmem:[%s0] sm:$0xff]
    %v28 = vld [vmem:[%s0 + $0x8] sm:$0xff]
    %v29 = vld [vmem:[%s0 + $0x10] sm:$0xff]
    %v30 = vld [vmem:[%s0 + $0x18] sm:$0xff]
    %v31 = vunpack.c.l.bf16 %v27
    %v32 = vunpack.c.h.bf16 %v27
    %v33 = vunpack.c.l.bf16 %v28
    %v34 = vunpack.c.h.bf16 %v28
    %v35 = vunpack.c.l.bf16 %v29
    %v36 = vunpack.c.h.bf16 %v29
    %v37 = vunpack.c.l.bf16 %v30
    %v38 = vunpack.c.h.bf16 %v30
    %v39 = vld [vmem:[%s1] sm:$0xff]
    %v40 = vld [vmem:[%s1 + $0x8] sm:$0xff]
    %v41 = vld [vmem:[%s1 + $0x10] sm:$0xff]
    %v42 = vld [vmem:[%s1 + $0x18] sm:$0xff]
    %v48 = vunpack.c.l.s4 857870592
    %v49 = vunpack.c.0.s8 %v48
    %v50 = vlaneseq
    %v51 = vshrl.u32 %v50, 7
    %v52 = vsub.s32 %v49, %v51
    %v53 = vrot.slane %v39, %v52
    %v55 = vunpack.c.l.s4 2003195204
    %v56 = vunpack.c.0.s8 %v55
    %v57 = vlaneseq
    %v58 = vshrl.u32 %v57, 7
    %v59 = vsub.s32 %v56, %v58
    %v60 = vrot.slane %v39, %v59
    %v62 = vunpack.c.l.s4 857870592
    %v63 = vunpack.c.0.s8 %v62
    %v64 = vlaneseq
    %v65 = vshrl.u32 %v64, 7
    %v66 = vsub.s32 %v63, %v65
    %v67 = vrot.slane %v40, %v66
    %v69 = vunpack.c.l.s4 2003195204
    %v70 = vunpack.c.0.s8 %v69
    %v71 = vlaneseq
    %v72 = vshrl.u32 %v71, 7
    %v73 = vsub.s32 %v70, %v72
    %v74 = vrot.slane %v40, %v73
    %v76 = vunpack.c.l.s4 857870592
    %v77 = vunpack.c.0.s8 %v76
    %v78 = vlaneseq
    %v79 = vshrl.u32 %v78, 7
    %v80 = vsub.s32 %v77, %v79
    %v81 = vrot.slane %v41, %v80
    %v83 = vunpack.c.l.s4 2003195204
    %v84 = vunpack.c.0.s8 %v83
    %v85 = vlaneseq
    %v86 = vshrl.u32 %v85, 7
    %v87 = vsub.s32 %v84, %v86
    %v88 = vrot.slane %v41, %v87
    %v90 = vunpack.c.l.s4 857870592
    %v91 = vunpack.c.0.s8 %v90
    %v92 = vlaneseq
    %v93 = vshrl.u32 %v92, 7
    %v94 = vsub.s32 %v91, %v93
    %v95 = vrot.slane %v42, %v94
    %v97 = vunpack.c.l.s4 2003195204
    %v98 = vunpack.c.0.s8 %v97
    %v99 = vlaneseq
    %v100 = vshrl.u32 %v99, 7
    %v101 = vsub.s32 %v98, %v100
    %v102 = vrot.slane %v42, %v101
    %v111 = vmul.f32 %v31, %v53
    %v112 = vmul.f32 %v32, %v60
    %v113 = vmul.f32 %v33, %v67
    %v114 = vmul.f32 %v34, %v74
    %v115 = vmul.f32 %v35, %v81
    %v116 = vmul.f32 %v36, %v88
    %v117 = vmul.f32 %v37, %v95
    %v118 = vmul.f32 %v38, %v102
    %v119 = vld [vmem:[%s2] sm:$0xff]
    %v120 = vld [vmem:[%s2 + $0x8] sm:$0xff]
    %v121 = vld [vmem:[%s2 + $0x10] sm:$0xff]
    %v122 = vld [vmem:[%s2 + $0x18] sm:$0xff]
    %v128 = vunpack.c.l.s4 857870592
    %v129 = vunpack.c.0.s8 %v128
    %v130 = vlaneseq
    %v131 = vshrl.u32 %v130, 7
    %v132 = vsub.s32 %v129, %v131
    %v133 = vrot.slane %v119, %v132
    %v135 = vunpack.c.l.s4 2003195204
    %v136 = vunpack.c.0.s8 %v135
    %v137 = vlaneseq
    %v138 = vshrl.u32 %v137, 7
    %v139 = vsub.s32 %v136, %v138
    %v140 = vrot.slane %v119, %v139
    %v142 = vunpack.c.l.s4 857870592
    %v143 = vunpack.c.0.s8 %v142
    %v144 = vlaneseq
    %v145 = vshrl.u32 %v144, 7
    %v146 = vsub.s32 %v143, %v145
    %v147 = vrot.slane %v120, %v146
    %v149 = vunpack.c.l.s4 2003195204
    %v150 = vunpack.c.0.s8 %v149
    %v151 = vlaneseq
    %v152 = vshrl.u32 %v151, 7
    %v153 = vsub.s32 %v150, %v152
    %v154 = vrot.slane %v120, %v153
    %v156 = vunpack.c.l.s4 857870592
    %v157 = vunpack.c.0.s8 %v156
    %v158 = vlaneseq
    %v159 = vshrl.u32 %v158, 7
    %v160 = vsub.s32 %v157, %v159
    %v161 = vrot.slane %v121, %v160
    %v163 = vunpack.c.l.s4 2003195204
    %v164 = vunpack.c.0.s8 %v163
    %v165 = vlaneseq
    %v166 = vshrl.u32 %v165, 7
    %v167 = vsub.s32 %v164, %v166
    %v168 = vrot.slane %v121, %v167
    %v170 = vunpack.c.l.s4 857870592
    %v171 = vunpack.c.0.s8 %v170
    %v172 = vlaneseq
    %v173 = vshrl.u32 %v172, 7
    %v174 = vsub.s32 %v171, %v173
    %v175 = vrot.slane %v122, %v174
    %v177 = vunpack.c.l.s4 2003195204
    %v178 = vunpack.c.0.s8 %v177
    %v179 = vlaneseq
    %v180 = vshrl.u32 %v179, 7
    %v181 = vsub.s32 %v178, %v180
    %v182 = vrot.slane %v122, %v181
    %v191 = vadd.f32 %v111, %v133
    %v192 = vadd.f32 %v112, %v140
    %v193 = vadd.f32 %v113, %v147
    %v194 = vadd.f32 %v114, %v154
    %v195 = vadd.f32 %v115, %v161
    %v196 = vadd.f32 %v116, %v168
    %v197 = vadd.f32 %v117, %v175
    %v198 = vadd.f32 %v118, %v182
    %v207 = vlaneseq
    %v208 = vshrl.u32 %v207, 7
    %v209 = vsub.s32 0, %v208
    %v210 = vrot.slane %v191, %v209
    %v211 = vlaneseq
    %v212 = vshrl.u32 %v211, 7
    %v213 = vsub.s32 2, %v212
    %v214 = vrot.slane %v191, %v213
    %v215 = vlaneseq
    %v216 = vshrl.u32 %v215, 7
    %v217 = vsub.s32 4, %v216
    %v218 = vrot.slane %v191, %v217
    %v219 = vlaneseq
    %v220 = vshrl.u32 %v219, 7
    %v221 = vsub.s32 6, %v220
    %v222 = vrot.slane %v191, %v221
    %v223 = vlaneseq
    %v224 = vshrl.u32 %v223, 7
    %v225 = vsub.s32 0, %v224
    %v226 = vrot.slane %v192, %v225
    %v227 = vlaneseq
    %v228 = vshrl.u32 %v227, 7
    %v229 = vsub.s32 2, %v228
    %v230 = vrot.slane %v192, %v229
    %v231 = vlaneseq
    %v232 = vshrl.u32 %v231, 7
    %v233 = vsub.s32 4, %v232
    %v234 = vrot.slane %v192, %v233
    %v235 = vlaneseq
    %v236 = vshrl.u32 %v235, 7
    %v237 = vsub.s32 6, %v236
    %v238 = vrot.slane %v192, %v237
    %v239 = vlaneseq
    %v240 = vshrl.u32 %v239, 7
    %v241 = vsub.s32 0, %v240
    %v242 = vrot.slane %v193, %v241
    %v243 = vlaneseq
    %v244 = vshrl.u32 %v243, 7
    %v245 = vsub.s32 2, %v244
    %v246 = vrot.slane %v193, %v245
    %v247 = vlaneseq
    %v248 = vshrl.u32 %v247, 7
    %v249 = vsub.s32 4, %v248
    %v250 = vrot.slane %v193, %v249
    %v251 = vlaneseq
    %v252 = vshrl.u32 %v251, 7
    %v253 = vsub.s32 6, %v252
    %v254 = vrot.slane %v193, %v253
    %v255 = vlaneseq
    %v256 = vshrl.u32 %v255, 7
    %v257 = vsub.s32 0, %v256
    %v258 = vrot.slane %v194, %v257
    %v259 = vlaneseq
    %v260 = vshrl.u32 %v259, 7
    %v261 = vsub.s32 2, %v260
    %v262 = vrot.slane %v194, %v261
    %v263 = vlaneseq
    %v264 = vshrl.u32 %v263, 7
    %v265 = vsub.s32 4, %v264
    %v266 = vrot.slane %v194, %v265
    %v267 = vlaneseq
    %v268 = vshrl.u32 %v267, 7
    %v269 = vsub.s32 6, %v268
    %v270 = vrot.slane %v194, %v269
    %v271 = vlaneseq
    %v272 = vshrl.u32 %v271, 7
    %v273 = vsub.s32 0, %v272
    %v274 = vrot.slane %v195, %v273
    %v275 = vlaneseq
    %v276 = vshrl.u32 %v275, 7
    %v277 = vsub.s32 2, %v276
    %v278 = vrot.slane %v195, %v277
    %v279 = vlaneseq
    %v280 = vshrl.u32 %v279, 7
    %v281 = vsub.s32 4, %v280
    %v282 = vrot.slane %v195, %v281
    %v283 = vlaneseq
    %v284 = vshrl.u32 %v283, 7
    %v285 = vsub.s32 6, %v284
    %v286 = vrot.slane %v195, %v285
    %v287 = vlaneseq
    %v288 = vshrl.u32 %v287, 7
    %v289 = vsub.s32 0, %v288
    %v290 = vrot.slane %v196, %v289
    %v291 = vlaneseq
    %v292 = vshrl.u32 %v291, 7
    %v293 = vsub.s32 2, %v292
    %v294 = vrot.slane %v196, %v293
    %v295 = vlaneseq
    %v296 = vshrl.u32 %v295, 7
    %v297 = vsub.s32 4, %v296
    %v298 = vrot.slane %v196, %v297
    %v299 = vlaneseq
    %v300 = vshrl.u32 %v299, 7
    %v301 = vsub.s32 6, %v300
    %v302 = vrot.slane %v196, %v301
    %v303 = vlaneseq
    %v304 = vshrl.u32 %v303, 7
    %v305 = vsub.s32 0, %v304
    %v306 = vrot.slane %v197, %v305
    %v307 = vlaneseq
    %v308 = vshrl.u32 %v307, 7
    %v309 = vsub.s32 2, %v308
    %v310 = vrot.slane %v197, %v309
    %v311 = vlaneseq
    %v312 = vshrl.u32 %v311, 7
    %v313 = vsub.s32 4, %v312
    %v314 = vrot.slane %v197, %v313
    %v315 = vlaneseq
    %v316 = vshrl.u32 %v315, 7
    %v317 = vsub.s32 6, %v316
    %v318 = vrot.slane %v197, %v317
    %v319 = vlaneseq
    %v320 = vshrl.u32 %v319, 7
    %v321 = vsub.s32 0, %v320
    %v322 = vrot.slane %v198, %v321
    %v323 = vlaneseq
    %v324 = vshrl.u32 %v323, 7
    %v325 = vsub.s32 2, %v324
    %v326 = vrot.slane %v198, %v325
    %v327 = vlaneseq
    %v328 = vshrl.u32 %v327, 7
    %v329 = vsub.s32 4, %v328
    %v330 = vrot.slane %v198, %v329
    %v331 = vlaneseq
    %v332 = vshrl.u32 %v331, 7
    %v333 = vsub.s32 6, %v332
    %v334 = vrot.slane %v198, %v333
    %v367 = vpack.c.bf16 %v210, %v210
    %v368 = vpack.c.bf16 %v214, %v214
    %v369 = vpack.c.bf16 %v218, %v218
    %v370 = vpack.c.bf16 %v222, %v222
    %v371 = vpack.c.bf16 %v226, %v226
    %v372 = vpack.c.bf16 %v230, %v230
    %v373 = vpack.c.bf16 %v234, %v234
    %v374 = vpack.c.bf16 %v238, %v238
    %v375 = vpack.c.bf16 %v242, %v242
    %v376 = vpack.c.bf16 %v246, %v246
    %v377 = vpack.c.bf16 %v250, %v250
    %v378 = vpack.c.bf16 %v254, %v254
    %v379 = vpack.c.bf16 %v258, %v258
    %v380 = vpack.c.bf16 %v262, %v262
    %v381 = vpack.c.bf16 %v266, %v266
    %v382 = vpack.c.bf16 %v270, %v270
    %v383 = vpack.c.bf16 %v274, %v274
    %v384 = vpack.c.bf16 %v278, %v278
    %v385 = vpack.c.bf16 %v282, %v282
    %v386 = vpack.c.bf16 %v286, %v286
    %v387 = vpack.c.bf16 %v290, %v290
    %v388 = vpack.c.bf16 %v294, %v294
    %v389 = vpack.c.bf16 %v298, %v298
    %v390 = vpack.c.bf16 %v302, %v302
    %v391 = vpack.c.bf16 %v306, %v306
    %v392 = vpack.c.bf16 %v310, %v310
    %v393 = vpack.c.bf16 %v314, %v314
    %v394 = vpack.c.bf16 %v318, %v318
    %v395 = vpack.c.bf16 %v322, %v322
    %v396 = vpack.c.bf16 %v326, %v326
    %v397 = vpack.c.bf16 %v330, %v330
    %v398 = vpack.c.bf16 %v334, %v334
    %v399 = vld [vmem:[%s3] sm:$0xff]
    %v400 = vld [vmem:[%s3 + $0x8] sm:$0xff]
    %v401 = vld [vmem:[%s3 + $0x10] sm:$0xff]
    %v402 = vld [vmem:[%s3 + $0x18] sm:$0xff]
    %v403 = vld [vmem:[%s3 + $0x20] sm:$0xff]
    %v404 = vld [vmem:[%s3 + $0x28] sm:$0xff]
    %v405 = vld [vmem:[%s3 + $0x30] sm:$0xff]
    %v406 = vld [vmem:[%s3 + $0x38] sm:$0xff]
    %v407 = vld [vmem:[%s3 + $0x40] sm:$0xff]
    %v408 = vld [vmem:[%s3 + $0x48] sm:$0xff]
    %v409 = vld [vmem:[%s3 + $0x50] sm:$0xff]
    %v410 = vld [vmem:[%s3 + $0x58] sm:$0xff]
    %v411 = vld [vmem:[%s3 + $0x60] sm:$0xff]
    %v412 = vld [vmem:[%s3 + $0x68] sm:$0xff]
    %v413 = vld [vmem:[%s3 + $0x70] sm:$0xff]
    %v414 = vld [vmem:[%s3 + $0x78] sm:$0xff]
    %v415 = vld [vmem:[%s3 + $0x80] sm:$0xff]
    %v416 = vld [vmem:[%s3 + $0x88] sm:$0xff]
    %v417 = vld [vmem:[%s3 + $0x90] sm:$0xff]
    %v418 = vld [vmem:[%s3 + $0x98] sm:$0xff]
    %v419 = vld [vmem:[%s3 + $0xa0] sm:$0xff]
    %v420 = vld [vmem:[%s3 + $0xa8] sm:$0xff]
    %v421 = vld [vmem:[%s3 + $0xb0] sm:$0xff]
    %v422 = vld [vmem:[%s3 + $0xb8] sm:$0xff]
    %v423 = vld [vmem:[%s3 + $0xc0] sm:$0xff]
    %v424 = vld [vmem:[%s3 + $0xc8] sm:$0xff]
    %v425 = vld [vmem:[%s3 + $0xd0] sm:$0xff]
    %v426 = vld [vmem:[%s3 + $0xd8] sm:$0xff]
    %v427 = vld [vmem:[%s3 + $0xe0] sm:$0xff]
    %v428 = vld [vmem:[%s3 + $0xe8] sm:$0xff]
    %v429 = vld [vmem:[%s3 + $0xf0] sm:$0xff]
    %v430 = vld [vmem:[%s3 + $0xf8] sm:$0xff]
    %v431 = vld [vmem:[%s3 + $0x100] sm:$0xff]
    %v432 = vld [vmem:[%s3 + $0x108] sm:$0xff]
    %v433 = vld [vmem:[%s3 + $0x110] sm:$0xff]
    %v434 = vld [vmem:[%s3 + $0x118] sm:$0xff]
    %v435 = vld [vmem:[%s3 + $0x120] sm:$0xff]
    %v436 = vld [vmem:[%s3 + $0x128] sm:$0xff]
    %v437 = vld [vmem:[%s3 + $0x130] sm:$0xff]
    %v438 = vld [vmem:[%s3 + $0x138] sm:$0xff]
    %v439 = vld [vmem:[%s3 + $0x140] sm:$0xff]
    %v440 = vld [vmem:[%s3 + $0x148] sm:$0xff]
    %v441 = vld [vmem:[%s3 + $0x150] sm:$0xff]
    %v442 = vld [vmem:[%s3 + $0x158] sm:$0xff]
    %v443 = vld [vmem:[%s3 + $0x160] sm:$0xff]
    %v444 = vld [vmem:[%s3 + $0x168] sm:$0xff]
    %v445 = vld [vmem:[%s3 + $0x170] sm:$0xff]
    %v446 = vld [vmem:[%s3 + $0x178] sm:$0xff]
    %v447 = vld [vmem:[%s3 + $0x180] sm:$0xff]
    %v448 = vld [vmem:[%s3 + $0x188] sm:$0xff]
    %v449 = vld [vmem:[%s3 + $0x190] sm:$0xff]
    %v450 = vld [vmem:[%s3 + $0x198] sm:$0xff]
    %v451 = vld [vmem:[%s3 + $0x1a0] sm:$0xff]
    %v452 = vld [vmem:[%s3 + $0x1a8] sm:$0xff]
    %v453 = vld [vmem:[%s3 + $0x1b0] sm:$0xff]
    %v454 = vld [vmem:[%s3 + $0x1b8] sm:$0xff]
    %v455 = vld [vmem:[%s3 + $0x1c0] sm:$0xff]
    %v456 = vld [vmem:[%s3 + $0x1c8] sm:$0xff]
    %v457 = vld [vmem:[%s3 + $0x1d0] sm:$0xff]
    %v458 = vld [vmem:[%s3 + $0x1d8] sm:$0xff]
    %v459 = vld [vmem:[%s3 + $0x1e0] sm:$0xff]
    %v460 = vld [vmem:[%s3 + $0x1e8] sm:$0xff]
    %v461 = vld [vmem:[%s3 + $0x1f0] sm:$0xff]
    %v462 = vld [vmem:[%s3 + $0x1f8] sm:$0xff]
    %v463 = vld [vmem:[%s3 + $0x200] sm:$0xff]
    %v464 = vld [vmem:[%s3 + $0x208] sm:$0xff]
    %v465 = vld [vmem:[%s3 + $0x210] sm:$0xff]
    %v466 = vld [vmem:[%s3 + $0x218] sm:$0xff]
    %v467 = vld [vmem:[%s3 + $0x220] sm:$0xff]
    %v468 = vld [vmem:[%s3 + $0x228] sm:$0xff]
    %v469 = vld [vmem:[%s3 + $0x230] sm:$0xff]
    %v470 = vld [vmem:[%s3 + $0x238] sm:$0xff]
    %v471 = vld [vmem:[%s3 + $0x240] sm:$0xff]
    %v472 = vld [vmem:[%s3 + $0x248] sm:$0xff]
    %v473 = vld [vmem:[%s3 + $0x250] sm:$0xff]
    %v474 = vld [vmem:[%s3 + $0x258] sm:$0xff]
    %v475 = vld [vmem:[%s3 + $0x260] sm:$0xff]
    %v476 = vld [vmem:[%s3 + $0x268] sm:$0xff]
    %v477 = vld [vmem:[%s3 + $0x270] sm:$0xff]
    %v478 = vld [vmem:[%s3 + $0x278] sm:$0xff]
    %v479 = vld [vmem:[%s3 + $0x280] sm:$0xff]
    %v480 = vld [vmem:[%s3 + $0x288] sm:$0xff]
    %v481 = vld [vmem:[%s3 + $0x290] sm:$0xff]
    %v482 = vld [vmem:[%s3 + $0x298] sm:$0xff]
    %v483 = vld [vmem:[%s3 + $0x2a0] sm:$0xff]
    %v484 = vld [vmem:[%s3 + $0x2a8] sm:$0xff]
    %v485 = vld [vmem:[%s3 + $0x2b0] sm:$0xff]
    %v486 = vld [vmem:[%s3 + $0x2b8] sm:$0xff]
    %v487 = vld [vmem:[%s3 + $0x2c0] sm:$0xff]
    %v488 = vld [vmem:[%s3 + $0x2c8] sm:$0xff]
    %v489 = vld [vmem:[%s3 + $0x2d0] sm:$0xff]
    %v490 = vld [vmem:[%s3 + $0x2d8] sm:$0xff]
    %v491 = vld [vmem:[%s3 + $0x2e0] sm:$0xff]
    %v492 = vld [vmem:[%s3 + $0x2e8] sm:$0xff]
    %v493 = vld [vmem:[%s3 + $0x2f0] sm:$0xff]
    %v494 = vld [vmem:[%s3 + $0x2f8] sm:$0xff]
    %v495 = vld [vmem:[%s3 + $0x300] sm:$0xff]
    %v496 = vld [vmem:[%s3 + $0x308] sm:$0xff]
    %v497 = vld [vmem:[%s3 + $0x310] sm:$0xff]
    %v498 = vld [vmem:[%s3 + $0x318] sm:$0xff]
    %v499 = vld [vmem:[%s3 + $0x320] sm:$0xff]
    %v500 = vld [vmem:[%s3 + $0x328] sm:$0xff]
    %v501 = vld [vmem:[%s3 + $0x330] sm:$0xff]
    %v502 = vld [vmem:[%s3 + $0x338] sm:$0xff]
    %v503 = vld [vmem:[%s3 + $0x340] sm:$0xff]
    %v504 = vld [vmem:[%s3 + $0x348] sm:$0xff]
    %v505 = vld [vmem:[%s3 + $0x350] sm:$0xff]
    %v506 = vld [vmem:[%s3 + $0x358] sm:$0xff]
    %v507 = vld [vmem:[%s3 + $0x360] sm:$0xff]
    %v508 = vld [vmem:[%s3 + $0x368] sm:$0xff]
    %v509 = vld [vmem:[%s3 + $0x370] sm:$0xff]
    %v510 = vld [vmem:[%s3 + $0x378] sm:$0xff]
    %v511 = vld [vmem:[%s3 + $0x380] sm:$0xff]
    %v512 = vld [vmem:[%s3 + $0x388] sm:$0xff]
    %v513 = vld [vmem:[%s3 + $0x390] sm:$0xff]
    %v514 = vld [vmem:[%s3 + $0x398] sm:$0xff]
    %v515 = vld [vmem:[%s3 + $0x3a0] sm:$0xff]
    %v516 = vld [vmem:[%s3 + $0x3a8] sm:$0xff]
    %v517 = vld [vmem:[%s3 + $0x3b0] sm:$0xff]
    %v518 = vld [vmem:[%s3 + $0x3b8] sm:$0xff]
    %v519 = vld [vmem:[%s3 + $0x3c0] sm:$0xff]
    %v520 = vld [vmem:[%s3 + $0x3c8] sm:$0xff]
    %v521 = vld [vmem:[%s3 + $0x3d0] sm:$0xff]
    %v522 = vld [vmem:[%s3 + $0x3d8] sm:$0xff]
    %v523 = vld [vmem:[%s3 + $0x3e0] sm:$0xff]
    %v524 = vld [vmem:[%s3 + $0x3e8] sm:$0xff]
    %v525 = vld [vmem:[%s3 + $0x3f0] sm:$0xff]
    %v526 = vld [vmem:[%s3 + $0x3f8] sm:$0xff]
    %v527 = vld [vmem:[%s3 + $0x400] sm:$0xff]
    %v528 = vld [vmem:[%s3 + $0x408] sm:$0xff]
    %v529 = vld [vmem:[%s3 + $0x410] sm:$0xff]
    %v530 = vld [vmem:[%s3 + $0x418] sm:$0xff]
    %v531 = vld [vmem:[%s3 + $0x420] sm:$0xff]
    %v532 = vld [vmem:[%s3 + $0x428] sm:$0xff]
    %v533 = vld [vmem:[%s3 + $0x430] sm:$0xff]
    %v534 = vld [vmem:[%s3 + $0x438] sm:$0xff]
    %v535 = vld [vmem:[%s3 + $0x440] sm:$0xff]
    %v536 = vld [vmem:[%s3 + $0x448] sm:$0xff]
    %v537 = vld [vmem:[%s3 + $0x450] sm:$0xff]
    %v538 = vld [vmem:[%s3 + $0x458] sm:$0xff]
    %v539 = vld [vmem:[%s3 + $0x460] sm:$0xff]
    %v540 = vld [vmem:[%s3 + $0x468] sm:$0xff]
    %v541 = vld [vmem:[%s3 + $0x470] sm:$0xff]
    %v542 = vld [vmem:[%s3 + $0x478] sm:$0xff]
    %v543 = vld [vmem:[%s3 + $0x480] sm:$0xff]
    %v544 = vld [vmem:[%s3 + $0x488] sm:$0xff]
    %v545 = vld [vmem:[%s3 + $0x490] sm:$0xff]
    %v546 = vld [vmem:[%s3 + $0x498] sm:$0xff]
    %v547 = vld [vmem:[%s3 + $0x4a0] sm:$0xff]
    %v548 = vld [vmem:[%s3 + $0x4a8] sm:$0xff]
    %v549 = vld [vmem:[%s3 + $0x4b0] sm:$0xff]
    %v550 = vld [vmem:[%s3 + $0x4b8] sm:$0xff]
    %v551 = vld [vmem:[%s3 + $0x4c0] sm:$0xff]
    %v552 = vld [vmem:[%s3 + $0x4c8] sm:$0xff]
    %v553 = vld [vmem:[%s3 + $0x4d0] sm:$0xff]
    %v554 = vld [vmem:[%s3 + $0x4d8] sm:$0xff]
    %v555 = vld [vmem:[%s3 + $0x4e0] sm:$0xff]
    %v556 = vld [vmem:[%s3 + $0x4e8] sm:$0xff]
    %v557 = vld [vmem:[%s3 + $0x4f0] sm:$0xff]
    %v558 = vld [vmem:[%s3 + $0x4f8] sm:$0xff]
    %v559 = vld [vmem:[%s3 + $0x500] sm:$0xff]
    %v560 = vld [vmem:[%s3 + $0x508] sm:$0xff]
    %v561 = vld [vmem:[%s3 + $0x510] sm:$0xff]
    %v562 = vld [vmem:[%s3 + $0x518] sm:$0xff]
    %v563 = vld [vmem:[%s3 + $0x520] sm:$0xff]
    %v564 = vld [vmem:[%s3 + $0x528] sm:$0xff]
    %v565 = vld [vmem:[%s3 + $0x530] sm:$0xff]
    %v566 = vld [vmem:[%s3 + $0x538] sm:$0xff]
    %v567 = vld [vmem:[%s3 + $0x540] sm:$0xff]
    %v568 = vld [vmem:[%s3 + $0x548] sm:$0xff]
    %v569 = vld [vmem:[%s3 + $0x550] sm:$0xff]
    %v570 = vld [vmem:[%s3 + $0x558] sm:$0xff]
    %v571 = vld [vmem:[%s3 + $0x560] sm:$0xff]
    %v572 = vld [vmem:[%s3 + $0x568] sm:$0xff]
    %v573 = vld [vmem:[%s3 + $0x570] sm:$0xff]
    %v574 = vld [vmem:[%s3 + $0x578] sm:$0xff]
    %v575 = vld [vmem:[%s3 + $0x580] sm:$0xff]
    %v576 = vld [vmem:[%s3 + $0x588] sm:$0xff]
    %v577 = vld [vmem:[%s3 + $0x590] sm:$0xff]
    %v578 = vld [vmem:[%s3 + $0x598] sm:$0xff]
    %v579 = vld [vmem:[%s3 + $0x5a0] sm:$0xff]
    %v580 = vld [vmem:[%s3 + $0x5a8] sm:$0xff]
    %v581 = vld [vmem:[%s3 + $0x5b0] sm:$0xff]
    %v582 = vld [vmem:[%s3 + $0x5b8] sm:$0xff]
    %v583 = vld [vmem:[%s3 + $0x5c0] sm:$0xff]
    %v584 = vld [vmem:[%s3 + $0x5c8] sm:$0xff]
    %v585 = vld [vmem:[%s3 + $0x5d0] sm:$0xff]
    %v586 = vld [vmem:[%s3 + $0x5d8] sm:$0xff]
    %v587 = vld [vmem:[%s3 + $0x5e0] sm:$0xff]
    %v588 = vld [vmem:[%s3 + $0x5e8] sm:$0xff]
    %v589 = vld [vmem:[%s3 + $0x5f0] sm:$0xff]
    %v590 = vld [vmem:[%s3 + $0x5f8] sm:$0xff]
    %v591 = vld [vmem:[%s3 + $0x600] sm:$0xff]
    %v592 = vld [vmem:[%s3 + $0x608] sm:$0xff]
    %v593 = vld [vmem:[%s3 + $0x610] sm:$0xff]
    %v594 = vld [vmem:[%s3 + $0x618] sm:$0xff]
    %v595 = vld [vmem:[%s3 + $0x620] sm:$0xff]
    %v596 = vld [vmem:[%s3 + $0x628] sm:$0xff]
    %v597 = vld [vmem:[%s3 + $0x630] sm:$0xff]
    %v598 = vld [vmem:[%s3 + $0x638] sm:$0xff]
    %v599 = vld [vmem:[%s3 + $0x640] sm:$0xff]
    %v600 = vld [vmem:[%s3 + $0x648] sm:$0xff]
    %v601 = vld [vmem:[%s3 + $0x650] sm:$0xff]
    %v602 = vld [vmem:[%s3 + $0x658] sm:$0xff]
    %v603 = vld [vmem:[%s3 + $0x660] sm:$0xff]
    %v604 = vld [vmem:[%s3 + $0x668] sm:$0xff]
    %v605 = vld [vmem:[%s3 + $0x670] sm:$0xff]
    %v606 = vld [vmem:[%s3 + $0x678] sm:$0xff]
    %v607 = vld [vmem:[%s3 + $0x680] sm:$0xff]
    %v608 = vld [vmem:[%s3 + $0x688] sm:$0xff]
    %v609 = vld [vmem:[%s3 + $0x690] sm:$0xff]
    %v610 = vld [vmem:[%s3 + $0x698] sm:$0xff]
    %v611 = vld [vmem:[%s3 + $0x6a0] sm:$0xff]
    %v612 = vld [vmem:[%s3 + $0x6a8] sm:$0xff]
    %v613 = vld [vmem:[%s3 + $0x6b0] sm:$0xff]
    %v614 = vld [vmem:[%s3 + $0x6b8] sm:$0xff]
    %v615 = vld [vmem:[%s3 + $0x6c0] sm:$0xff]
    %v616 = vld [vmem:[%s3 + $0x6c8] sm:$0xff]
    %v617 = vld [vmem:[%s3 + $0x6d0] sm:$0xff]
    %v618 = vld [vmem:[%s3 + $0x6d8] sm:$0xff]
    %v619 = vld [vmem:[%s3 + $0x6e0] sm:$0xff]
    %v620 = vld [vmem:[%s3 + $0x6e8] sm:$0xff]
    %v621 = vld [vmem:[%s3 + $0x6f0] sm:$0xff]
    %v622 = vld [vmem:[%s3 + $0x6f8] sm:$0xff]
    %v623 = vld [vmem:[%s3 + $0x700] sm:$0xff]
    %v624 = vld [vmem:[%s3 + $0x708] sm:$0xff]
    %v625 = vld [vmem:[%s3 + $0x710] sm:$0xff]
    %v626 = vld [vmem:[%s3 + $0x718] sm:$0xff]
    %v627 = vld [vmem:[%s3 + $0x720] sm:$0xff]
    %v628 = vld [vmem:[%s3 + $0x728] sm:$0xff]
    %v629 = vld [vmem:[%s3 + $0x730] sm:$0xff]
    %v630 = vld [vmem:[%s3 + $0x738] sm:$0xff]
    %v631 = vld [vmem:[%s3 + $0x740] sm:$0xff]
    %v632 = vld [vmem:[%s3 + $0x748] sm:$0xff]
    %v633 = vld [vmem:[%s3 + $0x750] sm:$0xff]
    %v634 = vld [vmem:[%s3 + $0x758] sm:$0xff]
    %v635 = vld [vmem:[%s3 + $0x760] sm:$0xff]
    %v636 = vld [vmem:[%s3 + $0x768] sm:$0xff]
    %v637 = vld [vmem:[%s3 + $0x770] sm:$0xff]
    %v638 = vld [vmem:[%s3 + $0x778] sm:$0xff]
    %v639 = vld [vmem:[%s3 + $0x780] sm:$0xff]
    %v640 = vld [vmem:[%s3 + $0x788] sm:$0xff]
    %v641 = vld [vmem:[%s3 + $0x790] sm:$0xff]
    %v642 = vld [vmem:[%s3 + $0x798] sm:$0xff]
    %v643 = vld [vmem:[%s3 + $0x7a0] sm:$0xff]
    %v644 = vld [vmem:[%s3 + $0x7a8] sm:$0xff]
    %v645 = vld [vmem:[%s3 + $0x7b0] sm:$0xff]
    %v646 = vld [vmem:[%s3 + $0x7b8] sm:$0xff]
    %v647 = vld [vmem:[%s3 + $0x7c0] sm:$0xff]
    %v648 = vld [vmem:[%s3 + $0x7c8] sm:$0xff]
    %v649 = vld [vmem:[%s3 + $0x7d0] sm:$0xff]
    %v650 = vld [vmem:[%s3 + $0x7d8] sm:$0xff]
    %v651 = vld [vmem:[%s3 + $0x7e0] sm:$0xff]
    %v652 = vld [vmem:[%s3 + $0x7e8] sm:$0xff]
    %v653 = vld [vmem:[%s3 + $0x7f0] sm:$0xff]
    %v654 = vld [vmem:[%s3 + $0x7f8] sm:$0xff]
    %v655 = vld [vmem:[%s3 + $0x800] sm:$0xff]
    %v656 = vld [vmem:[%s3 + $0x808] sm:$0xff]
    %v657 = vld [vmem:[%s3 + $0x810] sm:$0xff]
    %v658 = vld [vmem:[%s3 + $0x818] sm:$0xff]
    %v659 = vld [vmem:[%s3 + $0x820] sm:$0xff]
    %v660 = vld [vmem:[%s3 + $0x828] sm:$0xff]
    %v661 = vld [vmem:[%s3 + $0x830] sm:$0xff]
    %v662 = vld [vmem:[%s3 + $0x838] sm:$0xff]
    %v663 = vld [vmem:[%s3 + $0x840] sm:$0xff]
    %v664 = vld [vmem:[%s3 + $0x848] sm:$0xff]
    %v665 = vld [vmem:[%s3 + $0x850] sm:$0xff]
    %v666 = vld [vmem:[%s3 + $0x858] sm:$0xff]
    %v667 = vld [vmem:[%s3 + $0x860] sm:$0xff]
    %v668 = vld [vmem:[%s3 + $0x868] sm:$0xff]
    %v669 = vld [vmem:[%s3 + $0x870] sm:$0xff]
    %v670 = vld [vmem:[%s3 + $0x878] sm:$0xff]
    %v671 = vld [vmem:[%s3 + $0x880] sm:$0xff]
    %v672 = vld [vmem:[%s3 + $0x888] sm:$0xff]
    %v673 = vld [vmem:[%s3 + $0x890] sm:$0xff]
    %v674 = vld [vmem:[%s3 + $0x898] sm:$0xff]
    %v675 = vld [vmem:[%s3 + $0x8a0] sm:$0xff]
    %v676 = vld [vmem:[%s3 + $0x8a8] sm:$0xff]
    %v677 = vld [vmem:[%s3 + $0x8b0] sm:$0xff]
    %v678 = vld [vmem:[%s3 + $0x8b8] sm:$0xff]
    %v679 = vld [vmem:[%s3 + $0x8c0] sm:$0xff]
    %v680 = vld [vmem:[%s3 + $0x8c8] sm:$0xff]
    %v681 = vld [vmem:[%s3 + $0x8d0] sm:$0xff]
    %v682 = vld [vmem:[%s3 + $0x8d8] sm:$0xff]
    %v683 = vld [vmem:[%s3 + $0x8e0] sm:$0xff]
    %v684 = vld [vmem:[%s3 + $0x8e8] sm:$0xff]
    %v685 = vld [vmem:[%s3 + $0x8f0] sm:$0xff]
    %v686 = vld [vmem:[%s3 + $0x8f8] sm:$0xff]
    %v687 = vld [vmem:[%s3 + $0x900] sm:$0xff]
    %v688 = vld [vmem:[%s3 + $0x908] sm:$0xff]
    %v689 = vld [vmem:[%s3 + $0x910] sm:$0xff]
    %v690 = vld [vmem:[%s3 + $0x918] sm:$0xff]
    %v691 = vld [vmem:[%s3 + $0x920] sm:$0xff]
    %v692 = vld [vmem:[%s3 + $0x928] sm:$0xff]
    %v693 = vld [vmem:[%s3 + $0x930] sm:$0xff]
    %v694 = vld [vmem:[%s3 + $0x938] sm:$0xff]
    %v695 = vld [vmem:[%s3 + $0x940] sm:$0xff]
    %v696 = vld [vmem:[%s3 + $0x948] sm:$0xff]
    %v697 = vld [vmem:[%s3 + $0x950] sm:$0xff]
    %v698 = vld [vmem:[%s3 + $0x958] sm:$0xff]
    %v699 = vld [vmem:[%s3 + $0x960] sm:$0xff]
    %v700 = vld [vmem:[%s3 + $0x968] sm:$0xff]
    %v701 = vld [vmem:[%s3 + $0x970] sm:$0xff]
    %v702 = vld [vmem:[%s3 + $0x978] sm:$0xff]
    %v703 = vld [vmem:[%s3 + $0x980] sm:$0xff]
    %v704 = vld [vmem:[%s3 + $0x988] sm:$0xff]
    %v705 = vld [vmem:[%s3 + $0x990] sm:$0xff]
    %v706 = vld [vmem:[%s3 + $0x998] sm:$0xff]
    %v707 = vld [vmem:[%s3 + $0x9a0] sm:$0xff]
    %v708 = vld [vmem:[%s3 + $0x9a8] sm:$0xff]
    %v709 = vld [vmem:[%s3 + $0x9b0] sm:$0xff]
    %v710 = vld [vmem:[%s3 + $0x9b8] sm:$0xff]
    %v711 = vld [vmem:[%s3 + $0x9c0] sm:$0xff]
    %v712 = vld [vmem:[%s3 + $0x9c8] sm:$0xff]
    %v713 = vld [vmem:[%s3 + $0x9d0] sm:$0xff]
    %v714 = vld [vmem:[%s3 + $0x9d8] sm:$0xff]
    %v715 = vld [vmem:[%s3 + $0x9e0] sm:$0xff]
    %v716 = vld [vmem:[%s3 + $0x9e8] sm:$0xff]
    %v717 = vld [vmem:[%s3 + $0x9f0] sm:$0xff]
    %v718 = vld [vmem:[%s3 + $0x9f8] sm:$0xff]
    %v719 = vld [vmem:[%s3 + $0xa00] sm:$0xff]
    %v720 = vld [vmem:[%s3 + $0xa08] sm:$0xff]
    %v721 = vld [vmem:[%s3 + $0xa10] sm:$0xff]
    %v722 = vld [vmem:[%s3 + $0xa18] sm:$0xff]
    %v723 = vld [vmem:[%s3 + $0xa20] sm:$0xff]
    %v724 = vld [vmem:[%s3 + $0xa28] sm:$0xff]
    %v725 = vld [vmem:[%s3 + $0xa30] sm:$0xff]
    %v726 = vld [vmem:[%s3 + $0xa38] sm:$0xff]
    %v727 = vld [vmem:[%s3 + $0xa40] sm:$0xff]
    %v728 = vld [vmem:[%s3 + $0xa48] sm:$0xff]
    %v729 = vld [vmem:[%s3 + $0xa50] sm:$0xff]
    %v730 = vld [vmem:[%s3 + $0xa58] sm:$0xff]
    %v731 = vld [vmem:[%s3 + $0xa60] sm:$0xff]
    %v732 = vld [vmem:[%s3 + $0xa68] sm:$0xff]
    %v733 = vld [vmem:[%s3 + $0xa70] sm:$0xff]
    %v734 = vld [vmem:[%s3 + $0xa78] sm:$0xff]
    %v735 = vld [vmem:[%s3 + $0xa80] sm:$0xff]
    %v736 = vld [vmem:[%s3 + $0xa88] sm:$0xff]
    %v737 = vld [vmem:[%s3 + $0xa90] sm:$0xff]
    %v738 = vld [vmem:[%s3 + $0xa98] sm:$0xff]
    %v739 = vld [vmem:[%s3 + $0xaa0] sm:$0xff]
    %v740 = vld [vmem:[%s3 + $0xaa8] sm:$0xff]
    %v741 = vld [vmem:[%s3 + $0xab0] sm:$0xff]
    %v742 = vld [vmem:[%s3 + $0xab8] sm:$0xff]
    %v743 = vld [vmem:[%s3 + $0xac0] sm:$0xff]
    %v744 = vld [vmem:[%s3 + $0xac8] sm:$0xff]
    %v745 = vld [vmem:[%s3 + $0xad0] sm:$0xff]
    %v746 = vld [vmem:[%s3 + $0xad8] sm:$0xff]
    %v747 = vld [vmem:[%s3 + $0xae0] sm:$0xff]
    %v748 = vld [vmem:[%s3 + $0xae8] sm:$0xff]
    %v749 = vld [vmem:[%s3 + $0xaf0] sm:$0xff]
    %v750 = vld [vmem:[%s3 + $0xaf8] sm:$0xff]
    %v751 = vld [vmem:[%s3 + $0xb00] sm:$0xff]
    %v752 = vld [vmem:[%s3 + $0xb08] sm:$0xff]
    %v753 = vld [vmem:[%s3 + $0xb10] sm:$0xff]
    %v754 = vld [vmem:[%s3 + $0xb18] sm:$0xff]
    %v755 = vld [vmem:[%s3 + $0xb20] sm:$0xff]
    %v756 = vld [vmem:[%s3 + $0xb28] sm:$0xff]
    %v757 = vld [vmem:[%s3 + $0xb30] sm:$0xff]
    %v758 = vld [vmem:[%s3 + $0xb38] sm:$0xff]
    %v759 = vld [vmem:[%s3 + $0xb40] sm:$0xff]
    %v760 = vld [vmem:[%s3 + $0xb48] sm:$0xff]
    %v761 = vld [vmem:[%s3 + $0xb50] sm:$0xff]
    %v762 = vld [vmem:[%s3 + $0xb58] sm:$0xff]
    %v763 = vld [vmem:[%s3 + $0xb60] sm:$0xff]
    %v764 = vld [vmem:[%s3 + $0xb68] sm:$0xff]
    %v765 = vld [vmem:[%s3 + $0xb70] sm:$0xff]
    %v766 = vld [vmem:[%s3 + $0xb78] sm:$0xff]
    %v767 = vld [vmem:[%s3 + $0xb80] sm:$0xff]
    %v768 = vld [vmem:[%s3 + $0xb88] sm:$0xff]
    %v769 = vld [vmem:[%s3 + $0xb90] sm:$0xff]
    %v770 = vld [vmem:[%s3 + $0xb98] sm:$0xff]
    %v771 = vld [vmem:[%s3 + $0xba0] sm:$0xff]
    %v772 = vld [vmem:[%s3 + $0xba8] sm:$0xff]
    %v773 = vld [vmem:[%s3 + $0xbb0] sm:$0xff]
    %v774 = vld [vmem:[%s3 + $0xbb8] sm:$0xff]
    %v775 = vld [vmem:[%s3 + $0xbc0] sm:$0xff]
    %v776 = vld [vmem:[%s3 + $0xbc8] sm:$0xff]
    %v777 = vld [vmem:[%s3 + $0xbd0] sm:$0xff]
    %v778 = vld [vmem:[%s3 + $0xbd8] sm:$0xff]
    %v779 = vld [vmem:[%s3 + $0xbe0] sm:$0xff]
    %v780 = vld [vmem:[%s3 + $0xbe8] sm:$0xff]
    %v781 = vld [vmem:[%s3 + $0xbf0] sm:$0xff]
    %v782 = vld [vmem:[%s3 + $0xbf8] sm:$0xff]
    %v783 = vld [vmem:[%s3 + $0xc00] sm:$0xff]
    %v784 = vld [vmem:[%s3 + $0xc08] sm:$0xff]
    %v785 = vld [vmem:[%s3 + $0xc10] sm:$0xff]
    %v786 = vld [vmem:[%s3 + $0xc18] sm:$0xff]
    %v787 = vld [vmem:[%s3 + $0xc20] sm:$0xff]
    %v788 = vld [vmem:[%s3 + $0xc28] sm:$0xff]
    %v789 = vld [vmem:[%s3 + $0xc30] sm:$0xff]
    %v790 = vld [vmem:[%s3 + $0xc38] sm:$0xff]
    %v791 = vld [vmem:[%s3 + $0xc40] sm:$0xff]
    %v792 = vld [vmem:[%s3 + $0xc48] sm:$0xff]
    %v793 = vld [vmem:[%s3 + $0xc50] sm:$0xff]
    %v794 = vld [vmem:[%s3 + $0xc58] sm:$0xff]
    %v795 = vld [vmem:[%s3 + $0xc60] sm:$0xff]
    %v796 = vld [vmem:[%s3 + $0xc68] sm:$0xff]
    %v797 = vld [vmem:[%s3 + $0xc70] sm:$0xff]
    %v798 = vld [vmem:[%s3 + $0xc78] sm:$0xff]
    %v799 = vld [vmem:[%s3 + $0xc80] sm:$0xff]
    %v800 = vld [vmem:[%s3 + $0xc88] sm:$0xff]
    %v801 = vld [vmem:[%s3 + $0xc90] sm:$0xff]
    %v802 = vld [vmem:[%s3 + $0xc98] sm:$0xff]
    %v803 = vld [vmem:[%s3 + $0xca0] sm:$0xff]
    %v804 = vld [vmem:[%s3 + $0xca8] sm:$0xff]
    %v805 = vld [vmem:[%s3 + $0xcb0] sm:$0xff]
    %v806 = vld [vmem:[%s3 + $0xcb8] sm:$0xff]
    %v807 = vld [vmem:[%s3 + $0xcc0] sm:$0xff]
    %v808 = vld [vmem:[%s3 + $0xcc8] sm:$0xff]
    %v809 = vld [vmem:[%s3 + $0xcd0] sm:$0xff]
    %v810 = vld [vmem:[%s3 + $0xcd8] sm:$0xff]
    %v811 = vld [vmem:[%s3 + $0xce0] sm:$0xff]
    %v812 = vld [vmem:[%s3 + $0xce8] sm:$0xff]
    %v813 = vld [vmem:[%s3 + $0xcf0] sm:$0xff]
    %v814 = vld [vmem:[%s3 + $0xcf8] sm:$0xff]
    %v815 = vld [vmem:[%s3 + $0xd00] sm:$0xff]
    %v816 = vld [vmem:[%s3 + $0xd08] sm:$0xff]
    %v817 = vld [vmem:[%s3 + $0xd10] sm:$0xff]
    %v818 = vld [vmem:[%s3 + $0xd18] sm:$0xff]
    %v819 = vld [vmem:[%s3 + $0xd20] sm:$0xff]
    %v820 = vld [vmem:[%s3 + $0xd28] sm:$0xff]
    %v821 = vld [vmem:[%s3 + $0xd30] sm:$0xff]
    %v822 = vld [vmem:[%s3 + $0xd38] sm:$0xff]
    %v823 = vld [vmem:[%s3 + $0xd40] sm:$0xff]
    %v824 = vld [vmem:[%s3 + $0xd48] sm:$0xff]
    %v825 = vld [vmem:[%s3 + $0xd50] sm:$0xff]
    %v826 = vld [vmem:[%s3 + $0xd58] sm:$0xff]
    %v827 = vld [vmem:[%s3 + $0xd60] sm:$0xff]
    %v828 = vld [vmem:[%s3 + $0xd68] sm:$0xff]
    %v829 = vld [vmem:[%s3 + $0xd70] sm:$0xff]
    %v830 = vld [vmem:[%s3 + $0xd78] sm:$0xff]
    %v831 = vld [vmem:[%s3 + $0xd80] sm:$0xff]
    %v832 = vld [vmem:[%s3 + $0xd88] sm:$0xff]
    %v833 = vld [vmem:[%s3 + $0xd90] sm:$0xff]
    %v834 = vld [vmem:[%s3 + $0xd98] sm:$0xff]
    %v835 = vld [vmem:[%s3 + $0xda0] sm:$0xff]
    %v836 = vld [vmem:[%s3 + $0xda8] sm:$0xff]
    %v837 = vld [vmem:[%s3 + $0xdb0] sm:$0xff]
    %v838 = vld [vmem:[%s3 + $0xdb8] sm:$0xff]
    %v839 = vld [vmem:[%s3 + $0xdc0] sm:$0xff]
    %v840 = vld [vmem:[%s3 + $0xdc8] sm:$0xff]
    %v841 = vld [vmem:[%s3 + $0xdd0] sm:$0xff]
    %v842 = vld [vmem:[%s3 + $0xdd8] sm:$0xff]
    %v843 = vld [vmem:[%s3 + $0xde0] sm:$0xff]
    %v844 = vld [vmem:[%s3 + $0xde8] sm:$0xff]
    %v845 = vld [vmem:[%s3 + $0xdf0] sm:$0xff]
    %v846 = vld [vmem:[%s3 + $0xdf8] sm:$0xff]
    %v847 = vld [vmem:[%s3 + $0xe00] sm:$0xff]
    %v848 = vld [vmem:[%s3 + $0xe08] sm:$0xff]
    %v849 = vld [vmem:[%s3 + $0xe10] sm:$0xff]
    %v850 = vld [vmem:[%s3 + $0xe18] sm:$0xff]
    %v851 = vld [vmem:[%s3 + $0xe20] sm:$0xff]
    %v852 = vld [vmem:[%s3 + $0xe28] sm:$0xff]
    %v853 = vld [vmem:[%s3 + $0xe30] sm:$0xff]
    %v854 = vld [vmem:[%s3 + $0xe38] sm:$0xff]
    %v855 = vld [vmem:[%s3 + $0xe40] sm:$0xff]
    %v856 = vld [vmem:[%s3 + $0xe48] sm:$0xff]
    %v857 = vld [vmem:[%s3 + $0xe50] sm:$0xff]
    %v858 = vld [vmem:[%s3 + $0xe58] sm:$0xff]
    %v859 = vld [vmem:[%s3 + $0xe60] sm:$0xff]
    %v860 = vld [vmem:[%s3 + $0xe68] sm:$0xff]
    %v861 = vld [vmem:[%s3 + $0xe70] sm:$0xff]
    %v862 = vld [vmem:[%s3 + $0xe78] sm:$0xff]
    %v863 = vld [vmem:[%s3 + $0xe80] sm:$0xff]
    %v864 = vld [vmem:[%s3 + $0xe88] sm:$0xff]
    %v865 = vld [vmem:[%s3 + $0xe90] sm:$0xff]
    %v866 = vld [vmem:[%s3 + $0xe98] sm:$0xff]
    %v867 = vld [vmem:[%s3 + $0xea0] sm:$0xff]
    %v868 = vld [vmem:[%s3 + $0xea8] sm:$0xff]
    %v869 = vld [vmem:[%s3 + $0xeb0] sm:$0xff]
    %v870 = vld [vmem:[%s3 + $0xeb8] sm:$0xff]
    %v871 = vld [vmem:[%s3 + $0xec0] sm:$0xff]
    %v872 = vld [vmem:[%s3 + $0xec8] sm:$0xff]
    %v873 = vld [vmem:[%s3 + $0xed0] sm:$0xff]
    %v874 = vld [vmem:[%s3 + $0xed8] sm:$0xff]
    %v875 = vld [vmem:[%s3 + $0xee0] sm:$0xff]
    %v876 = vld [vmem:[%s3 + $0xee8] sm:$0xff]
    %v877 = vld [vmem:[%s3 + $0xef0] sm:$0xff]
    %v878 = vld [vmem:[%s3 + $0xef8] sm:$0xff]
    %v879 = vld [vmem:[%s3 + $0xf00] sm:$0xff]
    %v880 = vld [vmem:[%s3 + $0xf08] sm:$0xff]
    %v881 = vld [vmem:[%s3 + $0xf10] sm:$0xff]
    %v882 = vld [vmem:[%s3 + $0xf18] sm:$0xff]
    %v883 = vld [vmem:[%s3 + $0xf20] sm:$0xff]
    %v884 = vld [vmem:[%s3 + $0xf28] sm:$0xff]
    %v885 = vld [vmem:[%s3 + $0xf30] sm:$0xff]
    %v886 = vld [vmem:[%s3 + $0xf38] sm:$0xff]
    %v887 = vld [vmem:[%s3 + $0xf40] sm:$0xff]
    %v888 = vld [vmem:[%s3 + $0xf48] sm:$0xff]
    %v889 = vld [vmem:[%s3 + $0xf50] sm:$0xff]
    %v890 = vld [vmem:[%s3 + $0xf58] sm:$0xff]
    %v891 = vld [vmem:[%s3 + $0xf60] sm:$0xff]
    %v892 = vld [vmem:[%s3 + $0xf68] sm:$0xff]
    %v893 = vld [vmem:[%s3 + $0xf70] sm:$0xff]
    %v894 = vld [vmem:[%s3 + $0xf78] sm:$0xff]
    %v895 = vld [vmem:[%s3 + $0xf80] sm:$0xff]
    %v896 = vld [vmem:[%s3 + $0xf88] sm:$0xff]
    %v897 = vld [vmem:[%s3 + $0xf90] sm:$0xff]
    %v898 = vld [vmem:[%s3 + $0xf98] sm:$0xff]
    %v899 = vld [vmem:[%s3 + $0xfa0] sm:$0xff]
    %v900 = vld [vmem:[%s3 + $0xfa8] sm:$0xff]
    %v901 = vld [vmem:[%s3 + $0xfb0] sm:$0xff]
    %v902 = vld [vmem:[%s3 + $0xfb8] sm:$0xff]
    %v903 = vld [vmem:[%s3 + $0xfc0] sm:$0xff]
    %v904 = vld [vmem:[%s3 + $0xfc8] sm:$0xff]
    %v905 = vld [vmem:[%s3 + $0xfd0] sm:$0xff]
    %v906 = vld [vmem:[%s3 + $0xfd8] sm:$0xff]
    %v907 = vld [vmem:[%s3 + $0xfe0] sm:$0xff]
    %v908 = vld [vmem:[%s3 + $0xfe8] sm:$0xff]
    %v909 = vld [vmem:[%s3 + $0xff0] sm:$0xff]
    %v910 = vld [vmem:[%s3 + $0xff8] sm:$0xff]
    %v911 = vld [vmem:[%s3 + $0x1000] sm:$0xff]
    %v912 = vld [vmem:[%s3 + $0x1008] sm:$0xff]
    %v913 = vld [vmem:[%s3 + $0x1010] sm:$0xff]
    %v914 = vld [vmem:[%s3 + $0x1018] sm:$0xff]
    %v915 = vld [vmem:[%s3 + $0x1020] sm:$0xff]
    %v916 = vld [vmem:[%s3 + $0x1028] sm:$0xff]
    %v917 = vld [vmem:[%s3 + $0x1030] sm:$0xff]
    %v918 = vld [vmem:[%s3 + $0x1038] sm:$0xff]
    %v919 = vld [vmem:[%s3 + $0x1040] sm:$0xff]
    %v920 = vld [vmem:[%s3 + $0x1048] sm:$0xff]
    %v921 = vld [vmem:[%s3 + $0x1050] sm:$0xff]
    %v922 = vld [vmem:[%s3 + $0x1058] sm:$0xff]
    %v923 = vld [vmem:[%s3 + $0x1060] sm:$0xff]
    %v924 = vld [vmem:[%s3 + $0x1068] sm:$0xff]
    %v925 = vld [vmem:[%s3 + $0x1070] sm:$0xff]
    %v926 = vld [vmem:[%s3 + $0x1078] sm:$0xff]
    %v927 = vld [vmem:[%s3 + $0x1080] sm:$0xff]
    %v928 = vld [vmem:[%s3 + $0x1088] sm:$0xff]
    %v929 = vld [vmem:[%s3 + $0x1090] sm:$0xff]
    %v930 = vld [vmem:[%s3 + $0x1098] sm:$0xff]
    %v931 = vld [vmem:[%s3 + $0x10a0] sm:$0xff]
    %v932 = vld [vmem:[%s3 + $0x10a8] sm:$0xff]
    %v933 = vld [vmem:[%s3 + $0x10b0] sm:$0xff]
    %v934 = vld [vmem:[%s3 + $0x10b8] sm:$0xff]
    %v935 = vld [vmem:[%s3 + $0x10c0] sm:$0xff]
    %v936 = vld [vmem:[%s3 + $0x10c8] sm:$0xff]
    %v937 = vld [vmem:[%s3 + $0x10d0] sm:$0xff]
    %v938 = vld [vmem:[%s3 + $0x10d8] sm:$0xff]
    %v939 = vld [vmem:[%s3 + $0x10e0] sm:$0xff]
    %v940 = vld [vmem:[%s3 + $0x10e8] sm:$0xff]
    %v941 = vld [vmem:[%s3 + $0x10f0] sm:$0xff]
    %v942 = vld [vmem:[%s3 + $0x10f8] sm:$0xff]
    %v943 = vld [vmem:[%s3 + $0x1100] sm:$0xff]
    %v944 = vld [vmem:[%s3 + $0x1108] sm:$0xff]
    %v945 = vld [vmem:[%s3 + $0x1110] sm:$0xff]
    %v946 = vld [vmem:[%s3 + $0x1118] sm:$0xff]
    %v947 = vld [vmem:[%s3 + $0x1120] sm:$0xff]
    %v948 = vld [vmem:[%s3 + $0x1128] sm:$0xff]
    %v949 = vld [vmem:[%s3 + $0x1130] sm:$0xff]
    %v950 = vld [vmem:[%s3 + $0x1138] sm:$0xff]
    %v951 = vld [vmem:[%s3 + $0x1140] sm:$0xff]
    %v952 = vld [vmem:[%s3 + $0x1148] sm:$0xff]
    %v953 = vld [vmem:[%s3 + $0x1150] sm:$0xff]
    %v954 = vld [vmem:[%s3 + $0x1158] sm:$0xff]
    %v955 = vld [vmem:[%s3 + $0x1160] sm:$0xff]
    %v956 = vld [vmem:[%s3 + $0x1168] sm:$0xff]
    %v957 = vld [vmem:[%s3 + $0x1170] sm:$0xff]
    %v958 = vld [vmem:[%s3 + $0x1178] sm:$0xff]
    %v959 = vld [vmem:[%s3 + $0x1180] sm:$0xff]
    %v960 = vld [vmem:[%s3 + $0x1188] sm:$0xff]
    %v961 = vld [vmem:[%s3 + $0x1190] sm:$0xff]
    %v962 = vld [vmem:[%s3 + $0x1198] sm:$0xff]
    %v963 = vld [vmem:[%s3 + $0x11a0] sm:$0xff]
    %v964 = vld [vmem:[%s3 + $0x11a8] sm:$0xff]
    %v965 = vld [vmem:[%s3 + $0x11b0] sm:$0xff]
    %v966 = vld [vmem:[%s3 + $0x11b8] sm:$0xff]
    %v967 = vld [vmem:[%s3 + $0x11c0] sm:$0xff]
    %v968 = vld [vmem:[%s3 + $0x11c8] sm:$0xff]
    %v969 = vld [vmem:[%s3 + $0x11d0] sm:$0xff]
    %v970 = vld [vmem:[%s3 + $0x11d8] sm:$0xff]
    %v971 = vld [vmem:[%s3 + $0x11e0] sm:$0xff]
    %v972 = vld [vmem:[%s3 + $0x11e8] sm:$0xff]
    %v973 = vld [vmem:[%s3 + $0x11f0] sm:$0xff]
    %v974 = vld [vmem:[%s3 + $0x11f8] sm:$0xff]
    %v975 = vld [vmem:[%s3 + $0x1200] sm:$0xff]
    %v976 = vld [vmem:[%s3 + $0x1208] sm:$0xff]
    %v977 = vld [vmem:[%s3 + $0x1210] sm:$0xff]
    %v978 = vld [vmem:[%s3 + $0x1218] sm:$0xff]
    %v979 = vld [vmem:[%s3 + $0x1220] sm:$0xff]
    %v980 = vld [vmem:[%s3 + $0x1228] sm:$0xff]
    %v981 = vld [vmem:[%s3 + $0x1230] sm:$0xff]
    %v982 = vld [vmem:[%s3 + $0x1238] sm:$0xff]
    %v983 = vld [vmem:[%s3 + $0x1240] sm:$0xff]
    %v984 = vld [vmem:[%s3 + $0x1248] sm:$0xff]
    %v985 = vld [vmem:[%s3 + $0x1250] sm:$0xff]
    %v986 = vld [vmem:[%s3 + $0x1258] sm:$0xff]
    %v987 = vld [vmem:[%s3 + $0x1260] sm:$0xff]
    %v988 = vld [vmem:[%s3 + $0x1268] sm:$0xff]
    %v989 = vld [vmem:[%s3 + $0x1270] sm:$0xff]
    %v990 = vld [vmem:[%s3 + $0x1278] sm:$0xff]
    %v991 = vld [vmem:[%s3 + $0x1280] sm:$0xff]
    %v992 = vld [vmem:[%s3 + $0x1288] sm:$0xff]
    %v993 = vld [vmem:[%s3 + $0x1290] sm:$0xff]
    %v994 = vld [vmem:[%s3 + $0x1298] sm:$0xff]
    %v995 = vld [vmem:[%s3 + $0x12a0] sm:$0xff]
    %v996 = vld [vmem:[%s3 + $0x12a8] sm:$0xff]
    %v997 = vld [vmem:[%s3 + $0x12b0] sm:$0xff]
    %v998 = vld [vmem:[%s3 + $0x12b8] sm:$0xff]
    %v999 = vld [vmem:[%s3 + $0x12c0] sm:$0xff]
    %v1000 = vld [vmem:[%s3 + $0x12c8] sm:$0xff]
    %v1001 = vld [vmem:[%s3 + $0x12d0] sm:$0xff]
    %v1002 = vld [vmem:[%s3 + $0x12d8] sm:$0xff]
    %v1003 = vld [vmem:[%s3 + $0x12e0] sm:$0xff]
    %v1004 = vld [vmem:[%s3 + $0x12e8] sm:$0xff]
    %v1005 = vld [vmem:[%s3 + $0x12f0] sm:$0xff]
    %v1006 = vld [vmem:[%s3 + $0x12f8] sm:$0xff]
    %v1007 = vld [vmem:[%s3 + $0x1300] sm:$0xff]
    %v1008 = vld [vmem:[%s3 + $0x1308] sm:$0xff]
    %v1009 = vld [vmem:[%s3 + $0x1310] sm:$0xff]
    %v1010 = vld [vmem:[%s3 + $0x1318] sm:$0xff]
    %v1011 = vld [vmem:[%s3 + $0x1320] sm:$0xff]
    %v1012 = vld [vmem:[%s3 + $0x1328] sm:$0xff]
    %v1013 = vld [vmem:[%s3 + $0x1330] sm:$0xff]
    %v1014 = vld [vmem:[%s3 + $0x1338] sm:$0xff]
    %v1015 = vld [vmem:[%s3 + $0x1340] sm:$0xff]
    %v1016 = vld [vmem:[%s3 + $0x1348] sm:$0xff]
    %v1017 = vld [vmem:[%s3 + $0x1350] sm:$0xff]
    %v1018 = vld [vmem:[%s3 + $0x1358] sm:$0xff]
    %v1019 = vld [vmem:[%s3 + $0x1360] sm:$0xff]
    %v1020 = vld [vmem:[%s3 + $0x1368] sm:$0xff]
    %v1021 = vld [vmem:[%s3 + $0x1370] sm:$0xff]
    %v1022 = vld [vmem:[%s3 + $0x1378] sm:$0xff]
    %v1023 = vld [vmem:[%s3 + $0x1380] sm:$0xff]
    %v1024 = vld [vmem:[%s3 + $0x1388] sm:$0xff]
    %v1025 = vld [vmem:[%s3 + $0x1390] sm:$0xff]
    %v1026 = vld [vmem:[%s3 + $0x1398] sm:$0xff]
    %v1027 = vld [vmem:[%s3 + $0x13a0] sm:$0xff]
    %v1028 = vld [vmem:[%s3 + $0x13a8] sm:$0xff]
    %v1029 = vld [vmem:[%s3 + $0x13b0] sm:$0xff]
    %v1030 = vld [vmem:[%s3 + $0x13b8] sm:$0xff]
    %v1031 = vld [vmem:[%s3 + $0x13c0] sm:$0xff]
    %v1032 = vld [vmem:[%s3 + $0x13c8] sm:$0xff]
    %v1033 = vld [vmem:[%s3 + $0x13d0] sm:$0xff]
    %v1034 = vld [vmem:[%s3 + $0x13d8] sm:$0xff]
    %v1035 = vld [vmem:[%s3 + $0x13e0] sm:$0xff]
    %v1036 = vld [vmem:[%s3 + $0x13e8] sm:$0xff]
    %v1037 = vld [vmem:[%s3 + $0x13f0] sm:$0xff]
    %v1038 = vld [vmem:[%s3 + $0x13f8] sm:$0xff]
    %v1039 = vld [vmem:[%s3 + $0x1400] sm:$0xff]
    %v1040 = vld [vmem:[%s3 + $0x1408] sm:$0xff]
    %v1041 = vld [vmem:[%s3 + $0x1410] sm:$0xff]
    %v1042 = vld [vmem:[%s3 + $0x1418] sm:$0xff]
    %v1043 = vld [vmem:[%s3 + $0x1420] sm:$0xff]
    %v1044 = vld [vmem:[%s3 + $0x1428] sm:$0xff]
    %v1045 = vld [vmem:[%s3 + $0x1430] sm:$0xff]
    %v1046 = vld [vmem:[%s3 + $0x1438] sm:$0xff]
    %v1047 = vld [vmem:[%s3 + $0x1440] sm:$0xff]
    %v1048 = vld [vmem:[%s3 + $0x1448] sm:$0xff]
    %v1049 = vld [vmem:[%s3 + $0x1450] sm:$0xff]
    %v1050 = vld [vmem:[%s3 + $0x1458] sm:$0xff]
    %v1051 = vld [vmem:[%s3 + $0x1460] sm:$0xff]
    %v1052 = vld [vmem:[%s3 + $0x1468] sm:$0xff]
    %v1053 = vld [vmem:[%s3 + $0x1470] sm:$0xff]
    %v1054 = vld [vmem:[%s3 + $0x1478] sm:$0xff]
    %v1055 = vld [vmem:[%s3 + $0x1480] sm:$0xff]
    %v1056 = vld [vmem:[%s3 + $0x1488] sm:$0xff]
    %v1057 = vld [vmem:[%s3 + $0x1490] sm:$0xff]
    %v1058 = vld [vmem:[%s3 + $0x1498] sm:$0xff]
    %v1059 = vld [vmem:[%s3 + $0x14a0] sm:$0xff]
    %v1060 = vld [vmem:[%s3 + $0x14a8] sm:$0xff]
    %v1061 = vld [vmem:[%s3 + $0x14b0] sm:$0xff]
    %v1062 = vld [vmem:[%s3 + $0x14b8] sm:$0xff]
    %v1063 = vld [vmem:[%s3 + $0x14c0] sm:$0xff]
    %v1064 = vld [vmem:[%s3 + $0x14c8] sm:$0xff]
    %v1065 = vld [vmem:[%s3 + $0x14d0] sm:$0xff]
    %v1066 = vld [vmem:[%s3 + $0x14d8] sm:$0xff]
    %v1067 = vld [vmem:[%s3 + $0x14e0] sm:$0xff]
    %v1068 = vld [vmem:[%s3 + $0x14e8] sm:$0xff]
    %v1069 = vld [vmem:[%s3 + $0x14f0] sm:$0xff]
    %v1070 = vld [vmem:[%s3 + $0x14f8] sm:$0xff]
    %v1071 = vld [vmem:[%s3 + $0x1500] sm:$0xff]
    %v1072 = vld [vmem:[%s3 + $0x1508] sm:$0xff]
    %v1073 = vld [vmem:[%s3 + $0x1510] sm:$0xff]
    %v1074 = vld [vmem:[%s3 + $0x1518] sm:$0xff]
    %v1075 = vld [vmem:[%s3 + $0x1520] sm:$0xff]
    %v1076 = vld [vmem:[%s3 + $0x1528] sm:$0xff]
    %v1077 = vld [vmem:[%s3 + $0x1530] sm:$0xff]
    %v1078 = vld [vmem:[%s3 + $0x1538] sm:$0xff]
    %v1079 = vld [vmem:[%s3 + $0x1540] sm:$0xff]
    %v1080 = vld [vmem:[%s3 + $0x1548] sm:$0xff]
    %v1081 = vld [vmem:[%s3 + $0x1550] sm:$0xff]
    %v1082 = vld [vmem:[%s3 + $0x1558] sm:$0xff]
    %v1083 = vld [vmem:[%s3 + $0x1560] sm:$0xff]
    %v1084 = vld [vmem:[%s3 + $0x1568] sm:$0xff]
    %v1085 = vld [vmem:[%s3 + $0x1570] sm:$0xff]
    %v1086 = vld [vmem:[%s3 + $0x1578] sm:$0xff]
    %v1087 = vld [vmem:[%s3 + $0x1580] sm:$0xff]
    %v1088 = vld [vmem:[%s3 + $0x1588] sm:$0xff]
    %v1089 = vld [vmem:[%s3 + $0x1590] sm:$0xff]
    %v1090 = vld [vmem:[%s3 + $0x1598] sm:$0xff]
    %v1091 = vld [vmem:[%s3 + $0x15a0] sm:$0xff]
    %v1092 = vld [vmem:[%s3 + $0x15a8] sm:$0xff]
    %v1093 = vld [vmem:[%s3 + $0x15b0] sm:$0xff]
    %v1094 = vld [vmem:[%s3 + $0x15b8] sm:$0xff]
    %v1095 = vld [vmem:[%s3 + $0x15c0] sm:$0xff]
    %v1096 = vld [vmem:[%s3 + $0x15c8] sm:$0xff]
    %v1097 = vld [vmem:[%s3 + $0x15d0] sm:$0xff]
    %v1098 = vld [vmem:[%s3 + $0x15d8] sm:$0xff]
    %v1099 = vld [vmem:[%s3 + $0x15e0] sm:$0xff]
    %v1100 = vld [vmem:[%s3 + $0x15e8] sm:$0xff]
    %v1101 = vld [vmem:[%s3 + $0x15f0] sm:$0xff]
    %v1102 = vld [vmem:[%s3 + $0x15f8] sm:$0xff]
    %v1103 = vld [vmem:[%s3 + $0x1600] sm:$0xff]
    %v1104 = vld [vmem:[%s3 + $0x1608] sm:$0xff]
    %v1105 = vld [vmem:[%s3 + $0x1610] sm:$0xff]
    %v1106 = vld [vmem:[%s3 + $0x1618] sm:$0xff]
    %v1107 = vld [vmem:[%s3 + $0x1620] sm:$0xff]
    %v1108 = vld [vmem:[%s3 + $0x1628] sm:$0xff]
    %v1109 = vld [vmem:[%s3 + $0x1630] sm:$0xff]
    %v1110 = vld [vmem:[%s3 + $0x1638] sm:$0xff]
    %v1111 = vld [vmem:[%s3 + $0x1640] sm:$0xff]
    %v1112 = vld [vmem:[%s3 + $0x1648] sm:$0xff]
    %v1113 = vld [vmem:[%s3 + $0x1650] sm:$0xff]
    %v1114 = vld [vmem:[%s3 + $0x1658] sm:$0xff]
    %v1115 = vld [vmem:[%s3 + $0x1660] sm:$0xff]
    %v1116 = vld [vmem:[%s3 + $0x1668] sm:$0xff]
    %v1117 = vld [vmem:[%s3 + $0x1670] sm:$0xff]
    %v1118 = vld [vmem:[%s3 + $0x1678] sm:$0xff]
    %v1119 = vld [vmem:[%s3 + $0x1680] sm:$0xff]
    %v1120 = vld [vmem:[%s3 + $0x1688] sm:$0xff]
    %v1121 = vld [vmem:[%s3 + $0x1690] sm:$0xff]
    %v1122 = vld [vmem:[%s3 + $0x1698] sm:$0xff]
    %v1123 = vld [vmem:[%s3 + $0x16a0] sm:$0xff]
    %v1124 = vld [vmem:[%s3 + $0x16a8] sm:$0xff]
    %v1125 = vld [vmem:[%s3 + $0x16b0] sm:$0xff]
    %v1126 = vld [vmem:[%s3 + $0x16b8] sm:$0xff]
    %v1127 = vld [vmem:[%s3 + $0x16c0] sm:$0xff]
    %v1128 = vld [vmem:[%s3 + $0x16c8] sm:$0xff]
    %v1129 = vld [vmem:[%s3 + $0x16d0] sm:$0xff]
    %v1130 = vld [vmem:[%s3 + $0x16d8] sm:$0xff]
    %v1131 = vld [vmem:[%s3 + $0x16e0] sm:$0xff]
    %v1132 = vld [vmem:[%s3 + $0x16e8] sm:$0xff]
    %v1133 = vld [vmem:[%s3 + $0x16f0] sm:$0xff]
    %v1134 = vld [vmem:[%s3 + $0x16f8] sm:$0xff]
    %v1135 = vld [vmem:[%s3 + $0x1700] sm:$0xff]
    %v1136 = vld [vmem:[%s3 + $0x1708] sm:$0xff]
    %v1137 = vld [vmem:[%s3 + $0x1710] sm:$0xff]
    %v1138 = vld [vmem:[%s3 + $0x1718] sm:$0xff]
    %v1139 = vld [vmem:[%s3 + $0x1720] sm:$0xff]
    %v1140 = vld [vmem:[%s3 + $0x1728] sm:$0xff]
    %v1141 = vld [vmem:[%s3 + $0x1730] sm:$0xff]
    %v1142 = vld [vmem:[%s3 + $0x1738] sm:$0xff]
    %v1143 = vld [vmem:[%s3 + $0x1740] sm:$0xff]
    %v1144 = vld [vmem:[%s3 + $0x1748] sm:$0xff]
    %v1145 = vld [vmem:[%s3 + $0x1750] sm:$0xff]
    %v1146 = vld [vmem:[%s3 + $0x1758] sm:$0xff]
    %v1147 = vld [vmem:[%s3 + $0x1760] sm:$0xff]
    %v1148 = vld [vmem:[%s3 + $0x1768] sm:$0xff]
    %v1149 = vld [vmem:[%s3 + $0x1770] sm:$0xff]
    %v1150 = vld [vmem:[%s3 + $0x1778] sm:$0xff]
    %v1151 = vld [vmem:[%s3 + $0x1780] sm:$0xff]
    %v1152 = vld [vmem:[%s3 + $0x1788] sm:$0xff]
    %v1153 = vld [vmem:[%s3 + $0x1790] sm:$0xff]
    %v1154 = vld [vmem:[%s3 + $0x1798] sm:$0xff]
    %v1155 = vld [vmem:[%s3 + $0x17a0] sm:$0xff]
    %v1156 = vld [vmem:[%s3 + $0x17a8] sm:$0xff]
    %v1157 = vld [vmem:[%s3 + $0x17b0] sm:$0xff]
    %v1158 = vld [vmem:[%s3 + $0x17b8] sm:$0xff]
    %v1159 = vld [vmem:[%s3 + $0x17c0] sm:$0xff]
    %v1160 = vld [vmem:[%s3 + $0x17c8] sm:$0xff]
    %v1161 = vld [vmem:[%s3 + $0x17d0] sm:$0xff]
    %v1162 = vld [vmem:[%s3 + $0x17d8] sm:$0xff]
    %v1163 = vld [vmem:[%s3 + $0x17e0] sm:$0xff]
    %v1164 = vld [vmem:[%s3 + $0x17e8] sm:$0xff]
    %v1165 = vld [vmem:[%s3 + $0x17f0] sm:$0xff]
    %v1166 = vld [vmem:[%s3 + $0x17f8] sm:$0xff]
    %v1167 = vld [vmem:[%s3 + $0x1800] sm:$0xff]
    %v1168 = vld [vmem:[%s3 + $0x1808] sm:$0xff]
    %v1169 = vld [vmem:[%s3 + $0x1810] sm:$0xff]
    %v1170 = vld [vmem:[%s3 + $0x1818] sm:$0xff]
    %v1171 = vld [vmem:[%s3 + $0x1820] sm:$0xff]
    %v1172 = vld [vmem:[%s3 + $0x1828] sm:$0xff]
    %v1173 = vld [vmem:[%s3 + $0x1830] sm:$0xff]
    %v1174 = vld [vmem:[%s3 + $0x1838] sm:$0xff]
    %v1175 = vld [vmem:[%s3 + $0x1840] sm:$0xff]
    %v1176 = vld [vmem:[%s3 + $0x1848] sm:$0xff]
    %v1177 = vld [vmem:[%s3 + $0x1850] sm:$0xff]
    %v1178 = vld [vmem:[%s3 + $0x1858] sm:$0xff]
    %v1179 = vld [vmem:[%s3 + $0x1860] sm:$0xff]
    %v1180 = vld [vmem:[%s3 + $0x1868] sm:$0xff]
    %v1181 = vld [vmem:[%s3 + $0x1870] sm:$0xff]
    %v1182 = vld [vmem:[%s3 + $0x1878] sm:$0xff]
    %v1183 = vld [vmem:[%s3 + $0x1880] sm:$0xff]
    %v1184 = vld [vmem:[%s3 + $0x1888] sm:$0xff]
    %v1185 = vld [vmem:[%s3 + $0x1890] sm:$0xff]
    %v1186 = vld [vmem:[%s3 + $0x1898] sm:$0xff]
    %v1187 = vld [vmem:[%s3 + $0x18a0] sm:$0xff]
    %v1188 = vld [vmem:[%s3 + $0x18a8] sm:$0xff]
    %v1189 = vld [vmem:[%s3 + $0x18b0] sm:$0xff]
    %v1190 = vld [vmem:[%s3 + $0x18b8] sm:$0xff]
    %v1191 = vld [vmem:[%s3 + $0x18c0] sm:$0xff]
    %v1192 = vld [vmem:[%s3 + $0x18c8] sm:$0xff]
    %v1193 = vld [vmem:[%s3 + $0x18d0] sm:$0xff]
    %v1194 = vld [vmem:[%s3 + $0x18d8] sm:$0xff]
    %v1195 = vld [vmem:[%s3 + $0x18e0] sm:$0xff]
    %v1196 = vld [vmem:[%s3 + $0x18e8] sm:$0xff]
    %v1197 = vld [vmem:[%s3 + $0x18f0] sm:$0xff]
    %v1198 = vld [vmem:[%s3 + $0x18f8] sm:$0xff]
    %v1199 = vld [vmem:[%s3 + $0x1900] sm:$0xff]
    %v1200 = vld [vmem:[%s3 + $0x1908] sm:$0xff]
    %v1201 = vld [vmem:[%s3 + $0x1910] sm:$0xff]
    %v1202 = vld [vmem:[%s3 + $0x1918] sm:$0xff]
    %v1203 = vld [vmem:[%s3 + $0x1920] sm:$0xff]
    %v1204 = vld [vmem:[%s3 + $0x1928] sm:$0xff]
    %v1205 = vld [vmem:[%s3 + $0x1930] sm:$0xff]
    %v1206 = vld [vmem:[%s3 + $0x1938] sm:$0xff]
    %v1207 = vld [vmem:[%s3 + $0x1940] sm:$0xff]
    %v1208 = vld [vmem:[%s3 + $0x1948] sm:$0xff]
    %v1209 = vld [vmem:[%s3 + $0x1950] sm:$0xff]
    %v1210 = vld [vmem:[%s3 + $0x1958] sm:$0xff]
    %v1211 = vld [vmem:[%s3 + $0x1960] sm:$0xff]
    %v1212 = vld [vmem:[%s3 + $0x1968] sm:$0xff]
    %v1213 = vld [vmem:[%s3 + $0x1970] sm:$0xff]
    %v1214 = vld [vmem:[%s3 + $0x1978] sm:$0xff]
    %v1215 = vld [vmem:[%s3 + $0x1980] sm:$0xff]
    %v1216 = vld [vmem:[%s3 + $0x1988] sm:$0xff]
    %v1217 = vld [vmem:[%s3 + $0x1990] sm:$0xff]
    %v1218 = vld [vmem:[%s3 + $0x1998] sm:$0xff]
    %v1219 = vld [vmem:[%s3 + $0x19a0] sm:$0xff]
    %v1220 = vld [vmem:[%s3 + $0x19a8] sm:$0xff]
    %v1221 = vld [vmem:[%s3 + $0x19b0] sm:$0xff]
    %v1222 = vld [vmem:[%s3 + $0x19b8] sm:$0xff]
    %v1223 = vld [vmem:[%s3 + $0x19c0] sm:$0xff]
    %v1224 = vld [vmem:[%s3 + $0x19c8] sm:$0xff]
    %v1225 = vld [vmem:[%s3 + $0x19d0] sm:$0xff]
    %v1226 = vld [vmem:[%s3 + $0x19d8] sm:$0xff]
    %v1227 = vld [vmem:[%s3 + $0x19e0] sm:$0xff]
    %v1228 = vld [vmem:[%s3 + $0x19e8] sm:$0xff]
    %v1229 = vld [vmem:[%s3 + $0x19f0] sm:$0xff]
    %v1230 = vld [vmem:[%s3 + $0x19f8] sm:$0xff]
    %v1231 = vld [vmem:[%s3 + $0x1a00] sm:$0xff]
    %v1232 = vld [vmem:[%s3 + $0x1a08] sm:$0xff]
    %v1233 = vld [vmem:[%s3 + $0x1a10] sm:$0xff]
    %v1234 = vld [vmem:[%s3 + $0x1a18] sm:$0xff]
    %v1235 = vld [vmem:[%s3 + $0x1a20] sm:$0xff]
    %v1236 = vld [vmem:[%s3 + $0x1a28] sm:$0xff]
    %v1237 = vld [vmem:[%s3 + $0x1a30] sm:$0xff]
    %v1238 = vld [vmem:[%s3 + $0x1a38] sm:$0xff]
    %v1239 = vld [vmem:[%s3 + $0x1a40] sm:$0xff]
    %v1240 = vld [vmem:[%s3 + $0x1a48] sm:$0xff]
    %v1241 = vld [vmem:[%s3 + $0x1a50] sm:$0xff]
    %v1242 = vld [vmem:[%s3 + $0x1a58] sm:$0xff]
    %v1243 = vld [vmem:[%s3 + $0x1a60] sm:$0xff]
    %v1244 = vld [vmem:[%s3 + $0x1a68] sm:$0xff]
    %v1245 = vld [vmem:[%s3 + $0x1a70] sm:$0xff]
    %v1246 = vld [vmem:[%s3 + $0x1a78] sm:$0xff]
    %v1247 = vld [vmem:[%s3 + $0x1a80] sm:$0xff]
    %v1248 = vld [vmem:[%s3 + $0x1a88] sm:$0xff]
    %v1249 = vld [vmem:[%s3 + $0x1a90] sm:$0xff]
    %v1250 = vld [vmem:[%s3 + $0x1a98] sm:$0xff]
    %v1251 = vld [vmem:[%s3 + $0x1aa0] sm:$0xff]
    %v1252 = vld [vmem:[%s3 + $0x1aa8] sm:$0xff]
    %v1253 = vld [vmem:[%s3 + $0x1ab0] sm:$0xff]
    %v1254 = vld [vmem:[%s3 + $0x1ab8] sm:$0xff]
    %v1255 = vld [vmem:[%s3 + $0x1ac0] sm:$0xff]
    %v1256 = vld [vmem:[%s3 + $0x1ac8] sm:$0xff]
    %v1257 = vld [vmem:[%s3 + $0x1ad0] sm:$0xff]
    %v1258 = vld [vmem:[%s3 + $0x1ad8] sm:$0xff]
    %v1259 = vld [vmem:[%s3 + $0x1ae0] sm:$0xff]
    %v1260 = vld [vmem:[%s3 + $0x1ae8] sm:$0xff]
    %v1261 = vld [vmem:[%s3 + $0x1af0] sm:$0xff]
    %v1262 = vld [vmem:[%s3 + $0x1af8] sm:$0xff]
    %v1263 = vld [vmem:[%s3 + $0x1b00] sm:$0xff]
    %v1264 = vld [vmem:[%s3 + $0x1b08] sm:$0xff]
    %v1265 = vld [vmem:[%s3 + $0x1b10] sm:$0xff]
    %v1266 = vld [vmem:[%s3 + $0x1b18] sm:$0xff]
    %v1267 = vld [vmem:[%s3 + $0x1b20] sm:$0xff]
    %v1268 = vld [vmem:[%s3 + $0x1b28] sm:$0xff]
    %v1269 = vld [vmem:[%s3 + $0x1b30] sm:$0xff]
    %v1270 = vld [vmem:[%s3 + $0x1b38] sm:$0xff]
    %v1271 = vld [vmem:[%s3 + $0x1b40] sm:$0xff]
    %v1272 = vld [vmem:[%s3 + $0x1b48] sm:$0xff]
    %v1273 = vld [vmem:[%s3 + $0x1b50] sm:$0xff]
    %v1274 = vld [vmem:[%s3 + $0x1b58] sm:$0xff]
    %v1275 = vld [vmem:[%s3 + $0x1b60] sm:$0xff]
    %v1276 = vld [vmem:[%s3 + $0x1b68] sm:$0xff]
    %v1277 = vld [vmem:[%s3 + $0x1b70] sm:$0xff]
    %v1278 = vld [vmem:[%s3 + $0x1b78] sm:$0xff]
    %v1279 = vld [vmem:[%s3 + $0x1b80] sm:$0xff]
    %v1280 = vld [vmem:[%s3 + $0x1b88] sm:$0xff]
    %v1281 = vld [vmem:[%s3 + $0x1b90] sm:$0xff]
    %v1282 = vld [vmem:[%s3 + $0x1b98] sm:$0xff]
    %v1283 = vld [vmem:[%s3 + $0x1ba0] sm:$0xff]
    %v1284 = vld [vmem:[%s3 + $0x1ba8] sm:$0xff]
    %v1285 = vld [vmem:[%s3 + $0x1bb0] sm:$0xff]
    %v1286 = vld [vmem:[%s3 + $0x1bb8] sm:$0xff]
    %v1287 = vld [vmem:[%s3 + $0x1bc0] sm:$0xff]
    %v1288 = vld [vmem:[%s3 + $0x1bc8] sm:$0xff]
    %v1289 = vld [vmem:[%s3 + $0x1bd0] sm:$0xff]
    %v1290 = vld [vmem:[%s3 + $0x1bd8] sm:$0xff]
    %v1291 = vld [vmem:[%s3 + $0x1be0] sm:$0xff]
    %v1292 = vld [vmem:[%s3 + $0x1be8] sm:$0xff]
    %v1293 = vld [vmem:[%s3 + $0x1bf0] sm:$0xff]
    %v1294 = vld [vmem:[%s3 + $0x1bf8] sm:$0xff]
    %v1295 = vld [vmem:[%s3 + $0x1c00] sm:$0xff]
    %v1296 = vld [vmem:[%s3 + $0x1c08] sm:$0xff]
    %v1297 = vld [vmem:[%s3 + $0x1c10] sm:$0xff]
    %v1298 = vld [vmem:[%s3 + $0x1c18] sm:$0xff]
    %v1299 = vld [vmem:[%s3 + $0x1c20] sm:$0xff]
    %v1300 = vld [vmem:[%s3 + $0x1c28] sm:$0xff]
    %v1301 = vld [vmem:[%s3 + $0x1c30] sm:$0xff]
    %v1302 = vld [vmem:[%s3 + $0x1c38] sm:$0xff]
    %v1303 = vld [vmem:[%s3 + $0x1c40] sm:$0xff]
    %v1304 = vld [vmem:[%s3 + $0x1c48] sm:$0xff]
    %v1305 = vld [vmem:[%s3 + $0x1c50] sm:$0xff]
    %v1306 = vld [vmem:[%s3 + $0x1c58] sm:$0xff]
    %v1307 = vld [vmem:[%s3 + $0x1c60] sm:$0xff]
    %v1308 = vld [vmem:[%s3 + $0x1c68] sm:$0xff]
    %v1309 = vld [vmem:[%s3 + $0x1c70] sm:$0xff]
    %v1310 = vld [vmem:[%s3 + $0x1c78] sm:$0xff]
    %v1311 = vld [vmem:[%s3 + $0x1c80] sm:$0xff]
    %v1312 = vld [vmem:[%s3 + $0x1c88] sm:$0xff]
    %v1313 = vld [vmem:[%s3 + $0x1c90] sm:$0xff]
    %v1314 = vld [vmem:[%s3 + $0x1c98] sm:$0xff]
    %v1315 = vld [vmem:[%s3 + $0x1ca0] sm:$0xff]
    %v1316 = vld [vmem:[%s3 + $0x1ca8] sm:$0xff]
    %v1317 = vld [vmem:[%s3 + $0x1cb0] sm:$0xff]
    %v1318 = vld [vmem:[%s3 + $0x1cb8] sm:$0xff]
    %v1319 = vld [vmem:[%s3 + $0x1cc0] sm:$0xff]
    %v1320 = vld [vmem:[%s3 + $0x1cc8] sm:$0xff]
    %v1321 = vld [vmem:[%s3 + $0x1cd0] sm:$0xff]
    %v1322 = vld [vmem:[%s3 + $0x1cd8] sm:$0xff]
    %v1323 = vld [vmem:[%s3 + $0x1ce0] sm:$0xff]
    %v1324 = vld [vmem:[%s3 + $0x1ce8] sm:$0xff]
    %v1325 = vld [vmem:[%s3 + $0x1cf0] sm:$0xff]
    %v1326 = vld [vmem:[%s3 + $0x1cf8] sm:$0xff]
    %v1327 = vld [vmem:[%s3 + $0x1d00] sm:$0xff]
    %v1328 = vld [vmem:[%s3 + $0x1d08] sm:$0xff]
    %v1329 = vld [vmem:[%s3 + $0x1d10] sm:$0xff]
    %v1330 = vld [vmem:[%s3 + $0x1d18] sm:$0xff]
    %v1331 = vld [vmem:[%s3 + $0x1d20] sm:$0xff]
    %v1332 = vld [vmem:[%s3 + $0x1d28] sm:$0xff]
    %v1333 = vld [vmem:[%s3 + $0x1d30] sm:$0xff]
    %v1334 = vld [vmem:[%s3 + $0x1d38] sm:$0xff]
    %v1335 = vld [vmem:[%s3 + $0x1d40] sm:$0xff]
    %v1336 = vld [vmem:[%s3 + $0x1d48] sm:$0xff]
    %v1337 = vld [vmem:[%s3 + $0x1d50] sm:$0xff]
    %v1338 = vld [vmem:[%s3 + $0x1d58] sm:$0xff]
    %v1339 = vld [vmem:[%s3 + $0x1d60] sm:$0xff]
    %v1340 = vld [vmem:[%s3 + $0x1d68] sm:$0xff]
    %v1341 = vld [vmem:[%s3 + $0x1d70] sm:$0xff]
    %v1342 = vld [vmem:[%s3 + $0x1d78] sm:$0xff]
    %v1343 = vld [vmem:[%s3 + $0x1d80] sm:$0xff]
    %v1344 = vld [vmem:[%s3 + $0x1d88] sm:$0xff]
    %v1345 = vld [vmem:[%s3 + $0x1d90] sm:$0xff]
    %v1346 = vld [vmem:[%s3 + $0x1d98] sm:$0xff]
    %v1347 = vld [vmem:[%s3 + $0x1da0] sm:$0xff]
    %v1348 = vld [vmem:[%s3 + $0x1da8] sm:$0xff]
    %v1349 = vld [vmem:[%s3 + $0x1db0] sm:$0xff]
    %v1350 = vld [vmem:[%s3 + $0x1db8] sm:$0xff]
    %v1351 = vld [vmem:[%s3 + $0x1dc0] sm:$0xff]
    %v1352 = vld [vmem:[%s3 + $0x1dc8] sm:$0xff]
    %v1353 = vld [vmem:[%s3 + $0x1dd0] sm:$0xff]
    %v1354 = vld [vmem:[%s3 + $0x1dd8] sm:$0xff]
    %v1355 = vld [vmem:[%s3 + $0x1de0] sm:$0xff]
    %v1356 = vld [vmem:[%s3 + $0x1de8] sm:$0xff]
    %v1357 = vld [vmem:[%s3 + $0x1df0] sm:$0xff]
    %v1358 = vld [vmem:[%s3 + $0x1df8] sm:$0xff]
    %v1359 = vld [vmem:[%s3 + $0x1e00] sm:$0xff]
    %v1360 = vld [vmem:[%s3 + $0x1e08] sm:$0xff]
    %v1361 = vld [vmem:[%s3 + $0x1e10] sm:$0xff]
    %v1362 = vld [vmem:[%s3 + $0x1e18] sm:$0xff]
    %v1363 = vld [vmem:[%s3 + $0x1e20] sm:$0xff]
    %v1364 = vld [vmem:[%s3 + $0x1e28] sm:$0xff]
    %v1365 = vld [vmem:[%s3 + $0x1e30] sm:$0xff]
    %v1366 = vld [vmem:[%s3 + $0x1e38] sm:$0xff]
    %v1367 = vld [vmem:[%s3 + $0x1e40] sm:$0xff]
    %v1368 = vld [vmem:[%s3 + $0x1e48] sm:$0xff]
    %v1369 = vld [vmem:[%s3 + $0x1e50] sm:$0xff]
    %v1370 = vld [vmem:[%s3 + $0x1e58] sm:$0xff]
    %v1371 = vld [vmem:[%s3 + $0x1e60] sm:$0xff]
    %v1372 = vld [vmem:[%s3 + $0x1e68] sm:$0xff]
    %v1373 = vld [vmem:[%s3 + $0x1e70] sm:$0xff]
    %v1374 = vld [vmem:[%s3 + $0x1e78] sm:$0xff]
    %v1375 = vld [vmem:[%s3 + $0x1e80] sm:$0xff]
    %v1376 = vld [vmem:[%s3 + $0x1e88] sm:$0xff]
    %v1377 = vld [vmem:[%s3 + $0x1e90] sm:$0xff]
    %v1378 = vld [vmem:[%s3 + $0x1e98] sm:$0xff]
    %v1379 = vld [vmem:[%s3 + $0x1ea0] sm:$0xff]
    %v1380 = vld [vmem:[%s3 + $0x1ea8] sm:$0xff]
    %v1381 = vld [vmem:[%s3 + $0x1eb0] sm:$0xff]
    %v1382 = vld [vmem:[%s3 + $0x1eb8] sm:$0xff]
    %v1383 = vld [vmem:[%s3 + $0x1ec0] sm:$0xff]
    %v1384 = vld [vmem:[%s3 + $0x1ec8] sm:$0xff]
    %v1385 = vld [vmem:[%s3 + $0x1ed0] sm:$0xff]
    %v1386 = vld [vmem:[%s3 + $0x1ed8] sm:$0xff]
    %v1387 = vld [vmem:[%s3 + $0x1ee0] sm:$0xff]
    %v1388 = vld [vmem:[%s3 + $0x1ee8] sm:$0xff]
    %v1389 = vld [vmem:[%s3 + $0x1ef0] sm:$0xff]
    %v1390 = vld [vmem:[%s3 + $0x1ef8] sm:$0xff]
    %v1391 = vld [vmem:[%s3 + $0x1f00] sm:$0xff]
    %v1392 = vld [vmem:[%s3 + $0x1f08] sm:$0xff]
    %v1393 = vld [vmem:[%s3 + $0x1f10] sm:$0xff]
    %v1394 = vld [vmem:[%s3 + $0x1f18] sm:$0xff]
    %v1395 = vld [vmem:[%s3 + $0x1f20] sm:$0xff]
    %v1396 = vld [vmem:[%s3 + $0x1f28] sm:$0xff]
    %v1397 = vld [vmem:[%s3 + $0x1f30] sm:$0xff]
    %v1398 = vld [vmem:[%s3 + $0x1f38] sm:$0xff]
    %v1399 = vld [vmem:[%s3 + $0x1f40] sm:$0xff]
    %v1400 = vld [vmem:[%s3 + $0x1f48] sm:$0xff]
    %v1401 = vld [vmem:[%s3 + $0x1f50] sm:$0xff]
    %v1402 = vld [vmem:[%s3 + $0x1f58] sm:$0xff]
    %v1403 = vld [vmem:[%s3 + $0x1f60] sm:$0xff]
    %v1404 = vld [vmem:[%s3 + $0x1f68] sm:$0xff]
    %v1405 = vld [vmem:[%s3 + $0x1f70] sm:$0xff]
    %v1406 = vld [vmem:[%s3 + $0x1f78] sm:$0xff]
    %v1407 = vld [vmem:[%s3 + $0x1f80] sm:$0xff]
    %v1408 = vld [vmem:[%s3 + $0x1f88] sm:$0xff]
    %v1409 = vld [vmem:[%s3 + $0x1f90] sm:$0xff]
    %v1410 = vld [vmem:[%s3 + $0x1f98] sm:$0xff]
    %v1411 = vld [vmem:[%s3 + $0x1fa0] sm:$0xff]
    %v1412 = vld [vmem:[%s3 + $0x1fa8] sm:$0xff]
    %v1413 = vld [vmem:[%s3 + $0x1fb0] sm:$0xff]
    %v1414 = vld [vmem:[%s3 + $0x1fb8] sm:$0xff]
    %v1415 = vld [vmem:[%s3 + $0x1fc0] sm:$0xff]
    %v1416 = vld [vmem:[%s3 + $0x1fc8] sm:$0xff]
    %v1417 = vld [vmem:[%s3 + $0x1fd0] sm:$0xff]
    %v1418 = vld [vmem:[%s3 + $0x1fd8] sm:$0xff]
    %v1419 = vld [vmem:[%s3 + $0x1fe0] sm:$0xff]
    %v1420 = vld [vmem:[%s3 + $0x1fe8] sm:$0xff]
    %v1421 = vld [vmem:[%s3 + $0x1ff0] sm:$0xff]
    %v1422 = vld [vmem:[%s3 + $0x1ff8] sm:$0xff]
    %v1423 = vld [vmem:[%s4] sm:$0xf]
    %v2448 = vunpack.c.l.b16 %v399
    %v2449 = vunpack.c.h.b16 %v399
    %v2450 = vunpack.c.l.b16 %v400
    %v2451 = vunpack.c.h.b16 %v400
    %v2452 = vunpack.c.l.b16 %v401
    %v2453 = vunpack.c.h.b16 %v401
    %v2454 = vunpack.c.l.b16 %v402
    %v2455 = vunpack.c.h.b16 %v402
    %v2456 = vunpack.c.l.b16 %v403
    %v2457 = vunpack.c.h.b16 %v403
    %v2458 = vunpack.c.l.b16 %v404
    %v2459 = vunpack.c.h.b16 %v404
    %v2460 = vunpack.c.l.b16 %v405
    %v2461 = vunpack.c.h.b16 %v405
    %v2462 = vunpack.c.l.b16 %v406
    %v2463 = vunpack.c.h.b16 %v406
    %v2464 = vunpack.c.l.b16 %v407
    %v2465 = vunpack.c.h.b16 %v407
    %v2466 = vunpack.c.l.b16 %v408
    %v2467 = vunpack.c.h.b16 %v408
    %v2468 = vunpack.c.l.b16 %v409
    %v2469 = vunpack.c.h.b16 %v409
    %v2470 = vunpack.c.l.b16 %v410
    %v2471 = vunpack.c.h.b16 %v410
    %v2472 = vunpack.c.l.b16 %v411
    %v2473 = vunpack.c.h.b16 %v411
    %v2474 = vunpack.c.l.b16 %v412
    %v2475 = vunpack.c.h.b16 %v412
    %v2476 = vunpack.c.l.b16 %v413
    %v2477 = vunpack.c.h.b16 %v413
    %v2478 = vunpack.c.l.b16 %v414
    %v2479 = vunpack.c.h.b16 %v414
    %v2480 = vunpack.c.l.b16 %v415
    %v2481 = vunpack.c.h.b16 %v415
    %v2482 = vunpack.c.l.b16 %v416
    %v2483 = vunpack.c.h.b16 %v416
    %v2484 = vunpack.c.l.b16 %v417
    %v2485 = vunpack.c.h.b16 %v417
    %v2486 = vunpack.c.l.b16 %v418
    %v2487 = vunpack.c.h.b16 %v418
    %v2488 = vunpack.c.l.b16 %v419
    %v2489 = vunpack.c.h.b16 %v419
    %v2490 = vunpack.c.l.b16 %v420
    %v2491 = vunpack.c.h.b16 %v420
    %v2492 = vunpack.c.l.b16 %v421
    %v2493 = vunpack.c.h.b16 %v421
    %v2494 = vunpack.c.l.b16 %v422
    %v2495 = vunpack.c.h.b16 %v422
    %v2496 = vunpack.c.l.b16 %v423
    %v2497 = vunpack.c.h.b16 %v423
    %v2498 = vunpack.c.l.b16 %v424
    %v2499 = vunpack.c.h.b16 %v424
    %v2500 = vunpack.c.l.b16 %v425
    %v2501 = vunpack.c.h.b16 %v425
    %v2502 = vunpack.c.l.b16 %v426
    %v2503 = vunpack.c.h.b16 %v426
    %v2504 = vunpack.c.l.b16 %v427
    %v2505 = vunpack.c.h.b16 %v427
    %v2506 = vunpack.c.l.b16 %v428
    %v2507 = vunpack.c.h.b16 %v428
    %v2508 = vunpack.c.l.b16 %v429
    %v2509 = vunpack.c.h.b16 %v429
    %v2510 = vunpack.c.l.b16 %v430
    %v2511 = vunpack.c.h.b16 %v430
    %v2512 = vunpack.c.l.b16 %v431
    %v2513 = vunpack.c.h.b16 %v431
    %v2514 = vunpack.c.l.b16 %v432
    %v2515 = vunpack.c.h.b16 %v432
    %v2516 = vunpack.c.l.b16 %v433
    %v2517 = vunpack.c.h.b16 %v433
    %v2518 = vunpack.c.l.b16 %v434
    %v2519 = vunpack.c.h.b16 %v434
    %v2520 = vunpack.c.l.b16 %v435
    %v2521 = vunpack.c.h.b16 %v435
    %v2522 = vunpack.c.l.b16 %v436
    %v2523 = vunpack.c.h.b16 %v436
    %v2524 = vunpack.c.l.b16 %v437
    %v2525 = vunpack.c.h.b16 %v437
    %v2526 = vunpack.c.l.b16 %v438
    %v2527 = vunpack.c.h.b16 %v438
    %v2528 = vunpack.c.l.b16 %v439
    %v2529 = vunpack.c.h.b16 %v439
    %v2530 = vunpack.c.l.b16 %v440
    %v2531 = vunpack.c.h.b16 %v440
    %v2532 = vunpack.c.l.b16 %v441
    %v2533 = vunpack.c.h.b16 %v441
    %v2534 = vunpack.c.l.b16 %v442
    %v2535 = vunpack.c.h.b16 %v442
    %v2536 = vunpack.c.l.b16 %v443
    %v2537 = vunpack.c.h.b16 %v443
    %v2538 = vunpack.c.l.b16 %v444
    %v2539 = vunpack.c.h.b16 %v444
    %v2540 = vunpack.c.l.b16 %v445
    %v2541 = vunpack.c.h.b16 %v445
    %v2542 = vunpack.c.l.b16 %v446
    %v2543 = vunpack.c.h.b16 %v446
    %v2544 = vunpack.c.l.b16 %v447
    %v2545 = vunpack.c.h.b16 %v447
    %v2546 = vunpack.c.l.b16 %v448
    %v2547 = vunpack.c.h.b16 %v448
    %v2548 = vunpack.c.l.b16 %v449
    %v2549 = vunpack.c.h.b16 %v449
    %v2550 = vunpack.c.l.b16 %v450
    %v2551 = vunpack.c.h.b16 %v450
    %v2552 = vunpack.c.l.b16 %v451
    %v2553 = vunpack.c.h.b16 %v451
    %v2554 = vunpack.c.l.b16 %v452
    %v2555 = vunpack.c.h.b16 %v452
    %v2556 = vunpack.c.l.b16 %v453
    %v2557 = vunpack.c.h.b16 %v453
    %v2558 = vunpack.c.l.b16 %v454
    %v2559 = vunpack.c.h.b16 %v454
    %v2560 = vunpack.c.l.b16 %v455
    %v2561 = vunpack.c.h.b16 %v455
    %v2562 = vunpack.c.l.b16 %v456
    %v2563 = vunpack.c.h.b16 %v456
    %v2564 = vunpack.c.l.b16 %v457
    %v2565 = vunpack.c.h.b16 %v457
    %v2566 = vunpack.c.l.b16 %v458
    %v2567 = vunpack.c.h.b16 %v458
    %v2568 = vunpack.c.l.b16 %v459
    %v2569 = vunpack.c.h.b16 %v459
    %v2570 = vunpack.c.l.b16 %v460
    %v2571 = vunpack.c.h.b16 %v460
    %v2572 = vunpack.c.l.b16 %v461
    %v2573 = vunpack.c.h.b16 %v461
    %v2574 = vunpack.c.l.b16 %v462
    %v2575 = vunpack.c.h.b16 %v462
    %v2576 = vunpack.c.l.b16 %v463
    %v2577 = vunpack.c.h.b16 %v463
    %v2578 = vunpack.c.l.b16 %v464
    %v2579 = vunpack.c.h.b16 %v464
    %v2580 = vunpack.c.l.b16 %v465
    %v2581 = vunpack.c.h.b16 %v465
    %v2582 = vunpack.c.l.b16 %v466
    %v2583 = vunpack.c.h.b16 %v466
    %v2584 = vunpack.c.l.b16 %v467
    %v2585 = vunpack.c.h.b16 %v467
    %v2586 = vunpack.c.l.b16 %v468
    %v2587 = vunpack.c.h.b16 %v468
    %v2588 = vunpack.c.l.b16 %v469
    %v2589 = vunpack.c.h.b16 %v469
    %v2590 = vunpack.c.l.b16 %v470
    %v2591 = vunpack.c.h.b16 %v470
    %v2592 = vunpack.c.l.b16 %v471
    %v2593 = vunpack.c.h.b16 %v471
    %v2594 = vunpack.c.l.b16 %v472
    %v2595 = vunpack.c.h.b16 %v472
    %v2596 = vunpack.c.l.b16 %v473
    %v2597 = vunpack.c.h.b16 %v473
    %v2598 = vunpack.c.l.b16 %v474
    %v2599 = vunpack.c.h.b16 %v474
    %v2600 = vunpack.c.l.b16 %v475
    %v2601 = vunpack.c.h.b16 %v475
    %v2602 = vunpack.c.l.b16 %v476
    %v2603 = vunpack.c.h.b16 %v476
    %v2604 = vunpack.c.l.b16 %v477
    %v2605 = vunpack.c.h.b16 %v477
    %v2606 = vunpack.c.l.b16 %v478
    %v2607 = vunpack.c.h.b16 %v478
    %v2608 = vunpack.c.l.b16 %v479
    %v2609 = vunpack.c.h.b16 %v479
    %v2610 = vunpack.c.l.b16 %v480
    %v2611 = vunpack.c.h.b16 %v480
    %v2612 = vunpack.c.l.b16 %v481
    %v2613 = vunpack.c.h.b16 %v481
    %v2614 = vunpack.c.l.b16 %v482
    %v2615 = vunpack.c.h.b16 %v482
    %v2616 = vunpack.c.l.b16 %v483
    %v2617 = vunpack.c.h.b16 %v483
    %v2618 = vunpack.c.l.b16 %v484
    %v2619 = vunpack.c.h.b16 %v484
    %v2620 = vunpack.c.l.b16 %v485
    %v2621 = vunpack.c.h.b16 %v485
    %v2622 = vunpack.c.l.b16 %v486
    %v2623 = vunpack.c.h.b16 %v486
    %v2624 = vunpack.c.l.b16 %v487
    %v2625 = vunpack.c.h.b16 %v487
    %v2626 = vunpack.c.l.b16 %v488
    %v2627 = vunpack.c.h.b16 %v488
    %v2628 = vunpack.c.l.b16 %v489
    %v2629 = vunpack.c.h.b16 %v489
    %v2630 = vunpack.c.l.b16 %v490
    %v2631 = vunpack.c.h.b16 %v490
    %v2632 = vunpack.c.l.b16 %v491
    %v2633 = vunpack.c.h.b16 %v491
    %v2634 = vunpack.c.l.b16 %v492
    %v2635 = vunpack.c.h.b16 %v492
    %v2636 = vunpack.c.l.b16 %v493
    %v2637 = vunpack.c.h.b16 %v493
    %v2638 = vunpack.c.l.b16 %v494
    %v2639 = vunpack.c.h.b16 %v494
    %v2640 = vunpack.c.l.b16 %v495
    %v2641 = vunpack.c.h.b16 %v495
    %v2642 = vunpack.c.l.b16 %v496
    %v2643 = vunpack.c.h.b16 %v496
    %v2644 = vunpack.c.l.b16 %v497
    %v2645 = vunpack.c.h.b16 %v497
    %v2646 = vunpack.c.l.b16 %v498
    %v2647 = vunpack.c.h.b16 %v498
    %v2648 = vunpack.c.l.b16 %v499
    %v2649 = vunpack.c.h.b16 %v499
    %v2650 = vunpack.c.l.b16 %v500
    %v2651 = vunpack.c.h.b16 %v500
    %v2652 = vunpack.c.l.b16 %v501
    %v2653 = vunpack.c.h.b16 %v501
    %v2654 = vunpack.c.l.b16 %v502
    %v2655 = vunpack.c.h.b16 %v502
    %v2656 = vunpack.c.l.b16 %v503
    %v2657 = vunpack.c.h.b16 %v503
    %v2658 = vunpack.c.l.b16 %v504
    %v2659 = vunpack.c.h.b16 %v504
    %v2660 = vunpack.c.l.b16 %v505
    %v2661 = vunpack.c.h.b16 %v505
    %v2662 = vunpack.c.l.b16 %v506
    %v2663 = vunpack.c.h.b16 %v506
    %v2664 = vunpack.c.l.b16 %v507
    %v2665 = vunpack.c.h.b16 %v507
    %v2666 = vunpack.c.l.b16 %v508
    %v2667 = vunpack.c.h.b16 %v508
    %v2668 = vunpack.c.l.b16 %v509
    %v2669 = vunpack.c.h.b16 %v509
    %v2670 = vunpack.c.l.b16 %v510
    %v2671 = vunpack.c.h.b16 %v510
    %v2672 = vunpack.c.l.b16 %v511
    %v2673 = vunpack.c.h.b16 %v511
    %v2674 = vunpack.c.l.b16 %v512
    %v2675 = vunpack.c.h.b16 %v512
    %v2676 = vunpack.c.l.b16 %v513
    %v2677 = vunpack.c.h.b16 %v513
    %v2678 = vunpack.c.l.b16 %v514
    %v2679 = vunpack.c.h.b16 %v514
    %v2680 = vunpack.c.l.b16 %v515
    %v2681 = vunpack.c.h.b16 %v515
    %v2682 = vunpack.c.l.b16 %v516
    %v2683 = vunpack.c.h.b16 %v516
    %v2684 = vunpack.c.l.b16 %v517
    %v2685 = vunpack.c.h.b16 %v517
    %v2686 = vunpack.c.l.b16 %v518
    %v2687 = vunpack.c.h.b16 %v518
    %v2688 = vunpack.c.l.b16 %v519
    %v2689 = vunpack.c.h.b16 %v519
    %v2690 = vunpack.c.l.b16 %v520
    %v2691 = vunpack.c.h.b16 %v520
    %v2692 = vunpack.c.l.b16 %v521
    %v2693 = vunpack.c.h.b16 %v521
    %v2694 = vunpack.c.l.b16 %v522
    %v2695 = vunpack.c.h.b16 %v522
    %v2696 = vunpack.c.l.b16 %v523
    %v2697 = vunpack.c.h.b16 %v523
    %v2698 = vunpack.c.l.b16 %v524
    %v2699 = vunpack.c.h.b16 %v524
    %v2700 = vunpack.c.l.b16 %v525
    %v2701 = vunpack.c.h.b16 %v525
    %v2702 = vunpack.c.l.b16 %v526
    %v2703 = vunpack.c.h.b16 %v526
    %v2704 = vunpack.c.l.b16 %v527
    %v2705 = vunpack.c.h.b16 %v527
    %v2706 = vunpack.c.l.b16 %v528
    %v2707 = vunpack.c.h.b16 %v528
    %v2708 = vunpack.c.l.b16 %v529
    %v2709 = vunpack.c.h.b16 %v529
    %v2710 = vunpack.c.l.b16 %v530
    %v2711 = vunpack.c.h.b16 %v530
    %v2712 = vunpack.c.l.b16 %v531
    %v2713 = vunpack.c.h.b16 %v531
    %v2714 = vunpack.c.l.b16 %v532
    %v2715 = vunpack.c.h.b16 %v532
    %v2716 = vunpack.c.l.b16 %v533
    %v2717 = vunpack.c.h.b16 %v533
    %v2718 = vunpack.c.l.b16 %v534
    %v2719 = vunpack.c.h.b16 %v534
    %v2720 = vunpack.c.l.b16 %v535
    %v2721 = vunpack.c.h.b16 %v535
    %v2722 = vunpack.c.l.b16 %v536
    %v2723 = vunpack.c.h.b16 %v536
    %v2724 = vunpack.c.l.b16 %v537
    %v2725 = vunpack.c.h.b16 %v537
    %v2726 = vunpack.c.l.b16 %v538
    %v2727 = vunpack.c.h.b16 %v538
    %v2728 = vunpack.c.l.b16 %v539
    %v2729 = vunpack.c.h.b16 %v539
    %v2730 = vunpack.c.l.b16 %v540
    %v2731 = vunpack.c.h.b16 %v540
    %v2732 = vunpack.c.l.b16 %v541
    %v2733 = vunpack.c.h.b16 %v541
    %v2734 = vunpack.c.l.b16 %v542
    %v2735 = vunpack.c.h.b16 %v542
    %v2736 = vunpack.c.l.b16 %v543
    %v2737 = vunpack.c.h.b16 %v543
    %v2738 = vunpack.c.l.b16 %v544
    %v2739 = vunpack.c.h.b16 %v544
    %v2740 = vunpack.c.l.b16 %v545
    %v2741 = vunpack.c.h.b16 %v545
    %v2742 = vunpack.c.l.b16 %v546
    %v2743 = vunpack.c.h.b16 %v546
    %v2744 = vunpack.c.l.b16 %v547
    %v2745 = vunpack.c.h.b16 %v547
    %v2746 = vunpack.c.l.b16 %v548
    %v2747 = vunpack.c.h.b16 %v548
    %v2748 = vunpack.c.l.b16 %v549
    %v2749 = vunpack.c.h.b16 %v549
    %v2750 = vunpack.c.l.b16 %v550
    %v2751 = vunpack.c.h.b16 %v550
    %v2752 = vunpack.c.l.b16 %v551
    %v2753 = vunpack.c.h.b16 %v551
    %v2754 = vunpack.c.l.b16 %v552
    %v2755 = vunpack.c.h.b16 %v552
    %v2756 = vunpack.c.l.b16 %v553
    %v2757 = vunpack.c.h.b16 %v553
    %v2758 = vunpack.c.l.b16 %v554
    %v2759 = vunpack.c.h.b16 %v554
    %v2760 = vunpack.c.l.b16 %v555
    %v2761 = vunpack.c.h.b16 %v555
    %v2762 = vunpack.c.l.b16 %v556
    %v2763 = vunpack.c.h.b16 %v556
    %v2764 = vunpack.c.l.b16 %v557
    %v2765 = vunpack.c.h.b16 %v557
    %v2766 = vunpack.c.l.b16 %v558
    %v2767 = vunpack.c.h.b16 %v558
    %v2768 = vunpack.c.l.b16 %v559
    %v2769 = vunpack.c.h.b16 %v559
    %v2770 = vunpack.c.l.b16 %v560
    %v2771 = vunpack.c.h.b16 %v560
    %v2772 = vunpack.c.l.b16 %v561
    %v2773 = vunpack.c.h.b16 %v561
    %v2774 = vunpack.c.l.b16 %v562
    %v2775 = vunpack.c.h.b16 %v562
    %v2776 = vunpack.c.l.b16 %v563
    %v2777 = vunpack.c.h.b16 %v563
    %v2778 = vunpack.c.l.b16 %v564
    %v2779 = vunpack.c.h.b16 %v564
    %v2780 = vunpack.c.l.b16 %v565
    %v2781 = vunpack.c.h.b16 %v565
    %v2782 = vunpack.c.l.b16 %v566
    %v2783 = vunpack.c.h.b16 %v566
    %v2784 = vunpack.c.l.b16 %v567
    %v2785 = vunpack.c.h.b16 %v567
    %v2786 = vunpack.c.l.b16 %v568
    %v2787 = vunpack.c.h.b16 %v568
    %v2788 = vunpack.c.l.b16 %v569
    %v2789 = vunpack.c.h.b16 %v569
    %v2790 = vunpack.c.l.b16 %v570
    %v2791 = vunpack.c.h.b16 %v570
    %v2792 = vunpack.c.l.b16 %v571
    %v2793 = vunpack.c.h.b16 %v571
    %v2794 = vunpack.c.l.b16 %v572
    %v2795 = vunpack.c.h.b16 %v572
    %v2796 = vunpack.c.l.b16 %v573
    %v2797 = vunpack.c.h.b16 %v573
    %v2798 = vunpack.c.l.b16 %v574
    %v2799 = vunpack.c.h.b16 %v574
    %v2800 = vunpack.c.l.b16 %v575
    %v2801 = vunpack.c.h.b16 %v575
    %v2802 = vunpack.c.l.b16 %v576
    %v2803 = vunpack.c.h.b16 %v576
    %v2804 = vunpack.c.l.b16 %v577
    %v2805 = vunpack.c.h.b16 %v577
    %v2806 = vunpack.c.l.b16 %v578
    %v2807 = vunpack.c.h.b16 %v578
    %v2808 = vunpack.c.l.b16 %v579
    %v2809 = vunpack.c.h.b16 %v579
    %v2810 = vunpack.c.l.b16 %v580
    %v2811 = vunpack.c.h.b16 %v580
    %v2812 = vunpack.c.l.b16 %v581
    %v2813 = vunpack.c.h.b16 %v581
    %v2814 = vunpack.c.l.b16 %v582
    %v2815 = vunpack.c.h.b16 %v582
    %v2816 = vunpack.c.l.b16 %v583
    %v2817 = vunpack.c.h.b16 %v583
    %v2818 = vunpack.c.l.b16 %v584
    %v2819 = vunpack.c.h.b16 %v584
    %v2820 = vunpack.c.l.b16 %v585
    %v2821 = vunpack.c.h.b16 %v585
    %v2822 = vunpack.c.l.b16 %v586
    %v2823 = vunpack.c.h.b16 %v586
    %v2824 = vunpack.c.l.b16 %v587
    %v2825 = vunpack.c.h.b16 %v587
    %v2826 = vunpack.c.l.b16 %v588
    %v2827 = vunpack.c.h.b16 %v588
    %v2828 = vunpack.c.l.b16 %v589
    %v2829 = vunpack.c.h.b16 %v589
    %v2830 = vunpack.c.l.b16 %v590
    %v2831 = vunpack.c.h.b16 %v590
    %v2832 = vunpack.c.l.b16 %v591
    %v2833 = vunpack.c.h.b16 %v591
    %v2834 = vunpack.c.l.b16 %v592
    %v2835 = vunpack.c.h.b16 %v592
    %v2836 = vunpack.c.l.b16 %v593
    %v2837 = vunpack.c.h.b16 %v593
    %v2838 = vunpack.c.l.b16 %v594
    %v2839 = vunpack.c.h.b16 %v594
    %v2840 = vunpack.c.l.b16 %v595
    %v2841 = vunpack.c.h.b16 %v595
    %v2842 = vunpack.c.l.b16 %v596
    %v2843 = vunpack.c.h.b16 %v596
    %v2844 = vunpack.c.l.b16 %v597
    %v2845 = vunpack.c.h.b16 %v597
    %v2846 = vunpack.c.l.b16 %v598
    %v2847 = vunpack.c.h.b16 %v598
    %v2848 = vunpack.c.l.b16 %v599
    %v2849 = vunpack.c.h.b16 %v599
    %v2850 = vunpack.c.l.b16 %v600
    %v2851 = vunpack.c.h.b16 %v600
    %v2852 = vunpack.c.l.b16 %v601
    %v2853 = vunpack.c.h.b16 %v601
    %v2854 = vunpack.c.l.b16 %v602
    %v2855 = vunpack.c.h.b16 %v602
    %v2856 = vunpack.c.l.b16 %v603
    %v2857 = vunpack.c.h.b16 %v603
    %v2858 = vunpack.c.l.b16 %v604
    %v2859 = vunpack.c.h.b16 %v604
    %v2860 = vunpack.c.l.b16 %v605
    %v2861 = vunpack.c.h.b16 %v605
    %v2862 = vunpack.c.l.b16 %v606
    %v2863 = vunpack.c.h.b16 %v606
    %v2864 = vunpack.c.l.b16 %v607
    %v2865 = vunpack.c.h.b16 %v607
    %v2866 = vunpack.c.l.b16 %v608
    %v2867 = vunpack.c.h.b16 %v608
    %v2868 = vunpack.c.l.b16 %v609
    %v2869 = vunpack.c.h.b16 %v609
    %v2870 = vunpack.c.l.b16 %v610
    %v2871 = vunpack.c.h.b16 %v610
    %v2872 = vunpack.c.l.b16 %v611
    %v2873 = vunpack.c.h.b16 %v611
    %v2874 = vunpack.c.l.b16 %v612
    %v2875 = vunpack.c.h.b16 %v612
    %v2876 = vunpack.c.l.b16 %v613
    %v2877 = vunpack.c.h.b16 %v613
    %v2878 = vunpack.c.l.b16 %v614
    %v2879 = vunpack.c.h.b16 %v614
    %v2880 = vunpack.c.l.b16 %v615
    %v2881 = vunpack.c.h.b16 %v615
    %v2882 = vunpack.c.l.b16 %v616
    %v2883 = vunpack.c.h.b16 %v616
    %v2884 = vunpack.c.l.b16 %v617
    %v2885 = vunpack.c.h.b16 %v617
    %v2886 = vunpack.c.l.b16 %v618
    %v2887 = vunpack.c.h.b16 %v618
    %v2888 = vunpack.c.l.b16 %v619
    %v2889 = vunpack.c.h.b16 %v619
    %v2890 = vunpack.c.l.b16 %v620
    %v2891 = vunpack.c.h.b16 %v620
    %v2892 = vunpack.c.l.b16 %v621
    %v2893 = vunpack.c.h.b16 %v621
    %v2894 = vunpack.c.l.b16 %v622
    %v2895 = vunpack.c.h.b16 %v622
    %v2896 = vunpack.c.l.b16 %v623
    %v2897 = vunpack.c.h.b16 %v623
    %v2898 = vunpack.c.l.b16 %v624
    %v2899 = vunpack.c.h.b16 %v624
    %v2900 = vunpack.c.l.b16 %v625
    %v2901 = vunpack.c.h.b16 %v625
    %v2902 = vunpack.c.l.b16 %v626
    %v2903 = vunpack.c.h.b16 %v626
    %v2904 = vunpack.c.l.b16 %v627
    %v2905 = vunpack.c.h.b16 %v627
    %v2906 = vunpack.c.l.b16 %v628
    %v2907 = vunpack.c.h.b16 %v628
    %v2908 = vunpack.c.l.b16 %v629
    %v2909 = vunpack.c.h.b16 %v629
    %v2910 = vunpack.c.l.b16 %v630
    %v2911 = vunpack.c.h.b16 %v630
    %v2912 = vunpack.c.l.b16 %v631
    %v2913 = vunpack.c.h.b16 %v631
    %v2914 = vunpack.c.l.b16 %v632
    %v2915 = vunpack.c.h.b16 %v632
    %v2916 = vunpack.c.l.b16 %v633
    %v2917 = vunpack.c.h.b16 %v633
    %v2918 = vunpack.c.l.b16 %v634
    %v2919 = vunpack.c.h.b16 %v634
    %v2920 = vunpack.c.l.b16 %v635
    %v2921 = vunpack.c.h.b16 %v635
    %v2922 = vunpack.c.l.b16 %v636
    %v2923 = vunpack.c.h.b16 %v636
    %v2924 = vunpack.c.l.b16 %v637
    %v2925 = vunpack.c.h.b16 %v637
    %v2926 = vunpack.c.l.b16 %v638
    %v2927 = vunpack.c.h.b16 %v638
    %v2928 = vunpack.c.l.b16 %v639
    %v2929 = vunpack.c.h.b16 %v639
    %v2930 = vunpack.c.l.b16 %v640
    %v2931 = vunpack.c.h.b16 %v640
    %v2932 = vunpack.c.l.b16 %v641
    %v2933 = vunpack.c.h.b16 %v641
    %v2934 = vunpack.c.l.b16 %v642
    %v2935 = vunpack.c.h.b16 %v642
    %v2936 = vunpack.c.l.b16 %v643
    %v2937 = vunpack.c.h.b16 %v643
    %v2938 = vunpack.c.l.b16 %v644
    %v2939 = vunpack.c.h.b16 %v644
    %v2940 = vunpack.c.l.b16 %v645
    %v2941 = vunpack.c.h.b16 %v645
    %v2942 = vunpack.c.l.b16 %v646
    %v2943 = vunpack.c.h.b16 %v646
    %v2944 = vunpack.c.l.b16 %v647
    %v2945 = vunpack.c.h.b16 %v647
    %v2946 = vunpack.c.l.b16 %v648
    %v2947 = vunpack.c.h.b16 %v648
    %v2948 = vunpack.c.l.b16 %v649
    %v2949 = vunpack.c.h.b16 %v649
    %v2950 = vunpack.c.l.b16 %v650
    %v2951 = vunpack.c.h.b16 %v650
    %v2952 = vunpack.c.l.b16 %v651
    %v2953 = vunpack.c.h.b16 %v651
    %v2954 = vunpack.c.l.b16 %v652
    %v2955 = vunpack.c.h.b16 %v652
    %v2956 = vunpack.c.l.b16 %v653
    %v2957 = vunpack.c.h.b16 %v653
    %v2958 = vunpack.c.l.b16 %v654
    %v2959 = vunpack.c.h.b16 %v654
    %v2960 = vunpack.c.l.b16 %v655
    %v2961 = vunpack.c.h.b16 %v655
    %v2962 = vunpack.c.l.b16 %v656
    %v2963 = vunpack.c.h.b16 %v656
    %v2964 = vunpack.c.l.b16 %v657
    %v2965 = vunpack.c.h.b16 %v657
    %v2966 = vunpack.c.l.b16 %v658
    %v2967 = vunpack.c.h.b16 %v658
    %v2968 = vunpack.c.l.b16 %v659
    %v2969 = vunpack.c.h.b16 %v659
    %v2970 = vunpack.c.l.b16 %v660
    %v2971 = vunpack.c.h.b16 %v660
    %v2972 = vunpack.c.l.b16 %v661
    %v2973 = vunpack.c.h.b16 %v661
    %v2974 = vunpack.c.l.b16 %v662
    %v2975 = vunpack.c.h.b16 %v662
    %v2976 = vunpack.c.l.b16 %v663
    %v2977 = vunpack.c.h.b16 %v663
    %v2978 = vunpack.c.l.b16 %v664
    %v2979 = vunpack.c.h.b16 %v664
    %v2980 = vunpack.c.l.b16 %v665
    %v2981 = vunpack.c.h.b16 %v665
    %v2982 = vunpack.c.l.b16 %v666
    %v2983 = vunpack.c.h.b16 %v666
    %v2984 = vunpack.c.l.b16 %v667
    %v2985 = vunpack.c.h.b16 %v667
    %v2986 = vunpack.c.l.b16 %v668
    %v2987 = vunpack.c.h.b16 %v668
    %v2988 = vunpack.c.l.b16 %v669
    %v2989 = vunpack.c.h.b16 %v669
    %v2990 = vunpack.c.l.b16 %v670
    %v2991 = vunpack.c.h.b16 %v670
    %v2992 = vunpack.c.l.b16 %v671
    %v2993 = vunpack.c.h.b16 %v671
    %v2994 = vunpack.c.l.b16 %v672
    %v2995 = vunpack.c.h.b16 %v672
    %v2996 = vunpack.c.l.b16 %v673
    %v2997 = vunpack.c.h.b16 %v673
    %v2998 = vunpack.c.l.b16 %v674
    %v2999 = vunpack.c.h.b16 %v674
    %v3000 = vunpack.c.l.b16 %v675
    %v3001 = vunpack.c.h.b16 %v675
    %v3002 = vunpack.c.l.b16 %v676
    %v3003 = vunpack.c.h.b16 %v676
    %v3004 = vunpack.c.l.b16 %v677
    %v3005 = vunpack.c.h.b16 %v677
    %v3006 = vunpack.c.l.b16 %v678
    %v3007 = vunpack.c.h.b16 %v678
    %v3008 = vunpack.c.l.b16 %v679
    %v3009 = vunpack.c.h.b16 %v679
    %v3010 = vunpack.c.l.b16 %v680
    %v3011 = vunpack.c.h.b16 %v680
    %v3012 = vunpack.c.l.b16 %v681
    %v3013 = vunpack.c.h.b16 %v681
    %v3014 = vunpack.c.l.b16 %v682
    %v3015 = vunpack.c.h.b16 %v682
    %v3016 = vunpack.c.l.b16 %v683
    %v3017 = vunpack.c.h.b16 %v683
    %v3018 = vunpack.c.l.b16 %v684
    %v3019 = vunpack.c.h.b16 %v684
    %v3020 = vunpack.c.l.b16 %v685
    %v3021 = vunpack.c.h.b16 %v685
    %v3022 = vunpack.c.l.b16 %v686
    %v3023 = vunpack.c.h.b16 %v686
    %v3024 = vunpack.c.l.b16 %v687
    %v3025 = vunpack.c.h.b16 %v687
    %v3026 = vunpack.c.l.b16 %v688
    %v3027 = vunpack.c.h.b16 %v688
    %v3028 = vunpack.c.l.b16 %v689
    %v3029 = vunpack.c.h.b16 %v689
    %v3030 = vunpack.c.l.b16 %v690
    %v3031 = vunpack.c.h.b16 %v690
    %v3032 = vunpack.c.l.b16 %v691
    %v3033 = vunpack.c.h.b16 %v691
    %v3034 = vunpack.c.l.b16 %v692
    %v3035 = vunpack.c.h.b16 %v692
    %v3036 = vunpack.c.l.b16 %v693
    %v3037 = vunpack.c.h.b16 %v693
    %v3038 = vunpack.c.l.b16 %v694
    %v3039 = vunpack.c.h.b16 %v694
    %v3040 = vunpack.c.l.b16 %v695
    %v3041 = vunpack.c.h.b16 %v695
    %v3042 = vunpack.c.l.b16 %v696
    %v3043 = vunpack.c.h.b16 %v696
    %v3044 = vunpack.c.l.b16 %v697
    %v3045 = vunpack.c.h.b16 %v697
    %v3046 = vunpack.c.l.b16 %v698
    %v3047 = vunpack.c.h.b16 %v698
    %v3048 = vunpack.c.l.b16 %v699
    %v3049 = vunpack.c.h.b16 %v699
    %v3050 = vunpack.c.l.b16 %v700
    %v3051 = vunpack.c.h.b16 %v700
    %v3052 = vunpack.c.l.b16 %v701
    %v3053 = vunpack.c.h.b16 %v701
    %v3054 = vunpack.c.l.b16 %v702
    %v3055 = vunpack.c.h.b16 %v702
    %v3056 = vunpack.c.l.b16 %v703
    %v3057 = vunpack.c.h.b16 %v703
    %v3058 = vunpack.c.l.b16 %v704
    %v3059 = vunpack.c.h.b16 %v704
    %v3060 = vunpack.c.l.b16 %v705
    %v3061 = vunpack.c.h.b16 %v705
    %v3062 = vunpack.c.l.b16 %v706
    %v3063 = vunpack.c.h.b16 %v706
    %v3064 = vunpack.c.l.b16 %v707
    %v3065 = vunpack.c.h.b16 %v707
    %v3066 = vunpack.c.l.b16 %v708
    %v3067 = vunpack.c.h.b16 %v708
    %v3068 = vunpack.c.l.b16 %v709
    %v3069 = vunpack.c.h.b16 %v709
    %v3070 = vunpack.c.l.b16 %v710
    %v3071 = vunpack.c.h.b16 %v710
    %v3072 = vunpack.c.l.b16 %v711
    %v3073 = vunpack.c.h.b16 %v711
    %v3074 = vunpack.c.l.b16 %v712
    %v3075 = vunpack.c.h.b16 %v712
    %v3076 = vunpack.c.l.b16 %v713
    %v3077 = vunpack.c.h.b16 %v713
    %v3078 = vunpack.c.l.b16 %v714
    %v3079 = vunpack.c.h.b16 %v714
    %v3080 = vunpack.c.l.b16 %v715
    %v3081 = vunpack.c.h.b16 %v715
    %v3082 = vunpack.c.l.b16 %v716
    %v3083 = vunpack.c.h.b16 %v716
    %v3084 = vunpack.c.l.b16 %v717
    %v3085 = vunpack.c.h.b16 %v717
    %v3086 = vunpack.c.l.b16 %v718
    %v3087 = vunpack.c.h.b16 %v718
    %v3088 = vunpack.c.l.b16 %v719
    %v3089 = vunpack.c.h.b16 %v719
    %v3090 = vunpack.c.l.b16 %v720
    %v3091 = vunpack.c.h.b16 %v720
    %v3092 = vunpack.c.l.b16 %v721
    %v3093 = vunpack.c.h.b16 %v721
    %v3094 = vunpack.c.l.b16 %v722
    %v3095 = vunpack.c.h.b16 %v722
    %v3096 = vunpack.c.l.b16 %v723
    %v3097 = vunpack.c.h.b16 %v723
    %v3098 = vunpack.c.l.b16 %v724
    %v3099 = vunpack.c.h.b16 %v724
    %v3100 = vunpack.c.l.b16 %v725
    %v3101 = vunpack.c.h.b16 %v725
    %v3102 = vunpack.c.l.b16 %v726
    %v3103 = vunpack.c.h.b16 %v726
    %v3104 = vunpack.c.l.b16 %v727
    %v3105 = vunpack.c.h.b16 %v727
    %v3106 = vunpack.c.l.b16 %v728
    %v3107 = vunpack.c.h.b16 %v728
    %v3108 = vunpack.c.l.b16 %v729
    %v3109 = vunpack.c.h.b16 %v729
    %v3110 = vunpack.c.l.b16 %v730
    %v3111 = vunpack.c.h.b16 %v730
    %v3112 = vunpack.c.l.b16 %v731
    %v3113 = vunpack.c.h.b16 %v731
    %v3114 = vunpack.c.l.b16 %v732
    %v3115 = vunpack.c.h.b16 %v732
    %v3116 = vunpack.c.l.b16 %v733
    %v3117 = vunpack.c.h.b16 %v733
    %v3118 = vunpack.c.l.b16 %v734
    %v3119 = vunpack.c.h.b16 %v734
    %v3120 = vunpack.c.l.b16 %v735
    %v3121 = vunpack.c.h.b16 %v735
    %v3122 = vunpack.c.l.b16 %v736
    %v3123 = vunpack.c.h.b16 %v736
    %v3124 = vunpack.c.l.b16 %v737
    %v3125 = vunpack.c.h.b16 %v737
    %v3126 = vunpack.c.l.b16 %v738
    %v3127 = vunpack.c.h.b16 %v738
    %v3128 = vunpack.c.l.b16 %v739
    %v3129 = vunpack.c.h.b16 %v739
    %v3130 = vunpack.c.l.b16 %v740
    %v3131 = vunpack.c.h.b16 %v740
    %v3132 = vunpack.c.l.b16 %v741
    %v3133 = vunpack.c.h.b16 %v741
    %v3134 = vunpack.c.l.b16 %v742
    %v3135 = vunpack.c.h.b16 %v742
    %v3136 = vunpack.c.l.b16 %v743
    %v3137 = vunpack.c.h.b16 %v743
    %v3138 = vunpack.c.l.b16 %v744
    %v3139 = vunpack.c.h.b16 %v744
    %v3140 = vunpack.c.l.b16 %v745
    %v3141 = vunpack.c.h.b16 %v745
    %v3142 = vunpack.c.l.b16 %v746
    %v3143 = vunpack.c.h.b16 %v746
    %v3144 = vunpack.c.l.b16 %v747
    %v3145 = vunpack.c.h.b16 %v747
    %v3146 = vunpack.c.l.b16 %v748
    %v3147 = vunpack.c.h.b16 %v748
    %v3148 = vunpack.c.l.b16 %v749
    %v3149 = vunpack.c.h.b16 %v749
    %v3150 = vunpack.c.l.b16 %v750
    %v3151 = vunpack.c.h.b16 %v750
    %v3152 = vunpack.c.l.b16 %v751
    %v3153 = vunpack.c.h.b16 %v751
    %v3154 = vunpack.c.l.b16 %v752
    %v3155 = vunpack.c.h.b16 %v752
    %v3156 = vunpack.c.l.b16 %v753
    %v3157 = vunpack.c.h.b16 %v753
    %v3158 = vunpack.c.l.b16 %v754
    %v3159 = vunpack.c.h.b16 %v754
    %v3160 = vunpack.c.l.b16 %v755
    %v3161 = vunpack.c.h.b16 %v755
    %v3162 = vunpack.c.l.b16 %v756
    %v3163 = vunpack.c.h.b16 %v756
    %v3164 = vunpack.c.l.b16 %v757
    %v3165 = vunpack.c.h.b16 %v757
    %v3166 = vunpack.c.l.b16 %v758
    %v3167 = vunpack.c.h.b16 %v758
    %v3168 = vunpack.c.l.b16 %v759
    %v3169 = vunpack.c.h.b16 %v759
    %v3170 = vunpack.c.l.b16 %v760
    %v3171 = vunpack.c.h.b16 %v760
    %v3172 = vunpack.c.l.b16 %v761
    %v3173 = vunpack.c.h.b16 %v761
    %v3174 = vunpack.c.l.b16 %v762
    %v3175 = vunpack.c.h.b16 %v762
    %v3176 = vunpack.c.l.b16 %v763
    %v3177 = vunpack.c.h.b16 %v763
    %v3178 = vunpack.c.l.b16 %v764
    %v3179 = vunpack.c.h.b16 %v764
    %v3180 = vunpack.c.l.b16 %v765
    %v3181 = vunpack.c.h.b16 %v765
    %v3182 = vunpack.c.l.b16 %v766
    %v3183 = vunpack.c.h.b16 %v766
    %v3184 = vunpack.c.l.b16 %v767
    %v3185 = vunpack.c.h.b16 %v767
    %v3186 = vunpack.c.l.b16 %v768
    %v3187 = vunpack.c.h.b16 %v768
    %v3188 = vunpack.c.l.b16 %v769
    %v3189 = vunpack.c.h.b16 %v769
    %v3190 = vunpack.c.l.b16 %v770
    %v3191 = vunpack.c.h.b16 %v770
    %v3192 = vunpack.c.l.b16 %v771
    %v3193 = vunpack.c.h.b16 %v771
    %v3194 = vunpack.c.l.b16 %v772
    %v3195 = vunpack.c.h.b16 %v772
    %v3196 = vunpack.c.l.b16 %v773
    %v3197 = vunpack.c.h.b16 %v773
    %v3198 = vunpack.c.l.b16 %v774
    %v3199 = vunpack.c.h.b16 %v774
    %v3200 = vunpack.c.l.b16 %v775
    %v3201 = vunpack.c.h.b16 %v775
    %v3202 = vunpack.c.l.b16 %v776
    %v3203 = vunpack.c.h.b16 %v776
    %v3204 = vunpack.c.l.b16 %v777
    %v3205 = vunpack.c.h.b16 %v777
    %v3206 = vunpack.c.l.b16 %v778
    %v3207 = vunpack.c.h.b16 %v778
    %v3208 = vunpack.c.l.b16 %v779
    %v3209 = vunpack.c.h.b16 %v779
    %v3210 = vunpack.c.l.b16 %v780
    %v3211 = vunpack.c.h.b16 %v780
    %v3212 = vunpack.c.l.b16 %v781
    %v3213 = vunpack.c.h.b16 %v781
    %v3214 = vunpack.c.l.b16 %v782
    %v3215 = vunpack.c.h.b16 %v782
    %v3216 = vunpack.c.l.b16 %v783
    %v3217 = vunpack.c.h.b16 %v783
    %v3218 = vunpack.c.l.b16 %v784
    %v3219 = vunpack.c.h.b16 %v784
    %v3220 = vunpack.c.l.b16 %v785
    %v3221 = vunpack.c.h.b16 %v785
    %v3222 = vunpack.c.l.b16 %v786
    %v3223 = vunpack.c.h.b16 %v786
    %v3224 = vunpack.c.l.b16 %v787
    %v3225 = vunpack.c.h.b16 %v787
    %v3226 = vunpack.c.l.b16 %v788
    %v3227 = vunpack.c.h.b16 %v788
    %v3228 = vunpack.c.l.b16 %v789
    %v3229 = vunpack.c.h.b16 %v789
    %v3230 = vunpack.c.l.b16 %v790
    %v3231 = vunpack.c.h.b16 %v790
    %v3232 = vunpack.c.l.b16 %v791
    %v3233 = vunpack.c.h.b16 %v791
    %v3234 = vunpack.c.l.b16 %v792
    %v3235 = vunpack.c.h.b16 %v792
    %v3236 = vunpack.c.l.b16 %v793
    %v3237 = vunpack.c.h.b16 %v793
    %v3238 = vunpack.c.l.b16 %v794
    %v3239 = vunpack.c.h.b16 %v794
    %v3240 = vunpack.c.l.b16 %v795
    %v3241 = vunpack.c.h.b16 %v795
    %v3242 = vunpack.c.l.b16 %v796
    %v3243 = vunpack.c.h.b16 %v796
    %v3244 = vunpack.c.l.b16 %v797
    %v3245 = vunpack.c.h.b16 %v797
    %v3246 = vunpack.c.l.b16 %v798
    %v3247 = vunpack.c.h.b16 %v798
    %v3248 = vunpack.c.l.b16 %v799
    %v3249 = vunpack.c.h.b16 %v799
    %v3250 = vunpack.c.l.b16 %v800
    %v3251 = vunpack.c.h.b16 %v800
    %v3252 = vunpack.c.l.b16 %v801
    %v3253 = vunpack.c.h.b16 %v801
    %v3254 = vunpack.c.l.b16 %v802
    %v3255 = vunpack.c.h.b16 %v802
    %v3256 = vunpack.c.l.b16 %v803
    %v3257 = vunpack.c.h.b16 %v803
    %v3258 = vunpack.c.l.b16 %v804
    %v3259 = vunpack.c.h.b16 %v804
    %v3260 = vunpack.c.l.b16 %v805
    %v3261 = vunpack.c.h.b16 %v805
    %v3262 = vunpack.c.l.b16 %v806
    %v3263 = vunpack.c.h.b16 %v806
    %v3264 = vunpack.c.l.b16 %v807
    %v3265 = vunpack.c.h.b16 %v807
    %v3266 = vunpack.c.l.b16 %v808
    %v3267 = vunpack.c.h.b16 %v808
    %v3268 = vunpack.c.l.b16 %v809
    %v3269 = vunpack.c.h.b16 %v809
    %v3270 = vunpack.c.l.b16 %v810
    %v3271 = vunpack.c.h.b16 %v810
    %v3272 = vunpack.c.l.b16 %v811
    %v3273 = vunpack.c.h.b16 %v811
    %v3274 = vunpack.c.l.b16 %v812
    %v3275 = vunpack.c.h.b16 %v812
    %v3276 = vunpack.c.l.b16 %v813
    %v3277 = vunpack.c.h.b16 %v813
    %v3278 = vunpack.c.l.b16 %v814
    %v3279 = vunpack.c.h.b16 %v814
    %v3280 = vunpack.c.l.b16 %v815
    %v3281 = vunpack.c.h.b16 %v815
    %v3282 = vunpack.c.l.b16 %v816
    %v3283 = vunpack.c.h.b16 %v816
    %v3284 = vunpack.c.l.b16 %v817
    %v3285 = vunpack.c.h.b16 %v817
    %v3286 = vunpack.c.l.b16 %v818
    %v3287 = vunpack.c.h.b16 %v818
    %v3288 = vunpack.c.l.b16 %v819
    %v3289 = vunpack.c.h.b16 %v819
    %v3290 = vunpack.c.l.b16 %v820
    %v3291 = vunpack.c.h.b16 %v820
    %v3292 = vunpack.c.l.b16 %v821
    %v3293 = vunpack.c.h.b16 %v821
    %v3294 = vunpack.c.l.b16 %v822
    %v3295 = vunpack.c.h.b16 %v822
    %v3296 = vunpack.c.l.b16 %v823
    %v3297 = vunpack.c.h.b16 %v823
    %v3298 = vunpack.c.l.b16 %v824
    %v3299 = vunpack.c.h.b16 %v824
    %v3300 = vunpack.c.l.b16 %v825
    %v3301 = vunpack.c.h.b16 %v825
    %v3302 = vunpack.c.l.b16 %v826
    %v3303 = vunpack.c.h.b16 %v826
    %v3304 = vunpack.c.l.b16 %v827
    %v3305 = vunpack.c.h.b16 %v827
    %v3306 = vunpack.c.l.b16 %v828
    %v3307 = vunpack.c.h.b16 %v828
    %v3308 = vunpack.c.l.b16 %v829
    %v3309 = vunpack.c.h.b16 %v829
    %v3310 = vunpack.c.l.b16 %v830
    %v3311 = vunpack.c.h.b16 %v830
    %v3312 = vunpack.c.l.b16 %v831
    %v3313 = vunpack.c.h.b16 %v831
    %v3314 = vunpack.c.l.b16 %v832
    %v3315 = vunpack.c.h.b16 %v832
    %v3316 = vunpack.c.l.b16 %v833
    %v3317 = vunpack.c.h.b16 %v833
    %v3318 = vunpack.c.l.b16 %v834
    %v3319 = vunpack.c.h.b16 %v834
    %v3320 = vunpack.c.l.b16 %v835
    %v3321 = vunpack.c.h.b16 %v835
    %v3322 = vunpack.c.l.b16 %v836
    %v3323 = vunpack.c.h.b16 %v836
    %v3324 = vunpack.c.l.b16 %v837
    %v3325 = vunpack.c.h.b16 %v837
    %v3326 = vunpack.c.l.b16 %v838
    %v3327 = vunpack.c.h.b16 %v838
    %v3328 = vunpack.c.l.b16 %v839
    %v3329 = vunpack.c.h.b16 %v839
    %v3330 = vunpack.c.l.b16 %v840
    %v3331 = vunpack.c.h.b16 %v840
    %v3332 = vunpack.c.l.b16 %v841
    %v3333 = vunpack.c.h.b16 %v841
    %v3334 = vunpack.c.l.b16 %v842
    %v3335 = vunpack.c.h.b16 %v842
    %v3336 = vunpack.c.l.b16 %v843
    %v3337 = vunpack.c.h.b16 %v843
    %v3338 = vunpack.c.l.b16 %v844
    %v3339 = vunpack.c.h.b16 %v844
    %v3340 = vunpack.c.l.b16 %v845
    %v3341 = vunpack.c.h.b16 %v845
    %v3342 = vunpack.c.l.b16 %v846
    %v3343 = vunpack.c.h.b16 %v846
    %v3344 = vunpack.c.l.b16 %v847
    %v3345 = vunpack.c.h.b16 %v847
    %v3346 = vunpack.c.l.b16 %v848
    %v3347 = vunpack.c.h.b16 %v848
    %v3348 = vunpack.c.l.b16 %v849
    %v3349 = vunpack.c.h.b16 %v849
    %v3350 = vunpack.c.l.b16 %v850
    %v3351 = vunpack.c.h.b16 %v850
    %v3352 = vunpack.c.l.b16 %v851
    %v3353 = vunpack.c.h.b16 %v851
    %v3354 = vunpack.c.l.b16 %v852
    %v3355 = vunpack.c.h.b16 %v852
    %v3356 = vunpack.c.l.b16 %v853
    %v3357 = vunpack.c.h.b16 %v853
    %v3358 = vunpack.c.l.b16 %v854
    %v3359 = vunpack.c.h.b16 %v854
    %v3360 = vunpack.c.l.b16 %v855
    %v3361 = vunpack.c.h.b16 %v855
    %v3362 = vunpack.c.l.b16 %v856
    %v3363 = vunpack.c.h.b16 %v856
    %v3364 = vunpack.c.l.b16 %v857
    %v3365 = vunpack.c.h.b16 %v857
    %v3366 = vunpack.c.l.b16 %v858
    %v3367 = vunpack.c.h.b16 %v858
    %v3368 = vunpack.c.l.b16 %v859
    %v3369 = vunpack.c.h.b16 %v859
    %v3370 = vunpack.c.l.b16 %v860
    %v3371 = vunpack.c.h.b16 %v860
    %v3372 = vunpack.c.l.b16 %v861
    %v3373 = vunpack.c.h.b16 %v861
    %v3374 = vunpack.c.l.b16 %v862
    %v3375 = vunpack.c.h.b16 %v862
    %v3376 = vunpack.c.l.b16 %v863
    %v3377 = vunpack.c.h.b16 %v863
    %v3378 = vunpack.c.l.b16 %v864
    %v3379 = vunpack.c.h.b16 %v864
    %v3380 = vunpack.c.l.b16 %v865
    %v3381 = vunpack.c.h.b16 %v865
    %v3382 = vunpack.c.l.b16 %v866
    %v3383 = vunpack.c.h.b16 %v866
    %v3384 = vunpack.c.l.b16 %v867
    %v3385 = vunpack.c.h.b16 %v867
    %v3386 = vunpack.c.l.b16 %v868
    %v3387 = vunpack.c.h.b16 %v868
    %v3388 = vunpack.c.l.b16 %v869
    %v3389 = vunpack.c.h.b16 %v869
    %v3390 = vunpack.c.l.b16 %v870
    %v3391 = vunpack.c.h.b16 %v870
    %v3392 = vunpack.c.l.b16 %v871
    %v3393 = vunpack.c.h.b16 %v871
    %v3394 = vunpack.c.l.b16 %v872
    %v3395 = vunpack.c.h.b16 %v872
    %v3396 = vunpack.c.l.b16 %v873
    %v3397 = vunpack.c.h.b16 %v873
    %v3398 = vunpack.c.l.b16 %v874
    %v3399 = vunpack.c.h.b16 %v874
    %v3400 = vunpack.c.l.b16 %v875
    %v3401 = vunpack.c.h.b16 %v875
    %v3402 = vunpack.c.l.b16 %v876
    %v3403 = vunpack.c.h.b16 %v876
    %v3404 = vunpack.c.l.b16 %v877
    %v3405 = vunpack.c.h.b16 %v877
    %v3406 = vunpack.c.l.b16 %v878
    %v3407 = vunpack.c.h.b16 %v878
    %v3408 = vunpack.c.l.b16 %v879
    %v3409 = vunpack.c.h.b16 %v879
    %v3410 = vunpack.c.l.b16 %v880
    %v3411 = vunpack.c.h.b16 %v880
    %v3412 = vunpack.c.l.b16 %v881
    %v3413 = vunpack.c.h.b16 %v881
    %v3414 = vunpack.c.l.b16 %v882
    %v3415 = vunpack.c.h.b16 %v882
    %v3416 = vunpack.c.l.b16 %v883
    %v3417 = vunpack.c.h.b16 %v883
    %v3418 = vunpack.c.l.b16 %v884
    %v3419 = vunpack.c.h.b16 %v884
    %v3420 = vunpack.c.l.b16 %v885
    %v3421 = vunpack.c.h.b16 %v885
    %v3422 = vunpack.c.l.b16 %v886
    %v3423 = vunpack.c.h.b16 %v886
    %v3424 = vunpack.c.l.b16 %v887
    %v3425 = vunpack.c.h.b16 %v887
    %v3426 = vunpack.c.l.b16 %v888
    %v3427 = vunpack.c.h.b16 %v888
    %v3428 = vunpack.c.l.b16 %v889
    %v3429 = vunpack.c.h.b16 %v889
    %v3430 = vunpack.c.l.b16 %v890
    %v3431 = vunpack.c.h.b16 %v890
    %v3432 = vunpack.c.l.b16 %v891
    %v3433 = vunpack.c.h.b16 %v891
    %v3434 = vunpack.c.l.b16 %v892
    %v3435 = vunpack.c.h.b16 %v892
    %v3436 = vunpack.c.l.b16 %v893
    %v3437 = vunpack.c.h.b16 %v893
    %v3438 = vunpack.c.l.b16 %v894
    %v3439 = vunpack.c.h.b16 %v894
    %v3440 = vunpack.c.l.b16 %v895
    %v3441 = vunpack.c.h.b16 %v895
    %v3442 = vunpack.c.l.b16 %v896
    %v3443 = vunpack.c.h.b16 %v896
    %v3444 = vunpack.c.l.b16 %v897
    %v3445 = vunpack.c.h.b16 %v897
    %v3446 = vunpack.c.l.b16 %v898
    %v3447 = vunpack.c.h.b16 %v898
    %v3448 = vunpack.c.l.b16 %v899
    %v3449 = vunpack.c.h.b16 %v899
    %v3450 = vunpack.c.l.b16 %v900
    %v3451 = vunpack.c.h.b16 %v900
    %v3452 = vunpack.c.l.b16 %v901
    %v3453 = vunpack.c.h.b16 %v901
    %v3454 = vunpack.c.l.b16 %v902
    %v3455 = vunpack.c.h.b16 %v902
    %v3456 = vunpack.c.l.b16 %v903
    %v3457 = vunpack.c.h.b16 %v903
    %v3458 = vunpack.c.l.b16 %v904
    %v3459 = vunpack.c.h.b16 %v904
    %v3460 = vunpack.c.l.b16 %v905
    %v3461 = vunpack.c.h.b16 %v905
    %v3462 = vunpack.c.l.b16 %v906
    %v3463 = vunpack.c.h.b16 %v906
    %v3464 = vunpack.c.l.b16 %v907
    %v3465 = vunpack.c.h.b16 %v907
    %v3466 = vunpack.c.l.b16 %v908
    %v3467 = vunpack.c.h.b16 %v908
    %v3468 = vunpack.c.l.b16 %v909
    %v3469 = vunpack.c.h.b16 %v909
    %v3470 = vunpack.c.l.b16 %v910
    %v3471 = vunpack.c.h.b16 %v910
    %v3472 = vunpack.c.l.b16 %v911
    %v3473 = vunpack.c.h.b16 %v911
    %v3474 = vunpack.c.l.b16 %v912
    %v3475 = vunpack.c.h.b16 %v912
    %v3476 = vunpack.c.l.b16 %v913
    %v3477 = vunpack.c.h.b16 %v913
    %v3478 = vunpack.c.l.b16 %v914
    %v3479 = vunpack.c.h.b16 %v914
    %v3480 = vunpack.c.l.b16 %v915
    %v3481 = vunpack.c.h.b16 %v915
    %v3482 = vunpack.c.l.b16 %v916
    %v3483 = vunpack.c.h.b16 %v916
    %v3484 = vunpack.c.l.b16 %v917
    %v3485 = vunpack.c.h.b16 %v917
    %v3486 = vunpack.c.l.b16 %v918
    %v3487 = vunpack.c.h.b16 %v918
    %v3488 = vunpack.c.l.b16 %v919
    %v3489 = vunpack.c.h.b16 %v919
    %v3490 = vunpack.c.l.b16 %v920
    %v3491 = vunpack.c.h.b16 %v920
    %v3492 = vunpack.c.l.b16 %v921
    %v3493 = vunpack.c.h.b16 %v921
    %v3494 = vunpack.c.l.b16 %v922
    %v3495 = vunpack.c.h.b16 %v922
    %v3496 = vunpack.c.l.b16 %v923
    %v3497 = vunpack.c.h.b16 %v923
    %v3498 = vunpack.c.l.b16 %v924
    %v3499 = vunpack.c.h.b16 %v924
    %v3500 = vunpack.c.l.b16 %v925
    %v3501 = vunpack.c.h.b16 %v925
    %v3502 = vunpack.c.l.b16 %v926
    %v3503 = vunpack.c.h.b16 %v926
    %v3504 = vunpack.c.l.b16 %v927
    %v3505 = vunpack.c.h.b16 %v927
    %v3506 = vunpack.c.l.b16 %v928
    %v3507 = vunpack.c.h.b16 %v928
    %v3508 = vunpack.c.l.b16 %v929
    %v3509 = vunpack.c.h.b16 %v929
    %v3510 = vunpack.c.l.b16 %v930
    %v3511 = vunpack.c.h.b16 %v930
    %v3512 = vunpack.c.l.b16 %v931
    %v3513 = vunpack.c.h.b16 %v931
    %v3514 = vunpack.c.l.b16 %v932
    %v3515 = vunpack.c.h.b16 %v932
    %v3516 = vunpack.c.l.b16 %v933
    %v3517 = vunpack.c.h.b16 %v933
    %v3518 = vunpack.c.l.b16 %v934
    %v3519 = vunpack.c.h.b16 %v934
    %v3520 = vunpack.c.l.b16 %v935
    %v3521 = vunpack.c.h.b16 %v935
    %v3522 = vunpack.c.l.b16 %v936
    %v3523 = vunpack.c.h.b16 %v936
    %v3524 = vunpack.c.l.b16 %v937
    %v3525 = vunpack.c.h.b16 %v937
    %v3526 = vunpack.c.l.b16 %v938
    %v3527 = vunpack.c.h.b16 %v938
    %v3528 = vunpack.c.l.b16 %v939
    %v3529 = vunpack.c.h.b16 %v939
    %v3530 = vunpack.c.l.b16 %v940
    %v3531 = vunpack.c.h.b16 %v940
    %v3532 = vunpack.c.l.b16 %v941
    %v3533 = vunpack.c.h.b16 %v941
    %v3534 = vunpack.c.l.b16 %v942
    %v3535 = vunpack.c.h.b16 %v942
    %v3536 = vunpack.c.l.b16 %v943
    %v3537 = vunpack.c.h.b16 %v943
    %v3538 = vunpack.c.l.b16 %v944
    %v3539 = vunpack.c.h.b16 %v944
    %v3540 = vunpack.c.l.b16 %v945
    %v3541 = vunpack.c.h.b16 %v945
    %v3542 = vunpack.c.l.b16 %v946
    %v3543 = vunpack.c.h.b16 %v946
    %v3544 = vunpack.c.l.b16 %v947
    %v3545 = vunpack.c.h.b16 %v947
    %v3546 = vunpack.c.l.b16 %v948
    %v3547 = vunpack.c.h.b16 %v948
    %v3548 = vunpack.c.l.b16 %v949
    %v3549 = vunpack.c.h.b16 %v949
    %v3550 = vunpack.c.l.b16 %v950
    %v3551 = vunpack.c.h.b16 %v950
    %v3552 = vunpack.c.l.b16 %v951
    %v3553 = vunpack.c.h.b16 %v951
    %v3554 = vunpack.c.l.b16 %v952
    %v3555 = vunpack.c.h.b16 %v952
    %v3556 = vunpack.c.l.b16 %v953
    %v3557 = vunpack.c.h.b16 %v953
    %v3558 = vunpack.c.l.b16 %v954
    %v3559 = vunpack.c.h.b16 %v954
    %v3560 = vunpack.c.l.b16 %v955
    %v3561 = vunpack.c.h.b16 %v955
    %v3562 = vunpack.c.l.b16 %v956
    %v3563 = vunpack.c.h.b16 %v956
    %v3564 = vunpack.c.l.b16 %v957
    %v3565 = vunpack.c.h.b16 %v957
    %v3566 = vunpack.c.l.b16 %v958
    %v3567 = vunpack.c.h.b16 %v958
    %v3568 = vunpack.c.l.b16 %v959
    %v3569 = vunpack.c.h.b16 %v959
    %v3570 = vunpack.c.l.b16 %v960
    %v3571 = vunpack.c.h.b16 %v960
    %v3572 = vunpack.c.l.b16 %v961
    %v3573 = vunpack.c.h.b16 %v961
    %v3574 = vunpack.c.l.b16 %v962
    %v3575 = vunpack.c.h.b16 %v962
    %v3576 = vunpack.c.l.b16 %v963
    %v3577 = vunpack.c.h.b16 %v963
    %v3578 = vunpack.c.l.b16 %v964
    %v3579 = vunpack.c.h.b16 %v964
    %v3580 = vunpack.c.l.b16 %v965
    %v3581 = vunpack.c.h.b16 %v965
    %v3582 = vunpack.c.l.b16 %v966
    %v3583 = vunpack.c.h.b16 %v966
    %v3584 = vunpack.c.l.b16 %v967
    %v3585 = vunpack.c.h.b16 %v967
    %v3586 = vunpack.c.l.b16 %v968
    %v3587 = vunpack.c.h.b16 %v968
    %v3588 = vunpack.c.l.b16 %v969
    %v3589 = vunpack.c.h.b16 %v969
    %v3590 = vunpack.c.l.b16 %v970
    %v3591 = vunpack.c.h.b16 %v970
    %v3592 = vunpack.c.l.b16 %v971
    %v3593 = vunpack.c.h.b16 %v971
    %v3594 = vunpack.c.l.b16 %v972
    %v3595 = vunpack.c.h.b16 %v972
    %v3596 = vunpack.c.l.b16 %v973
    %v3597 = vunpack.c.h.b16 %v973
    %v3598 = vunpack.c.l.b16 %v974
    %v3599 = vunpack.c.h.b16 %v974
    %v3600 = vunpack.c.l.b16 %v975
    %v3601 = vunpack.c.h.b16 %v975
    %v3602 = vunpack.c.l.b16 %v976
    %v3603 = vunpack.c.h.b16 %v976
    %v3604 = vunpack.c.l.b16 %v977
    %v3605 = vunpack.c.h.b16 %v977
    %v3606 = vunpack.c.l.b16 %v978
    %v3607 = vunpack.c.h.b16 %v978
    %v3608 = vunpack.c.l.b16 %v979
    %v3609 = vunpack.c.h.b16 %v979
    %v3610 = vunpack.c.l.b16 %v980
    %v3611 = vunpack.c.h.b16 %v980
    %v3612 = vunpack.c.l.b16 %v981
    %v3613 = vunpack.c.h.b16 %v981
    %v3614 = vunpack.c.l.b16 %v982
    %v3615 = vunpack.c.h.b16 %v982
    %v3616 = vunpack.c.l.b16 %v983
    %v3617 = vunpack.c.h.b16 %v983
    %v3618 = vunpack.c.l.b16 %v984
    %v3619 = vunpack.c.h.b16 %v984
    %v3620 = vunpack.c.l.b16 %v985
    %v3621 = vunpack.c.h.b16 %v985
    %v3622 = vunpack.c.l.b16 %v986
    %v3623 = vunpack.c.h.b16 %v986
    %v3624 = vunpack.c.l.b16 %v987
    %v3625 = vunpack.c.h.b16 %v987
    %v3626 = vunpack.c.l.b16 %v988
    %v3627 = vunpack.c.h.b16 %v988
    %v3628 = vunpack.c.l.b16 %v989
    %v3629 = vunpack.c.h.b16 %v989
    %v3630 = vunpack.c.l.b16 %v990
    %v3631 = vunpack.c.h.b16 %v990
    %v3632 = vunpack.c.l.b16 %v991
    %v3633 = vunpack.c.h.b16 %v991
    %v3634 = vunpack.c.l.b16 %v992
    %v3635 = vunpack.c.h.b16 %v992
    %v3636 = vunpack.c.l.b16 %v993
    %v3637 = vunpack.c.h.b16 %v993
    %v3638 = vunpack.c.l.b16 %v994
    %v3639 = vunpack.c.h.b16 %v994
    %v3640 = vunpack.c.l.b16 %v995
    %v3641 = vunpack.c.h.b16 %v995
    %v3642 = vunpack.c.l.b16 %v996
    %v3643 = vunpack.c.h.b16 %v996
    %v3644 = vunpack.c.l.b16 %v997
    %v3645 = vunpack.c.h.b16 %v997
    %v3646 = vunpack.c.l.b16 %v998
    %v3647 = vunpack.c.h.b16 %v998
    %v3648 = vunpack.c.l.b16 %v999
    %v3649 = vunpack.c.h.b16 %v999
    %v3650 = vunpack.c.l.b16 %v1000
    %v3651 = vunpack.c.h.b16 %v1000
    %v3652 = vunpack.c.l.b16 %v1001
    %v3653 = vunpack.c.h.b16 %v1001
    %v3654 = vunpack.c.l.b16 %v1002
    %v3655 = vunpack.c.h.b16 %v1002
    %v3656 = vunpack.c.l.b16 %v1003
    %v3657 = vunpack.c.h.b16 %v1003
    %v3658 = vunpack.c.l.b16 %v1004
    %v3659 = vunpack.c.h.b16 %v1004
    %v3660 = vunpack.c.l.b16 %v1005
    %v3661 = vunpack.c.h.b16 %v1005
    %v3662 = vunpack.c.l.b16 %v1006
    %v3663 = vunpack.c.h.b16 %v1006
    %v3664 = vunpack.c.l.b16 %v1007
    %v3665 = vunpack.c.h.b16 %v1007
    %v3666 = vunpack.c.l.b16 %v1008
    %v3667 = vunpack.c.h.b16 %v1008
    %v3668 = vunpack.c.l.b16 %v1009
    %v3669 = vunpack.c.h.b16 %v1009
    %v3670 = vunpack.c.l.b16 %v1010
    %v3671 = vunpack.c.h.b16 %v1010
    %v3672 = vunpack.c.l.b16 %v1011
    %v3673 = vunpack.c.h.b16 %v1011
    %v3674 = vunpack.c.l.b16 %v1012
    %v3675 = vunpack.c.h.b16 %v1012
    %v3676 = vunpack.c.l.b16 %v1013
    %v3677 = vunpack.c.h.b16 %v1013
    %v3678 = vunpack.c.l.b16 %v1014
    %v3679 = vunpack.c.h.b16 %v1014
    %v3680 = vunpack.c.l.b16 %v1015
    %v3681 = vunpack.c.h.b16 %v1015
    %v3682 = vunpack.c.l.b16 %v1016
    %v3683 = vunpack.c.h.b16 %v1016
    %v3684 = vunpack.c.l.b16 %v1017
    %v3685 = vunpack.c.h.b16 %v1017
    %v3686 = vunpack.c.l.b16 %v1018
    %v3687 = vunpack.c.h.b16 %v1018
    %v3688 = vunpack.c.l.b16 %v1019
    %v3689 = vunpack.c.h.b16 %v1019
    %v3690 = vunpack.c.l.b16 %v1020
    %v3691 = vunpack.c.h.b16 %v1020
    %v3692 = vunpack.c.l.b16 %v1021
    %v3693 = vunpack.c.h.b16 %v1021
    %v3694 = vunpack.c.l.b16 %v1022
    %v3695 = vunpack.c.h.b16 %v1022
    %v3696 = vunpack.c.l.b16 %v1023
    %v3697 = vunpack.c.h.b16 %v1023
    %v3698 = vunpack.c.l.b16 %v1024
    %v3699 = vunpack.c.h.b16 %v1024
    %v3700 = vunpack.c.l.b16 %v1025
    %v3701 = vunpack.c.h.b16 %v1025
    %v3702 = vunpack.c.l.b16 %v1026
    %v3703 = vunpack.c.h.b16 %v1026
    %v3704 = vunpack.c.l.b16 %v1027
    %v3705 = vunpack.c.h.b16 %v1027
    %v3706 = vunpack.c.l.b16 %v1028
    %v3707 = vunpack.c.h.b16 %v1028
    %v3708 = vunpack.c.l.b16 %v1029
    %v3709 = vunpack.c.h.b16 %v1029
    %v3710 = vunpack.c.l.b16 %v1030
    %v3711 = vunpack.c.h.b16 %v1030
    %v3712 = vunpack.c.l.b16 %v1031
    %v3713 = vunpack.c.h.b16 %v1031
    %v3714 = vunpack.c.l.b16 %v1032
    %v3715 = vunpack.c.h.b16 %v1032
    %v3716 = vunpack.c.l.b16 %v1033
    %v3717 = vunpack.c.h.b16 %v1033
    %v3718 = vunpack.c.l.b16 %v1034
    %v3719 = vunpack.c.h.b16 %v1034
    %v3720 = vunpack.c.l.b16 %v1035
    %v3721 = vunpack.c.h.b16 %v1035
    %v3722 = vunpack.c.l.b16 %v1036
    %v3723 = vunpack.c.h.b16 %v1036
    %v3724 = vunpack.c.l.b16 %v1037
    %v3725 = vunpack.c.h.b16 %v1037
    %v3726 = vunpack.c.l.b16 %v1038
    %v3727 = vunpack.c.h.b16 %v1038
    %v3728 = vunpack.c.l.b16 %v1039
    %v3729 = vunpack.c.h.b16 %v1039
    %v3730 = vunpack.c.l.b16 %v1040
    %v3731 = vunpack.c.h.b16 %v1040
    %v3732 = vunpack.c.l.b16 %v1041
    %v3733 = vunpack.c.h.b16 %v1041
    %v3734 = vunpack.c.l.b16 %v1042
    %v3735 = vunpack.c.h.b16 %v1042
    %v3736 = vunpack.c.l.b16 %v1043
    %v3737 = vunpack.c.h.b16 %v1043
    %v3738 = vunpack.c.l.b16 %v1044
    %v3739 = vunpack.c.h.b16 %v1044
    %v3740 = vunpack.c.l.b16 %v1045
    %v3741 = vunpack.c.h.b16 %v1045
    %v3742 = vunpack.c.l.b16 %v1046
    %v3743 = vunpack.c.h.b16 %v1046
    %v3744 = vunpack.c.l.b16 %v1047
    %v3745 = vunpack.c.h.b16 %v1047
    %v3746 = vunpack.c.l.b16 %v1048
    %v3747 = vunpack.c.h.b16 %v1048
    %v3748 = vunpack.c.l.b16 %v1049
    %v3749 = vunpack.c.h.b16 %v1049
    %v3750 = vunpack.c.l.b16 %v1050
    %v3751 = vunpack.c.h.b16 %v1050
    %v3752 = vunpack.c.l.b16 %v1051
    %v3753 = vunpack.c.h.b16 %v1051
    %v3754 = vunpack.c.l.b16 %v1052
    %v3755 = vunpack.c.h.b16 %v1052
    %v3756 = vunpack.c.l.b16 %v1053
    %v3757 = vunpack.c.h.b16 %v1053
    %v3758 = vunpack.c.l.b16 %v1054
    %v3759 = vunpack.c.h.b16 %v1054
    %v3760 = vunpack.c.l.b16 %v1055
    %v3761 = vunpack.c.h.b16 %v1055
    %v3762 = vunpack.c.l.b16 %v1056
    %v3763 = vunpack.c.h.b16 %v1056
    %v3764 = vunpack.c.l.b16 %v1057
    %v3765 = vunpack.c.h.b16 %v1057
    %v3766 = vunpack.c.l.b16 %v1058
    %v3767 = vunpack.c.h.b16 %v1058
    %v3768 = vunpack.c.l.b16 %v1059
    %v3769 = vunpack.c.h.b16 %v1059
    %v3770 = vunpack.c.l.b16 %v1060
    %v3771 = vunpack.c.h.b16 %v1060
    %v3772 = vunpack.c.l.b16 %v1061
    %v3773 = vunpack.c.h.b16 %v1061
    %v3774 = vunpack.c.l.b16 %v1062
    %v3775 = vunpack.c.h.b16 %v1062
    %v3776 = vunpack.c.l.b16 %v1063
    %v3777 = vunpack.c.h.b16 %v1063
    %v3778 = vunpack.c.l.b16 %v1064
    %v3779 = vunpack.c.h.b16 %v1064
    %v3780 = vunpack.c.l.b16 %v1065
    %v3781 = vunpack.c.h.b16 %v1065
    %v3782 = vunpack.c.l.b16 %v1066
    %v3783 = vunpack.c.h.b16 %v1066
    %v3784 = vunpack.c.l.b16 %v1067
    %v3785 = vunpack.c.h.b16 %v1067
    %v3786 = vunpack.c.l.b16 %v1068
    %v3787 = vunpack.c.h.b16 %v1068
    %v3788 = vunpack.c.l.b16 %v1069
    %v3789 = vunpack.c.h.b16 %v1069
    %v3790 = vunpack.c.l.b16 %v1070
    %v3791 = vunpack.c.h.b16 %v1070
    %v3792 = vunpack.c.l.b16 %v1071
    %v3793 = vunpack.c.h.b16 %v1071
    %v3794 = vunpack.c.l.b16 %v1072
    %v3795 = vunpack.c.h.b16 %v1072
    %v3796 = vunpack.c.l.b16 %v1073
    %v3797 = vunpack.c.h.b16 %v1073
    %v3798 = vunpack.c.l.b16 %v1074
    %v3799 = vunpack.c.h.b16 %v1074
    %v3800 = vunpack.c.l.b16 %v1075
    %v3801 = vunpack.c.h.b16 %v1075
    %v3802 = vunpack.c.l.b16 %v1076
    %v3803 = vunpack.c.h.b16 %v1076
    %v3804 = vunpack.c.l.b16 %v1077
    %v3805 = vunpack.c.h.b16 %v1077
    %v3806 = vunpack.c.l.b16 %v1078
    %v3807 = vunpack.c.h.b16 %v1078
    %v3808 = vunpack.c.l.b16 %v1079
    %v3809 = vunpack.c.h.b16 %v1079
    %v3810 = vunpack.c.l.b16 %v1080
    %v3811 = vunpack.c.h.b16 %v1080
    %v3812 = vunpack.c.l.b16 %v1081
    %v3813 = vunpack.c.h.b16 %v1081
    %v3814 = vunpack.c.l.b16 %v1082
    %v3815 = vunpack.c.h.b16 %v1082
    %v3816 = vunpack.c.l.b16 %v1083
    %v3817 = vunpack.c.h.b16 %v1083
    %v3818 = vunpack.c.l.b16 %v1084
    %v3819 = vunpack.c.h.b16 %v1084
    %v3820 = vunpack.c.l.b16 %v1085
    %v3821 = vunpack.c.h.b16 %v1085
    %v3822 = vunpack.c.l.b16 %v1086
    %v3823 = vunpack.c.h.b16 %v1086
    %v3824 = vunpack.c.l.b16 %v1087
    %v3825 = vunpack.c.h.b16 %v1087
    %v3826 = vunpack.c.l.b16 %v1088
    %v3827 = vunpack.c.h.b16 %v1088
    %v3828 = vunpack.c.l.b16 %v1089
    %v3829 = vunpack.c.h.b16 %v1089
    %v3830 = vunpack.c.l.b16 %v1090
    %v3831 = vunpack.c.h.b16 %v1090
    %v3832 = vunpack.c.l.b16 %v1091
    %v3833 = vunpack.c.h.b16 %v1091
    %v3834 = vunpack.c.l.b16 %v1092
    %v3835 = vunpack.c.h.b16 %v1092
    %v3836 = vunpack.c.l.b16 %v1093
    %v3837 = vunpack.c.h.b16 %v1093
    %v3838 = vunpack.c.l.b16 %v1094
    %v3839 = vunpack.c.h.b16 %v1094
    %v3840 = vunpack.c.l.b16 %v1095
    %v3841 = vunpack.c.h.b16 %v1095
    %v3842 = vunpack.c.l.b16 %v1096
    %v3843 = vunpack.c.h.b16 %v1096
    %v3844 = vunpack.c.l.b16 %v1097
    %v3845 = vunpack.c.h.b16 %v1097
    %v3846 = vunpack.c.l.b16 %v1098
    %v3847 = vunpack.c.h.b16 %v1098
    %v3848 = vunpack.c.l.b16 %v1099
    %v3849 = vunpack.c.h.b16 %v1099
    %v3850 = vunpack.c.l.b16 %v1100
    %v3851 = vunpack.c.h.b16 %v1100
    %v3852 = vunpack.c.l.b16 %v1101
    %v3853 = vunpack.c.h.b16 %v1101
    %v3854 = vunpack.c.l.b16 %v1102
    %v3855 = vunpack.c.h.b16 %v1102
    %v3856 = vunpack.c.l.b16 %v1103
    %v3857 = vunpack.c.h.b16 %v1103
    %v3858 = vunpack.c.l.b16 %v1104
    %v3859 = vunpack.c.h.b16 %v1104
    %v3860 = vunpack.c.l.b16 %v1105
    %v3861 = vunpack.c.h.b16 %v1105
    %v3862 = vunpack.c.l.b16 %v1106
    %v3863 = vunpack.c.h.b16 %v1106
    %v3864 = vunpack.c.l.b16 %v1107
    %v3865 = vunpack.c.h.b16 %v1107
    %v3866 = vunpack.c.l.b16 %v1108
    %v3867 = vunpack.c.h.b16 %v1108
    %v3868 = vunpack.c.l.b16 %v1109
    %v3869 = vunpack.c.h.b16 %v1109
    %v3870 = vunpack.c.l.b16 %v1110
    %v3871 = vunpack.c.h.b16 %v1110
    %v3872 = vunpack.c.l.b16 %v1111
    %v3873 = vunpack.c.h.b16 %v1111
    %v3874 = vunpack.c.l.b16 %v1112
    %v3875 = vunpack.c.h.b16 %v1112
    %v3876 = vunpack.c.l.b16 %v1113
    %v3877 = vunpack.c.h.b16 %v1113
    %v3878 = vunpack.c.l.b16 %v1114
    %v3879 = vunpack.c.h.b16 %v1114
    %v3880 = vunpack.c.l.b16 %v1115
    %v3881 = vunpack.c.h.b16 %v1115
    %v3882 = vunpack.c.l.b16 %v1116
    %v3883 = vunpack.c.h.b16 %v1116
    %v3884 = vunpack.c.l.b16 %v1117
    %v3885 = vunpack.c.h.b16 %v1117
    %v3886 = vunpack.c.l.b16 %v1118
    %v3887 = vunpack.c.h.b16 %v1118
    %v3888 = vunpack.c.l.b16 %v1119
    %v3889 = vunpack.c.h.b16 %v1119
    %v3890 = vunpack.c.l.b16 %v1120
    %v3891 = vunpack.c.h.b16 %v1120
    %v3892 = vunpack.c.l.b16 %v1121
    %v3893 = vunpack.c.h.b16 %v1121
    %v3894 = vunpack.c.l.b16 %v1122
    %v3895 = vunpack.c.h.b16 %v1122
    %v3896 = vunpack.c.l.b16 %v1123
    %v3897 = vunpack.c.h.b16 %v1123
    %v3898 = vunpack.c.l.b16 %v1124
    %v3899 = vunpack.c.h.b16 %v1124
    %v3900 = vunpack.c.l.b16 %v1125
    %v3901 = vunpack.c.h.b16 %v1125
    %v3902 = vunpack.c.l.b16 %v1126
    %v3903 = vunpack.c.h.b16 %v1126
    %v3904 = vunpack.c.l.b16 %v1127
    %v3905 = vunpack.c.h.b16 %v1127
    %v3906 = vunpack.c.l.b16 %v1128
    %v3907 = vunpack.c.h.b16 %v1128
    %v3908 = vunpack.c.l.b16 %v1129
    %v3909 = vunpack.c.h.b16 %v1129
    %v3910 = vunpack.c.l.b16 %v1130
    %v3911 = vunpack.c.h.b16 %v1130
    %v3912 = vunpack.c.l.b16 %v1131
    %v3913 = vunpack.c.h.b16 %v1131
    %v3914 = vunpack.c.l.b16 %v1132
    %v3915 = vunpack.c.h.b16 %v1132
    %v3916 = vunpack.c.l.b16 %v1133
    %v3917 = vunpack.c.h.b16 %v1133
    %v3918 = vunpack.c.l.b16 %v1134
    %v3919 = vunpack.c.h.b16 %v1134
    %v3920 = vunpack.c.l.b16 %v1135
    %v3921 = vunpack.c.h.b16 %v1135
    %v3922 = vunpack.c.l.b16 %v1136
    %v3923 = vunpack.c.h.b16 %v1136
    %v3924 = vunpack.c.l.b16 %v1137
    %v3925 = vunpack.c.h.b16 %v1137
    %v3926 = vunpack.c.l.b16 %v1138
    %v3927 = vunpack.c.h.b16 %v1138
    %v3928 = vunpack.c.l.b16 %v1139
    %v3929 = vunpack.c.h.b16 %v1139
    %v3930 = vunpack.c.l.b16 %v1140
    %v3931 = vunpack.c.h.b16 %v1140
    %v3932 = vunpack.c.l.b16 %v1141
    %v3933 = vunpack.c.h.b16 %v1141
    %v3934 = vunpack.c.l.b16 %v1142
    %v3935 = vunpack.c.h.b16 %v1142
    %v3936 = vunpack.c.l.b16 %v1143
    %v3937 = vunpack.c.h.b16 %v1143
    %v3938 = vunpack.c.l.b16 %v1144
    %v3939 = vunpack.c.h.b16 %v1144
    %v3940 = vunpack.c.l.b16 %v1145
    %v3941 = vunpack.c.h.b16 %v1145
    %v3942 = vunpack.c.l.b16 %v1146
    %v3943 = vunpack.c.h.b16 %v1146
    %v3944 = vunpack.c.l.b16 %v1147
    %v3945 = vunpack.c.h.b16 %v1147
    %v3946 = vunpack.c.l.b16 %v1148
    %v3947 = vunpack.c.h.b16 %v1148
    %v3948 = vunpack.c.l.b16 %v1149
    %v3949 = vunpack.c.h.b16 %v1149
    %v3950 = vunpack.c.l.b16 %v1150
    %v3951 = vunpack.c.h.b16 %v1150
    %v3952 = vunpack.c.l.b16 %v1151
    %v3953 = vunpack.c.h.b16 %v1151
    %v3954 = vunpack.c.l.b16 %v1152
    %v3955 = vunpack.c.h.b16 %v1152
    %v3956 = vunpack.c.l.b16 %v1153
    %v3957 = vunpack.c.h.b16 %v1153
    %v3958 = vunpack.c.l.b16 %v1154
    %v3959 = vunpack.c.h.b16 %v1154
    %v3960 = vunpack.c.l.b16 %v1155
    %v3961 = vunpack.c.h.b16 %v1155
    %v3962 = vunpack.c.l.b16 %v1156
    %v3963 = vunpack.c.h.b16 %v1156
    %v3964 = vunpack.c.l.b16 %v1157
    %v3965 = vunpack.c.h.b16 %v1157
    %v3966 = vunpack.c.l.b16 %v1158
    %v3967 = vunpack.c.h.b16 %v1158
    %v3968 = vunpack.c.l.b16 %v1159
    %v3969 = vunpack.c.h.b16 %v1159
    %v3970 = vunpack.c.l.b16 %v1160
    %v3971 = vunpack.c.h.b16 %v1160
    %v3972 = vunpack.c.l.b16 %v1161
    %v3973 = vunpack.c.h.b16 %v1161
    %v3974 = vunpack.c.l.b16 %v1162
    %v3975 = vunpack.c.h.b16 %v1162
    %v3976 = vunpack.c.l.b16 %v1163
    %v3977 = vunpack.c.h.b16 %v1163
    %v3978 = vunpack.c.l.b16 %v1164
    %v3979 = vunpack.c.h.b16 %v1164
    %v3980 = vunpack.c.l.b16 %v1165
    %v3981 = vunpack.c.h.b16 %v1165
    %v3982 = vunpack.c.l.b16 %v1166
    %v3983 = vunpack.c.h.b16 %v1166
    %v3984 = vunpack.c.l.b16 %v1167
    %v3985 = vunpack.c.h.b16 %v1167
    %v3986 = vunpack.c.l.b16 %v1168
    %v3987 = vunpack.c.h.b16 %v1168
    %v3988 = vunpack.c.l.b16 %v1169
    %v3989 = vunpack.c.h.b16 %v1169
    %v3990 = vunpack.c.l.b16 %v1170
    %v3991 = vunpack.c.h.b16 %v1170
    %v3992 = vunpack.c.l.b16 %v1171
    %v3993 = vunpack.c.h.b16 %v1171
    %v3994 = vunpack.c.l.b16 %v1172
    %v3995 = vunpack.c.h.b16 %v1172
    %v3996 = vunpack.c.l.b16 %v1173
    %v3997 = vunpack.c.h.b16 %v1173
    %v3998 = vunpack.c.l.b16 %v1174
    %v3999 = vunpack.c.h.b16 %v1174
    %v4000 = vunpack.c.l.b16 %v1175
    %v4001 = vunpack.c.h.b16 %v1175
    %v4002 = vunpack.c.l.b16 %v1176
    %v4003 = vunpack.c.h.b16 %v1176
    %v4004 = vunpack.c.l.b16 %v1177
    %v4005 = vunpack.c.h.b16 %v1177
    %v4006 = vunpack.c.l.b16 %v1178
    %v4007 = vunpack.c.h.b16 %v1178
    %v4008 = vunpack.c.l.b16 %v1179
    %v4009 = vunpack.c.h.b16 %v1179
    %v4010 = vunpack.c.l.b16 %v1180
    %v4011 = vunpack.c.h.b16 %v1180
    %v4012 = vunpack.c.l.b16 %v1181
    %v4013 = vunpack.c.h.b16 %v1181
    %v4014 = vunpack.c.l.b16 %v1182
    %v4015 = vunpack.c.h.b16 %v1182
    %v4016 = vunpack.c.l.b16 %v1183
    %v4017 = vunpack.c.h.b16 %v1183
    %v4018 = vunpack.c.l.b16 %v1184
    %v4019 = vunpack.c.h.b16 %v1184
    %v4020 = vunpack.c.l.b16 %v1185
    %v4021 = vunpack.c.h.b16 %v1185
    %v4022 = vunpack.c.l.b16 %v1186
    %v4023 = vunpack.c.h.b16 %v1186
    %v4024 = vunpack.c.l.b16 %v1187
    %v4025 = vunpack.c.h.b16 %v1187
    %v4026 = vunpack.c.l.b16 %v1188
    %v4027 = vunpack.c.h.b16 %v1188
    %v4028 = vunpack.c.l.b16 %v1189
    %v4029 = vunpack.c.h.b16 %v1189
    %v4030 = vunpack.c.l.b16 %v1190
    %v4031 = vunpack.c.h.b16 %v1190
    %v4032 = vunpack.c.l.b16 %v1191
    %v4033 = vunpack.c.h.b16 %v1191
    %v4034 = vunpack.c.l.b16 %v1192
    %v4035 = vunpack.c.h.b16 %v1192
    %v4036 = vunpack.c.l.b16 %v1193
    %v4037 = vunpack.c.h.b16 %v1193
    %v4038 = vunpack.c.l.b16 %v1194
    %v4039 = vunpack.c.h.b16 %v1194
    %v4040 = vunpack.c.l.b16 %v1195
    %v4041 = vunpack.c.h.b16 %v1195
    %v4042 = vunpack.c.l.b16 %v1196
    %v4043 = vunpack.c.h.b16 %v1196
    %v4044 = vunpack.c.l.b16 %v1197
    %v4045 = vunpack.c.h.b16 %v1197
    %v4046 = vunpack.c.l.b16 %v1198
    %v4047 = vunpack.c.h.b16 %v1198
    %v4048 = vunpack.c.l.b16 %v1199
    %v4049 = vunpack.c.h.b16 %v1199
    %v4050 = vunpack.c.l.b16 %v1200
    %v4051 = vunpack.c.h.b16 %v1200
    %v4052 = vunpack.c.l.b16 %v1201
    %v4053 = vunpack.c.h.b16 %v1201
    %v4054 = vunpack.c.l.b16 %v1202
    %v4055 = vunpack.c.h.b16 %v1202
    %v4056 = vunpack.c.l.b16 %v1203
    %v4057 = vunpack.c.h.b16 %v1203
    %v4058 = vunpack.c.l.b16 %v1204
    %v4059 = vunpack.c.h.b16 %v1204
    %v4060 = vunpack.c.l.b16 %v1205
    %v4061 = vunpack.c.h.b16 %v1205
    %v4062 = vunpack.c.l.b16 %v1206
    %v4063 = vunpack.c.h.b16 %v1206
    %v4064 = vunpack.c.l.b16 %v1207
    %v4065 = vunpack.c.h.b16 %v1207
    %v4066 = vunpack.c.l.b16 %v1208
    %v4067 = vunpack.c.h.b16 %v1208
    %v4068 = vunpack.c.l.b16 %v1209
    %v4069 = vunpack.c.h.b16 %v1209
    %v4070 = vunpack.c.l.b16 %v1210
    %v4071 = vunpack.c.h.b16 %v1210
    %v4072 = vunpack.c.l.b16 %v1211
    %v4073 = vunpack.c.h.b16 %v1211
    %v4074 = vunpack.c.l.b16 %v1212
    %v4075 = vunpack.c.h.b16 %v1212
    %v4076 = vunpack.c.l.b16 %v1213
    %v4077 = vunpack.c.h.b16 %v1213
    %v4078 = vunpack.c.l.b16 %v1214
    %v4079 = vunpack.c.h.b16 %v1214
    %v4080 = vunpack.c.l.b16 %v1215
    %v4081 = vunpack.c.h.b16 %v1215
    %v4082 = vunpack.c.l.b16 %v1216
    %v4083 = vunpack.c.h.b16 %v1216
    %v4084 = vunpack.c.l.b16 %v1217
    %v4085 = vunpack.c.h.b16 %v1217
    %v4086 = vunpack.c.l.b16 %v1218
    %v4087 = vunpack.c.h.b16 %v1218
    %v4088 = vunpack.c.l.b16 %v1219
    %v4089 = vunpack.c.h.b16 %v1219
    %v4090 = vunpack.c.l.b16 %v1220
    %v4091 = vunpack.c.h.b16 %v1220
    %v4092 = vunpack.c.l.b16 %v1221
    %v4093 = vunpack.c.h.b16 %v1221
    %v4094 = vunpack.c.l.b16 %v1222
    %v4095 = vunpack.c.h.b16 %v1222
    %v4096 = vunpack.c.l.b16 %v1223
    %v4097 = vunpack.c.h.b16 %v1223
    %v4098 = vunpack.c.l.b16 %v1224
    %v4099 = vunpack.c.h.b16 %v1224
    %v4100 = vunpack.c.l.b16 %v1225
    %v4101 = vunpack.c.h.b16 %v1225
    %v4102 = vunpack.c.l.b16 %v1226
    %v4103 = vunpack.c.h.b16 %v1226
    %v4104 = vunpack.c.l.b16 %v1227
    %v4105 = vunpack.c.h.b16 %v1227
    %v4106 = vunpack.c.l.b16 %v1228
    %v4107 = vunpack.c.h.b16 %v1228
    %v4108 = vunpack.c.l.b16 %v1229
    %v4109 = vunpack.c.h.b16 %v1229
    %v4110 = vunpack.c.l.b16 %v1230
    %v4111 = vunpack.c.h.b16 %v1230
    %v4112 = vunpack.c.l.b16 %v1231
    %v4113 = vunpack.c.h.b16 %v1231
    %v4114 = vunpack.c.l.b16 %v1232
    %v4115 = vunpack.c.h.b16 %v1232
    %v4116 = vunpack.c.l.b16 %v1233
    %v4117 = vunpack.c.h.b16 %v1233
    %v4118 = vunpack.c.l.b16 %v1234
    %v4119 = vunpack.c.h.b16 %v1234
    %v4120 = vunpack.c.l.b16 %v1235
    %v4121 = vunpack.c.h.b16 %v1235
    %v4122 = vunpack.c.l.b16 %v1236
    %v4123 = vunpack.c.h.b16 %v1236
    %v4124 = vunpack.c.l.b16 %v1237
    %v4125 = vunpack.c.h.b16 %v1237
    %v4126 = vunpack.c.l.b16 %v1238
    %v4127 = vunpack.c.h.b16 %v1238
    %v4128 = vunpack.c.l.b16 %v1239
    %v4129 = vunpack.c.h.b16 %v1239
    %v4130 = vunpack.c.l.b16 %v1240
    %v4131 = vunpack.c.h.b16 %v1240
    %v4132 = vunpack.c.l.b16 %v1241
    %v4133 = vunpack.c.h.b16 %v1241
    %v4134 = vunpack.c.l.b16 %v1242
    %v4135 = vunpack.c.h.b16 %v1242
    %v4136 = vunpack.c.l.b16 %v1243
    %v4137 = vunpack.c.h.b16 %v1243
    %v4138 = vunpack.c.l.b16 %v1244
    %v4139 = vunpack.c.h.b16 %v1244
    %v4140 = vunpack.c.l.b16 %v1245
    %v4141 = vunpack.c.h.b16 %v1245
    %v4142 = vunpack.c.l.b16 %v1246
    %v4143 = vunpack.c.h.b16 %v1246
    %v4144 = vunpack.c.l.b16 %v1247
    %v4145 = vunpack.c.h.b16 %v1247
    %v4146 = vunpack.c.l.b16 %v1248
    %v4147 = vunpack.c.h.b16 %v1248
    %v4148 = vunpack.c.l.b16 %v1249
    %v4149 = vunpack.c.h.b16 %v1249
    %v4150 = vunpack.c.l.b16 %v1250
    %v4151 = vunpack.c.h.b16 %v1250
    %v4152 = vunpack.c.l.b16 %v1251
    %v4153 = vunpack.c.h.b16 %v1251
    %v4154 = vunpack.c.l.b16 %v1252
    %v4155 = vunpack.c.h.b16 %v1252
    %v4156 = vunpack.c.l.b16 %v1253
    %v4157 = vunpack.c.h.b16 %v1253
    %v4158 = vunpack.c.l.b16 %v1254
    %v4159 = vunpack.c.h.b16 %v1254
    %v4160 = vunpack.c.l.b16 %v1255
    %v4161 = vunpack.c.h.b16 %v1255
    %v4162 = vunpack.c.l.b16 %v1256
    %v4163 = vunpack.c.h.b16 %v1256
    %v4164 = vunpack.c.l.b16 %v1257
    %v4165 = vunpack.c.h.b16 %v1257
    %v4166 = vunpack.c.l.b16 %v1258
    %v4167 = vunpack.c.h.b16 %v1258
    %v4168 = vunpack.c.l.b16 %v1259
    %v4169 = vunpack.c.h.b16 %v1259
    %v4170 = vunpack.c.l.b16 %v1260
    %v4171 = vunpack.c.h.b16 %v1260
    %v4172 = vunpack.c.l.b16 %v1261
    %v4173 = vunpack.c.h.b16 %v1261
    %v4174 = vunpack.c.l.b16 %v1262
    %v4175 = vunpack.c.h.b16 %v1262
    %v4176 = vunpack.c.l.b16 %v1263
    %v4177 = vunpack.c.h.b16 %v1263
    %v4178 = vunpack.c.l.b16 %v1264
    %v4179 = vunpack.c.h.b16 %v1264
    %v4180 = vunpack.c.l.b16 %v1265
    %v4181 = vunpack.c.h.b16 %v1265
    %v4182 = vunpack.c.l.b16 %v1266
    %v4183 = vunpack.c.h.b16 %v1266
    %v4184 = vunpack.c.l.b16 %v1267
    %v4185 = vunpack.c.h.b16 %v1267
    %v4186 = vunpack.c.l.b16 %v1268
    %v4187 = vunpack.c.h.b16 %v1268
    %v4188 = vunpack.c.l.b16 %v1269
    %v4189 = vunpack.c.h.b16 %v1269
    %v4190 = vunpack.c.l.b16 %v1270
    %v4191 = vunpack.c.h.b16 %v1270
    %v4192 = vunpack.c.l.b16 %v1271
    %v4193 = vunpack.c.h.b16 %v1271
    %v4194 = vunpack.c.l.b16 %v1272
    %v4195 = vunpack.c.h.b16 %v1272
    %v4196 = vunpack.c.l.b16 %v1273
    %v4197 = vunpack.c.h.b16 %v1273
    %v4198 = vunpack.c.l.b16 %v1274
    %v4199 = vunpack.c.h.b16 %v1274
    %v4200 = vunpack.c.l.b16 %v1275
    %v4201 = vunpack.c.h.b16 %v1275
    %v4202 = vunpack.c.l.b16 %v1276
    %v4203 = vunpack.c.h.b16 %v1276
    %v4204 = vunpack.c.l.b16 %v1277
    %v4205 = vunpack.c.h.b16 %v1277
    %v4206 = vunpack.c.l.b16 %v1278
    %v4207 = vunpack.c.h.b16 %v1278
    %v4208 = vunpack.c.l.b16 %v1279
    %v4209 = vunpack.c.h.b16 %v1279
    %v4210 = vunpack.c.l.b16 %v1280
    %v4211 = vunpack.c.h.b16 %v1280
    %v4212 = vunpack.c.l.b16 %v1281
    %v4213 = vunpack.c.h.b16 %v1281
    %v4214 = vunpack.c.l.b16 %v1282
    %v4215 = vunpack.c.h.b16 %v1282
    %v4216 = vunpack.c.l.b16 %v1283
    %v4217 = vunpack.c.h.b16 %v1283
    %v4218 = vunpack.c.l.b16 %v1284
    %v4219 = vunpack.c.h.b16 %v1284
    %v4220 = vunpack.c.l.b16 %v1285
    %v4221 = vunpack.c.h.b16 %v1285
    %v4222 = vunpack.c.l.b16 %v1286
    %v4223 = vunpack.c.h.b16 %v1286
    %v4224 = vunpack.c.l.b16 %v1287
    %v4225 = vunpack.c.h.b16 %v1287
    %v4226 = vunpack.c.l.b16 %v1288
    %v4227 = vunpack.c.h.b16 %v1288
    %v4228 = vunpack.c.l.b16 %v1289
    %v4229 = vunpack.c.h.b16 %v1289
    %v4230 = vunpack.c.l.b16 %v1290
    %v4231 = vunpack.c.h.b16 %v1290
    %v4232 = vunpack.c.l.b16 %v1291
    %v4233 = vunpack.c.h.b16 %v1291
    %v4234 = vunpack.c.l.b16 %v1292
    %v4235 = vunpack.c.h.b16 %v1292
    %v4236 = vunpack.c.l.b16 %v1293
    %v4237 = vunpack.c.h.b16 %v1293
    %v4238 = vunpack.c.l.b16 %v1294
    %v4239 = vunpack.c.h.b16 %v1294
    %v4240 = vunpack.c.l.b16 %v1295
    %v4241 = vunpack.c.h.b16 %v1295
    %v4242 = vunpack.c.l.b16 %v1296
    %v4243 = vunpack.c.h.b16 %v1296
    %v4244 = vunpack.c.l.b16 %v1297
    %v4245 = vunpack.c.h.b16 %v1297
    %v4246 = vunpack.c.l.b16 %v1298
    %v4247 = vunpack.c.h.b16 %v1298
    %v4248 = vunpack.c.l.b16 %v1299
    %v4249 = vunpack.c.h.b16 %v1299
    %v4250 = vunpack.c.l.b16 %v1300
    %v4251 = vunpack.c.h.b16 %v1300
    %v4252 = vunpack.c.l.b16 %v1301
    %v4253 = vunpack.c.h.b16 %v1301
    %v4254 = vunpack.c.l.b16 %v1302
    %v4255 = vunpack.c.h.b16 %v1302
    %v4256 = vunpack.c.l.b16 %v1303
    %v4257 = vunpack.c.h.b16 %v1303
    %v4258 = vunpack.c.l.b16 %v1304
    %v4259 = vunpack.c.h.b16 %v1304
    %v4260 = vunpack.c.l.b16 %v1305
    %v4261 = vunpack.c.h.b16 %v1305
    %v4262 = vunpack.c.l.b16 %v1306
    %v4263 = vunpack.c.h.b16 %v1306
    %v4264 = vunpack.c.l.b16 %v1307
    %v4265 = vunpack.c.h.b16 %v1307
    %v4266 = vunpack.c.l.b16 %v1308
    %v4267 = vunpack.c.h.b16 %v1308
    %v4268 = vunpack.c.l.b16 %v1309
    %v4269 = vunpack.c.h.b16 %v1309
    %v4270 = vunpack.c.l.b16 %v1310
    %v4271 = vunpack.c.h.b16 %v1310
    %v4272 = vunpack.c.l.b16 %v1311
    %v4273 = vunpack.c.h.b16 %v1311
    %v4274 = vunpack.c.l.b16 %v1312
    %v4275 = vunpack.c.h.b16 %v1312
    %v4276 = vunpack.c.l.b16 %v1313
    %v4277 = vunpack.c.h.b16 %v1313
    %v4278 = vunpack.c.l.b16 %v1314
    %v4279 = vunpack.c.h.b16 %v1314
    %v4280 = vunpack.c.l.b16 %v1315
    %v4281 = vunpack.c.h.b16 %v1315
    %v4282 = vunpack.c.l.b16 %v1316
    %v4283 = vunpack.c.h.b16 %v1316
    %v4284 = vunpack.c.l.b16 %v1317
    %v4285 = vunpack.c.h.b16 %v1317
    %v4286 = vunpack.c.l.b16 %v1318
    %v4287 = vunpack.c.h.b16 %v1318
    %v4288 = vunpack.c.l.b16 %v1319
    %v4289 = vunpack.c.h.b16 %v1319
    %v4290 = vunpack.c.l.b16 %v1320
    %v4291 = vunpack.c.h.b16 %v1320
    %v4292 = vunpack.c.l.b16 %v1321
    %v4293 = vunpack.c.h.b16 %v1321
    %v4294 = vunpack.c.l.b16 %v1322
    %v4295 = vunpack.c.h.b16 %v1322
    %v4296 = vunpack.c.l.b16 %v1323
    %v4297 = vunpack.c.h.b16 %v1323
    %v4298 = vunpack.c.l.b16 %v1324
    %v4299 = vunpack.c.h.b16 %v1324
    %v4300 = vunpack.c.l.b16 %v1325
    %v4301 = vunpack.c.h.b16 %v1325
    %v4302 = vunpack.c.l.b16 %v1326
    %v4303 = vunpack.c.h.b16 %v1326
    %v4304 = vunpack.c.l.b16 %v1327
    %v4305 = vunpack.c.h.b16 %v1327
    %v4306 = vunpack.c.l.b16 %v1328
    %v4307 = vunpack.c.h.b16 %v1328
    %v4308 = vunpack.c.l.b16 %v1329
    %v4309 = vunpack.c.h.b16 %v1329
    %v4310 = vunpack.c.l.b16 %v1330
    %v4311 = vunpack.c.h.b16 %v1330
    %v4312 = vunpack.c.l.b16 %v1331
    %v4313 = vunpack.c.h.b16 %v1331
    %v4314 = vunpack.c.l.b16 %v1332
    %v4315 = vunpack.c.h.b16 %v1332
    %v4316 = vunpack.c.l.b16 %v1333
    %v4317 = vunpack.c.h.b16 %v1333
    %v4318 = vunpack.c.l.b16 %v1334
    %v4319 = vunpack.c.h.b16 %v1334
    %v4320 = vunpack.c.l.b16 %v1335
    %v4321 = vunpack.c.h.b16 %v1335
    %v4322 = vunpack.c.l.b16 %v1336
    %v4323 = vunpack.c.h.b16 %v1336
    %v4324 = vunpack.c.l.b16 %v1337
    %v4325 = vunpack.c.h.b16 %v1337
    %v4326 = vunpack.c.l.b16 %v1338
    %v4327 = vunpack.c.h.b16 %v1338
    %v4328 = vunpack.c.l.b16 %v1339
    %v4329 = vunpack.c.h.b16 %v1339
    %v4330 = vunpack.c.l.b16 %v1340
    %v4331 = vunpack.c.h.b16 %v1340
    %v4332 = vunpack.c.l.b16 %v1341
    %v4333 = vunpack.c.h.b16 %v1341
    %v4334 = vunpack.c.l.b16 %v1342
    %v4335 = vunpack.c.h.b16 %v1342
    %v4336 = vunpack.c.l.b16 %v1343
    %v4337 = vunpack.c.h.b16 %v1343
    %v4338 = vunpack.c.l.b16 %v1344
    %v4339 = vunpack.c.h.b16 %v1344
    %v4340 = vunpack.c.l.b16 %v1345
    %v4341 = vunpack.c.h.b16 %v1345
    %v4342 = vunpack.c.l.b16 %v1346
    %v4343 = vunpack.c.h.b16 %v1346
    %v4344 = vunpack.c.l.b16 %v1347
    %v4345 = vunpack.c.h.b16 %v1347
    %v4346 = vunpack.c.l.b16 %v1348
    %v4347 = vunpack.c.h.b16 %v1348
    %v4348 = vunpack.c.l.b16 %v1349
    %v4349 = vunpack.c.h.b16 %v1349
    %v4350 = vunpack.c.l.b16 %v1350
    %v4351 = vunpack.c.h.b16 %v1350
    %v4352 = vunpack.c.l.b16 %v1351
    %v4353 = vunpack.c.h.b16 %v1351
    %v4354 = vunpack.c.l.b16 %v1352
    %v4355 = vunpack.c.h.b16 %v1352
    %v4356 = vunpack.c.l.b16 %v1353
    %v4357 = vunpack.c.h.b16 %v1353
    %v4358 = vunpack.c.l.b16 %v1354
    %v4359 = vunpack.c.h.b16 %v1354
    %v4360 = vunpack.c.l.b16 %v1355
    %v4361 = vunpack.c.h.b16 %v1355
    %v4362 = vunpack.c.l.b16 %v1356
    %v4363 = vunpack.c.h.b16 %v1356
    %v4364 = vunpack.c.l.b16 %v1357
    %v4365 = vunpack.c.h.b16 %v1357
    %v4366 = vunpack.c.l.b16 %v1358
    %v4367 = vunpack.c.h.b16 %v1358
    %v4368 = vunpack.c.l.b16 %v1359
    %v4369 = vunpack.c.h.b16 %v1359
    %v4370 = vunpack.c.l.b16 %v1360
    %v4371 = vunpack.c.h.b16 %v1360
    %v4372 = vunpack.c.l.b16 %v1361
    %v4373 = vunpack.c.h.b16 %v1361
    %v4374 = vunpack.c.l.b16 %v1362
    %v4375 = vunpack.c.h.b16 %v1362
    %v4376 = vunpack.c.l.b16 %v1363
    %v4377 = vunpack.c.h.b16 %v1363
    %v4378 = vunpack.c.l.b16 %v1364
    %v4379 = vunpack.c.h.b16 %v1364
    %v4380 = vunpack.c.l.b16 %v1365
    %v4381 = vunpack.c.h.b16 %v1365
    %v4382 = vunpack.c.l.b16 %v1366
    %v4383 = vunpack.c.h.b16 %v1366
    %v4384 = vunpack.c.l.b16 %v1367
    %v4385 = vunpack.c.h.b16 %v1367
    %v4386 = vunpack.c.l.b16 %v1368
    %v4387 = vunpack.c.h.b16 %v1368
    %v4388 = vunpack.c.l.b16 %v1369
    %v4389 = vunpack.c.h.b16 %v1369
    %v4390 = vunpack.c.l.b16 %v1370
    %v4391 = vunpack.c.h.b16 %v1370
    %v4392 = vunpack.c.l.b16 %v1371
    %v4393 = vunpack.c.h.b16 %v1371
    %v4394 = vunpack.c.l.b16 %v1372
    %v4395 = vunpack.c.h.b16 %v1372
    %v4396 = vunpack.c.l.b16 %v1373
    %v4397 = vunpack.c.h.b16 %v1373
    %v4398 = vunpack.c.l.b16 %v1374
    %v4399 = vunpack.c.h.b16 %v1374
    %v4400 = vunpack.c.l.b16 %v1375
    %v4401 = vunpack.c.h.b16 %v1375
    %v4402 = vunpack.c.l.b16 %v1376
    %v4403 = vunpack.c.h.b16 %v1376
    %v4404 = vunpack.c.l.b16 %v1377
    %v4405 = vunpack.c.h.b16 %v1377
    %v4406 = vunpack.c.l.b16 %v1378
    %v4407 = vunpack.c.h.b16 %v1378
    %v4408 = vunpack.c.l.b16 %v1379
    %v4409 = vunpack.c.h.b16 %v1379
    %v4410 = vunpack.c.l.b16 %v1380
    %v4411 = vunpack.c.h.b16 %v1380
    %v4412 = vunpack.c.l.b16 %v1381
    %v4413 = vunpack.c.h.b16 %v1381
    %v4414 = vunpack.c.l.b16 %v1382
    %v4415 = vunpack.c.h.b16 %v1382
    %v4416 = vunpack.c.l.b16 %v1383
    %v4417 = vunpack.c.h.b16 %v1383
    %v4418 = vunpack.c.l.b16 %v1384
    %v4419 = vunpack.c.h.b16 %v1384
    %v4420 = vunpack.c.l.b16 %v1385
    %v4421 = vunpack.c.h.b16 %v1385
    %v4422 = vunpack.c.l.b16 %v1386
    %v4423 = vunpack.c.h.b16 %v1386
    %v4424 = vunpack.c.l.b16 %v1387
    %v4425 = vunpack.c.h.b16 %v1387
    %v4426 = vunpack.c.l.b16 %v1388
    %v4427 = vunpack.c.h.b16 %v1388
    %v4428 = vunpack.c.l.b16 %v1389
    %v4429 = vunpack.c.h.b16 %v1389
    %v4430 = vunpack.c.l.b16 %v1390
    %v4431 = vunpack.c.h.b16 %v1390
    %v4432 = vunpack.c.l.b16 %v1391
    %v4433 = vunpack.c.h.b16 %v1391
    %v4434 = vunpack.c.l.b16 %v1392
    %v4435 = vunpack.c.h.b16 %v1392
    %v4436 = vunpack.c.l.b16 %v1393
    %v4437 = vunpack.c.h.b16 %v1393
    %v4438 = vunpack.c.l.b16 %v1394
    %v4439 = vunpack.c.h.b16 %v1394
    %v4440 = vunpack.c.l.b16 %v1395
    %v4441 = vunpack.c.h.b16 %v1395
    %v4442 = vunpack.c.l.b16 %v1396
    %v4443 = vunpack.c.h.b16 %v1396
    %v4444 = vunpack.c.l.b16 %v1397
    %v4445 = vunpack.c.h.b16 %v1397
    %v4446 = vunpack.c.l.b16 %v1398
    %v4447 = vunpack.c.h.b16 %v1398
    %v4448 = vunpack.c.l.b16 %v1399
    %v4449 = vunpack.c.h.b16 %v1399
    %v4450 = vunpack.c.l.b16 %v1400
    %v4451 = vunpack.c.h.b16 %v1400
    %v4452 = vunpack.c.l.b16 %v1401
    %v4453 = vunpack.c.h.b16 %v1401
    %v4454 = vunpack.c.l.b16 %v1402
    %v4455 = vunpack.c.h.b16 %v1402
    %v4456 = vunpack.c.l.b16 %v1403
    %v4457 = vunpack.c.h.b16 %v1403
    %v4458 = vunpack.c.l.b16 %v1404
    %v4459 = vunpack.c.h.b16 %v1404
    %v4460 = vunpack.c.l.b16 %v1405
    %v4461 = vunpack.c.h.b16 %v1405
    %v4462 = vunpack.c.l.b16 %v1406
    %v4463 = vunpack.c.h.b16 %v1406
    %v4464 = vunpack.c.l.b16 %v1407
    %v4465 = vunpack.c.h.b16 %v1407
    %v4466 = vunpack.c.l.b16 %v1408
    %v4467 = vunpack.c.h.b16 %v1408
    %v4468 = vunpack.c.l.b16 %v1409
    %v4469 = vunpack.c.h.b16 %v1409
    %v4470 = vunpack.c.l.b16 %v1410
    %v4471 = vunpack.c.h.b16 %v1410
    %v4472 = vunpack.c.l.b16 %v1411
    %v4473 = vunpack.c.h.b16 %v1411
    %v4474 = vunpack.c.l.b16 %v1412
    %v4475 = vunpack.c.h.b16 %v1412
    %v4476 = vunpack.c.l.b16 %v1413
    %v4477 = vunpack.c.h.b16 %v1413
    %v4478 = vunpack.c.l.b16 %v1414
    %v4479 = vunpack.c.h.b16 %v1414
    %v4480 = vunpack.c.l.b16 %v1415
    %v4481 = vunpack.c.h.b16 %v1415
    %v4482 = vunpack.c.l.b16 %v1416
    %v4483 = vunpack.c.h.b16 %v1416
    %v4484 = vunpack.c.l.b16 %v1417
    %v4485 = vunpack.c.h.b16 %v1417
    %v4486 = vunpack.c.l.b16 %v1418
    %v4487 = vunpack.c.h.b16 %v1418
    %v4488 = vunpack.c.l.b16 %v1419
    %v4489 = vunpack.c.h.b16 %v1419
    %v4490 = vunpack.c.l.b16 %v1420
    %v4491 = vunpack.c.h.b16 %v1420
    %v4492 = vunpack.c.l.b16 %v1421
    %v4493 = vunpack.c.h.b16 %v1421
    %v4494 = vunpack.c.l.b16 %v1422
    %v4495 = vunpack.c.h.b16 %v1422
    %v4496 = vpack.c.b16 %v2452, %v2448
    %v4497 = vpack.c.b16 %v2453, %v2449
    %v4498 = vpack.c.b16 %v2454, %v2450
    %v4499 = vpack.c.b16 %v2455, %v2451
    %v4500 = vpack.c.b16 %v2460, %v2456
    %v4501 = vpack.c.b16 %v2461, %v2457
    %v4502 = vpack.c.b16 %v2462, %v2458
    %v4503 = vpack.c.b16 %v2463, %v2459
    %v4504 = vpack.c.b16 %v2468, %v2464
    %v4505 = vpack.c.b16 %v2469, %v2465
    %v4506 = vpack.c.b16 %v2470, %v2466
    %v4507 = vpack.c.b16 %v2471, %v2467
    %v4508 = vpack.c.b16 %v2476, %v2472
    %v4509 = vpack.c.b16 %v2477, %v2473
    %v4510 = vpack.c.b16 %v2478, %v2474
    %v4511 = vpack.c.b16 %v2479, %v2475
    %v4512 = vpack.c.b16 %v2484, %v2480
    %v4513 = vpack.c.b16 %v2485, %v2481
    %v4514 = vpack.c.b16 %v2486, %v2482
    %v4515 = vpack.c.b16 %v2487, %v2483
    %v4516 = vpack.c.b16 %v2492, %v2488
    %v4517 = vpack.c.b16 %v2493, %v2489
    %v4518 = vpack.c.b16 %v2494, %v2490
    %v4519 = vpack.c.b16 %v2495, %v2491
    %v4520 = vpack.c.b16 %v2500, %v2496
    %v4521 = vpack.c.b16 %v2501, %v2497
    %v4522 = vpack.c.b16 %v2502, %v2498
    %v4523 = vpack.c.b16 %v2503, %v2499
    %v4524 = vpack.c.b16 %v2508, %v2504
    %v4525 = vpack.c.b16 %v2509, %v2505
    %v4526 = vpack.c.b16 %v2510, %v2506
    %v4527 = vpack.c.b16 %v2511, %v2507
    %v4528 = vpack.c.b16 %v2516, %v2512
    %v4529 = vpack.c.b16 %v2517, %v2513
    %v4530 = vpack.c.b16 %v2518, %v2514
    %v4531 = vpack.c.b16 %v2519, %v2515
    %v4532 = vpack.c.b16 %v2524, %v2520
    %v4533 = vpack.c.b16 %v2525, %v2521
    %v4534 = vpack.c.b16 %v2526, %v2522
    %v4535 = vpack.c.b16 %v2527, %v2523
    %v4536 = vpack.c.b16 %v2532, %v2528
    %v4537 = vpack.c.b16 %v2533, %v2529
    %v4538 = vpack.c.b16 %v2534, %v2530
    %v4539 = vpack.c.b16 %v2535, %v2531
    %v4540 = vpack.c.b16 %v2540, %v2536
    %v4541 = vpack.c.b16 %v2541, %v2537
    %v4542 = vpack.c.b16 %v2542, %v2538
    %v4543 = vpack.c.b16 %v2543, %v2539
    %v4544 = vpack.c.b16 %v2548, %v2544
    %v4545 = vpack.c.b16 %v2549, %v2545
    %v4546 = vpack.c.b16 %v2550, %v2546
    %v4547 = vpack.c.b16 %v2551, %v2547
    %v4548 = vpack.c.b16 %v2556, %v2552
    %v4549 = vpack.c.b16 %v2557, %v2553
    %v4550 = vpack.c.b16 %v2558, %v2554
    %v4551 = vpack.c.b16 %v2559, %v2555
    %v4552 = vpack.c.b16 %v2564, %v2560
    %v4553 = vpack.c.b16 %v2565, %v2561
    %v4554 = vpack.c.b16 %v2566, %v2562
    %v4555 = vpack.c.b16 %v2567, %v2563
    %v4556 = vpack.c.b16 %v2572, %v2568
    %v4557 = vpack.c.b16 %v2573, %v2569
    %v4558 = vpack.c.b16 %v2574, %v2570
    %v4559 = vpack.c.b16 %v2575, %v2571
    %v4560 = vpack.c.b16 %v2580, %v2576
    %v4561 = vpack.c.b16 %v2581, %v2577
    %v4562 = vpack.c.b16 %v2582, %v2578
    %v4563 = vpack.c.b16 %v2583, %v2579
    %v4564 = vpack.c.b16 %v2588, %v2584
    %v4565 = vpack.c.b16 %v2589, %v2585
    %v4566 = vpack.c.b16 %v2590, %v2586
    %v4567 = vpack.c.b16 %v2591, %v2587
    %v4568 = vpack.c.b16 %v2596, %v2592
    %v4569 = vpack.c.b16 %v2597, %v2593
    %v4570 = vpack.c.b16 %v2598, %v2594
    %v4571 = vpack.c.b16 %v2599, %v2595
    %v4572 = vpack.c.b16 %v2604, %v2600
    %v4573 = vpack.c.b16 %v2605, %v2601
    %v4574 = vpack.c.b16 %v2606, %v2602
    %v4575 = vpack.c.b16 %v2607, %v2603
    %v4576 = vpack.c.b16 %v2612, %v2608
    %v4577 = vpack.c.b16 %v2613, %v2609
    %v4578 = vpack.c.b16 %v2614, %v2610
    %v4579 = vpack.c.b16 %v2615, %v2611
    %v4580 = vpack.c.b16 %v2620, %v2616
    %v4581 = vpack.c.b16 %v2621, %v2617
    %v4582 = vpack.c.b16 %v2622, %v2618
    %v4583 = vpack.c.b16 %v2623, %v2619
    %v4584 = vpack.c.b16 %v2628, %v2624
    %v4585 = vpack.c.b16 %v2629, %v2625
    %v4586 = vpack.c.b16 %v2630, %v2626
    %v4587 = vpack.c.b16 %v2631, %v2627
    %v4588 = vpack.c.b16 %v2636, %v2632
    %v4589 = vpack.c.b16 %v2637, %v2633
    %v4590 = vpack.c.b16 %v2638, %v2634
    %v4591 = vpack.c.b16 %v2639, %v2635
    %v4592 = vpack.c.b16 %v2644, %v2640
    %v4593 = vpack.c.b16 %v2645, %v2641
    %v4594 = vpack.c.b16 %v2646, %v2642
    %v4595 = vpack.c.b16 %v2647, %v2643
    %v4596 = vpack.c.b16 %v2652, %v2648
    %v4597 = vpack.c.b16 %v2653, %v2649
    %v4598 = vpack.c.b16 %v2654, %v2650
    %v4599 = vpack.c.b16 %v2655, %v2651
    %v4600 = vpack.c.b16 %v2660, %v2656
    %v4601 = vpack.c.b16 %v2661, %v2657
    %v4602 = vpack.c.b16 %v2662, %v2658
    %v4603 = vpack.c.b16 %v2663, %v2659
    %v4604 = vpack.c.b16 %v2668, %v2664
    %v4605 = vpack.c.b16 %v2669, %v2665
    %v4606 = vpack.c.b16 %v2670, %v2666
    %v4607 = vpack.c.b16 %v2671, %v2667
    %v4608 = vpack.c.b16 %v2676, %v2672
    %v4609 = vpack.c.b16 %v2677, %v2673
    %v4610 = vpack.c.b16 %v2678, %v2674
    %v4611 = vpack.c.b16 %v2679, %v2675
    %v4612 = vpack.c.b16 %v2684, %v2680
    %v4613 = vpack.c.b16 %v2685, %v2681
    %v4614 = vpack.c.b16 %v2686, %v2682
    %v4615 = vpack.c.b16 %v2687, %v2683
    %v4616 = vpack.c.b16 %v2692, %v2688
    %v4617 = vpack.c.b16 %v2693, %v2689
    %v4618 = vpack.c.b16 %v2694, %v2690
    %v4619 = vpack.c.b16 %v2695, %v2691
    %v4620 = vpack.c.b16 %v2700, %v2696
    %v4621 = vpack.c.b16 %v2701, %v2697
    %v4622 = vpack.c.b16 %v2702, %v2698
    %v4623 = vpack.c.b16 %v2703, %v2699
    %v4624 = vpack.c.b16 %v2708, %v2704
    %v4625 = vpack.c.b16 %v2709, %v2705
    %v4626 = vpack.c.b16 %v2710, %v2706
    %v4627 = vpack.c.b16 %v2711, %v2707
    %v4628 = vpack.c.b16 %v2716, %v2712
    %v4629 = vpack.c.b16 %v2717, %v2713
    %v4630 = vpack.c.b16 %v2718, %v2714
    %v4631 = vpack.c.b16 %v2719, %v2715
    %v4632 = vpack.c.b16 %v2724, %v2720
    %v4633 = vpack.c.b16 %v2725, %v2721
    %v4634 = vpack.c.b16 %v2726, %v2722
    %v4635 = vpack.c.b16 %v2727, %v2723
    %v4636 = vpack.c.b16 %v2732, %v2728
    %v4637 = vpack.c.b16 %v2733, %v2729
    %v4638 = vpack.c.b16 %v2734, %v2730
    %v4639 = vpack.c.b16 %v2735, %v2731
    %v4640 = vpack.c.b16 %v2740, %v2736
    %v4641 = vpack.c.b16 %v2741, %v2737
    %v4642 = vpack.c.b16 %v2742, %v2738
    %v4643 = vpack.c.b16 %v2743, %v2739
    %v4644 = vpack.c.b16 %v2748, %v2744
    %v4645 = vpack.c.b16 %v2749, %v2745
    %v4646 = vpack.c.b16 %v2750, %v2746
    %v4647 = vpack.c.b16 %v2751, %v2747
    %v4648 = vpack.c.b16 %v2756, %v2752
    %v4649 = vpack.c.b16 %v2757, %v2753
    %v4650 = vpack.c.b16 %v2758, %v2754
    %v4651 = vpack.c.b16 %v2759, %v2755
    %v4652 = vpack.c.b16 %v2764, %v2760
    %v4653 = vpack.c.b16 %v2765, %v2761
    %v4654 = vpack.c.b16 %v2766, %v2762
    %v4655 = vpack.c.b16 %v2767, %v2763
    %v4656 = vpack.c.b16 %v2772, %v2768
    %v4657 = vpack.c.b16 %v2773, %v2769
    %v4658 = vpack.c.b16 %v2774, %v2770
    %v4659 = vpack.c.b16 %v2775, %v2771
    %v4660 = vpack.c.b16 %v2780, %v2776
    %v4661 = vpack.c.b16 %v2781, %v2777
    %v4662 = vpack.c.b16 %v2782, %v2778
    %v4663 = vpack.c.b16 %v2783, %v2779
    %v4664 = vpack.c.b16 %v2788, %v2784
    %v4665 = vpack.c.b16 %v2789, %v2785
    %v4666 = vpack.c.b16 %v2790, %v2786
    %v4667 = vpack.c.b16 %v2791, %v2787
    %v4668 = vpack.c.b16 %v2796, %v2792
    %v4669 = vpack.c.b16 %v2797, %v2793
    %v4670 = vpack.c.b16 %v2798, %v2794
    %v4671 = vpack.c.b16 %v2799, %v2795
    %v4672 = vpack.c.b16 %v2804, %v2800
    %v4673 = vpack.c.b16 %v2805, %v2801
    %v4674 = vpack.c.b16 %v2806, %v2802
    %v4675 = vpack.c.b16 %v2807, %v2803
    %v4676 = vpack.c.b16 %v2812, %v2808
    %v4677 = vpack.c.b16 %v2813, %v2809
    %v4678 = vpack.c.b16 %v2814, %v2810
    %v4679 = vpack.c.b16 %v2815, %v2811
    %v4680 = vpack.c.b16 %v2820, %v2816
    %v4681 = vpack.c.b16 %v2821, %v2817
    %v4682 = vpack.c.b16 %v2822, %v2818
    %v4683 = vpack.c.b16 %v2823, %v2819
    %v4684 = vpack.c.b16 %v2828, %v2824
    %v4685 = vpack.c.b16 %v2829, %v2825
    %v4686 = vpack.c.b16 %v2830, %v2826
    %v4687 = vpack.c.b16 %v2831, %v2827
    %v4688 = vpack.c.b16 %v2836, %v2832
    %v4689 = vpack.c.b16 %v2837, %v2833
    %v4690 = vpack.c.b16 %v2838, %v2834
    %v4691 = vpack.c.b16 %v2839, %v2835
    %v4692 = vpack.c.b16 %v2844, %v2840
    %v4693 = vpack.c.b16 %v2845, %v2841
    %v4694 = vpack.c.b16 %v2846, %v2842
    %v4695 = vpack.c.b16 %v2847, %v2843
    %v4696 = vpack.c.b16 %v2852, %v2848
    %v4697 = vpack.c.b16 %v2853, %v2849
    %v4698 = vpack.c.b16 %v2854, %v2850
    %v4699 = vpack.c.b16 %v2855, %v2851
    %v4700 = vpack.c.b16 %v2860, %v2856
    %v4701 = vpack.c.b16 %v2861, %v2857
    %v4702 = vpack.c.b16 %v2862, %v2858
    %v4703 = vpack.c.b16 %v2863, %v2859
    %v4704 = vpack.c.b16 %v2868, %v2864
    %v4705 = vpack.c.b16 %v2869, %v2865
    %v4706 = vpack.c.b16 %v2870, %v2866
    %v4707 = vpack.c.b16 %v2871, %v2867
    %v4708 = vpack.c.b16 %v2876, %v2872
    %v4709 = vpack.c.b16 %v2877, %v2873
    %v4710 = vpack.c.b16 %v2878, %v2874
    %v4711 = vpack.c.b16 %v2879, %v2875
    %v4712 = vpack.c.b16 %v2884, %v2880
    %v4713 = vpack.c.b16 %v2885, %v2881
    %v4714 = vpack.c.b16 %v2886, %v2882
    %v4715 = vpack.c.b16 %v2887, %v2883
    %v4716 = vpack.c.b16 %v2892, %v2888
    %v4717 = vpack.c.b16 %v2893, %v2889
    %v4718 = vpack.c.b16 %v2894, %v2890
    %v4719 = vpack.c.b16 %v2895, %v2891
    %v4720 = vpack.c.b16 %v2900, %v2896
    %v4721 = vpack.c.b16 %v2901, %v2897
    %v4722 = vpack.c.b16 %v2902, %v2898
    %v4723 = vpack.c.b16 %v2903, %v2899
    %v4724 = vpack.c.b16 %v2908, %v2904
    %v4725 = vpack.c.b16 %v2909, %v2905
    %v4726 = vpack.c.b16 %v2910, %v2906
    %v4727 = vpack.c.b16 %v2911, %v2907
    %v4728 = vpack.c.b16 %v2916, %v2912
    %v4729 = vpack.c.b16 %v2917, %v2913
    %v4730 = vpack.c.b16 %v2918, %v2914
    %v4731 = vpack.c.b16 %v2919, %v2915
    %v4732 = vpack.c.b16 %v2924, %v2920
    %v4733 = vpack.c.b16 %v2925, %v2921
    %v4734 = vpack.c.b16 %v2926, %v2922
    %v4735 = vpack.c.b16 %v2927, %v2923
    %v4736 = vpack.c.b16 %v2932, %v2928
    %v4737 = vpack.c.b16 %v2933, %v2929
    %v4738 = vpack.c.b16 %v2934, %v2930
    %v4739 = vpack.c.b16 %v2935, %v2931
    %v4740 = vpack.c.b16 %v2940, %v2936
    %v4741 = vpack.c.b16 %v2941, %v2937
    %v4742 = vpack.c.b16 %v2942, %v2938
    %v4743 = vpack.c.b16 %v2943, %v2939
    %v4744 = vpack.c.b16 %v2948, %v2944
    %v4745 = vpack.c.b16 %v2949, %v2945
    %v4746 = vpack.c.b16 %v2950, %v2946
    %v4747 = vpack.c.b16 %v2951, %v2947
    %v4748 = vpack.c.b16 %v2956, %v2952
    %v4749 = vpack.c.b16 %v2957, %v2953
    %v4750 = vpack.c.b16 %v2958, %v2954
    %v4751 = vpack.c.b16 %v2959, %v2955
    %v4752 = vpack.c.b16 %v2964, %v2960
    %v4753 = vpack.c.b16 %v2965, %v2961
    %v4754 = vpack.c.b16 %v2966, %v2962
    %v4755 = vpack.c.b16 %v2967, %v2963
    %v4756 = vpack.c.b16 %v2972, %v2968
    %v4757 = vpack.c.b16 %v2973, %v2969
    %v4758 = vpack.c.b16 %v2974, %v2970
    %v4759 = vpack.c.b16 %v2975, %v2971
    %v4760 = vpack.c.b16 %v2980, %v2976
    %v4761 = vpack.c.b16 %v2981, %v2977
    %v4762 = vpack.c.b16 %v2982, %v2978
    %v4763 = vpack.c.b16 %v2983, %v2979
    %v4764 = vpack.c.b16 %v2988, %v2984
    %v4765 = vpack.c.b16 %v2989, %v2985
    %v4766 = vpack.c.b16 %v2990, %v2986
    %v4767 = vpack.c.b16 %v2991, %v2987
    %v4768 = vpack.c.b16 %v2996, %v2992
    %v4769 = vpack.c.b16 %v2997, %v2993
    %v4770 = vpack.c.b16 %v2998, %v2994
    %v4771 = vpack.c.b16 %v2999, %v2995
    %v4772 = vpack.c.b16 %v3004, %v3000
    %v4773 = vpack.c.b16 %v3005, %v3001
    %v4774 = vpack.c.b16 %v3006, %v3002
    %v4775 = vpack.c.b16 %v3007, %v3003
    %v4776 = vpack.c.b16 %v3012, %v3008
    %v4777 = vpack.c.b16 %v3013, %v3009
    %v4778 = vpack.c.b16 %v3014, %v3010
    %v4779 = vpack.c.b16 %v3015, %v3011
    %v4780 = vpack.c.b16 %v3020, %v3016
    %v4781 = vpack.c.b16 %v3021, %v3017
    %v4782 = vpack.c.b16 %v3022, %v3018
    %v4783 = vpack.c.b16 %v3023, %v3019
    %v4784 = vpack.c.b16 %v3028, %v3024
    %v4785 = vpack.c.b16 %v3029, %v3025
    %v4786 = vpack.c.b16 %v3030, %v3026
    %v4787 = vpack.c.b16 %v3031, %v3027
    %v4788 = vpack.c.b16 %v3036, %v3032
    %v4789 = vpack.c.b16 %v3037, %v3033
    %v4790 = vpack.c.b16 %v3038, %v3034
    %v4791 = vpack.c.b16 %v3039, %v3035
    %v4792 = vpack.c.b16 %v3044, %v3040
    %v4793 = vpack.c.b16 %v3045, %v3041
    %v4794 = vpack.c.b16 %v3046, %v3042
    %v4795 = vpack.c.b16 %v3047, %v3043
    %v4796 = vpack.c.b16 %v3052, %v3048
    %v4797 = vpack.c.b16 %v3053, %v3049
    %v4798 = vpack.c.b16 %v3054, %v3050
    %v4799 = vpack.c.b16 %v3055, %v3051
    %v4800 = vpack.c.b16 %v3060, %v3056
    %v4801 = vpack.c.b16 %v3061, %v3057
    %v4802 = vpack.c.b16 %v3062, %v3058
    %v4803 = vpack.c.b16 %v3063, %v3059
    %v4804 = vpack.c.b16 %v3068, %v3064
    %v4805 = vpack.c.b16 %v3069, %v3065
    %v4806 = vpack.c.b16 %v3070, %v3066
    %v4807 = vpack.c.b16 %v3071, %v3067
    %v4808 = vpack.c.b16 %v3076, %v3072
    %v4809 = vpack.c.b16 %v3077, %v3073
    %v4810 = vpack.c.b16 %v3078, %v3074
    %v4811 = vpack.c.b16 %v3079, %v3075
    %v4812 = vpack.c.b16 %v3084, %v3080
    %v4813 = vpack.c.b16 %v3085, %v3081
    %v4814 = vpack.c.b16 %v3086, %v3082
    %v4815 = vpack.c.b16 %v3087, %v3083
    %v4816 = vpack.c.b16 %v3092, %v3088
    %v4817 = vpack.c.b16 %v3093, %v3089
    %v4818 = vpack.c.b16 %v3094, %v3090
    %v4819 = vpack.c.b16 %v3095, %v3091
    %v4820 = vpack.c.b16 %v3100, %v3096
    %v4821 = vpack.c.b16 %v3101, %v3097
    %v4822 = vpack.c.b16 %v3102, %v3098
    %v4823 = vpack.c.b16 %v3103, %v3099
    %v4824 = vpack.c.b16 %v3108, %v3104
    %v4825 = vpack.c.b16 %v3109, %v3105
    %v4826 = vpack.c.b16 %v3110, %v3106
    %v4827 = vpack.c.b16 %v3111, %v3107
    %v4828 = vpack.c.b16 %v3116, %v3112
    %v4829 = vpack.c.b16 %v3117, %v3113
    %v4830 = vpack.c.b16 %v3118, %v3114
    %v4831 = vpack.c.b16 %v3119, %v3115
    %v4832 = vpack.c.b16 %v3124, %v3120
    %v4833 = vpack.c.b16 %v3125, %v3121
    %v4834 = vpack.c.b16 %v3126, %v3122
    %v4835 = vpack.c.b16 %v3127, %v3123
    %v4836 = vpack.c.b16 %v3132, %v3128
    %v4837 = vpack.c.b16 %v3133, %v3129
    %v4838 = vpack.c.b16 %v3134, %v3130
    %v4839 = vpack.c.b16 %v3135, %v3131
    %v4840 = vpack.c.b16 %v3140, %v3136
    %v4841 = vpack.c.b16 %v3141, %v3137
    %v4842 = vpack.c.b16 %v3142, %v3138
    %v4843 = vpack.c.b16 %v3143, %v3139
    %v4844 = vpack.c.b16 %v3148, %v3144
    %v4845 = vpack.c.b16 %v3149, %v3145
    %v4846 = vpack.c.b16 %v3150, %v3146
    %v4847 = vpack.c.b16 %v3151, %v3147
    %v4848 = vpack.c.b16 %v3156, %v3152
    %v4849 = vpack.c.b16 %v3157, %v3153
    %v4850 = vpack.c.b16 %v3158, %v3154
    %v4851 = vpack.c.b16 %v3159, %v3155
    %v4852 = vpack.c.b16 %v3164, %v3160
    %v4853 = vpack.c.b16 %v3165, %v3161
    %v4854 = vpack.c.b16 %v3166, %v3162
    %v4855 = vpack.c.b16 %v3167, %v3163
    %v4856 = vpack.c.b16 %v3172, %v3168
    %v4857 = vpack.c.b16 %v3173, %v3169
    %v4858 = vpack.c.b16 %v3174, %v3170
    %v4859 = vpack.c.b16 %v3175, %v3171
    %v4860 = vpack.c.b16 %v3180, %v3176
    %v4861 = vpack.c.b16 %v3181, %v3177
    %v4862 = vpack.c.b16 %v3182, %v3178
    %v4863 = vpack.c.b16 %v3183, %v3179
    %v4864 = vpack.c.b16 %v3188, %v3184
    %v4865 = vpack.c.b16 %v3189, %v3185
    %v4866 = vpack.c.b16 %v3190, %v3186
    %v4867 = vpack.c.b16 %v3191, %v3187
    %v4868 = vpack.c.b16 %v3196, %v3192
    %v4869 = vpack.c.b16 %v3197, %v3193
    %v4870 = vpack.c.b16 %v3198, %v3194
    %v4871 = vpack.c.b16 %v3199, %v3195
    %v4872 = vpack.c.b16 %v3204, %v3200
    %v4873 = vpack.c.b16 %v3205, %v3201
    %v4874 = vpack.c.b16 %v3206, %v3202
    %v4875 = vpack.c.b16 %v3207, %v3203
    %v4876 = vpack.c.b16 %v3212, %v3208
    %v4877 = vpack.c.b16 %v3213, %v3209
    %v4878 = vpack.c.b16 %v3214, %v3210
    %v4879 = vpack.c.b16 %v3215, %v3211
    %v4880 = vpack.c.b16 %v3220, %v3216
    %v4881 = vpack.c.b16 %v3221, %v3217
    %v4882 = vpack.c.b16 %v3222, %v3218
    %v4883 = vpack.c.b16 %v3223, %v3219
    %v4884 = vpack.c.b16 %v3228, %v3224
    %v4885 = vpack.c.b16 %v3229, %v3225
    %v4886 = vpack.c.b16 %v3230, %v3226
    %v4887 = vpack.c.b16 %v3231, %v3227
    %v4888 = vpack.c.b16 %v3236, %v3232
    %v4889 = vpack.c.b16 %v3237, %v3233
    %v4890 = vpack.c.b16 %v3238, %v3234
    %v4891 = vpack.c.b16 %v3239, %v3235
    %v4892 = vpack.c.b16 %v3244, %v3240
    %v4893 = vpack.c.b16 %v3245, %v3241
    %v4894 = vpack.c.b16 %v3246, %v3242
    %v4895 = vpack.c.b16 %v3247, %v3243
    %v4896 = vpack.c.b16 %v3252, %v3248
    %v4897 = vpack.c.b16 %v3253, %v3249
    %v4898 = vpack.c.b16 %v3254, %v3250
    %v4899 = vpack.c.b16 %v3255, %v3251
    %v4900 = vpack.c.b16 %v3260, %v3256
    %v4901 = vpack.c.b16 %v3261, %v3257
    %v4902 = vpack.c.b16 %v3262, %v3258
    %v4903 = vpack.c.b16 %v3263, %v3259
    %v4904 = vpack.c.b16 %v3268, %v3264
    %v4905 = vpack.c.b16 %v3269, %v3265
    %v4906 = vpack.c.b16 %v3270, %v3266
    %v4907 = vpack.c.b16 %v3271, %v3267
    %v4908 = vpack.c.b16 %v3276, %v3272
    %v4909 = vpack.c.b16 %v3277, %v3273
    %v4910 = vpack.c.b16 %v3278, %v3274
    %v4911 = vpack.c.b16 %v3279, %v3275
    %v4912 = vpack.c.b16 %v3284, %v3280
    %v4913 = vpack.c.b16 %v3285, %v3281
    %v4914 = vpack.c.b16 %v3286, %v3282
    %v4915 = vpack.c.b16 %v3287, %v3283
    %v4916 = vpack.c.b16 %v3292, %v3288
    %v4917 = vpack.c.b16 %v3293, %v3289
    %v4918 = vpack.c.b16 %v3294, %v3290
    %v4919 = vpack.c.b16 %v3295, %v3291
    %v4920 = vpack.c.b16 %v3300, %v3296
    %v4921 = vpack.c.b16 %v3301, %v3297
    %v4922 = vpack.c.b16 %v3302, %v3298
    %v4923 = vpack.c.b16 %v3303, %v3299
    %v4924 = vpack.c.b16 %v3308, %v3304
    %v4925 = vpack.c.b16 %v3309, %v3305
    %v4926 = vpack.c.b16 %v3310, %v3306
    %v4927 = vpack.c.b16 %v3311, %v3307
    %v4928 = vpack.c.b16 %v3316, %v3312
    %v4929 = vpack.c.b16 %v3317, %v3313
    %v4930 = vpack.c.b16 %v3318, %v3314
    %v4931 = vpack.c.b16 %v3319, %v3315
    %v4932 = vpack.c.b16 %v3324, %v3320
    %v4933 = vpack.c.b16 %v3325, %v3321
    %v4934 = vpack.c.b16 %v3326, %v3322
    %v4935 = vpack.c.b16 %v3327, %v3323
    %v4936 = vpack.c.b16 %v3332, %v3328
    %v4937 = vpack.c.b16 %v3333, %v3329
    %v4938 = vpack.c.b16 %v3334, %v3330
    %v4939 = vpack.c.b16 %v3335, %v3331
    %v4940 = vpack.c.b16 %v3340, %v3336
    %v4941 = vpack.c.b16 %v3341, %v3337
    %v4942 = vpack.c.b16 %v3342, %v3338
    %v4943 = vpack.c.b16 %v3343, %v3339
    %v4944 = vpack.c.b16 %v3348, %v3344
    %v4945 = vpack.c.b16 %v3349, %v3345
    %v4946 = vpack.c.b16 %v3350, %v3346
    %v4947 = vpack.c.b16 %v3351, %v3347
    %v4948 = vpack.c.b16 %v3356, %v3352
    %v4949 = vpack.c.b16 %v3357, %v3353
    %v4950 = vpack.c.b16 %v3358, %v3354
    %v4951 = vpack.c.b16 %v3359, %v3355
    %v4952 = vpack.c.b16 %v3364, %v3360
    %v4953 = vpack.c.b16 %v3365, %v3361
    %v4954 = vpack.c.b16 %v3366, %v3362
    %v4955 = vpack.c.b16 %v3367, %v3363
    %v4956 = vpack.c.b16 %v3372, %v3368
    %v4957 = vpack.c.b16 %v3373, %v3369
    %v4958 = vpack.c.b16 %v3374, %v3370
    %v4959 = vpack.c.b16 %v3375, %v3371
    %v4960 = vpack.c.b16 %v3380, %v3376
    %v4961 = vpack.c.b16 %v3381, %v3377
    %v4962 = vpack.c.b16 %v3382, %v3378
    %v4963 = vpack.c.b16 %v3383, %v3379
    %v4964 = vpack.c.b16 %v3388, %v3384
    %v4965 = vpack.c.b16 %v3389, %v3385
    %v4966 = vpack.c.b16 %v3390, %v3386
    %v4967 = vpack.c.b16 %v3391, %v3387
    %v4968 = vpack.c.b16 %v3396, %v3392
    %v4969 = vpack.c.b16 %v3397, %v3393
    %v4970 = vpack.c.b16 %v3398, %v3394
    %v4971 = vpack.c.b16 %v3399, %v3395
    %v4972 = vpack.c.b16 %v3404, %v3400
    %v4973 = vpack.c.b16 %v3405, %v3401
    %v4974 = vpack.c.b16 %v3406, %v3402
    %v4975 = vpack.c.b16 %v3407, %v3403
    %v4976 = vpack.c.b16 %v3412, %v3408
    %v4977 = vpack.c.b16 %v3413, %v3409
    %v4978 = vpack.c.b16 %v3414, %v3410
    %v4979 = vpack.c.b16 %v3415, %v3411
    %v4980 = vpack.c.b16 %v3420, %v3416
    %v4981 = vpack.c.b16 %v3421, %v3417
    %v4982 = vpack.c.b16 %v3422, %v3418
    %v4983 = vpack.c.b16 %v3423, %v3419
    %v4984 = vpack.c.b16 %v3428, %v3424
    %v4985 = vpack.c.b16 %v3429, %v3425
    %v4986 = vpack.c.b16 %v3430, %v3426
    %v4987 = vpack.c.b16 %v3431, %v3427
    %v4988 = vpack.c.b16 %v3436, %v3432
    %v4989 = vpack.c.b16 %v3437, %v3433
    %v4990 = vpack.c.b16 %v3438, %v3434
    %v4991 = vpack.c.b16 %v3439, %v3435
    %v4992 = vpack.c.b16 %v3444, %v3440
    %v4993 = vpack.c.b16 %v3445, %v3441
    %v4994 = vpack.c.b16 %v3446, %v3442
    %v4995 = vpack.c.b16 %v3447, %v3443
    %v4996 = vpack.c.b16 %v3452, %v3448
    %v4997 = vpack.c.b16 %v3453, %v3449
    %v4998 = vpack.c.b16 %v3454, %v3450
    %v4999 = vpack.c.b16 %v3455, %v3451
    %v5000 = vpack.c.b16 %v3460, %v3456
    %v5001 = vpack.c.b16 %v3461, %v3457
    %v5002 = vpack.c.b16 %v3462, %v3458
    %v5003 = vpack.c.b16 %v3463, %v3459
    %v5004 = vpack.c.b16 %v3468, %v3464
    %v5005 = vpack.c.b16 %v3469, %v3465
    %v5006 = vpack.c.b16 %v3470, %v3466
    %v5007 = vpack.c.b16 %v3471, %v3467
    %v5008 = vpack.c.b16 %v3476, %v3472
    %v5009 = vpack.c.b16 %v3477, %v3473
    %v5010 = vpack.c.b16 %v3478, %v3474
    %v5011 = vpack.c.b16 %v3479, %v3475
    %v5012 = vpack.c.b16 %v3484, %v3480
    %v5013 = vpack.c.b16 %v3485, %v3481
    %v5014 = vpack.c.b16 %v3486, %v3482
    %v5015 = vpack.c.b16 %v3487, %v3483
    %v5016 = vpack.c.b16 %v3492, %v3488
    %v5017 = vpack.c.b16 %v3493, %v3489
    %v5018 = vpack.c.b16 %v3494, %v3490
    %v5019 = vpack.c.b16 %v3495, %v3491
    %v5020 = vpack.c.b16 %v3500, %v3496
    %v5021 = vpack.c.b16 %v3501, %v3497
    %v5022 = vpack.c.b16 %v3502, %v3498
    %v5023 = vpack.c.b16 %v3503, %v3499
    %v5024 = vpack.c.b16 %v3508, %v3504
    %v5025 = vpack.c.b16 %v3509, %v3505
    %v5026 = vpack.c.b16 %v3510, %v3506
    %v5027 = vpack.c.b16 %v3511, %v3507
    %v5028 = vpack.c.b16 %v3516, %v3512
    %v5029 = vpack.c.b16 %v3517, %v3513
    %v5030 = vpack.c.b16 %v3518, %v3514
    %v5031 = vpack.c.b16 %v3519, %v3515
    %v5032 = vpack.c.b16 %v3524, %v3520
    %v5033 = vpack.c.b16 %v3525, %v3521
    %v5034 = vpack.c.b16 %v3526, %v3522
    %v5035 = vpack.c.b16 %v3527, %v3523
    %v5036 = vpack.c.b16 %v3532, %v3528
    %v5037 = vpack.c.b16 %v3533, %v3529
    %v5038 = vpack.c.b16 %v3534, %v3530
    %v5039 = vpack.c.b16 %v3535, %v3531
    %v5040 = vpack.c.b16 %v3540, %v3536
    %v5041 = vpack.c.b16 %v3541, %v3537
    %v5042 = vpack.c.b16 %v3542, %v3538
    %v5043 = vpack.c.b16 %v3543, %v3539
    %v5044 = vpack.c.b16 %v3548, %v3544
    %v5045 = vpack.c.b16 %v3549, %v3545
    %v5046 = vpack.c.b16 %v3550, %v3546
    %v5047 = vpack.c.b16 %v3551, %v3547
    %v5048 = vpack.c.b16 %v3556, %v3552
    %v5049 = vpack.c.b16 %v3557, %v3553
    %v5050 = vpack.c.b16 %v3558, %v3554
    %v5051 = vpack.c.b16 %v3559, %v3555
    %v5052 = vpack.c.b16 %v3564, %v3560
    %v5053 = vpack.c.b16 %v3565, %v3561
    %v5054 = vpack.c.b16 %v3566, %v3562
    %v5055 = vpack.c.b16 %v3567, %v3563
    %v5056 = vpack.c.b16 %v3572, %v3568
    %v5057 = vpack.c.b16 %v3573, %v3569
    %v5058 = vpack.c.b16 %v3574, %v3570
    %v5059 = vpack.c.b16 %v3575, %v3571
    %v5060 = vpack.c.b16 %v3580, %v3576
    %v5061 = vpack.c.b16 %v3581, %v3577
    %v5062 = vpack.c.b16 %v3582, %v3578
    %v5063 = vpack.c.b16 %v3583, %v3579
    %v5064 = vpack.c.b16 %v3588, %v3584
    %v5065 = vpack.c.b16 %v3589, %v3585
    %v5066 = vpack.c.b16 %v3590, %v3586
    %v5067 = vpack.c.b16 %v3591, %v3587
    %v5068 = vpack.c.b16 %v3596, %v3592
    %v5069 = vpack.c.b16 %v3597, %v3593
    %v5070 = vpack.c.b16 %v3598, %v3594
    %v5071 = vpack.c.b16 %v3599, %v3595
    %v5072 = vpack.c.b16 %v3604, %v3600
    %v5073 = vpack.c.b16 %v3605, %v3601
    %v5074 = vpack.c.b16 %v3606, %v3602
    %v5075 = vpack.c.b16 %v3607, %v3603
    %v5076 = vpack.c.b16 %v3612, %v3608
    %v5077 = vpack.c.b16 %v3613, %v3609
    %v5078 = vpack.c.b16 %v3614, %v3610
    %v5079 = vpack.c.b16 %v3615, %v3611
    %v5080 = vpack.c.b16 %v3620, %v3616
    %v5081 = vpack.c.b16 %v3621, %v3617
    %v5082 = vpack.c.b16 %v3622, %v3618
    %v5083 = vpack.c.b16 %v3623, %v3619
    %v5084 = vpack.c.b16 %v3628, %v3624
    %v5085 = vpack.c.b16 %v3629, %v3625
    %v5086 = vpack.c.b16 %v3630, %v3626
    %v5087 = vpack.c.b16 %v3631, %v3627
    %v5088 = vpack.c.b16 %v3636, %v3632
    %v5089 = vpack.c.b16 %v3637, %v3633
    %v5090 = vpack.c.b16 %v3638, %v3634
    %v5091 = vpack.c.b16 %v3639, %v3635
    %v5092 = vpack.c.b16 %v3644, %v3640
    %v5093 = vpack.c.b16 %v3645, %v3641
    %v5094 = vpack.c.b16 %v3646, %v3642
    %v5095 = vpack.c.b16 %v3647, %v3643
    %v5096 = vpack.c.b16 %v3652, %v3648
    %v5097 = vpack.c.b16 %v3653, %v3649
    %v5098 = vpack.c.b16 %v3654, %v3650
    %v5099 = vpack.c.b16 %v3655, %v3651
    %v5100 = vpack.c.b16 %v3660, %v3656
    %v5101 = vpack.c.b16 %v3661, %v3657
    %v5102 = vpack.c.b16 %v3662, %v3658
    %v5103 = vpack.c.b16 %v3663, %v3659
    %v5104 = vpack.c.b16 %v3668, %v3664
    %v5105 = vpack.c.b16 %v3669, %v3665
    %v5106 = vpack.c.b16 %v3670, %v3666
    %v5107 = vpack.c.b16 %v3671, %v3667
    %v5108 = vpack.c.b16 %v3676, %v3672
    %v5109 = vpack.c.b16 %v3677, %v3673
    %v5110 = vpack.c.b16 %v3678, %v3674
    %v5111 = vpack.c.b16 %v3679, %v3675
    %v5112 = vpack.c.b16 %v3684, %v3680
    %v5113 = vpack.c.b16 %v3685, %v3681
    %v5114 = vpack.c.b16 %v3686, %v3682
    %v5115 = vpack.c.b16 %v3687, %v3683
    %v5116 = vpack.c.b16 %v3692, %v3688
    %v5117 = vpack.c.b16 %v3693, %v3689
    %v5118 = vpack.c.b16 %v3694, %v3690
    %v5119 = vpack.c.b16 %v3695, %v3691
    %v5120 = vpack.c.b16 %v3700, %v3696
    %v5121 = vpack.c.b16 %v3701, %v3697
    %v5122 = vpack.c.b16 %v3702, %v3698
    %v5123 = vpack.c.b16 %v3703, %v3699
    %v5124 = vpack.c.b16 %v3708, %v3704
    %v5125 = vpack.c.b16 %v3709, %v3705
    %v5126 = vpack.c.b16 %v3710, %v3706
    %v5127 = vpack.c.b16 %v3711, %v3707
    %v5128 = vpack.c.b16 %v3716, %v3712
    %v5129 = vpack.c.b16 %v3717, %v3713
    %v5130 = vpack.c.b16 %v3718, %v3714
    %v5131 = vpack.c.b16 %v3719, %v3715
    %v5132 = vpack.c.b16 %v3724, %v3720
    %v5133 = vpack.c.b16 %v3725, %v3721
    %v5134 = vpack.c.b16 %v3726, %v3722
    %v5135 = vpack.c.b16 %v3727, %v3723
    %v5136 = vpack.c.b16 %v3732, %v3728
    %v5137 = vpack.c.b16 %v3733, %v3729
    %v5138 = vpack.c.b16 %v3734, %v3730
    %v5139 = vpack.c.b16 %v3735, %v3731
    %v5140 = vpack.c.b16 %v3740, %v3736
    %v5141 = vpack.c.b16 %v3741, %v3737
    %v5142 = vpack.c.b16 %v3742, %v3738
    %v5143 = vpack.c.b16 %v3743, %v3739
    %v5144 = vpack.c.b16 %v3748, %v3744
    %v5145 = vpack.c.b16 %v3749, %v3745
    %v5146 = vpack.c.b16 %v3750, %v3746
    %v5147 = vpack.c.b16 %v3751, %v3747
    %v5148 = vpack.c.b16 %v3756, %v3752
    %v5149 = vpack.c.b16 %v3757, %v3753
    %v5150 = vpack.c.b16 %v3758, %v3754
    %v5151 = vpack.c.b16 %v3759, %v3755
    %v5152 = vpack.c.b16 %v3764, %v3760
    %v5153 = vpack.c.b16 %v3765, %v3761
    %v5154 = vpack.c.b16 %v3766, %v3762
    %v5155 = vpack.c.b16 %v3767, %v3763
    %v5156 = vpack.c.b16 %v3772, %v3768
    %v5157 = vpack.c.b16 %v3773, %v3769
    %v5158 = vpack.c.b16 %v3774, %v3770
    %v5159 = vpack.c.b16 %v3775, %v3771
    %v5160 = vpack.c.b16 %v3780, %v3776
    %v5161 = vpack.c.b16 %v3781, %v3777
    %v5162 = vpack.c.b16 %v3782, %v3778
    %v5163 = vpack.c.b16 %v3783, %v3779
    %v5164 = vpack.c.b16 %v3788, %v3784
    %v5165 = vpack.c.b16 %v3789, %v3785
    %v5166 = vpack.c.b16 %v3790, %v3786
    %v5167 = vpack.c.b16 %v3791, %v3787
    %v5168 = vpack.c.b16 %v3796, %v3792
    %v5169 = vpack.c.b16 %v3797, %v3793
    %v5170 = vpack.c.b16 %v3798, %v3794
    %v5171 = vpack.c.b16 %v3799, %v3795
    %v5172 = vpack.c.b16 %v3804, %v3800
    %v5173 = vpack.c.b16 %v3805, %v3801
    %v5174 = vpack.c.b16 %v3806, %v3802
    %v5175 = vpack.c.b16 %v3807, %v3803
    %v5176 = vpack.c.b16 %v3812, %v3808
    %v5177 = vpack.c.b16 %v3813, %v3809
    %v5178 = vpack.c.b16 %v3814, %v3810
    %v5179 = vpack.c.b16 %v3815, %v3811
    %v5180 = vpack.c.b16 %v3820, %v3816
    %v5181 = vpack.c.b16 %v3821, %v3817
    %v5182 = vpack.c.b16 %v3822, %v3818
    %v5183 = vpack.c.b16 %v3823, %v3819
    %v5184 = vpack.c.b16 %v3828, %v3824
    %v5185 = vpack.c.b16 %v3829, %v3825
    %v5186 = vpack.c.b16 %v3830, %v3826
    %v5187 = vpack.c.b16 %v3831, %v3827
    %v5188 = vpack.c.b16 %v3836, %v3832
    %v5189 = vpack.c.b16 %v3837, %v3833
    %v5190 = vpack.c.b16 %v3838, %v3834
    %v5191 = vpack.c.b16 %v3839, %v3835
    %v5192 = vpack.c.b16 %v3844, %v3840
    %v5193 = vpack.c.b16 %v3845, %v3841
    %v5194 = vpack.c.b16 %v3846, %v3842
    %v5195 = vpack.c.b16 %v3847, %v3843
    %v5196 = vpack.c.b16 %v3852, %v3848
    %v5197 = vpack.c.b16 %v3853, %v3849
    %v5198 = vpack.c.b16 %v3854, %v3850
    %v5199 = vpack.c.b16 %v3855, %v3851
    %v5200 = vpack.c.b16 %v3860, %v3856
    %v5201 = vpack.c.b16 %v3861, %v3857
    %v5202 = vpack.c.b16 %v3862, %v3858
    %v5203 = vpack.c.b16 %v3863, %v3859
    %v5204 = vpack.c.b16 %v3868, %v3864
    %v5205 = vpack.c.b16 %v3869, %v3865
    %v5206 = vpack.c.b16 %v3870, %v3866
    %v5207 = vpack.c.b16 %v3871, %v3867
    %v5208 = vpack.c.b16 %v3876, %v3872
    %v5209 = vpack.c.b16 %v3877, %v3873
    %v5210 = vpack.c.b16 %v3878, %v3874
    %v5211 = vpack.c.b16 %v3879, %v3875
    %v5212 = vpack.c.b16 %v3884, %v3880
    %v5213 = vpack.c.b16 %v3885, %v3881
    %v5214 = vpack.c.b16 %v3886, %v3882
    %v5215 = vpack.c.b16 %v3887, %v3883
    %v5216 = vpack.c.b16 %v3892, %v3888
    %v5217 = vpack.c.b16 %v3893, %v3889
    %v5218 = vpack.c.b16 %v3894, %v3890
    %v5219 = vpack.c.b16 %v3895, %v3891
    %v5220 = vpack.c.b16 %v3900, %v3896
    %v5221 = vpack.c.b16 %v3901, %v3897
    %v5222 = vpack.c.b16 %v3902, %v3898
    %v5223 = vpack.c.b16 %v3903, %v3899
    %v5224 = vpack.c.b16 %v3908, %v3904
    %v5225 = vpack.c.b16 %v3909, %v3905
    %v5226 = vpack.c.b16 %v3910, %v3906
    %v5227 = vpack.c.b16 %v3911, %v3907
    %v5228 = vpack.c.b16 %v3916, %v3912
    %v5229 = vpack.c.b16 %v3917, %v3913
    %v5230 = vpack.c.b16 %v3918, %v3914
    %v5231 = vpack.c.b16 %v3919, %v3915
    %v5232 = vpack.c.b16 %v3924, %v3920
    %v5233 = vpack.c.b16 %v3925, %v3921
    %v5234 = vpack.c.b16 %v3926, %v3922
    %v5235 = vpack.c.b16 %v3927, %v3923
    %v5236 = vpack.c.b16 %v3932, %v3928
    %v5237 = vpack.c.b16 %v3933, %v3929
    %v5238 = vpack.c.b16 %v3934, %v3930
    %v5239 = vpack.c.b16 %v3935, %v3931
    %v5240 = vpack.c.b16 %v3940, %v3936
    %v5241 = vpack.c.b16 %v3941, %v3937
    %v5242 = vpack.c.b16 %v3942, %v3938
    %v5243 = vpack.c.b16 %v3943, %v3939
    %v5244 = vpack.c.b16 %v3948, %v3944
    %v5245 = vpack.c.b16 %v3949, %v3945
    %v5246 = vpack.c.b16 %v3950, %v3946
    %v5247 = vpack.c.b16 %v3951, %v3947
    %v5248 = vpack.c.b16 %v3956, %v3952
    %v5249 = vpack.c.b16 %v3957, %v3953
    %v5250 = vpack.c.b16 %v3958, %v3954
    %v5251 = vpack.c.b16 %v3959, %v3955
    %v5252 = vpack.c.b16 %v3964, %v3960
    %v5253 = vpack.c.b16 %v3965, %v3961
    %v5254 = vpack.c.b16 %v3966, %v3962
    %v5255 = vpack.c.b16 %v3967, %v3963
    %v5256 = vpack.c.b16 %v3972, %v3968
    %v5257 = vpack.c.b16 %v3973, %v3969
    %v5258 = vpack.c.b16 %v3974, %v3970
    %v5259 = vpack.c.b16 %v3975, %v3971
    %v5260 = vpack.c.b16 %v3980, %v3976
    %v5261 = vpack.c.b16 %v3981, %v3977
    %v5262 = vpack.c.b16 %v3982, %v3978
    %v5263 = vpack.c.b16 %v3983, %v3979
    %v5264 = vpack.c.b16 %v3988, %v3984
    %v5265 = vpack.c.b16 %v3989, %v3985
    %v5266 = vpack.c.b16 %v3990, %v3986
    %v5267 = vpack.c.b16 %v3991, %v3987
    %v5268 = vpack.c.b16 %v3996, %v3992
    %v5269 = vpack.c.b16 %v3997, %v3993
    %v5270 = vpack.c.b16 %v3998, %v3994
    %v5271 = vpack.c.b16 %v3999, %v3995
    %v5272 = vpack.c.b16 %v4004, %v4000
    %v5273 = vpack.c.b16 %v4005, %v4001
    %v5274 = vpack.c.b16 %v4006, %v4002
    %v5275 = vpack.c.b16 %v4007, %v4003
    %v5276 = vpack.c.b16 %v4012, %v4008
    %v5277 = vpack.c.b16 %v4013, %v4009
    %v5278 = vpack.c.b16 %v4014, %v4010
    %v5279 = vpack.c.b16 %v4015, %v4011
    %v5280 = vpack.c.b16 %v4020, %v4016
    %v5281 = vpack.c.b16 %v4021, %v4017
    %v5282 = vpack.c.b16 %v4022, %v4018
    %v5283 = vpack.c.b16 %v4023, %v4019
    %v5284 = vpack.c.b16 %v4028, %v4024
    %v5285 = vpack.c.b16 %v4029, %v4025
    %v5286 = vpack.c.b16 %v4030, %v4026
    %v5287 = vpack.c.b16 %v4031, %v4027
    %v5288 = vpack.c.b16 %v4036, %v4032
    %v5289 = vpack.c.b16 %v4037, %v4033
    %v5290 = vpack.c.b16 %v4038, %v4034
    %v5291 = vpack.c.b16 %v4039, %v4035
    %v5292 = vpack.c.b16 %v4044, %v4040
    %v5293 = vpack.c.b16 %v4045, %v4041
    %v5294 = vpack.c.b16 %v4046, %v4042
    %v5295 = vpack.c.b16 %v4047, %v4043
    %v5296 = vpack.c.b16 %v4052, %v4048
    %v5297 = vpack.c.b16 %v4053, %v4049
    %v5298 = vpack.c.b16 %v4054, %v4050
    %v5299 = vpack.c.b16 %v4055, %v4051
    %v5300 = vpack.c.b16 %v4060, %v4056
    %v5301 = vpack.c.b16 %v4061, %v4057
    %v5302 = vpack.c.b16 %v4062, %v4058
    %v5303 = vpack.c.b16 %v4063, %v4059
    %v5304 = vpack.c.b16 %v4068, %v4064
    %v5305 = vpack.c.b16 %v4069, %v4065
    %v5306 = vpack.c.b16 %v4070, %v4066
    %v5307 = vpack.c.b16 %v4071, %v4067
    %v5308 = vpack.c.b16 %v4076, %v4072
    %v5309 = vpack.c.b16 %v4077, %v4073
    %v5310 = vpack.c.b16 %v4078, %v4074
    %v5311 = vpack.c.b16 %v4079, %v4075
    %v5312 = vpack.c.b16 %v4084, %v4080
    %v5313 = vpack.c.b16 %v4085, %v4081
    %v5314 = vpack.c.b16 %v4086, %v4082
    %v5315 = vpack.c.b16 %v4087, %v4083
    %v5316 = vpack.c.b16 %v4092, %v4088
    %v5317 = vpack.c.b16 %v4093, %v4089
    %v5318 = vpack.c.b16 %v4094, %v4090
    %v5319 = vpack.c.b16 %v4095, %v4091
    %v5320 = vpack.c.b16 %v4100, %v4096
    %v5321 = vpack.c.b16 %v4101, %v4097
    %v5322 = vpack.c.b16 %v4102, %v4098
    %v5323 = vpack.c.b16 %v4103, %v4099
    %v5324 = vpack.c.b16 %v4108, %v4104
    %v5325 = vpack.c.b16 %v4109, %v4105
    %v5326 = vpack.c.b16 %v4110, %v4106
    %v5327 = vpack.c.b16 %v4111, %v4107
    %v5328 = vpack.c.b16 %v4116, %v4112
    %v5329 = vpack.c.b16 %v4117, %v4113
    %v5330 = vpack.c.b16 %v4118, %v4114
    %v5331 = vpack.c.b16 %v4119, %v4115
    %v5332 = vpack.c.b16 %v4124, %v4120
    %v5333 = vpack.c.b16 %v4125, %v4121
    %v5334 = vpack.c.b16 %v4126, %v4122
    %v5335 = vpack.c.b16 %v4127, %v4123
    %v5336 = vpack.c.b16 %v4132, %v4128
    %v5337 = vpack.c.b16 %v4133, %v4129
    %v5338 = vpack.c.b16 %v4134, %v4130
    %v5339 = vpack.c.b16 %v4135, %v4131
    %v5340 = vpack.c.b16 %v4140, %v4136
    %v5341 = vpack.c.b16 %v4141, %v4137
    %v5342 = vpack.c.b16 %v4142, %v4138
    %v5343 = vpack.c.b16 %v4143, %v4139
    %v5344 = vpack.c.b16 %v4148, %v4144
    %v5345 = vpack.c.b16 %v4149, %v4145
    %v5346 = vpack.c.b16 %v4150, %v4146
    %v5347 = vpack.c.b16 %v4151, %v4147
    %v5348 = vpack.c.b16 %v4156, %v4152
    %v5349 = vpack.c.b16 %v4157, %v4153
    %v5350 = vpack.c.b16 %v4158, %v4154
    %v5351 = vpack.c.b16 %v4159, %v4155
    %v5352 = vpack.c.b16 %v4164, %v4160
    %v5353 = vpack.c.b16 %v4165, %v4161
    %v5354 = vpack.c.b16 %v4166, %v4162
    %v5355 = vpack.c.b16 %v4167, %v4163
    %v5356 = vpack.c.b16 %v4172, %v4168
    %v5357 = vpack.c.b16 %v4173, %v4169
    %v5358 = vpack.c.b16 %v4174, %v4170
    %v5359 = vpack.c.b16 %v4175, %v4171
    %v5360 = vpack.c.b16 %v4180, %v4176
    %v5361 = vpack.c.b16 %v4181, %v4177
    %v5362 = vpack.c.b16 %v4182, %v4178
    %v5363 = vpack.c.b16 %v4183, %v4179
    %v5364 = vpack.c.b16 %v4188, %v4184
    %v5365 = vpack.c.b16 %v4189, %v4185
    %v5366 = vpack.c.b16 %v4190, %v4186
    %v5367 = vpack.c.b16 %v4191, %v4187
    %v5368 = vpack.c.b16 %v4196, %v4192
    %v5369 = vpack.c.b16 %v4197, %v4193
    %v5370 = vpack.c.b16 %v4198, %v4194
    %v5371 = vpack.c.b16 %v4199, %v4195
    %v5372 = vpack.c.b16 %v4204, %v4200
    %v5373 = vpack.c.b16 %v4205, %v4201
    %v5374 = vpack.c.b16 %v4206, %v4202
    %v5375 = vpack.c.b16 %v4207, %v4203
    %v5376 = vpack.c.b16 %v4212, %v4208
    %v5377 = vpack.c.b16 %v4213, %v4209
    %v5378 = vpack.c.b16 %v4214, %v4210
    %v5379 = vpack.c.b16 %v4215, %v4211
    %v5380 = vpack.c.b16 %v4220, %v4216
    %v5381 = vpack.c.b16 %v4221, %v4217
    %v5382 = vpack.c.b16 %v4222, %v4218
    %v5383 = vpack.c.b16 %v4223, %v4219
    %v5384 = vpack.c.b16 %v4228, %v4224
    %v5385 = vpack.c.b16 %v4229, %v4225
    %v5386 = vpack.c.b16 %v4230, %v4226
    %v5387 = vpack.c.b16 %v4231, %v4227
    %v5388 = vpack.c.b16 %v4236, %v4232
    %v5389 = vpack.c.b16 %v4237, %v4233
    %v5390 = vpack.c.b16 %v4238, %v4234
    %v5391 = vpack.c.b16 %v4239, %v4235
    %v5392 = vpack.c.b16 %v4244, %v4240
    %v5393 = vpack.c.b16 %v4245, %v4241
    %v5394 = vpack.c.b16 %v4246, %v4242
    %v5395 = vpack.c.b16 %v4247, %v4243
    %v5396 = vpack.c.b16 %v4252, %v4248
    %v5397 = vpack.c.b16 %v4253, %v4249
    %v5398 = vpack.c.b16 %v4254, %v4250
    %v5399 = vpack.c.b16 %v4255, %v4251
    %v5400 = vpack.c.b16 %v4260, %v4256
    %v5401 = vpack.c.b16 %v4261, %v4257
    %v5402 = vpack.c.b16 %v4262, %v4258
    %v5403 = vpack.c.b16 %v4263, %v4259
    %v5404 = vpack.c.b16 %v4268, %v4264
    %v5405 = vpack.c.b16 %v4269, %v4265
    %v5406 = vpack.c.b16 %v4270, %v4266
    %v5407 = vpack.c.b16 %v4271, %v4267
    %v5408 = vpack.c.b16 %v4276, %v4272
    %v5409 = vpack.c.b16 %v4277, %v4273
    %v5410 = vpack.c.b16 %v4278, %v4274
    %v5411 = vpack.c.b16 %v4279, %v4275
    %v5412 = vpack.c.b16 %v4284, %v4280
    %v5413 = vpack.c.b16 %v4285, %v4281
    %v5414 = vpack.c.b16 %v4286, %v4282
    %v5415 = vpack.c.b16 %v4287, %v4283
    %v5416 = vpack.c.b16 %v4292, %v4288
    %v5417 = vpack.c.b16 %v4293, %v4289
    %v5418 = vpack.c.b16 %v4294, %v4290
    %v5419 = vpack.c.b16 %v4295, %v4291
    %v5420 = vpack.c.b16 %v4300, %v4296
    %v5421 = vpack.c.b16 %v4301, %v4297
    %v5422 = vpack.c.b16 %v4302, %v4298
    %v5423 = vpack.c.b16 %v4303, %v4299
    %v5424 = vpack.c.b16 %v4308, %v4304
    %v5425 = vpack.c.b16 %v4309, %v4305
    %v5426 = vpack.c.b16 %v4310, %v4306
    %v5427 = vpack.c.b16 %v4311, %v4307
    %v5428 = vpack.c.b16 %v4316, %v4312
    %v5429 = vpack.c.b16 %v4317, %v4313
    %v5430 = vpack.c.b16 %v4318, %v4314
    %v5431 = vpack.c.b16 %v4319, %v4315
    %v5432 = vpack.c.b16 %v4324, %v4320
    %v5433 = vpack.c.b16 %v4325, %v4321
    %v5434 = vpack.c.b16 %v4326, %v4322
    %v5435 = vpack.c.b16 %v4327, %v4323
    %v5436 = vpack.c.b16 %v4332, %v4328
    %v5437 = vpack.c.b16 %v4333, %v4329
    %v5438 = vpack.c.b16 %v4334, %v4330
    %v5439 = vpack.c.b16 %v4335, %v4331
    %v5440 = vpack.c.b16 %v4340, %v4336
    %v5441 = vpack.c.b16 %v4341, %v4337
    %v5442 = vpack.c.b16 %v4342, %v4338
    %v5443 = vpack.c.b16 %v4343, %v4339
    %v5444 = vpack.c.b16 %v4348, %v4344
    %v5445 = vpack.c.b16 %v4349, %v4345
    %v5446 = vpack.c.b16 %v4350, %v4346
    %v5447 = vpack.c.b16 %v4351, %v4347
    %v5448 = vpack.c.b16 %v4356, %v4352
    %v5449 = vpack.c.b16 %v4357, %v4353
    %v5450 = vpack.c.b16 %v4358, %v4354
    %v5451 = vpack.c.b16 %v4359, %v4355
    %v5452 = vpack.c.b16 %v4364, %v4360
    %v5453 = vpack.c.b16 %v4365, %v4361
    %v5454 = vpack.c.b16 %v4366, %v4362
    %v5455 = vpack.c.b16 %v4367, %v4363
    %v5456 = vpack.c.b16 %v4372, %v4368
    %v5457 = vpack.c.b16 %v4373, %v4369
    %v5458 = vpack.c.b16 %v4374, %v4370
    %v5459 = vpack.c.b16 %v4375, %v4371
    %v5460 = vpack.c.b16 %v4380, %v4376
    %v5461 = vpack.c.b16 %v4381, %v4377
    %v5462 = vpack.c.b16 %v4382, %v4378
    %v5463 = vpack.c.b16 %v4383, %v4379
    %v5464 = vpack.c.b16 %v4388, %v4384
    %v5465 = vpack.c.b16 %v4389, %v4385
    %v5466 = vpack.c.b16 %v4390, %v4386
    %v5467 = vpack.c.b16 %v4391, %v4387
    %v5468 = vpack.c.b16 %v4396, %v4392
    %v5469 = vpack.c.b16 %v4397, %v4393
    %v5470 = vpack.c.b16 %v4398, %v4394
    %v5471 = vpack.c.b16 %v4399, %v4395
    %v5472 = vpack.c.b16 %v4404, %v4400
    %v5473 = vpack.c.b16 %v4405, %v4401
    %v5474 = vpack.c.b16 %v4406, %v4402
    %v5475 = vpack.c.b16 %v4407, %v4403
    %v5476 = vpack.c.b16 %v4412, %v4408
    %v5477 = vpack.c.b16 %v4413, %v4409
    %v5478 = vpack.c.b16 %v4414, %v4410
    %v5479 = vpack.c.b16 %v4415, %v4411
    %v5480 = vpack.c.b16 %v4420, %v4416
    %v5481 = vpack.c.b16 %v4421, %v4417
    %v5482 = vpack.c.b16 %v4422, %v4418
    %v5483 = vpack.c.b16 %v4423, %v4419
    %v5484 = vpack.c.b16 %v4428, %v4424
    %v5485 = vpack.c.b16 %v4429, %v4425
    %v5486 = vpack.c.b16 %v4430, %v4426
    %v5487 = vpack.c.b16 %v4431, %v4427
    %v5488 = vpack.c.b16 %v4436, %v4432
    %v5489 = vpack.c.b16 %v4437, %v4433
    %v5490 = vpack.c.b16 %v4438, %v4434
    %v5491 = vpack.c.b16 %v4439, %v4435
    %v5492 = vpack.c.b16 %v4444, %v4440
    %v5493 = vpack.c.b16 %v4445, %v4441
    %v5494 = vpack.c.b16 %v4446, %v4442
    %v5495 = vpack.c.b16 %v4447, %v4443
    %v5496 = vpack.c.b16 %v4452, %v4448
    %v5497 = vpack.c.b16 %v4453, %v4449
    %v5498 = vpack.c.b16 %v4454, %v4450
    %v5499 = vpack.c.b16 %v4455, %v4451
    %v5500 = vpack.c.b16 %v4460, %v4456
    %v5501 = vpack.c.b16 %v4461, %v4457
    %v5502 = vpack.c.b16 %v4462, %v4458
    %v5503 = vpack.c.b16 %v4463, %v4459
    %v5504 = vpack.c.b16 %v4468, %v4464
    %v5505 = vpack.c.b16 %v4469, %v4465
    %v5506 = vpack.c.b16 %v4470, %v4466
    %v5507 = vpack.c.b16 %v4471, %v4467
    %v5508 = vpack.c.b16 %v4476, %v4472
    %v5509 = vpack.c.b16 %v4477, %v4473
    %v5510 = vpack.c.b16 %v4478, %v4474
    %v5511 = vpack.c.b16 %v4479, %v4475
    %v5512 = vpack.c.b16 %v4484, %v4480
    %v5513 = vpack.c.b16 %v4485, %v4481
    %v5514 = vpack.c.b16 %v4486, %v4482
    %v5515 = vpack.c.b16 %v4487, %v4483
    %v5516 = vpack.c.b16 %v4492, %v4488
    %v5517 = vpack.c.b16 %v4493, %v4489
    %v5518 = vpack.c.b16 %v4494, %v4490
    %v5519 = vpack.c.b16 %v4495, %v4491
    %v6545 = vlaneseq
    %v6546 = vshrl.u32 %v6545, 7
    %v6547 = vsub.s32 0, %v6546
    %v6548 = vrot.slane %v1423, %v6547
    %v6549 = vlaneseq
    %v6550 = vshrl.u32 %v6549, 7
    %v6551 = vsub.s32 1, %v6550
    %v6552 = vrot.slane %v1423, %v6551
    %v6553 = vlaneseq
    %v6554 = vshrl.u32 %v6553, 7
    %v6555 = vsub.s32 2, %v6554
    %v6556 = vrot.slane %v1423, %v6555
    %v6557 = vlaneseq
    %v6558 = vshrl.u32 %v6557, 7
    %v6559 = vsub.s32 3, %v6558
    %v6560 = vrot.slane %v1423, %v6559
    %6565 = vmatprep.subr.bf16.mxu0 %v4497
    %6566 = vmatpush1.bf16.msra.mxu0 %v4496
    %6567 = vmatprep.subr.bf16.mxu0 %v4501
    %6568 = vmatpush1.bf16.msra.mxu0 %v4500
    %6569 = vmatprep.subr.bf16.mxu0 %v4505
    %6570 = vmatpush1.bf16.msra.mxu0 %v4504
    %6571 = vmatprep.subr.bf16.mxu0 %v4509
    %6572 = vmatpush1.bf16.msra.mxu0 %v4508
    %6573 = vmatprep.subr.bf16.mxu0 %v4513
    %6574 = vmatpush1.bf16.msra.mxu0 %v4512
    %6575 = vmatprep.subr.bf16.mxu0 %v4517
    %6576 = vmatpush1.bf16.msra.mxu0 %v4516
    %6577 = vmatprep.subr.bf16.mxu0 %v4521
    %6578 = vmatpush1.bf16.msra.mxu0 %v4520
    %6579 = vmatprep.subr.bf16.mxu0 %v4525
    %6580 = vmatpush1.bf16.msra.mxu0 %v4524
    %6581 = vmatprep.subr.bf16.mxu0 %v4529
    %6582 = vmatpush1.bf16.msra.mxu0 %v4528
    %6583 = vmatprep.subr.bf16.mxu0 %v4533
    %6584 = vmatpush1.bf16.msra.mxu0 %v4532
    %6585 = vmatprep.subr.bf16.mxu0 %v4537
    %6586 = vmatpush1.bf16.msra.mxu0 %v4536
    %6587 = vmatprep.subr.bf16.mxu0 %v4541
    %6588 = vmatpush1.bf16.msra.mxu0 %v4540
    %6589 = vmatprep.subr.bf16.mxu0 %v4545
    %6590 = vmatpush1.bf16.msra.mxu0 %v4544
    %6591 = vmatprep.subr.bf16.mxu0 %v4549
    %6592 = vmatpush1.bf16.msra.mxu0 %v4548
    %6593 = vmatprep.subr.bf16.mxu0 %v4553
    %6594 = vmatpush1.bf16.msra.mxu0 %v4552
    %6595 = vmatprep.subr.bf16.mxu0 %v4557
    %6596 = vmatpush1.bf16.msra.mxu0 %v4556
    %6597 = vmatprep.mubr.bf16.mxu0 %v368
    %6598 = vmatmul.mubr.bf16.gmra.mrb[0].mxu0 %v367
    %v6599 = vpop.f32.mrb[0].mxu0
    %v6600 = vadd.f32 %v6548, %v6599
    %v6601 = vpop.f32.mrb[0].mxu0
    %v6602 = vadd.f32 %v6552, %v6601
    %v6603 = vpop.f32.mrb[0].mxu0
    %v6604 = vpop.f32.mrb[0].mxu0
    %6605 = vdwg.mxu0
    %6606 = vmatprep.subr.bf16.mxu0 %v4561
    %6607 = vmatpush1.bf16.msra.mxu0 %v4560
    %6608 = vmatprep.subr.bf16.mxu0 %v4565
    %6609 = vmatpush1.bf16.msra.mxu0 %v4564
    %6610 = vmatprep.subr.bf16.mxu0 %v4569
    %6611 = vmatpush1.bf16.msra.mxu0 %v4568
    %6612 = vmatprep.subr.bf16.mxu0 %v4573
    %6613 = vmatpush1.bf16.msra.mxu0 %v4572
    %6614 = vmatprep.subr.bf16.mxu0 %v4577
    %6615 = vmatpush1.bf16.msra.mxu0 %v4576
    %6616 = vmatprep.subr.bf16.mxu0 %v4581
    %6617 = vmatpush1.bf16.msra.mxu0 %v4580
    %6618 = vmatprep.subr.bf16.mxu0 %v4585
    %6619 = vmatpush1.bf16.msra.mxu0 %v4584
    %6620 = vmatprep.subr.bf16.mxu0 %v4589
    %6621 = vmatpush1.bf16.msra.mxu0 %v4588
    %6622 = vmatprep.subr.bf16.mxu0 %v4593
    %6623 = vmatpush1.bf16.msra.mxu0 %v4592
    %6624 = vmatprep.subr.bf16.mxu0 %v4597
    %6625 = vmatpush1.bf16.msra.mxu0 %v4596
    %6626 = vmatprep.subr.bf16.mxu0 %v4601
    %6627 = vmatpush1.bf16.msra.mxu0 %v4600
    %6628 = vmatprep.subr.bf16.mxu0 %v4605
    %6629 = vmatpush1.bf16.msra.mxu0 %v4604
    %6630 = vmatprep.subr.bf16.mxu0 %v4609
    %6631 = vmatpush1.bf16.msra.mxu0 %v4608
    %6632 = vmatprep.subr.bf16.mxu0 %v4613
    %6633 = vmatpush1.bf16.msra.mxu0 %v4612
    %6634 = vmatprep.subr.bf16.mxu0 %v4617
    %6635 = vmatpush1.bf16.msra.mxu0 %v4616
    %6636 = vmatprep.subr.bf16.mxu0 %v4621
    %6637 = vmatpush1.bf16.msra.mxu0 %v4620
    %6638 = vmatprep.mubr.bf16.mxu0 %v370
    %6639 = vmatmul.mubr.bf16.gmra.mrb[0].mxu0 %v369
    %v6640 = vpop.f32.mrb[0].mxu0
    %v6641 = vadd.f32 %v6600, %v6640
    %v6642 = vpop.f32.mrb[0].mxu0
    %v6643 = vadd.f32 %v6602, %v6642
    %v6644 = vpop.f32.mrb[0].mxu0
    %v6645 = vpop.f32.mrb[0].mxu0
    %6646 = vdwg.mxu0
    %6647 = vmatprep.subr.bf16.mxu0 %v4625
    %6648 = vmatpush1.bf16.msra.mxu0 %v4624
    %6649 = vmatprep.subr.bf16.mxu0 %v4629
    %6650 = vmatpush1.bf16.msra.mxu0 %v4628
    %6651 = vmatprep.subr.bf16.mxu0 %v4633
    %6652 = vmatpush1.bf16.msra.mxu0 %v4632
    %6653 = vmatprep.subr.bf16.mxu0 %v4637
    %6654 = vmatpush1.bf16.msra.mxu0 %v4636
    %6655 = vmatprep.subr.bf16.mxu0 %v4641
    %6656 = vmatpush1.bf16.msra.mxu0 %v4640
    %6657 = vmatprep.subr.bf16.mxu0 %v4645
    %6658 = vmatpush1.bf16.msra.mxu0 %v4644
    %6659 = vmatprep.subr.bf16.mxu0 %v4649
    %6660 = vmatpush1.bf16.msra.mxu0 %v4648
    %6661 = vmatprep.subr.bf16.mxu0 %v4653
    %6662 = vmatpush1.bf16.msra.mxu0 %v4652
    %6663 = vmatprep.subr.bf16.mxu0 %v4657
    %6664 = vmatpush1.bf16.msra.mxu0 %v4656
    %6665 = vmatprep.subr.bf16.mxu0 %v4661
    %6666 = vmatpush1.bf16.msra.mxu0 %v4660
    %6667 = vmatprep.subr.bf16.mxu0 %v4665
    %6668 = vmatpush1.bf16.msra.mxu0 %v4664
    %6669 = vmatprep.subr.bf16.mxu0 %v4669
    %6670 = vmatpush1.bf16.msra.mxu0 %v4668
    %6671 = vmatprep.subr.bf16.mxu0 %v4673
    %6672 = vmatpush1.bf16.msra.mxu0 %v4672
    %6673 = vmatprep.subr.bf16.mxu0 %v4677
    %6674 = vmatpush1.bf16.msra.mxu0 %v4676
    %6675 = vmatprep.subr.bf16.mxu0 %v4681
    %6676 = vmatpush1.bf16.msra.mxu0 %v4680
    %6677 = vmatprep.subr.bf16.mxu0 %v4685
    %6678 = vmatpush1.bf16.msra.mxu0 %v4684
    %6679 = vmatprep.mubr.bf16.mxu0 %v372
    %6680 = vmatmul.mubr.bf16.gmra.mrb[0].mxu0 %v371
    %v6681 = vpop.f32.mrb[0].mxu0
    %v6682 = vadd.f32 %v6641, %v6681
    %v6683 = vpop.f32.mrb[0].mxu0
    %v6684 = vadd.f32 %v6643, %v6683
    %v6685 = vpop.f32.mrb[0].mxu0
    %v6686 = vpop.f32.mrb[0].mxu0
    %6687 = vdwg.mxu0
    %6688 = vmatprep.subr.bf16.mxu0 %v4689
    %6689 = vmatpush1.bf16.msra.mxu0 %v4688
    %6690 = vmatprep.subr.bf16.mxu0 %v4693
    %6691 = vmatpush1.bf16.msra.mxu0 %v4692
    %6692 = vmatprep.subr.bf16.mxu0 %v4697
    %6693 = vmatpush1.bf16.msra.mxu0 %v4696
    %6694 = vmatprep.subr.bf16.mxu0 %v4701
    %6695 = vmatpush1.bf16.msra.mxu0 %v4700
    %6696 = vmatprep.subr.bf16.mxu0 %v4705
    %6697 = vmatpush1.bf16.msra.mxu0 %v4704
    %6698 = vmatprep.subr.bf16.mxu0 %v4709
    %6699 = vmatpush1.bf16.msra.mxu0 %v4708
    %6700 = vmatprep.subr.bf16.mxu0 %v4713
    %6701 = vmatpush1.bf16.msra.mxu0 %v4712
    %6702 = vmatprep.subr.bf16.mxu0 %v4717
    %6703 = vmatpush1.bf16.msra.mxu0 %v4716
    %6704 = vmatprep.subr.bf16.mxu0 %v4721
    %6705 = vmatpush1.bf16.msra.mxu0 %v4720
    %6706 = vmatprep.subr.bf16.mxu0 %v4725
    %6707 = vmatpush1.bf16.msra.mxu0 %v4724
    %6708 = vmatprep.subr.bf16.mxu0 %v4729
    %6709 = vmatpush1.bf16.msra.mxu0 %v4728
    %6710 = vmatprep.subr.bf16.mxu0 %v4733
    %6711 = vmatpush1.bf16.msra.mxu0 %v4732
    %6712 = vmatprep.subr.bf16.mxu0 %v4737
    %6713 = vmatpush1.bf16.msra.mxu0 %v4736
    %6714 = vmatprep.subr.bf16.mxu0 %v4741
    %6715 = vmatpush1.bf16.msra.mxu0 %v4740
    %6716 = vmatprep.subr.bf16.mxu0 %v4745
    %6717 = vmatpush1.bf16.msra.mxu0 %v4744
    %6718 = vmatprep.subr.bf16.mxu0 %v4749
    %6719 = vmatpush1.bf16.msra.mxu0 %v4748
    %6720 = vmatprep.mubr.bf16.mxu0 %v374
    %6721 = vmatmul.mubr.bf16.gmra.mrb[0].mxu0 %v373
    %v6722 = vpop.f32.mrb[0].mxu0
    %v6723 = vadd.f32 %v6682, %v6722
    %v6724 = vpop.f32.mrb[0].mxu0
    %v6725 = vadd.f32 %v6684, %v6724
    %v6726 = vpop.f32.mrb[0].mxu0
    %v6727 = vpop.f32.mrb[0].mxu0
    %6728 = vdwg.mxu0
    %6729 = vmatprep.subr.bf16.mxu0 %v4753
    %6730 = vmatpush1.bf16.msra.mxu0 %v4752
    %6731 = vmatprep.subr.bf16.mxu0 %v4757
    %6732 = vmatpush1.bf16.msra.mxu0 %v4756
    %6733 = vmatprep.subr.bf16.mxu0 %v4761
    %6734 = vmatpush1.bf16.msra.mxu0 %v4760
    %6735 = vmatprep.subr.bf16.mxu0 %v4765
    %6736 = vmatpush1.bf16.msra.mxu0 %v4764
    %6737 = vmatprep.subr.bf16.mxu0 %v4769
    %6738 = vmatpush1.bf16.msra.mxu0 %v4768
    %6739 = vmatprep.subr.bf16.mxu0 %v4773
    %6740 = vmatpush1.bf16.msra.mxu0 %v4772
    %6741 = vmatprep.subr.bf16.mxu0 %v4777
    %6742 = vmatpush1.bf16.msra.mxu0 %v4776
    %6743 = vmatprep.subr.bf16.mxu0 %v4781
    %6744 = vmatpush1.bf16.msra.mxu0 %v4780
    %6745 = vmatprep.subr.bf16.mxu0 %v4785
    %6746 = vmatpush1.bf16.msra.mxu0 %v4784
    %6747 = vmatprep.subr.bf16.mxu0 %v4789
    %6748 = vmatpush1.bf16.msra.mxu0 %v4788
    %6749 = vmatprep.subr.bf16.mxu0 %v4793
    %6750 = vmatpush1.bf16.msra.mxu0 %v4792
    %6751 = vmatprep.subr.bf16.mxu0 %v4797
    %6752 = vmatpush1.bf16.msra.mxu0 %v4796
    %6753 = vmatprep.subr.bf16.mxu0 %v4801
    %6754 = vmatpush1.bf16.msra.mxu0 %v4800
    %6755 = vmatprep.subr.bf16.mxu0 %v4805
    %6756 = vmatpush1.bf16.msra.mxu0 %v4804
    %6757 = vmatprep.subr.bf16.mxu0 %v4809
    %6758 = vmatpush1.bf16.msra.mxu0 %v4808
    %6759 = vmatprep.subr.bf16.mxu0 %v4813
    %6760 = vmatpush1.bf16.msra.mxu0 %v4812
    %6761 = vmatprep.mubr.bf16.mxu0 %v376
    %6762 = vmatmul.mubr.bf16.gmra.mrb[0].mxu0 %v375
    %v6763 = vpop.f32.mrb[0].mxu0
    %v6764 = vadd.f32 %v6723, %v6763
    %v6765 = vpop.f32.mrb[0].mxu0
    %v6766 = vadd.f32 %v6725, %v6765
    %v6767 = vpop.f32.mrb[0].mxu0
    %v6768 = vpop.f32.mrb[0].mxu0
    %6769 = vdwg.mxu0
    %6770 = vmatprep.subr.bf16.mxu0 %v4817
    %6771 = vmatpush1.bf16.msra.mxu0 %v4816
    %6772 = vmatprep.subr.bf16.mxu0 %v4821
    %6773 = vmatpush1.bf16.msra.mxu0 %v4820
    %6774 = vmatprep.subr.bf16.mxu0 %v4825
    %6775 = vmatpush1.bf16.msra.mxu0 %v4824
    %6776 = vmatprep.subr.bf16.mxu0 %v4829
    %6777 = vmatpush1.bf16.msra.mxu0 %v4828
    %6778 = vmatprep.subr.bf16.mxu0 %v4833
    %6779 = vmatpush1.bf16.msra.mxu0 %v4832
    %6780 = vmatprep.subr.bf16.mxu0 %v4837
    %6781 = vmatpush1.bf16.msra.mxu0 %v4836
    %6782 = vmatprep.subr.bf16.mxu0 %v4841
    %6783 = vmatpush1.bf16.msra.mxu0 %v4840
    %6784 = vmatprep.subr.bf16.mxu0 %v4845
    %6785 = vmatpush1.bf16.msra.mxu0 %v4844
    %6786 = vmatprep.subr.bf16.mxu0 %v4849
    %6787 = vmatpush1.bf16.msra.mxu0 %v4848
    %6788 = vmatprep.subr.bf16.mxu0 %v4853
    %6789 = vmatpush1.bf16.msra.mxu0 %v4852
    %6790 = vmatprep.subr.bf16.mxu0 %v4857
    %6791 = vmatpush1.bf16.msra.mxu0 %v4856
    %6792 = vmatprep.subr.bf16.mxu0 %v4861
    %6793 = vmatpush1.bf16.msra.mxu0 %v4860
    %6794 = vmatprep.subr.bf16.mxu0 %v4865
    %6795 = vmatpush1.bf16.msra.mxu0 %v4864
    %6796 = vmatprep.subr.bf16.mxu0 %v4869
    %6797 = vmatpush1.bf16.msra.mxu0 %v4868
    %6798 = vmatprep.subr.bf16.mxu0 %v4873
    %6799 = vmatpush1.bf16.msra.mxu0 %v4872
    %6800 = vmatprep.subr.bf16.mxu0 %v4877
    %6801 = vmatpush1.bf16.msra.mxu0 %v4876
    %6802 = vmatprep.mubr.bf16.mxu0 %v378
    %6803 = vmatmul.mubr.bf16.gmra.mrb[0].mxu0 %v377
    %v6804 = vpop.f32.mrb[0].mxu0
    %v6805 = vadd.f32 %v6764, %v6804
    %v6806 = vpop.f32.mrb[0].mxu0
    %v6807 = vadd.f32 %v6766, %v6806
    %v6808 = vpop.f32.mrb[0].mxu0
    %v6809 = vpop.f32.mrb[0].mxu0
    %6810 = vdwg.mxu0
    %6811 = vmatprep.subr.bf16.mxu0 %v4881
    %6812 = vmatpush1.bf16.msra.mxu0 %v4880
    %6813 = vmatprep.subr.bf16.mxu0 %v4885
    %6814 = vmatpush1.bf16.msra.mxu0 %v4884
    %6815 = vmatprep.subr.bf16.mxu0 %v4889
    %6816 = vmatpush1.bf16.msra.mxu0 %v4888
    %6817 = vmatprep.subr.bf16.mxu0 %v4893
    %6818 = vmatpush1.bf16.msra.mxu0 %v4892
    %6819 = vmatprep.subr.bf16.mxu0 %v4897
    %6820 = vmatpush1.bf16.msra.mxu0 %v4896
    %6821 = vmatprep.subr.bf16.mxu0 %v4901
    %6822 = vmatpush1.bf16.msra.mxu0 %v4900
    %6823 = vmatprep.subr.bf16.mxu0 %v4905
    %6824 = vmatpush1.bf16.msra.mxu0 %v4904
    %6825 = vmatprep.subr.bf16.mxu0 %v4909
    %6826 = vmatpush1.bf16.msra.mxu0 %v4908
    %6827 = vmatprep.subr.bf16.mxu0 %v4913
    %6828 = vmatpush1.bf16.msra.mxu0 %v4912
    %6829 = vmatprep.subr.bf16.mxu0 %v4917
    %6830 = vmatpush1.bf16.msra.mxu0 %v4916
    %6831 = vmatprep.subr.bf16.mxu0 %v4921
    %6832 = vmatpush1.bf16.msra.mxu0 %v4920
    %6833 = vmatprep.subr.bf16.mxu0 %v4925
    %6834 = vmatpush1.bf16.msra.mxu0 %v4924
    %6835 = vmatprep.subr.bf16.mxu0 %v4929
    %6836 = vmatpush1.bf16.msra.mxu0 %v4928
    %6837 = vmatprep.subr.bf16.mxu0 %v4933
    %6838 = vmatpush1.bf16.msra.mxu0 %v4932
    %6839 = vmatprep.subr.bf16.mxu0 %v4937
    %6840 = vmatpush1.bf16.msra.mxu0 %v4936
    %6841 = vmatprep.subr.bf16.mxu0 %v4941
    %6842 = vmatpush1.bf16.msra.mxu0 %v4940
    %6843 = vmatprep.mubr.bf16.mxu0 %v380
    %6844 = vmatmul.mubr.bf16.gmra.mrb[0].mxu0 %v379
    %v6845 = vpop.f32.mrb[0].mxu0
    %v6846 = vadd.f32 %v6805, %v6845
    %v6847 = vpop.f32.mrb[0].mxu0
    %v6848 = vadd.f32 %v6807, %v6847
    %v6849 = vpop.f32.mrb[0].mxu0
    %v6850 = vpop.f32.mrb[0].mxu0
    %6851 = vdwg.mxu0
    %6852 = vmatprep.subr.bf16.mxu0 %v4945
    %6853 = vmatpush1.bf16.msra.mxu0 %v4944
    %6854 = vmatprep.subr.bf16.mxu0 %v4949
    %6855 = vmatpush1.bf16.msra.mxu0 %v4948
    %6856 = vmatprep.subr.bf16.mxu0 %v4953
    %6857 = vmatpush1.bf16.msra.mxu0 %v4952
    %6858 = vmatprep.subr.bf16.mxu0 %v4957
    %6859 = vmatpush1.bf16.msra.mxu0 %v4956
    %6860 = vmatprep.subr.bf16.mxu0 %v4961
    %6861 = vmatpush1.bf16.msra.mxu0 %v4960
    %6862 = vmatprep.subr.bf16.mxu0 %v4965
    %6863 = vmatpush1.bf16.msra.mxu0 %v4964
    %6864 = vmatprep.subr.bf16.mxu0 %v4969
    %6865 = vmatpush1.bf16.msra.mxu0 %v4968
    %6866 = vmatprep.subr.bf16.mxu0 %v4973
    %6867 = vmatpush1.bf16.msra.mxu0 %v4972
    %6868 = vmatprep.subr.bf16.mxu0 %v4977
    %6869 = vmatpush1.bf16.msra.mxu0 %v4976
    %6870 = vmatprep.subr.bf16.mxu0 %v4981
    %6871 = vmatpush1.bf16.msra.mxu0 %v4980
    %6872 = vmatprep.subr.bf16.mxu0 %v4985
    %6873 = vmatpush1.bf16.msra.mxu0 %v4984
    %6874 = vmatprep.subr.bf16.mxu0 %v4989
    %6875 = vmatpush1.bf16.msra.mxu0 %v4988
    %6876 = vmatprep.subr.bf16.mxu0 %v4993
    %6877 = vmatpush1.bf16.msra.mxu0 %v4992
    %6878 = vmatprep.subr.bf16.mxu0 %v4997
    %6879 = vmatpush1.bf16.msra.mxu0 %v4996
    %6880 = vmatprep.subr.bf16.mxu0 %v5001
    %6881 = vmatpush1.bf16.msra.mxu0 %v5000
    %6882 = vmatprep.subr.bf16.mxu0 %v5005
    %6883 = vmatpush1.bf16.msra.mxu0 %v5004
    %6884 = vmatprep.mubr.bf16.mxu0 %v382
    %6885 = vmatmul.mubr.bf16.gmra.mrb[0].mxu0 %v381
    %v6886 = vpop.f32.mrb[0].mxu0
    %v6887 = vadd.f32 %v6846, %v6886
    %v6888 = vpop.f32.mrb[0].mxu0
    %v6889 = vadd.f32 %v6848, %v6888
    %v6890 = vpop.f32.mrb[0].mxu0
    %v6891 = vpop.f32.mrb[0].mxu0
    %6892 = vdwg.mxu0
    %6893 = vmatprep.subr.bf16.mxu0 %v5009
    %6894 = vmatpush1.bf16.msra.mxu0 %v5008
    %6895 = vmatprep.subr.bf16.mxu0 %v5013
    %6896 = vmatpush1.bf16.msra.mxu0 %v5012
    %6897 = vmatprep.subr.bf16.mxu0 %v5017
    %6898 = vmatpush1.bf16.msra.mxu0 %v5016
    %6899 = vmatprep.subr.bf16.mxu0 %v5021
    %6900 = vmatpush1.bf16.msra.mxu0 %v5020
    %6901 = vmatprep.subr.bf16.mxu0 %v5025
    %6902 = vmatpush1.bf16.msra.mxu0 %v5024
    %6903 = vmatprep.subr.bf16.mxu0 %v5029
    %6904 = vmatpush1.bf16.msra.mxu0 %v5028
    %6905 = vmatprep.subr.bf16.mxu0 %v5033
    %6906 = vmatpush1.bf16.msra.mxu0 %v5032
    %6907 = vmatprep.subr.bf16.mxu0 %v5037
    %6908 = vmatpush1.bf16.msra.mxu0 %v5036
    %6909 = vmatprep.subr.bf16.mxu0 %v5041
    %6910 = vmatpush1.bf16.msra.mxu0 %v5040
    %6911 = vmatprep.subr.bf16.mxu0 %v5045
    %6912 = vmatpush1.bf16.msra.mxu0 %v5044
    %6913 = vmatprep.subr.bf16.mxu0 %v5049
    %6914 = vmatpush1.bf16.msra.mxu0 %v5048
    %6915 = vmatprep.subr.bf16.mxu0 %v5053
    %6916 = vmatpush1.bf16.msra.mxu0 %v5052
    %6917 = vmatprep.subr.bf16.mxu0 %v5057
    %6918 = vmatpush1.bf16.msra.mxu0 %v5056
    %6919 = vmatprep.subr.bf16.mxu0 %v5061
    %6920 = vmatpush1.bf16.msra.mxu0 %v5060
    %6921 = vmatprep.subr.bf16.mxu0 %v5065
    %6922 = vmatpush1.bf16.msra.mxu0 %v5064
    %6923 = vmatprep.subr.bf16.mxu0 %v5069
    %6924 = vmatpush1.bf16.msra.mxu0 %v5068
    %6925 = vmatprep.mubr.bf16.mxu0 %v384
    %6926 = vmatmul.mubr.bf16.gmra.mrb[0].mxu0 %v383
    %v6927 = vpop.f32.mrb[0].mxu0
    %v6928 = vadd.f32 %v6887, %v6927
    %v6929 = vpop.f32.mrb[0].mxu0
    %v6930 = vadd.f32 %v6889, %v6929
    %v6931 = vpop.f32.mrb[0].mxu0
    %v6932 = vpop.f32.mrb[0].mxu0
    %6933 = vdwg.mxu0
    %6934 = vmatprep.subr.bf16.mxu0 %v5073
    %6935 = vmatpush1.bf16.msra.mxu0 %v5072
    %6936 = vmatprep.subr.bf16.mxu0 %v5077
    %6937 = vmatpush1.bf16.msra.mxu0 %v5076
    %6938 = vmatprep.subr.bf16.mxu0 %v5081
    %6939 = vmatpush1.bf16.msra.mxu0 %v5080
    %6940 = vmatprep.subr.bf16.mxu0 %v5085
    %6941 = vmatpush1.bf16.msra.mxu0 %v5084
    %6942 = vmatprep.subr.bf16.mxu0 %v5089
    %6943 = vmatpush1.bf16.msra.mxu0 %v5088
    %6944 = vmatprep.subr.bf16.mxu0 %v5093
    %6945 = vmatpush1.bf16.msra.mxu0 %v5092
    %6946 = vmatprep.subr.bf16.mxu0 %v5097
    %6947 = vmatpush1.bf16.msra.mxu0 %v5096
    %6948 = vmatprep.subr.bf16.mxu0 %v5101
    %6949 = vmatpush1.bf16.msra.mxu0 %v5100
    %6950 = vmatprep.subr.bf16.mxu0 %v5105
    %6951 = vmatpush1.bf16.msra.mxu0 %v5104
    %6952 = vmatprep.subr.bf16.mxu0 %v5109
    %6953 = vmatpush1.bf16.msra.mxu0 %v5108
    %6954 = vmatprep.subr.bf16.mxu0 %v5113
    %6955 = vmatpush1.bf16.msra.mxu0 %v5112
    %6956 = vmatprep.subr.bf16.mxu0 %v5117
    %6957 = vmatpush1.bf16.msra.mxu0 %v5116
    %6958 = vmatprep.subr.bf16.mxu0 %v5121
    %6959 = vmatpush1.bf16.msra.mxu0 %v5120
    %6960 = vmatprep.subr.bf16.mxu0 %v5125
    %6961 = vmatpush1.bf16.msra.mxu0 %v5124
    %6962 = vmatprep.subr.bf16.mxu0 %v5129
    %6963 = vmatpush1.bf16.msra.mxu0 %v5128
    %6964 = vmatprep.subr.bf16.mxu0 %v5133
    %6965 = vmatpush1.bf16.msra.mxu0 %v5132
    %6966 = vmatprep.mubr.bf16.mxu0 %v386
    %6967 = vmatmul.mubr.bf16.gmra.mrb[0].mxu0 %v385
    %v6968 = vpop.f32.mrb[0].mxu0
    %v6969 = vadd.f32 %v6928, %v6968
    %v6970 = vpop.f32.mrb[0].mxu0
    %v6971 = vadd.f32 %v6930, %v6970
    %v6972 = vpop.f32.mrb[0].mxu0
    %v6973 = vpop.f32.mrb[0].mxu0
    %6974 = vdwg.mxu0
    %6975 = vmatprep.subr.bf16.mxu0 %v5137
    %6976 = vmatpush1.bf16.msra.mxu0 %v5136
    %6977 = vmatprep.subr.bf16.mxu0 %v5141
    %6978 = vmatpush1.bf16.msra.mxu0 %v5140
    %6979 = vmatprep.subr.bf16.mxu0 %v5145
    %6980 = vmatpush1.bf16.msra.mxu0 %v5144
    %6981 = vmatprep.subr.bf16.mxu0 %v5149
    %6982 = vmatpush1.bf16.msra.mxu0 %v5148
    %6983 = vmatprep.subr.bf16.mxu0 %v5153
    %6984 = vmatpush1.bf16.msra.mxu0 %v5152
    %6985 = vmatprep.subr.bf16.mxu0 %v5157
    %6986 = vmatpush1.bf16.msra.mxu0 %v5156
    %6987 = vmatprep.subr.bf16.mxu0 %v5161
    %6988 = vmatpush1.bf16.msra.mxu0 %v5160
    %6989 = vmatprep.subr.bf16.mxu0 %v5165
    %6990 = vmatpush1.bf16.msra.mxu0 %v5164
    %6991 = vmatprep.subr.bf16.mxu0 %v5169
    %6992 = vmatpush1.bf16.msra.mxu0 %v5168
    %6993 = vmatprep.subr.bf16.mxu0 %v5173
    %6994 = vmatpush1.bf16.msra.mxu0 %v5172
    %6995 = vmatprep.subr.bf16.mxu0 %v5177
    %6996 = vmatpush1.bf16.msra.mxu0 %v5176
    %6997 = vmatprep.subr.bf16.mxu0 %v5181
    %6998 = vmatpush1.bf16.msra.mxu0 %v5180
    %6999 = vmatprep.subr.bf16.mxu0 %v5185
    %7000 = vmatpush1.bf16.msra.mxu0 %v5184
    %7001 = vmatprep.subr.bf16.mxu0 %v5189
    %7002 = vmatpush1.bf16.msra.mxu0 %v5188
    %7003 = vmatprep.subr.bf16.mxu0 %v5193
    %7004 = vmatpush1.bf16.msra.mxu0 %v5192
    %7005 = vmatprep.subr.bf16.mxu0 %v5197
    %7006 = vmatpush1.bf16.msra.mxu0 %v5196
    %7007 = vmatprep.mubr.bf16.mxu0 %v388
    %7008 = vmatmul.mubr.bf16.gmra.mrb[0].mxu0 %v387
    %v7009 = vpop.f32.mrb[0].mxu0
    %v7010 = vadd.f32 %v6969, %v7009
    %v7011 = vpop.f32.mrb[0].mxu0
    %v7012 = vadd.f32 %v6971, %v7011
    %v7013 = vpop.f32.mrb[0].mxu0
    %v7014 = vpop.f32.mrb[0].mxu0
    %7015 = vdwg.mxu0
    %7016 = vmatprep.subr.bf16.mxu0 %v5201
    %7017 = vmatpush1.bf16.msra.mxu0 %v5200
    %7018 = vmatprep.subr.bf16.mxu0 %v5205
    %7019 = vmatpush1.bf16.msra.mxu0 %v5204
    %7020 = vmatprep.subr.bf16.mxu0 %v5209
    %7021 = vmatpush1.bf16.msra.mxu0 %v5208
    %7022 = vmatprep.subr.bf16.mxu0 %v5213
    %7023 = vmatpush1.bf16.msra.mxu0 %v5212
    %7024 = vmatprep.subr.bf16.mxu0 %v5217
    %7025 = vmatpush1.bf16.msra.mxu0 %v5216
    %7026 = vmatprep.subr.bf16.mxu0 %v5221
    %7027 = vmatpush1.bf16.msra.mxu0 %v5220
    %7028 = vmatprep.subr.bf16.mxu0 %v5225
    %7029 = vmatpush1.bf16.msra.mxu0 %v5224
    %7030 = vmatprep.subr.bf16.mxu0 %v5229
    %7031 = vmatpush1.bf16.msra.mxu0 %v5228
    %7032 = vmatprep.subr.bf16.mxu0 %v5233
    %7033 = vmatpush1.bf16.msra.mxu0 %v5232
    %7034 = vmatprep.subr.bf16.mxu0 %v5237
    %7035 = vmatpush1.bf16.msra.mxu0 %v5236
    %7036 = vmatprep.subr.bf16.mxu0 %v5241
    %7037 = vmatpush1.bf16.msra.mxu0 %v5240
    %7038 = vmatprep.subr.bf16.mxu0 %v5245
    %7039 = vmatpush1.bf16.msra.mxu0 %v5244
    %7040 = vmatprep.subr.bf16.mxu0 %v5249
    %7041 = vmatpush1.bf16.msra.mxu0 %v5248
    %7042 = vmatprep.subr.bf16.mxu0 %v5253
    %7043 = vmatpush1.bf16.msra.mxu0 %v5252
    %7044 = vmatprep.subr.bf16.mxu0 %v5257
    %7045 = vmatpush1.bf16.msra.mxu0 %v5256
    %7046 = vmatprep.subr.bf16.mxu0 %v5261
    %7047 = vmatpush1.bf16.msra.mxu0 %v5260
    %7048 = vmatprep.mubr.bf16.mxu0 %v390
    %7049 = vmatmul.mubr.bf16.gmra.mrb[0].mxu0 %v389
    %v7050 = vpop.f32.mrb[0].mxu0
    %v7051 = vadd.f32 %v7010, %v7050
    %v7052 = vpop.f32.mrb[0].mxu0
    %v7053 = vadd.f32 %v7012, %v7052
    %v7054 = vpop.f32.mrb[0].mxu0
    %v7055 = vpop.f32.mrb[0].mxu0
    %7056 = vdwg.mxu0
    %7057 = vmatprep.subr.bf16.mxu0 %v5265
    %7058 = vmatpush1.bf16.msra.mxu0 %v5264
    %7059 = vmatprep.subr.bf16.mxu0 %v5269
    %7060 = vmatpush1.bf16.msra.mxu0 %v5268
    %7061 = vmatprep.subr.bf16.mxu0 %v5273
    %7062 = vmatpush1.bf16.msra.mxu0 %v5272
    %7063 = vmatprep.subr.bf16.mxu0 %v5277
    %7064 = vmatpush1.bf16.msra.mxu0 %v5276
    %7065 = vmatprep.subr.bf16.mxu0 %v5281
    %7066 = vmatpush1.bf16.msra.mxu0 %v5280
    %7067 = vmatprep.subr.bf16.mxu0 %v5285
    %7068 = vmatpush1.bf16.msra.mxu0 %v5284
    %7069 = vmatprep.subr.bf16.mxu0 %v5289
    %7070 = vmatpush1.bf16.msra.mxu0 %v5288
    %7071 = vmatprep.subr.bf16.mxu0 %v5293
    %7072 = vmatpush1.bf16.msra.mxu0 %v5292
    %7073 = vmatprep.subr.bf16.mxu0 %v5297
    %7074 = vmatpush1.bf16.msra.mxu0 %v5296
    %7075 = vmatprep.subr.bf16.mxu0 %v5301
    %7076 = vmatpush1.bf16.msra.mxu0 %v5300
    %7077 = vmatprep.subr.bf16.mxu0 %v5305
    %7078 = vmatpush1.bf16.msra.mxu0 %v5304
    %7079 = vmatprep.subr.bf16.mxu0 %v5309
    %7080 = vmatpush1.bf16.msra.mxu0 %v5308
    %7081 = vmatprep.subr.bf16.mxu0 %v5313
    %7082 = vmatpush1.bf16.msra.mxu0 %v5312
    %7083 = vmatprep.subr.bf16.mxu0 %v5317
    %7084 = vmatpush1.bf16.msra.mxu0 %v5316
    %7085 = vmatprep.subr.bf16.mxu0 %v5321
    %7086 = vmatpush1.bf16.msra.mxu0 %v5320
    %7087 = vmatprep.subr.bf16.mxu0 %v5325
    %7088 = vmatpush1.bf16.msra.mxu0 %v5324
    %7089 = vmatprep.mubr.bf16.mxu0 %v392
    %7090 = vmatmul.mubr.bf16.gmra.mrb[0].mxu0 %v391
    %v7091 = vpop.f32.mrb[0].mxu0
    %v7092 = vadd.f32 %v7051, %v7091
    %v7093 = vpop.f32.mrb[0].mxu0
    %v7094 = vadd.f32 %v7053, %v7093
    %v7095 = vpop.f32.mrb[0].mxu0
    %v7096 = vpop.f32.mrb[0].mxu0
    %7097 = vdwg.mxu0
    %7098 = vmatprep.subr.bf16.mxu0 %v5329
    %7099 = vmatpush1.bf16.msra.mxu0 %v5328
    %7100 = vmatprep.subr.bf16.mxu0 %v5333
    %7101 = vmatpush1.bf16.msra.mxu0 %v5332
    %7102 = vmatprep.subr.bf16.mxu0 %v5337
    %7103 = vmatpush1.bf16.msra.mxu0 %v5336
    %7104 = vmatprep.subr.bf16.mxu0 %v5341
    %7105 = vmatpush1.bf16.msra.mxu0 %v5340
    %7106 = vmatprep.subr.bf16.mxu0 %v5345
    %7107 = vmatpush1.bf16.msra.mxu0 %v5344
    %7108 = vmatprep.subr.bf16.mxu0 %v5349
    %7109 = vmatpush1.bf16.msra.mxu0 %v5348
    %7110 = vmatprep.subr.bf16.mxu0 %v5353
    %7111 = vmatpush1.bf16.msra.mxu0 %v5352
    %7112 = vmatprep.subr.bf16.mxu0 %v5357
    %7113 = vmatpush1.bf16.msra.mxu0 %v5356
    %7114 = vmatprep.subr.bf16.mxu0 %v5361
    %7115 = vmatpush1.bf16.msra.mxu0 %v5360
    %7116 = vmatprep.subr.bf16.mxu0 %v5365
    %7117 = vmatpush1.bf16.msra.mxu0 %v5364
    %7118 = vmatprep.subr.bf16.mxu0 %v5369
    %7119 = vmatpush1.bf16.msra.mxu0 %v5368
    %7120 = vmatprep.subr.bf16.mxu0 %v5373
    %7121 = vmatpush1.bf16.msra.mxu0 %v5372
    %7122 = vmatprep.subr.bf16.mxu0 %v5377
    %7123 = vmatpush1.bf16.msra.mxu0 %v5376
    %7124 = vmatprep.subr.bf16.mxu0 %v5381
    %7125 = vmatpush1.bf16.msra.mxu0 %v5380
    %7126 = vmatprep.subr.bf16.mxu0 %v5385
    %7127 = vmatpush1.bf16.msra.mxu0 %v5384
    %7128 = vmatprep.subr.bf16.mxu0 %v5389
    %7129 = vmatpush1.bf16.msra.mxu0 %v5388
    %7130 = vmatprep.mubr.bf16.mxu0 %v394
    %7131 = vmatmul.mubr.bf16.gmra.mrb[0].mxu0 %v393
    %v7132 = vpop.f32.mrb[0].mxu0
    %v7133 = vadd.f32 %v7092, %v7132
    %v7134 = vpop.f32.mrb[0].mxu0
    %v7135 = vadd.f32 %v7094, %v7134
    %v7136 = vpop.f32.mrb[0].mxu0
    %v7137 = vpop.f32.mrb[0].mxu0
    %7138 = vdwg.mxu0
    %7139 = vmatprep.subr.bf16.mxu0 %v5393
    %7140 = vmatpush1.bf16.msra.mxu0 %v5392
    %7141 = vmatprep.subr.bf16.mxu0 %v5397
    %7142 = vmatpush1.bf16.msra.mxu0 %v5396
    %7143 = vmatprep.subr.bf16.mxu0 %v5401
    %7144 = vmatpush1.bf16.msra.mxu0 %v5400
    %7145 = vmatprep.subr.bf16.mxu0 %v5405
    %7146 = vmatpush1.bf16.msra.mxu0 %v5404
    %7147 = vmatprep.subr.bf16.mxu0 %v5409
    %7148 = vmatpush1.bf16.msra.mxu0 %v5408
    %7149 = vmatprep.subr.bf16.mxu0 %v5413
    %7150 = vmatpush1.bf16.msra.mxu0 %v5412
    %7151 = vmatprep.subr.bf16.mxu0 %v5417
    %7152 = vmatpush1.bf16.msra.mxu0 %v5416
    %7153 = vmatprep.subr.bf16.mxu0 %v5421
    %7154 = vmatpush1.bf16.msra.mxu0 %v5420
    %7155 = vmatprep.subr.bf16.mxu0 %v5425
    %7156 = vmatpush1.bf16.msra.mxu0 %v5424
    %7157 = vmatprep.subr.bf16.mxu0 %v5429
    %7158 = vmatpush1.bf16.msra.mxu0 %v5428
    %7159 = vmatprep.subr.bf16.mxu0 %v5433
    %7160 = vmatpush1.bf16.msra.mxu0 %v5432
    %7161 = vmatprep.subr.bf16.mxu0 %v5437
    %7162 = vmatpush1.bf16.msra.mxu0 %v5436
    %7163 = vmatprep.subr.bf16.mxu0 %v5441
    %7164 = vmatpush1.bf16.msra.mxu0 %v5440
    %7165 = vmatprep.subr.bf16.mxu0 %v5445
    %7166 = vmatpush1.bf16.msra.mxu0 %v5444
    %7167 = vmatprep.subr.bf16.mxu0 %v5449
    %7168 = vmatpush1.bf16.msra.mxu0 %v5448
    %7169 = vmatprep.subr.bf16.mxu0 %v5453
    %7170 = vmatpush1.bf16.msra.mxu0 %v5452
    %7171 = vmatprep.mubr.bf16.mxu0 %v396
    %7172 = vmatmul.mubr.bf16.gmra.mrb[0].mxu0 %v395
    %v7173 = vpop.f32.mrb[0].mxu0
    %v7174 = vadd.f32 %v7133, %v7173
    %v7175 = vpop.f32.mrb[0].mxu0
    %v7176 = vadd.f32 %v7135, %v7175
    %v7177 = vpop.f32.mrb[0].mxu0
    %v7178 = vpop.f32.mrb[0].mxu0
    %7179 = vdwg.mxu0
    %7180 = vmatprep.subr.bf16.mxu0 %v5457
    %7181 = vmatpush1.bf16.msra.mxu0 %v5456
    %7182 = vmatprep.subr.bf16.mxu0 %v5461
    %7183 = vmatpush1.bf16.msra.mxu0 %v5460
    %7184 = vmatprep.subr.bf16.mxu0 %v5465
    %7185 = vmatpush1.bf16.msra.mxu0 %v5464
    %7186 = vmatprep.subr.bf16.mxu0 %v5469
    %7187 = vmatpush1.bf16.msra.mxu0 %v5468
    %7188 = vmatprep.subr.bf16.mxu0 %v5473
    %7189 = vmatpush1.bf16.msra.mxu0 %v5472
    %7190 = vmatprep.subr.bf16.mxu0 %v5477
    %7191 = vmatpush1.bf16.msra.mxu0 %v5476
    %7192 = vmatprep.subr.bf16.mxu0 %v5481
    %7193 = vmatpush1.bf16.msra.mxu0 %v5480
    %7194 = vmatprep.subr.bf16.mxu0 %v5485
    %7195 = vmatpush1.bf16.msra.mxu0 %v5484
    %7196 = vmatprep.subr.bf16.mxu0 %v5489
    %7197 = vmatpush1.bf16.msra.mxu0 %v5488
    %7198 = vmatprep.subr.bf16.mxu0 %v5493
    %7199 = vmatpush1.bf16.msra.mxu0 %v5492
    %7200 = vmatprep.subr.bf16.mxu0 %v5497
    %7201 = vmatpush1.bf16.msra.mxu0 %v5496
    %7202 = vmatprep.subr.bf16.mxu0 %v5501
    %7203 = vmatpush1.bf16.msra.mxu0 %v5500
    %7204 = vmatprep.subr.bf16.mxu0 %v5505
    %7205 = vmatpush1.bf16.msra.mxu0 %v5504
    %7206 = vmatprep.subr.bf16.mxu0 %v5509
    %7207 = vmatpush1.bf16.msra.mxu0 %v5508
    %7208 = vmatprep.subr.bf16.mxu0 %v5513
    %7209 = vmatpush1.bf16.msra.mxu0 %v5512
    %7210 = vmatprep.subr.bf16.mxu0 %v5517
    %7211 = vmatpush1.bf16.msra.mxu0 %v5516
    %7212 = vmatprep.mubr.bf16.mxu0 %v398
    %7213 = vmatmul.mubr.bf16.gmra.mrb[0].mxu0 %v397
    %v7214 = vpop.f32.mrb[0].mxu0
    %v7215 = vadd.f32 %v7174, %v7214
    %v7216 = vpop.f32.mrb[0].mxu0
    %v7217 = vadd.f32 %v7176, %v7216
    %v7218 = vpop.f32.mrb[0].mxu0
    %v7219 = vpop.f32.mrb[0].mxu0
    %7220 = vdwg.mxu0
    %7221 = vmatprep.subr.bf16.mxu0 %v4499
    %7222 = vmatpush1.bf16.msra.mxu0 %v4498
    %7223 = vmatprep.subr.bf16.mxu0 %v4503
    %7224 = vmatpush1.bf16.msra.mxu0 %v4502
    %7225 = vmatprep.subr.bf16.mxu0 %v4507
    %7226 = vmatpush1.bf16.msra.mxu0 %v4506
    %7227 = vmatprep.subr.bf16.mxu0 %v4511
    %7228 = vmatpush1.bf16.msra.mxu0 %v4510
    %7229 = vmatprep.subr.bf16.mxu0 %v4515
    %7230 = vmatpush1.bf16.msra.mxu0 %v4514
    %7231 = vmatprep.subr.bf16.mxu0 %v4519
    %7232 = vmatpush1.bf16.msra.mxu0 %v4518
    %7233 = vmatprep.subr.bf16.mxu0 %v4523
    %7234 = vmatpush1.bf16.msra.mxu0 %v4522
    %7235 = vmatprep.subr.bf16.mxu0 %v4527
    %7236 = vmatpush1.bf16.msra.mxu0 %v4526
    %7237 = vmatprep.subr.bf16.mxu0 %v4531
    %7238 = vmatpush1.bf16.msra.mxu0 %v4530
    %7239 = vmatprep.subr.bf16.mxu0 %v4535
    %7240 = vmatpush1.bf16.msra.mxu0 %v4534
    %7241 = vmatprep.subr.bf16.mxu0 %v4539
    %7242 = vmatpush1.bf16.msra.mxu0 %v4538
    %7243 = vmatprep.subr.bf16.mxu0 %v4543
    %7244 = vmatpush1.bf16.msra.mxu0 %v4542
    %7245 = vmatprep.subr.bf16.mxu0 %v4547
    %7246 = vmatpush1.bf16.msra.mxu0 %v4546
    %7247 = vmatprep.subr.bf16.mxu0 %v4551
    %7248 = vmatpush1.bf16.msra.mxu0 %v4550
    %7249 = vmatprep.subr.bf16.mxu0 %v4555
    %7250 = vmatpush1.bf16.msra.mxu0 %v4554
    %7251 = vmatprep.subr.bf16.mxu0 %v4559
    %7252 = vmatpush1.bf16.msra.mxu0 %v4558
    %7253 = vmatprep.mubr.bf16.mxu0 %v368
    %7254 = vmatmul.mubr.bf16.gmra.mrb[0].mxu0 %v367
    %v7255 = vpop.f32.mrb[0].mxu0
    %v7256 = vadd.f32 %v6556, %v7255
    %v7257 = vpop.f32.mrb[0].mxu0
    %v7258 = vadd.f32 %v6560, %v7257
    %v7259 = vpop.f32.mrb[0].mxu0
    %v7260 = vpop.f32.mrb[0].mxu0
    %7261 = vdwg.mxu0
    %7262 = vmatprep.subr.bf16.mxu0 %v4563
    %7263 = vmatpush1.bf16.msra.mxu0 %v4562
    %7264 = vmatprep.subr.bf16.mxu0 %v4567
    %7265 = vmatpush1.bf16.msra.mxu0 %v4566
    %7266 = vmatprep.subr.bf16.mxu0 %v4571
    %7267 = vmatpush1.bf16.msra.mxu0 %v4570
    %7268 = vmatprep.subr.bf16.mxu0 %v4575
    %7269 = vmatpush1.bf16.msra.mxu0 %v4574
    %7270 = vmatprep.subr.bf16.mxu0 %v4579
    %7271 = vmatpush1.bf16.msra.mxu0 %v4578
    %7272 = vmatprep.subr.bf16.mxu0 %v4583
    %7273 = vmatpush1.bf16.msra.mxu0 %v4582
    %7274 = vmatprep.subr.bf16.mxu0 %v4587
    %7275 = vmatpush1.bf16.msra.mxu0 %v4586
    %7276 = vmatprep.subr.bf16.mxu0 %v4591
    %7277 = vmatpush1.bf16.msra.mxu0 %v4590
    %7278 = vmatprep.subr.bf16.mxu0 %v4595
    %7279 = vmatpush1.bf16.msra.mxu0 %v4594
    %7280 = vmatprep.subr.bf16.mxu0 %v4599
    %7281 = vmatpush1.bf16.msra.mxu0 %v4598
    %7282 = vmatprep.subr.bf16.mxu0 %v4603
    %7283 = vmatpush1.bf16.msra.mxu0 %v4602
    %7284 = vmatprep.subr.bf16.mxu0 %v4607
    %7285 = vmatpush1.bf16.msra.mxu0 %v4606
    %7286 = vmatprep.subr.bf16.mxu0 %v4611
    %7287 = vmatpush1.bf16.msra.mxu0 %v4610
    %7288 = vmatprep.subr.bf16.mxu0 %v4615
    %7289 = vmatpush1.bf16.msra.mxu0 %v4614
    %7290 = vmatprep.subr.bf16.mxu0 %v4619
    %7291 = vmatpush1.bf16.msra.mxu0 %v4618
    %7292 = vmatprep.subr.bf16.mxu0 %v4623
    %7293 = vmatpush1.bf16.msra.mxu0 %v4622
    %7294 = vmatprep.mubr.bf16.mxu0 %v370
    %7295 = vmatmul.mubr.bf16.gmra.mrb[0].mxu0 %v369
    %v7296 = vpop.f32.mrb[0].mxu0
    %v7297 = vadd.f32 %v7256, %v7296
    %v7298 = vpop.f32.mrb[0].mxu0
    %v7299 = vadd.f32 %v7258, %v7298
    %v7300 = vpop.f32.mrb[0].mxu0
    %v7301 = vpop.f32.mrb[0].mxu0
    %7302 = vdwg.mxu0
    %7303 = vmatprep.subr.bf16.mxu0 %v4627
    %7304 = vmatpush1.bf16.msra.mxu0 %v4626
    %7305 = vmatprep.subr.bf16.mxu0 %v4631
    %7306 = vmatpush1.bf16.msra.mxu0 %v4630
    %7307 = vmatprep.subr.bf16.mxu0 %v4635
    %7308 = vmatpush1.bf16.msra.mxu0 %v4634
    %7309 = vmatprep.subr.bf16.mxu0 %v4639
    %7310 = vmatpush1.bf16.msra.mxu0 %v4638
    %7311 = vmatprep.subr.bf16.mxu0 %v4643
    %7312 = vmatpush1.bf16.msra.mxu0 %v4642
    %7313 = vmatprep.subr.bf16.mxu0 %v4647
    %7314 = vmatpush1.bf16.msra.mxu0 %v4646
    %7315 = vmatprep.subr.bf16.mxu0 %v4651
    %7316 = vmatpush1.bf16.msra.mxu0 %v4650
    %7317 = vmatprep.subr.bf16.mxu0 %v4655
    %7318 = vmatpush1.bf16.msra.mxu0 %v4654
    %7319 = vmatprep.subr.bf16.mxu0 %v4659
    %7320 = vmatpush1.bf16.msra.mxu0 %v4658
    %7321 = vmatprep.subr.bf16.mxu0 %v4663
    %7322 = vmatpush1.bf16.msra.mxu0 %v4662
    %7323 = vmatprep.subr.bf16.mxu0 %v4667
    %7324 = vmatpush1.bf16.msra.mxu0 %v4666
    %7325 = vmatprep.subr.bf16.mxu0 %v4671
    %7326 = vmatpush1.bf16.msra.mxu0 %v4670
    %7327 = vmatprep.subr.bf16.mxu0 %v4675
    %7328 = vmatpush1.bf16.msra.mxu0 %v4674
    %7329 = vmatprep.subr.bf16.mxu0 %v4679
    %7330 = vmatpush1.bf16.msra.mxu0 %v4678
    %7331 = vmatprep.subr.bf16.mxu0 %v4683
    %7332 = vmatpush1.bf16.msra.mxu0 %v4682
    %7333 = vmatprep.subr.bf16.mxu0 %v4687
    %7334 = vmatpush1.bf16.msra.mxu0 %v4686
    %7335 = vmatprep.mubr.bf16.mxu0 %v372
    %7336 = vmatmul.mubr.bf16.gmra.mrb[0].mxu0 %v371
    %v7337 = vpop.f32.mrb[0].mxu0
    %v7338 = vadd.f32 %v7297, %v7337
    %v7339 = vpop.f32.mrb[0].mxu0
    %v7340 = vadd.f32 %v7299, %v7339
    %v7341 = vpop.f32.mrb[0].mxu0
    %v7342 = vpop.f32.mrb[0].mxu0
    %7343 = vdwg.mxu0
    %7344 = vmatprep.subr.bf16.mxu0 %v4691
    %7345 = vmatpush1.bf16.msra.mxu0 %v4690
    %7346 = vmatprep.subr.bf16.mxu0 %v4695
    %7347 = vmatpush1.bf16.msra.mxu0 %v4694
    %7348 = vmatprep.subr.bf16.mxu0 %v4699
    %7349 = vmatpush1.bf16.msra.mxu0 %v4698
    %7350 = vmatprep.subr.bf16.mxu0 %v4703
    %7351 = vmatpush1.bf16.msra.mxu0 %v4702
    %7352 = vmatprep.subr.bf16.mxu0 %v4707
    %7353 = vmatpush1.bf16.msra.mxu0 %v4706
    %7354 = vmatprep.subr.bf16.mxu0 %v4711
    %7355 = vmatpush1.bf16.msra.mxu0 %v4710
    %7356 = vmatprep.subr.bf16.mxu0 %v4715
    %7357 = vmatpush1.bf16.msra.mxu0 %v4714
    %7358 = vmatprep.subr.bf16.mxu0 %v4719
    %7359 = vmatpush1.bf16.msra.mxu0 %v4718
    %7360 = vmatprep.subr.bf16.mxu0 %v4723
    %7361 = vmatpush1.bf16.msra.mxu0 %v4722
    %7362 = vmatprep.subr.bf16.mxu0 %v4727
    %7363 = vmatpush1.bf16.msra.mxu0 %v4726
    %7364 = vmatprep.subr.bf16.mxu0 %v4731
    %7365 = vmatpush1.bf16.msra.mxu0 %v4730
    %7366 = vmatprep.subr.bf16.mxu0 %v4735
    %7367 = vmatpush1.bf16.msra.mxu0 %v4734
    %7368 = vmatprep.subr.bf16.mxu0 %v4739
    %7369 = vmatpush1.bf16.msra.mxu0 %v4738
    %7370 = vmatprep.subr.bf16.mxu0 %v4743
    %7371 = vmatpush1.bf16.msra.mxu0 %v4742
    %7372 = vmatprep.subr.bf16.mxu0 %v4747
    %7373 = vmatpush1.bf16.msra.mxu0 %v4746
    %7374 = vmatprep.subr.bf16.mxu0 %v4751
    %7375 = vmatpush1.bf16.msra.mxu0 %v4750
    %7376 = vmatprep.mubr.bf16.mxu0 %v374
    %7377 = vmatmul.mubr.bf16.gmra.mrb[0].mxu0 %v373
    %v7378 = vpop.f32.mrb[0].mxu0
    %v7379 = vadd.f32 %v7338, %v7378
    %v7380 = vpop.f32.mrb[0].mxu0
    %v7381 = vadd.f32 %v7340, %v7380
    %v7382 = vpop.f32.mrb[0].mxu0
    %v7383 = vpop.f32.mrb[0].mxu0
    %7384 = vdwg.mxu0
    %7385 = vmatprep.subr.bf16.mxu0 %v4755
    %7386 = vmatpush1.bf16.msra.mxu0 %v4754
    %7387 = vmatprep.subr.bf16.mxu0 %v4759
    %7388 = vmatpush1.bf16.msra.mxu0 %v4758
    %7389 = vmatprep.subr.bf16.mxu0 %v4763
    %7390 = vmatpush1.bf16.msra.mxu0 %v4762
    %7391 = vmatprep.subr.bf16.mxu0 %v4767
    %7392 = vmatpush1.bf16.msra.mxu0 %v4766
    %7393 = vmatprep.subr.bf16.mxu0 %v4771
    %7394 = vmatpush1.bf16.msra.mxu0 %v4770
    %7395 = vmatprep.subr.bf16.mxu0 %v4775
    %7396 = vmatpush1.bf16.msra.mxu0 %v4774
    %7397 = vmatprep.subr.bf16.mxu0 %v4779
    %7398 = vmatpush1.bf16.msra.mxu0 %v4778
    %7399 = vmatprep.subr.bf16.mxu0 %v4783
    %7400 = vmatpush1.bf16.msra.mxu0 %v4782
    %7401 = vmatprep.subr.bf16.mxu0 %v4787
    %7402 = vmatpush1.bf16.msra.mxu0 %v4786
    %7403 = vmatprep.subr.bf16.mxu0 %v4791
    %7404 = vmatpush1.bf16.msra.mxu0 %v4790
    %7405 = vmatprep.subr.bf16.mxu0 %v4795
    %7406 = vmatpush1.bf16.msra.mxu0 %v4794
    %7407 = vmatprep.subr.bf16.mxu0 %v4799
    %7408 = vmatpush1.bf16.msra.mxu0 %v4798
    %7409 = vmatprep.subr.bf16.mxu0 %v4803
    %7410 = vmatpush1.bf16.msra.mxu0 %v4802
    %7411 = vmatprep.subr.bf16.mxu0 %v4807
    %7412 = vmatpush1.bf16.msra.mxu0 %v4806
    %7413 = vmatprep.subr.bf16.mxu0 %v4811
    %7414 = vmatpush1.bf16.msra.mxu0 %v4810
    %7415 = vmatprep.subr.bf16.mxu0 %v4815
    %7416 = vmatpush1.bf16.msra.mxu0 %v4814
    %7417 = vmatprep.mubr.bf16.mxu0 %v376
    %7418 = vmatmul.mubr.bf16.gmra.mrb[0].mxu0 %v375
    %v7419 = vpop.f32.mrb[0].mxu0
    %v7420 = vadd.f32 %v7379, %v7419
    %v7421 = vpop.f32.mrb[0].mxu0
    %v7422 = vadd.f32 %v7381, %v7421
    %v7423 = vpop.f32.mrb[0].mxu0
    %v7424 = vpop.f32.mrb[0].mxu0
    %7425 = vdwg.mxu0
    %7426 = vmatprep.subr.bf16.mxu0 %v4819
    %7427 = vmatpush1.bf16.msra.mxu0 %v4818
    %7428 = vmatprep.subr.bf16.mxu0 %v4823
    %7429 = vmatpush1.bf16.msra.mxu0 %v4822
    %7430 = vmatprep.subr.bf16.mxu0 %v4827
    %7431 = vmatpush1.bf16.msra.mxu0 %v4826
    %7432 = vmatprep.subr.bf16.mxu0 %v4831
    %7433 = vmatpush1.bf16.msra.mxu0 %v4830
    %7434 = vmatprep.subr.bf16.mxu0 %v4835
    %7435 = vmatpush1.bf16.msra.mxu0 %v4834
    %7436 = vmatprep.subr.bf16.mxu0 %v4839
    %7437 = vmatpush1.bf16.msra.mxu0 %v4838
    %7438 = vmatprep.subr.bf16.mxu0 %v4843
    %7439 = vmatpush1.bf16.msra.mxu0 %v4842
    %7440 = vmatprep.subr.bf16.mxu0 %v4847
    %7441 = vmatpush1.bf16.msra.mxu0 %v4846
    %7442 = vmatprep.subr.bf16.mxu0 %v4851
    %7443 = vmatpush1.bf16.msra.mxu0 %v4850
    %7444 = vmatprep.subr.bf16.mxu0 %v4855
    %7445 = vmatpush1.bf16.msra.mxu0 %v4854
    %7446 = vmatprep.subr.bf16.mxu0 %v4859
    %7447 = vmatpush1.bf16.msra.mxu0 %v4858
    %7448 = vmatprep.subr.bf16.mxu0 %v4863
    %7449 = vmatpush1.bf16.msra.mxu0 %v4862
    %7450 = vmatprep.subr.bf16.mxu0 %v4867
    %7451 = vmatpush1.bf16.msra.mxu0 %v4866
    %7452 = vmatprep.subr.bf16.mxu0 %v4871
    %7453 = vmatpush1.bf16.msra.mxu0 %v4870
    %7454 = vmatprep.subr.bf16.mxu0 %v4875
    %7455 = vmatpush1.bf16.msra.mxu0 %v4874
    %7456 = vmatprep.subr.bf16.mxu0 %v4879
    %7457 = vmatpush1.bf16.msra.mxu0 %v4878
    %7458 = vmatprep.mubr.bf16.mxu0 %v378
    %7459 = vmatmul.mubr.bf16.gmra.mrb[0].mxu0 %v377
    %v7460 = vpop.f32.mrb[0].mxu0
    %v7461 = vadd.f32 %v7420, %v7460
    %v7462 = vpop.f32.mrb[0].mxu0
    %v7463 = vadd.f32 %v7422, %v7462
    %v7464 = vpop.f32.mrb[0].mxu0
    %v7465 = vpop.f32.mrb[0].mxu0
    %7466 = vdwg.mxu0
    %7467 = vmatprep.subr.bf16.mxu0 %v4883
    %7468 = vmatpush1.bf16.msra.mxu0 %v4882
    %7469 = vmatprep.subr.bf16.mxu0 %v4887
    %7470 = vmatpush1.bf16.msra.mxu0 %v4886
    %7471 = vmatprep.subr.bf16.mxu0 %v4891
    %7472 = vmatpush1.bf16.msra.mxu0 %v4890
    %7473 = vmatprep.subr.bf16.mxu0 %v4895
    %7474 = vmatpush1.bf16.msra.mxu0 %v4894
    %7475 = vmatprep.subr.bf16.mxu0 %v4899
    %7476 = vmatpush1.bf16.msra.mxu0 %v4898
    %7477 = vmatprep.subr.bf16.mxu0 %v4903
    %7478 = vmatpush1.bf16.msra.mxu0 %v4902
    %7479 = vmatprep.subr.bf16.mxu0 %v4907
    %7480 = vmatpush1.bf16.msra.mxu0 %v4906
    %7481 = vmatprep.subr.bf16.mxu0 %v4911
    %7482 = vmatpush1.bf16.msra.mxu0 %v4910
    %7483 = vmatprep.subr.bf16.mxu0 %v4915
    %7484 = vmatpush1.bf16.msra.mxu0 %v4914
    %7485 = vmatprep.subr.bf16.mxu0 %v4919
    %7486 = vmatpush1.bf16.msra.mxu0 %v4918
    %7487 = vmatprep.subr.bf16.mxu0 %v4923
    %7488 = vmatpush1.bf16.msra.mxu0 %v4922
    %7489 = vmatprep.subr.bf16.mxu0 %v4927
    %7490 = vmatpush1.bf16.msra.mxu0 %v4926
    %7491 = vmatprep.subr.bf16.mxu0 %v4931
    %7492 = vmatpush1.bf16.msra.mxu0 %v4930
    %7493 = vmatprep.subr.bf16.mxu0 %v4935
    %7494 = vmatpush1.bf16.msra.mxu0 %v4934
    %7495 = vmatprep.subr.bf16.mxu0 %v4939
    %7496 = vmatpush1.bf16.msra.mxu0 %v4938
    %7497 = vmatprep.subr.bf16.mxu0 %v4943
    %7498 = vmatpush1.bf16.msra.mxu0 %v4942
    %7499 = vmatprep.mubr.bf16.mxu0 %v380
    %7500 = vmatmul.mubr.bf16.gmra.mrb[0].mxu0 %v379
    %v7501 = vpop.f32.mrb[0].mxu0
    %v7502 = vadd.f32 %v7461, %v7501
    %v7503 = vpop.f32.mrb[0].mxu0
    %v7504 = vadd.f32 %v7463, %v7503
    %v7505 = vpop.f32.mrb[0].mxu0
    %v7506 = vpop.f32.mrb[0].mxu0
    %7507 = vdwg.mxu0
    %7508 = vmatprep.subr.bf16.mxu0 %v4947
    %7509 = vmatpush1.bf16.msra.mxu0 %v4946
    %7510 = vmatprep.subr.bf16.mxu0 %v4951
    %7511 = vmatpush1.bf16.msra.mxu0 %v4950
    %7512 = vmatprep.subr.bf16.mxu0 %v4955
    %7513 = vmatpush1.bf16.msra.mxu0 %v4954
    %7514 = vmatprep.subr.bf16.mxu0 %v4959
    %7515 = vmatpush1.bf16.msra.mxu0 %v4958
    %7516 = vmatprep.subr.bf16.mxu0 %v4963
    %7517 = vmatpush1.bf16.msra.mxu0 %v4962
    %7518 = vmatprep.subr.bf16.mxu0 %v4967
    %7519 = vmatpush1.bf16.msra.mxu0 %v4966
    %7520 = vmatprep.subr.bf16.mxu0 %v4971
    %7521 = vmatpush1.bf16.msra.mxu0 %v4970
    %7522 = vmatprep.subr.bf16.mxu0 %v4975
    %7523 = vmatpush1.bf16.msra.mxu0 %v4974
    %7524 = vmatprep.subr.bf16.mxu0 %v4979
    %7525 = vmatpush1.bf16.msra.mxu0 %v4978
    %7526 = vmatprep.subr.bf16.mxu0 %v4983
    %7527 = vmatpush1.bf16.msra.mxu0 %v4982
    %7528 = vmatprep.subr.bf16.mxu0 %v4987
    %7529 = vmatpush1.bf16.msra.mxu0 %v4986
    %7530 = vmatprep.subr.bf16.mxu0 %v4991
    %7531 = vmatpush1.bf16.msra.mxu0 %v4990
    %7532 = vmatprep.subr.bf16.mxu0 %v4995
    %7533 = vmatpush1.bf16.msra.mxu0 %v4994
    %7534 = vmatprep.subr.bf16.mxu0 %v4999
    %7535 = vmatpush1.bf16.msra.mxu0 %v4998
    %7536 = vmatprep.subr.bf16.mxu0 %v5003
    %7537 = vmatpush1.bf16.msra.mxu0 %v5002
    %7538 = vmatprep.subr.bf16.mxu0 %v5007
    %7539 = vmatpush1.bf16.msra.mxu0 %v5006
    %7540 = vmatprep.mubr.bf16.mxu0 %v382
    %7541 = vmatmul.mubr.bf16.gmra.mrb[0].mxu0 %v381
    %v7542 = vpop.f32.mrb[0].mxu0
    %v7543 = vadd.f32 %v7502, %v7542
    %v7544 = vpop.f32.mrb[0].mxu0
    %v7545 = vadd.f32 %v7504, %v7544
    %v7546 = vpop.f32.mrb[0].mxu0
    %v7547 = vpop.f32.mrb[0].mxu0
    %7548 = vdwg.mxu0
    %7549 = vmatprep.subr.bf16.mxu0 %v5011
    %7550 = vmatpush1.bf16.msra.mxu0 %v5010
    %7551 = vmatprep.subr.bf16.mxu0 %v5015
    %7552 = vmatpush1.bf16.msra.mxu0 %v5014
    %7553 = vmatprep.subr.bf16.mxu0 %v5019
    %7554 = vmatpush1.bf16.msra.mxu0 %v5018
    %7555 = vmatprep.subr.bf16.mxu0 %v5023
    %7556 = vmatpush1.bf16.msra.mxu0 %v5022
    %7557 = vmatprep.subr.bf16.mxu0 %v5027
    %7558 = vmatpush1.bf16.msra.mxu0 %v5026
    %7559 = vmatprep.subr.bf16.mxu0 %v5031
    %7560 = vmatpush1.bf16.msra.mxu0 %v5030
    %7561 = vmatprep.subr.bf16.mxu0 %v5035
    %7562 = vmatpush1.bf16.msra.mxu0 %v5034
    %7563 = vmatprep.subr.bf16.mxu0 %v5039
    %7564 = vmatpush1.bf16.msra.mxu0 %v5038
    %7565 = vmatprep.subr.bf16.mxu0 %v5043
    %7566 = vmatpush1.bf16.msra.mxu0 %v5042
    %7567 = vmatprep.subr.bf16.mxu0 %v5047
    %7568 = vmatpush1.bf16.msra.mxu0 %v5046
    %7569 = vmatprep.subr.bf16.mxu0 %v5051
    %7570 = vmatpush1.bf16.msra.mxu0 %v5050
    %7571 = vmatprep.subr.bf16.mxu0 %v5055
    %7572 = vmatpush1.bf16.msra.mxu0 %v5054
    %7573 = vmatprep.subr.bf16.mxu0 %v5059
    %7574 = vmatpush1.bf16.msra.mxu0 %v5058
    %7575 = vmatprep.subr.bf16.mxu0 %v5063
    %7576 = vmatpush1.bf16.msra.mxu0 %v5062
    %7577 = vmatprep.subr.bf16.mxu0 %v5067
    %7578 = vmatpush1.bf16.msra.mxu0 %v5066
    %7579 = vmatprep.subr.bf16.mxu0 %v5071
    %7580 = vmatpush1.bf16.msra.mxu0 %v5070
    %7581 = vmatprep.mubr.bf16.mxu0 %v384
    %7582 = vmatmul.mubr.bf16.gmra.mrb[0].mxu0 %v383
    %v7583 = vpop.f32.mrb[0].mxu0
    %v7584 = vadd.f32 %v7543, %v7583
    %v7585 = vpop.f32.mrb[0].mxu0
    %v7586 = vadd.f32 %v7545, %v7585
    %v7587 = vpop.f32.mrb[0].mxu0
    %v7588 = vpop.f32.mrb[0].mxu0
    %7589 = vdwg.mxu0
    %7590 = vmatprep.subr.bf16.mxu0 %v5075
    %7591 = vmatpush1.bf16.msra.mxu0 %v5074
    %7592 = vmatprep.subr.bf16.mxu0 %v5079
    %7593 = vmatpush1.bf16.msra.mxu0 %v5078
    %7594 = vmatprep.subr.bf16.mxu0 %v5083
    %7595 = vmatpush1.bf16.msra.mxu0 %v5082
    %7596 = vmatprep.subr.bf16.mxu0 %v5087
    %7597 = vmatpush1.bf16.msra.mxu0 %v5086
    %7598 = vmatprep.subr.bf16.mxu0 %v5091
    %7599 = vmatpush1.bf16.msra.mxu0 %v5090
    %7600 = vmatprep.subr.bf16.mxu0 %v5095
    %7601 = vmatpush1.bf16.msra.mxu0 %v5094
    %7602 = vmatprep.subr.bf16.mxu0 %v5099
    %7603 = vmatpush1.bf16.msra.mxu0 %v5098
    %7604 = vmatprep.subr.bf16.mxu0 %v5103
    %7605 = vmatpush1.bf16.msra.mxu0 %v5102
    %7606 = vmatprep.subr.bf16.mxu0 %v5107
    %7607 = vmatpush1.bf16.msra.mxu0 %v5106
    %7608 = vmatprep.subr.bf16.mxu0 %v5111
    %7609 = vmatpush1.bf16.msra.mxu0 %v5110
    %7610 = vmatprep.subr.bf16.mxu0 %v5115
    %7611 = vmatpush1.bf16.msra.mxu0 %v5114
    %7612 = vmatprep.subr.bf16.mxu0 %v5119
    %7613 = vmatpush1.bf16.msra.mxu0 %v5118
    %7614 = vmatprep.subr.bf16.mxu0 %v5123
    %7615 = vmatpush1.bf16.msra.mxu0 %v5122
    %7616 = vmatprep.subr.bf16.mxu0 %v5127
    %7617 = vmatpush1.bf16.msra.mxu0 %v5126
    %7618 = vmatprep.subr.bf16.mxu0 %v5131
    %7619 = vmatpush1.bf16.msra.mxu0 %v5130
    %7620 = vmatprep.subr.bf16.mxu0 %v5135
    %7621 = vmatpush1.bf16.msra.mxu0 %v5134
    %7622 = vmatprep.mubr.bf16.mxu0 %v386
    %7623 = vmatmul.mubr.bf16.gmra.mrb[0].mxu0 %v385
    %v7624 = vpop.f32.mrb[0].mxu0
    %v7625 = vadd.f32 %v7584, %v7624
    %v7626 = vpop.f32.mrb[0].mxu0
    %v7627 = vadd.f32 %v7586, %v7626
    %v7628 = vpop.f32.mrb[0].mxu0
    %v7629 = vpop.f32.mrb[0].mxu0
    %7630 = vdwg.mxu0
    %7631 = vmatprep.subr.bf16.mxu0 %v5139
    %7632 = vmatpush1.bf16.msra.mxu0 %v5138
    %7633 = vmatprep.subr.bf16.mxu0 %v5143
    %7634 = vmatpush1.bf16.msra.mxu0 %v5142
    %7635 = vmatprep.subr.bf16.mxu0 %v5147
    %7636 = vmatpush1.bf16.msra.mxu0 %v5146
    %7637 = vmatprep.subr.bf16.mxu0 %v5151
    %7638 = vmatpush1.bf16.msra.mxu0 %v5150
    %7639 = vmatprep.subr.bf16.mxu0 %v5155
    %7640 = vmatpush1.bf16.msra.mxu0 %v5154
    %7641 = vmatprep.subr.bf16.mxu0 %v5159
    %7642 = vmatpush1.bf16.msra.mxu0 %v5158
    %7643 = vmatprep.subr.bf16.mxu0 %v5163
    %7644 = vmatpush1.bf16.msra.mxu0 %v5162
    %7645 = vmatprep.subr.bf16.mxu0 %v5167
    %7646 = vmatpush1.bf16.msra.mxu0 %v5166
    %7647 = vmatprep.subr.bf16.mxu0 %v5171
    %7648 = vmatpush1.bf16.msra.mxu0 %v5170
    %7649 = vmatprep.subr.bf16.mxu0 %v5175
    %7650 = vmatpush1.bf16.msra.mxu0 %v5174
    %7651 = vmatprep.subr.bf16.mxu0 %v5179
    %7652 = vmatpush1.bf16.msra.mxu0 %v5178
    %7653 = vmatprep.subr.bf16.mxu0 %v5183
    %7654 = vmatpush1.bf16.msra.mxu0 %v5182
    %7655 = vmatprep.subr.bf16.mxu0 %v5187
    %7656 = vmatpush1.bf16.msra.mxu0 %v5186
    %7657 = vmatprep.subr.bf16.mxu0 %v5191
    %7658 = vmatpush1.bf16.msra.mxu0 %v5190
    %7659 = vmatprep.subr.bf16.mxu0 %v5195
    %7660 = vmatpush1.bf16.msra.mxu0 %v5194
    %7661 = vmatprep.subr.bf16.mxu0 %v5199
    %7662 = vmatpush1.bf16.msra.mxu0 %v5198
    %7663 = vmatprep.mubr.bf16.mxu0 %v388
    %7664 = vmatmul.mubr.bf16.gmra.mrb[0].mxu0 %v387
    %v7665 = vpop.f32.mrb[0].mxu0
    %v7666 = vadd.f32 %v7625, %v7665
    %v7667 = vpop.f32.mrb[0].mxu0
    %v7668 = vadd.f32 %v7627, %v7667
    %v7669 = vpop.f32.mrb[0].mxu0
    %v7670 = vpop.f32.mrb[0].mxu0
    %7671 = vdwg.mxu0
    %7672 = vmatprep.subr.bf16.mxu0 %v5203
    %7673 = vmatpush1.bf16.msra.mxu0 %v5202
    %7674 = vmatprep.subr.bf16.mxu0 %v5207
    %7675 = vmatpush1.bf16.msra.mxu0 %v5206
    %7676 = vmatprep.subr.bf16.mxu0 %v5211
    %7677 = vmatpush1.bf16.msra.mxu0 %v5210
    %7678 = vmatprep.subr.bf16.mxu0 %v5215
    %7679 = vmatpush1.bf16.msra.mxu0 %v5214
    %7680 = vmatprep.subr.bf16.mxu0 %v5219
    %7681 = vmatpush1.bf16.msra.mxu0 %v5218
    %7682 = vmatprep.subr.bf16.mxu0 %v5223
    %7683 = vmatpush1.bf16.msra.mxu0 %v5222
    %7684 = vmatprep.subr.bf16.mxu0 %v5227
    %7685 = vmatpush1.bf16.msra.mxu0 %v5226
    %7686 = vmatprep.subr.bf16.mxu0 %v5231
    %7687 = vmatpush1.bf16.msra.mxu0 %v5230
    %7688 = vmatprep.subr.bf16.mxu0 %v5235
    %7689 = vmatpush1.bf16.msra.mxu0 %v5234
    %7690 = vmatprep.subr.bf16.mxu0 %v5239
    %7691 = vmatpush1.bf16.msra.mxu0 %v5238
    %7692 = vmatprep.subr.bf16.mxu0 %v5243
    %7693 = vmatpush1.bf16.msra.mxu0 %v5242
    %7694 = vmatprep.subr.bf16.mxu0 %v5247
    %7695 = vmatpush1.bf16.msra.mxu0 %v5246
    %7696 = vmatprep.subr.bf16.mxu0 %v5251
    %7697 = vmatpush1.bf16.msra.mxu0 %v5250
    %7698 = vmatprep.subr.bf16.mxu0 %v5255
    %7699 = vmatpush1.bf16.msra.mxu0 %v5254
    %7700 = vmatprep.subr.bf16.mxu0 %v5259
    %7701 = vmatpush1.bf16.msra.mxu0 %v5258
    %7702 = vmatprep.subr.bf16.mxu0 %v5263
    %7703 = vmatpush1.bf16.msra.mxu0 %v5262
    %7704 = vmatprep.mubr.bf16.mxu0 %v390
    %7705 = vmatmul.mubr.bf16.gmra.mrb[0].mxu0 %v389
    %v7706 = vpop.f32.mrb[0].mxu0
    %v7707 = vadd.f32 %v7666, %v7706
    %v7708 = vpop.f32.mrb[0].mxu0
    %v7709 = vadd.f32 %v7668, %v7708
    %v7710 = vpop.f32.mrb[0].mxu0
    %v7711 = vpop.f32.mrb[0].mxu0
    %7712 = vdwg.mxu0
    %7713 = vmatprep.subr.bf16.mxu0 %v5267
    %7714 = vmatpush1.bf16.msra.mxu0 %v5266
    %7715 = vmatprep.subr.bf16.mxu0 %v5271
    %7716 = vmatpush1.bf16.msra.mxu0 %v5270
    %7717 = vmatprep.subr.bf16.mxu0 %v5275
    %7718 = vmatpush1.bf16.msra.mxu0 %v5274
    %7719 = vmatprep.subr.bf16.mxu0 %v5279
    %7720 = vmatpush1.bf16.msra.mxu0 %v5278
    %7721 = vmatprep.subr.bf16.mxu0 %v5283
    %7722 = vmatpush1.bf16.msra.mxu0 %v5282
    %7723 = vmatprep.subr.bf16.mxu0 %v5287
    %7724 = vmatpush1.bf16.msra.mxu0 %v5286
    %7725 = vmatprep.subr.bf16.mxu0 %v5291
    %7726 = vmatpush1.bf16.msra.mxu0 %v5290
    %7727 = vmatprep.subr.bf16.mxu0 %v5295
    %7728 = vmatpush1.bf16.msra.mxu0 %v5294
    %7729 = vmatprep.subr.bf16.mxu0 %v5299
    %7730 = vmatpush1.bf16.msra.mxu0 %v5298
    %7731 = vmatprep.subr.bf16.mxu0 %v5303
    %7732 = vmatpush1.bf16.msra.mxu0 %v5302
    %7733 = vmatprep.subr.bf16.mxu0 %v5307
    %7734 = vmatpush1.bf16.msra.mxu0 %v5306
    %7735 = vmatprep.subr.bf16.mxu0 %v5311
    %7736 = vmatpush1.bf16.msra.mxu0 %v5310
    %7737 = vmatprep.subr.bf16.mxu0 %v5315
    %7738 = vmatpush1.bf16.msra.mxu0 %v5314
    %7739 = vmatprep.subr.bf16.mxu0 %v5319
    %7740 = vmatpush1.bf16.msra.mxu0 %v5318
    %7741 = vmatprep.subr.bf16.mxu0 %v5323
    %7742 = vmatpush1.bf16.msra.mxu0 %v5322
    %7743 = vmatprep.subr.bf16.mxu0 %v5327
    %7744 = vmatpush1.bf16.msra.mxu0 %v5326
    %7745 = vmatprep.mubr.bf16.mxu0 %v392
    %7746 = vmatmul.mubr.bf16.gmra.mrb[0].mxu0 %v391
    %v7747 = vpop.f32.mrb[0].mxu0
    %v7748 = vadd.f32 %v7707, %v7747
    %v7749 = vpop.f32.mrb[0].mxu0
    %v7750 = vadd.f32 %v7709, %v7749
    %v7751 = vpop.f32.mrb[0].mxu0
    %v7752 = vpop.f32.mrb[0].mxu0
    %7753 = vdwg.mxu0
    %7754 = vmatprep.subr.bf16.mxu0 %v5331
    %7755 = vmatpush1.bf16.msra.mxu0 %v5330
    %7756 = vmatprep.subr.bf16.mxu0 %v5335
    %7757 = vmatpush1.bf16.msra.mxu0 %v5334
    %7758 = vmatprep.subr.bf16.mxu0 %v5339
    %7759 = vmatpush1.bf16.msra.mxu0 %v5338
    %7760 = vmatprep.subr.bf16.mxu0 %v5343
    %7761 = vmatpush1.bf16.msra.mxu0 %v5342
    %7762 = vmatprep.subr.bf16.mxu0 %v5347
    %7763 = vmatpush1.bf16.msra.mxu0 %v5346
    %7764 = vmatprep.subr.bf16.mxu0 %v5351
    %7765 = vmatpush1.bf16.msra.mxu0 %v5350
    %7766 = vmatprep.subr.bf16.mxu0 %v5355
    %7767 = vmatpush1.bf16.msra.mxu0 %v5354
    %7768 = vmatprep.subr.bf16.mxu0 %v5359
    %7769 = vmatpush1.bf16.msra.mxu0 %v5358
    %7770 = vmatprep.subr.bf16.mxu0 %v5363
    %7771 = vmatpush1.bf16.msra.mxu0 %v5362
    %7772 = vmatprep.subr.bf16.mxu0 %v5367
    %7773 = vmatpush1.bf16.msra.mxu0 %v5366
    %7774 = vmatprep.subr.bf16.mxu0 %v5371
    %7775 = vmatpush1.bf16.msra.mxu0 %v5370
    %7776 = vmatprep.subr.bf16.mxu0 %v5375
    %7777 = vmatpush1.bf16.msra.mxu0 %v5374
    %7778 = vmatprep.subr.bf16.mxu0 %v5379
    %7779 = vmatpush1.bf16.msra.mxu0 %v5378
    %7780 = vmatprep.subr.bf16.mxu0 %v5383
    %7781 = vmatpush1.bf16.msra.mxu0 %v5382
    %7782 = vmatprep.subr.bf16.mxu0 %v5387
    %7783 = vmatpush1.bf16.msra.mxu0 %v5386
    %7784 = vmatprep.subr.bf16.mxu0 %v5391
    %7785 = vmatpush1.bf16.msra.mxu0 %v5390
    %7786 = vmatprep.mubr.bf16.mxu0 %v394
    %7787 = vmatmul.mubr.bf16.gmra.mrb[0].mxu0 %v393
    %v7788 = vpop.f32.mrb[0].mxu0
    %v7789 = vadd.f32 %v7748, %v7788
    %v7790 = vpop.f32.mrb[0].mxu0
    %v7791 = vadd.f32 %v7750, %v7790
    %v7792 = vpop.f32.mrb[0].mxu0
    %v7793 = vpop.f32.mrb[0].mxu0
    %7794 = vdwg.mxu0
    %7795 = vmatprep.subr.bf16.mxu0 %v5395
    %7796 = vmatpush1.bf16.msra.mxu0 %v5394
    %7797 = vmatprep.subr.bf16.mxu0 %v5399
    %7798 = vmatpush1.bf16.msra.mxu0 %v5398
    %7799 = vmatprep.subr.bf16.mxu0 %v5403
    %7800 = vmatpush1.bf16.msra.mxu0 %v5402
    %7801 = vmatprep.subr.bf16.mxu0 %v5407
    %7802 = vmatpush1.bf16.msra.mxu0 %v5406
    %7803 = vmatprep.subr.bf16.mxu0 %v5411
    %7804 = vmatpush1.bf16.msra.mxu0 %v5410
    %7805 = vmatprep.subr.bf16.mxu0 %v5415
    %7806 = vmatpush1.bf16.msra.mxu0 %v5414
    %7807 = vmatprep.subr.bf16.mxu0 %v5419
    %7808 = vmatpush1.bf16.msra.mxu0 %v5418
    %7809 = vmatprep.subr.bf16.mxu0 %v5423
    %7810 = vmatpush1.bf16.msra.mxu0 %v5422
    %7811 = vmatprep.subr.bf16.mxu0 %v5427
    %7812 = vmatpush1.bf16.msra.mxu0 %v5426
    %7813 = vmatprep.subr.bf16.mxu0 %v5431
    %7814 = vmatpush1.bf16.msra.mxu0 %v5430
    %7815 = vmatprep.subr.bf16.mxu0 %v5435
    %7816 = vmatpush1.bf16.msra.mxu0 %v5434
    %7817 = vmatprep.subr.bf16.mxu0 %v5439
    %7818 = vmatpush1.bf16.msra.mxu0 %v5438
    %7819 = vmatprep.subr.bf16.mxu0 %v5443
    %7820 = vmatpush1.bf16.msra.mxu0 %v5442
    %7821 = vmatprep.subr.bf16.mxu0 %v5447
    %7822 = vmatpush1.bf16.msra.mxu0 %v5446
    %7823 = vmatprep.subr.bf16.mxu0 %v5451
    %7824 = vmatpush1.bf16.msra.mxu0 %v5450
    %7825 = vmatprep.subr.bf16.mxu0 %v5455
    %7826 = vmatpush1.bf16.msra.mxu0 %v5454
    %7827 = vmatprep.mubr.bf16.mxu0 %v396
    %7828 = vmatmul.mubr.bf16.gmra.mrb[0].mxu0 %v395
    %v7829 = vpop.f32.mrb[0].mxu0
    %v7830 = vadd.f32 %v7789, %v7829
    %v7831 = vpop.f32.mrb[0].mxu0
    %v7832 = vadd.f32 %v7791, %v7831
    %v7833 = vpop.f32.mrb[0].mxu0
    %v7834 = vpop.f32.mrb[0].mxu0
    %7835 = vdwg.mxu0
    %7836 = vmatprep.subr.bf16.mxu0 %v5459
    %7837 = vmatpush1.bf16.msra.mxu0 %v5458
    %7838 = vmatprep.subr.bf16.mxu0 %v5463
    %7839 = vmatpush1.bf16.msra.mxu0 %v5462
    %7840 = vmatprep.subr.bf16.mxu0 %v5467
    %7841 = vmatpush1.bf16.msra.mxu0 %v5466
    %7842 = vmatprep.subr.bf16.mxu0 %v5471
    %7843 = vmatpush1.bf16.msra.mxu0 %v5470
    %7844 = vmatprep.subr.bf16.mxu0 %v5475
    %7845 = vmatpush1.bf16.msra.mxu0 %v5474
    %7846 = vmatprep.subr.bf16.mxu0 %v5479
    %7847 = vmatpush1.bf16.msra.mxu0 %v5478
    %7848 = vmatprep.subr.bf16.mxu0 %v5483
    %7849 = vmatpush1.bf16.msra.mxu0 %v5482
    %7850 = vmatprep.subr.bf16.mxu0 %v5487
    %7851 = vmatpush1.bf16.msra.mxu0 %v5486
    %7852 = vmatprep.subr.bf16.mxu0 %v5491
    %7853 = vmatpush1.bf16.msra.mxu0 %v5490
    %7854 = vmatprep.subr.bf16.mxu0 %v5495
    %7855 = vmatpush1.bf16.msra.mxu0 %v5494
    %7856 = vmatprep.subr.bf16.mxu0 %v5499
    %7857 = vmatpush1.bf16.msra.mxu0 %v5498
    %7858 = vmatprep.subr.bf16.mxu0 %v5503
    %7859 = vmatpush1.bf16.msra.mxu0 %v5502
    %7860 = vmatprep.subr.bf16.mxu0 %v5507
    %7861 = vmatpush1.bf16.msra.mxu0 %v5506
    %7862 = vmatprep.subr.bf16.mxu0 %v5511
    %7863 = vmatpush1.bf16.msra.mxu0 %v5510
    %7864 = vmatprep.subr.bf16.mxu0 %v5515
    %7865 = vmatpush1.bf16.msra.mxu0 %v5514
    %7866 = vmatprep.subr.bf16.mxu0 %v5519
    %7867 = vmatpush1.bf16.msra.mxu0 %v5518
    %7868 = vmatprep.mubr.bf16.mxu0 %v398
    %7869 = vmatmul.mubr.bf16.gmra.mrb[0].mxu0 %v397
    %v7870 = vpop.f32.mrb[0].mxu0
    %v7871 = vadd.f32 %v7830, %v7870
    %v7872 = vpop.f32.mrb[0].mxu0
    %v7873 = vadd.f32 %v7832, %v7872
    %v7874 = vpop.f32.mrb[0].mxu0
    %v7875 = vpop.f32.mrb[0].mxu0
    %7876 = vdwg.mxu0
    %vm7877 = vcmp.gt.f32.partialorder %v7215, 0.0
    %vm7878 = vcmp.gt.f32.partialorder %v7217, 0.0
    %vm7879 = vcmp.gt.f32.partialorder %v7871, 0.0
    %vm7880 = vcmp.gt.f32.partialorder %v7873, 0.0
    %v7881 = vmul.f32 %v7215, 0.01
    %v7882 = vmul.f32 %v7217, 0.01
    %v7883 = vmul.f32 %v7871, 0.01
    %v7884 = vmul.f32 %v7873, 0.01
    %v7885 = vsel %vm7877, %v7215, %v7881
    %v7886 = vsel %vm7878, %v7217, %v7882
    %v7887 = vsel %vm7879, %v7871, %v7883
    %v7888 = vsel %vm7880, %v7873, %v7884
    %vm7889 = vcmask 1040384
    %v7890 = vsel %vm7889, %v7885, 0.0
    %v7891 = vsel %vm7889, %v7886, 0.0
    %v7892 = vadd.f32 %v7890, %v7891
    %v7893 = vsel %vm7889, %v7887, 0.0
    %v7894 = vadd.f32 %v7892, %v7893
    %v7895 = vsel %vm7889, %v7888, 0.0
    %v7896 = vadd.f32 %v7894, %v7895
    %7897 = vadd.xlane.f32.xlu0 %v7896
    %v7898 = vpop.xlane.xlu0 %7897
    %v7899 = vrcp.pop 512.0
    %v7900 = vmul.f32 %v7898, %v7899
    %v7901 = vsub.f32 %v7885, %v7900
    %v7902 = vsub.f32 %v7886, %v7900
    %v7903 = vsub.f32 %v7887, %v7900
    %v7904 = vsub.f32 %v7888, %v7900
    %v7905 = vmul.f32 %v7901, %v7901
    %v7906 = vmul.f32 %v7902, %v7902
    %v7907 = vmul.f32 %v7903, %v7903
    %v7908 = vmul.f32 %v7904, %v7904
    %v7909 = vsel %vm7889, %v7905, 0.0
    %v7910 = vsel %vm7889, %v7906, 0.0
    %v7911 = vadd.f32 %v7909, %v7910
    %v7912 = vsel %vm7889, %v7907, 0.0
    %v7913 = vadd.f32 %v7911, %v7912
    %v7914 = vsel %vm7889, %v7908, 0.0
    %v7915 = vadd.f32 %v7913, %v7914
    %7916 = vadd.xlane.f32.xlu0 %v7915
    %v7917 = vpop.xlane.xlu0 %7916
    %v7918 = vmul.f32 %v7917, %v7899
    %v7919 = vadd.f32 %v7918, 1e-05
    %v7920 = vrsqrt.pop %v7919
    %v7921 = vmul.f32 %v7901, %v7920
    %v7922 = vmul.f32 %v7902, %v7920
    %v7923 = vmul.f32 %v7903, %v7920
    %v7924 = vmul.f32 %v7904, %v7920
    %v7925 = vld [vmem:[%s5] sm:$0xf]
    %v7927 = vlaneseq
    %v7928 = vshrl.u32 %v7927, 7
    %v7929 = vsub.s32 0, %v7928
    %v7930 = vrot.slane %v7925, %v7929
    %v7931 = vlaneseq
    %v7932 = vshrl.u32 %v7931, 7
    %v7933 = vsub.s32 1, %v7932
    %v7934 = vrot.slane %v7925, %v7933
    %v7935 = vlaneseq
    %v7936 = vshrl.u32 %v7935, 7
    %v7937 = vsub.s32 2, %v7936
    %v7938 = vrot.slane %v7925, %v7937
    %v7939 = vlaneseq
    %v7940 = vshrl.u32 %v7939, 7
    %v7941 = vsub.s32 3, %v7940
    %v7942 = vrot.slane %v7925, %v7941
    %v7947 = vmul.f32 %v7921, %v7930
    %v7948 = vmul.f32 %v7922, %v7934
    %v7949 = vmul.f32 %v7923, %v7938
    %v7950 = vmul.f32 %v7924, %v7942
    %v7951 = vld [vmem:[%s6] sm:$0xf]
    %v7953 = vlaneseq
    %v7954 = vshrl.u32 %v7953, 7
    %v7955 = vsub.s32 0, %v7954
    %v7956 = vrot.slane %v7951, %v7955
    %v7957 = vlaneseq
    %v7958 = vshrl.u32 %v7957, 7
    %v7959 = vsub.s32 1, %v7958
    %v7960 = vrot.slane %v7951, %v7959
    %v7961 = vlaneseq
    %v7962 = vshrl.u32 %v7961, 7
    %v7963 = vsub.s32 2, %v7962
    %v7964 = vrot.slane %v7951, %v7963
    %v7965 = vlaneseq
    %v7966 = vshrl.u32 %v7965, 7
    %v7967 = vsub.s32 3, %v7966
    %v7968 = vrot.slane %v7951, %v7967
    %v7973 = vadd.f32 %v7947, %v7956
    %v7974 = vadd.f32 %v7948, %v7960
    %v7975 = vadd.f32 %v7949, %v7964
    %v7976 = vadd.f32 %v7950, %v7968
    %v7981 = vcombine.low %v7973, %v7974
    %v7982 = vcombine.low %v7975, %v7976
    %v7984 = vunpack.c.l.s4 1966171168
    %v7985 = vunpack.c.0.s8 %v7984
    %v7986 = vlaneseq
    %v7987 = vshrl.u32 %v7986, 7
    %v7988 = vsub.s32 %v7985, %v7987
    %v7989 = vrot.slane %v7981, %v7988
    %v7991 = vunpack.c.l.s4 1966171168
    %v7992 = vunpack.c.0.s8 %v7991
    %v7993 = vlaneseq
    %v7994 = vshrl.u32 %v7993, 7
    %v7995 = vsub.s32 %v7992, %v7994
    %v7996 = vrot.slane %v7982, %v7995
    %v7997 = vcombine.low %v7989, %v7996
    %v7999 = vunpack.c.l.s4 1966171168
    %v8000 = vunpack.c.0.s8 %v7999
    %v8001 = vlaneseq
    %v8002 = vshrl.u32 %v8001, 7
    %v8003 = vsub.s32 %v8000, %v8002
    %v8004 = vrot.slane %v7997, %v8003
    %v8006 = vlaneseq
    %vm8007 = vcmp.ge.s32.totalorder %v8006, 0
    %vm8008 = vcmp.lt.s32.totalorder %v8006, 512
    %vm8009 = vmand %vm8007, %vm8008
    %8010 = vst.msk [vmem:[#allocation2] sm:$0xf] %vm8009, %v8004
    // Predicated region
    $region30: #{encoder_forward.9} parent=1 // pred_check
      _
    $region31: #{encoder_forward.9} parent=1 // pred_check_branch
      %8012 = sbr.rel (0) target = $region33
    $region32: #{encoder_forward.9} parent=1 // pred_region
      %s8014 = ssub.s32 64, 64
      %8015 = vsyncadd [#allocation3], %s8014
      %s8017 = sshll.u32 [#allocation2], 4
      %s8018 = int_to_ptr.vmem [resolvable:$true] %s8017
      %8020 = dma.vmem_to_hbm [thread:$0]  %s8018, 64, %s7, [#allocation3]
    $region33: #{encoder_forward.9} parent=1 // pred_fallthru
      _
    // Predicated region
    $region34: #{encoder_forward.9} parent=1 // pred_check
      _
    $region35: #{encoder_forward.9} parent=1 // pred_check_branch
      %8022 = sbr.rel (0) target = $region37
    $region36: #{encoder_forward.9} parent=1 // pred_region
      %8023 = dma.done [#allocation3], 64
    $region37: #{encoder_forward.9} parent=1 // pred_fallthru
      _
    %8024 = vsyncpa [#allocation3], 1

</llo_original>
